<compile_context>
chip_gen: v7x
topology: tpu7x:2x2x1
jax: 0.10.0
libtpu: 0.0.40
codegen_flags: <defaults>
</compile_context>

<pallas_src>
import functools
import math

import jax
import jax.numpy as jnp
from jax import lax
from jax.experimental import pallas as pl
from jax.experimental.pallas import tpu as pltpu


def _round_up(x, m):
    return ((x + m - 1) // m) * m


# ----------------------------------------------------------------------------
# Fully fused forward kernel: BiLSTM stack + dense + Viterbi DP + backtrack
# ----------------------------------------------------------------------------
def _fused_forward_kernel(*refs, num_layers, T, H, G, KP,
                          start_idx, stop_idx, unroll):
    it = iter(refs)
    x_ref = next(it)
    layer_refs = [(next(it), next(it), next(it)) for _ in range(num_layers)]
    dw_ref = next(it)
    db_ref = next(it)
    transT_ref = next(it)
    path_oh_ref = next(it)
    term_ref = next(it)
    start_oh_ref = next(it)
    h_scr = next(it)        # (T, G)  fwd rows during the loop / merged output
    rev_scr = next(it)      # (T, G)  bwd rows (stored at time index T-1-s)
    gx_scr = next(it)       # (T, 4G) hoisted input projection
    feats_scr = next(it)    # (T, KP) emissions
    bptr_scr = next(it)     # (T, KP) backpointers (as float indices)

    f32 = jnp.float32

    # Lane masks (whole-vreg, 128-aligned).
    lane4g = lax.broadcasted_iota(jnp.int32, (1, 4 * G), 1)
    is_fwd = (lane4g % G) < H                    # fwd lanes of each gate group
    lane_tg = lax.broadcasted_iota(jnp.int32, (T, G), 1)
    fwd_half = lane_tg < H                       # fwd half of the hidden layout
    lane_kp = lax.broadcasted_iota(jnp.int32, (1, KP), 1).astype(f32)

    # ---------------- Bidirectional LSTM layers ----------------
    def run_layer(inp_ref, wih_ref, whh_ref, b_ref):
        # Hoisted input projection for BOTH directions and all T steps:
        #   gx[t] = x[t] @ Wih_packed + b   -> (T, 4G)
        # gate-group layout (each G lanes): [fwd H | bwd H | zero pad]
        gx_scr[...] = (jnp.dot(inp_ref[...], wih_ref[...],
                               preferred_element_type=f32) + b_ref[...])

        zeros = jnp.zeros((1, G), f32)

        def step(s, carry):
            h, c = carry                                    # (1, G) = [fwd|bwd|0]
            # Direction-dependent rows; not on the serial h->h dependency chain,
            # so with unrolling they overlap the previous step's MXU/EUP work.
            row_f = gx_scr[pl.ds(s, 1), :]
            row_b = gx_scr[pl.ds(T - 1 - s, 1), :]
            gx = jnp.where(is_fwd, row_f, row_b)            # (1, 4G)
            # Block-diagonal recurrent matmul handles both directions at once.
            gates = gx + jnp.dot(h, whh_ref[...], preferred_element_type=f32)
            i_g = jax.nn.sigmoid(gates[:, 0 * G:1 * G])
            f_g = jax.nn.sigmoid(gates[:, 1 * G:2 * G])
            g_g = jnp.tanh(gates[:, 2 * G:3 * G])
            o_g = jax.nn.sigmoid(gates[:, 3 * G:4 * G])
            c_new = f_g * c + i_g * g_g
            h_new = o_g * jnp.tanh(c_new)
            # Two full-row, lane-dense (128-lane) stores; no masked sub-vreg vst.
            h_scr[pl.ds(s, 1), :] = h_new
            rev_scr[pl.ds(T - 1 - s, 1), :] = h_new
            return (h_new, c_new)

        lax.fori_loop(0, T, step, (zeros, zeros), unroll=unroll)

        # Merge: fwd half from forward-time rows, bwd half from reversed rows.
        # Result layout per row t: [h_fwd(t) | h_bwd(t) | 0] -> next layer input.
        h_scr[...] = jnp.where(fwd_half, h_scr[...], rev_scr[...])

    run_layer(x_ref, *layer_refs[0])
    for layer in range(1, num_layers):
        run_layer(h_scr, *layer_refs[layer])

    # ---------------- Dense head (dropout = identity at inference) ------------
    feats_scr[...] = (jnp.dot(h_scr[...], dw_ref[...],
                              preferred_element_type=f32) + db_ref[...])

    # ---------------- Viterbi forward DP ----------------
    row_kp = lax.broadcasted_iota(jnp.int32, (KP, 1), 0)
    fv0 = jnp.where(row_kp == start_idx, 0.0, -10000.0).astype(f32)   # (KP, 1)

    def dp_step(t, fv):
        transT = transT_ref[...]                         # transT[prev, next]
        prev_iota = lax.broadcasted_iota(jnp.int32, (KP, KP), 0).astype(f32)
        # M[prev, next] = forward_var[prev] + transition[next, prev]
        M = transT + fv                                  # (KP, KP)
        best = jnp.max(M, axis=0, keepdims=True)         # (1, KP)
        # first-max argmax (matches torch.max tie semantics), reuses the max
        bp = jnp.min(jnp.where(M == best, prev_iota, float(KP)),
                     axis=0, keepdims=True)              # (1, KP) float indices
        bptr_scr[pl.ds(t, 1), :] = bp
        feat_t = feats_scr[pl.ds(t, 1), :]               # (1, KP)
        return (best + feat_t).T                         # (KP, 1)

    fv = lax.fori_loop(0, T, dp_step, fv0, unroll=unroll)

    transT = transT_ref[...]
    # terminal[k] = forward_var[k] + transition[STOP, k]
    term_row = (fv + transT[:, stop_idx:stop_idx + 1]).T          # (1, KP)
    term_ref[...] = term_row

    tmax = jnp.max(term_row, axis=1, keepdims=True)               # (1, 1)
    best_last = jnp.min(jnp.where(term_row == tmax, lane_kp, float(KP)),
                        axis=1, keepdims=True)                    # (1, 1)
    cur_oh0 = (lane_kp == best_last).astype(f32)                  # one-hot tag

    # ---------------- In-kernel backtrack (one-hot vector math) ----------------
    def bt_step(i, cur_oh):
        t = T - 1 - i
        path_oh_ref[pl.ds(t, 1), :] = cur_oh                      # decoded tag t
        bp_row = bptr_scr[pl.ds(t, 1), :]
        prev = jnp.sum(bp_row * cur_oh, axis=1, keepdims=True)    # (1, 1)
        return (lane_kp == prev).astype(f32)

    start_oh = lax.fori_loop(0, T, bt_step, cur_oh0, unroll=unroll)
    start_oh_ref[...] = start_oh                                  # should be <START>


# ----------------------------------------------------------------------------
# Jitted device-side forward (single pallas_call + tiny reductions)
# ----------------------------------------------------------------------------
@functools.partial(jax.jit,
                   static_argnames=("hid_dim", "num_layers", "num_tags",
                                    "start_idx", "stop_idx"))
def _bilstm_crf_device(sentence, params, *, hid_dim, num_layers, num_tags,
                       start_idx, stop_idx):
    x = sentence[0]                                       # (T, E); batch == 1
    T = x.shape[0]
    H = hid_dim
    G = _round_up(2 * H, 128)                             # padded hidden / gate group
    KP = _round_up(num_tags, 128)                         # padded tag dim
    unroll = max(1, min(T, 8))                            # bounded unroll

    kernel = functools.partial(
        _fused_forward_kernel, num_layers=num_layers, T=T, H=H, G=G, KP=KP,
        start_idx=start_idx, stop_idx=stop_idx, unroll=unroll)

    inputs = [x]
    in_specs = [pl.BlockSpec(x.shape, lambda i: (0, 0))]
    for lp in params["lstm"]:
        for name in ("wih", "whh", "b"):
            arr = lp[name]
            inputs.append(arr)
            in_specs.append(pl.BlockSpec(arr.shape, lambda i: (0, 0)))
    for arr in (params["dense_w"], params["dense_b"], params["transT"]):
        inputs.append(arr)
        in_specs.append(pl.BlockSpec(arr.shape, lambda i: (0, 0)))

    out_shape = (jax.ShapeDtypeStruct((T, KP), jnp.float32),   # one-hot path
                 jax.ShapeDtypeStruct((1, KP), jnp.float32),   # terminal row
                 jax.ShapeDtypeStruct((1, KP), jnp.float32))   # start one-hot
    out_specs = (pl.BlockSpec((T, KP), lambda i: (0, 0)),
                 pl.BlockSpec((1, KP), lambda i: (0, 0)),
                 pl.BlockSpec((1, KP), lambda i: (0, 0)))

    scratch_shapes = [
        pltpu.VMEM((T, G), jnp.float32),        # h_scr   (fwd / merged act)
        pltpu.VMEM((T, G), jnp.float32),        # rev_scr (bwd rows)
        pltpu.VMEM((T, 4 * G), jnp.float32),    # gx_scr  (hoisted projection)
        pltpu.VMEM((T, KP), jnp.float32),       # feats
        pltpu.VMEM((T, KP), jnp.float32),       # backpointers
    ]

    path_oh, term, start_oh = pl.pallas_call(
        kernel,
        grid=(1,),
        out_shape=out_shape,
        in_specs=in_specs,
        out_specs=out_specs,
        scratch_shapes=scratch_shapes,
        compiler_params=pltpu.CompilerParams(
            dimension_semantics=("arbitrary",),
            vmem_limit_bytes=32 * 1024 * 1024),
    )(*inputs)

    tags = jnp.argmax(path_oh, axis=1).astype(jnp.int32)          # (T,)
    score = jnp.max(term[0, :num_tags])                            # path score
    start_tag = jnp.argmax(start_oh[0]).astype(jnp.int32)
    return score, tags, start_tag


def bilstm_crf_forward(sentence, params, hid_dim, num_layers, num_tags,
                       start_idx, stop_idx):
    """sentence: (1, T, E) batch_first, batch must be 1 (squeeze(0) semantics)."""
    score, tags, start_tag = _bilstm_crf_device(
        sentence, params, hid_dim=hid_dim, num_layers=num_layers,
        num_tags=num_tags, start_idx=start_idx, stop_idx=stop_idx)
    tags_host, start_host = jax.device_get((tags, start_tag))
    assert int(start_host) == start_idx            # mirrors the PyTorch assert
    return score, [int(t) for t in tags_host]


# ----------------------------------------------------------------------------
# Parameter construction / packing (mirrors the PyTorch module's shapes)
# ----------------------------------------------------------------------------
def _pack_bidir_lstm(w_ih_f, w_hh_f, b_f, w_ih_b, w_hh_b, b_b, *,
                     hid_dim, in_dim, in_pad, G):
    """Pack fwd/bwd LSTM weights into the fused-kernel layout.

    Gate groups are G (128-aligned) lanes wide; within gate g (PyTorch order
    i, f, g, o) lanes [gG, gG+H) are forward, [gG+H, gG+2H) are backward and
    the remainder is zero padding.  whh is block-diagonal per gate so
    [h_fwd | h_bwd | 0] @ whh computes both recurrences in one matmul."""
    H = hid_dim
    wih = jnp.zeros((in_pad, 4 * G), jnp.float32)
    whh = jnp.zeros((G, 4 * G), jnp.float32)
    b = jnp.zeros((1, 4 * G), jnp.float32)
    for g in range(4):
        c0 = g * G
        wih = wih.at[:in_dim, c0:c0 + H].set(w_ih_f[:, g * H:(g + 1) * H])
        wih = wih.at[:in_dim, c0 + H:c0 + 2 * H].set(w_ih_b[:, g * H:(g + 1) * H])
        whh = whh.at[0:H, c0:c0 + H].set(w_hh_f[:, g * H:(g + 1) * H])
        whh = whh.at[H:2 * H, c0 + H:c0 + 2 * H].set(w_hh_b[:, g * H:(g + 1) * H])
        b = b.at[:, c0:c0 + H].set(b_f[:, g * H:(g + 1) * H])
        b = b.at[:, c0 + H:c0 + 2 * H].set(b_b[:, g * H:(g + 1) * H])
    return wih, whh, b


def init_params(key, embed_dim, hid_dim, num_layers, target_size,
                start_idx, stop_idx):
    H = hid_dim
    G = _round_up(2 * H, 128)
    KP = _round_up(target_size, 128)
    std = 1.0 / math.sqrt(H)
    params = {"lstm": []}

    def rand_dir(k, in_dim):
        k1, k2, k3, k4 = jax.random.split(k, 4)
        w_ih = jax.random.uniform(k1, (in_dim, 4 * H), minval=-std, maxval=std,
                                  dtype=jnp.float32)
        w_hh = jax.random.uniform(k2, (H, 4 * H), minval=-std, maxval=std,
                                  dtype=jnp.float32)
        b_ih = jax.random.uniform(k3, (4 * H,), minval=-std, maxval=std,
                                  dtype=jnp.float32)
        b_hh = jax.random.uniform(k4, (4 * H,), minval=-std, maxval=std,
                                  dtype=jnp.float32)
        return w_ih, w_hh, (b_ih + b_hh).reshape(1, 4 * H)

    for layer in range(num_layers):
        in_dim = embed_dim if layer == 0 else 2 * H
        in_pad = embed_dim if layer == 0 else G
        key, kf, kb = jax.random.split(key, 3)
        w_ih_f, w_hh_f, b_f = rand_dir(kf, in_dim)
        w_ih_b, w_hh_b, b_b = rand_dir(kb, in_dim)
        wih, whh, b = _pack_bidir_lstm(w_ih_f, w_hh_f, b_f,
                                       w_ih_b, w_hh_b, b_b,
                                       hid_dim=H, in_dim=in_dim,
                                       in_pad=in_pad, G=G)
        params["lstm"].append({"wih": wih, "whh": whh, "b": b})

    key, kd, kt = jax.random.split(key, 3)
    bound = (6.0 / (2 * H + target_size)) ** 0.5
    dw = jax.random.uniform(kd, (2 * H, target_size), minval=-bound,
                            maxval=bound, dtype=jnp.float32)
    params["dense_w"] = (jnp.zeros((G, KP), jnp.float32)
                         .at[:2 * H, :target_size].set(dw))
    params["dense_b"] = jnp.zeros((1, KP), jnp.float32)

    transition = jax.random.normal(kt, (target_size, target_size),
                                   dtype=jnp.float32)
    transition = transition.at[start_idx, :].set(-10000.0)
    transition = transition.at[:, stop_idx].set(-10000.0)
    # Precomputed once: [prev, next] layout, padded to (KP, KP) with a large
    # negative so padded tags can never be selected by the Viterbi DP.
    transT = (jnp.full((KP, KP), -10000.0, jnp.float32)
              .at[:target_size, :target_size].set(transition.T))
    params["transT"] = transT
    return params


if __name__ == "__main__":
    # config (small shapes): char_embed_dim=8, word_embed_dim=24 -> embed=32
    char_embed_dim, word_embed_dim = 8, 24
    embed_dim = char_embed_dim + word_embed_dim
    hid_dim = 32
    num_layers = 2
    seq_len = 8
    tag_to_idx = {"B": 0, "I": 1, "O": 2, "<START>": 3, "<STOP>": 4}
    target_size = len(tag_to_idx)
    start_idx = tag_to_idx["<START>"]
    stop_idx = tag_to_idx["<STOP>"]

    key = jax.random.PRNGKey(0)
    k_params, k_sent = jax.random.split(key)
    params = init_params(k_params, embed_dim, hid_dim, num_layers,
                         target_size, start_idx, stop_idx)
    sentence = jax.random.normal(k_sent, (1, seq_len, embed_dim),
                                 dtype=jnp.float32)

    score, tag_seq = bilstm_crf_forward(sentence, params, hid_dim, num_layers,
                                        target_size, start_idx, stop_idx)
    jax.block_until_ready(score)
    assert len(tag_seq) == seq_len
    assert all(0 <= t < target_size for t in tag_seq)
    print("KERNEL_OK")
</pallas_src>

<mosaic_0001>
module attributes {stable_mosaic.version = 11 : i64} {
  func.func @_fused_forward_kernel(%arg0: i32, %arg1: memref<8x32xf32, #tpu.memory_space<vmem>>, %arg2: memref<32x512xf32, #tpu.memory_space<vmem>>, %arg3: memref<128x512xf32, #tpu.memory_space<vmem>>, %arg4: memref<1x512xf32, #tpu.memory_space<vmem>>, %arg5: memref<128x512xf32, #tpu.memory_space<vmem>>, %arg6: memref<128x512xf32, #tpu.memory_space<vmem>>, %arg7: memref<1x512xf32, #tpu.memory_space<vmem>>, %arg8: memref<128x128xf32, #tpu.memory_space<vmem>>, %arg9: memref<1x128xf32, #tpu.memory_space<vmem>>, %arg10: memref<128x128xf32, #tpu.memory_space<vmem>>, %arg11: memref<8x128xf32, #tpu.memory_space<vmem>>, %arg12: memref<1x128xf32, #tpu.memory_space<vmem>>, %arg13: memref<1x128xf32, #tpu.memory_space<vmem>>, %arg14: memref<8x128xf32, #tpu.memory_space<vmem>>, %arg15: memref<8x128xf32, #tpu.memory_space<vmem>>, %arg16: memref<8x512xf32, #tpu.memory_space<vmem>>, %arg17: memref<8x128xf32, #tpu.memory_space<vmem>>, %arg18: memref<8x128xf32, #tpu.memory_space<vmem>>) attributes {dimension_semantics = [#tpu.dimension_semantics<arbitrary>], iteration_bounds = array<i64: 1>, scalar_prefetch = 0 : i64, scratch_operands = 5 : i64, tpu.core_type = #tpu.core_type<tc>, window_params = [{pipeline_mode = #tpu.pipeline_mode<synchronous>, transform_indices = @transform_0, window_bounds = array<i64: 8, 32>}, {pipeline_mode = #tpu.pipeline_mode<synchronous>, transform_indices = @transform_1, window_bounds = array<i64: 32, 512>}, {pipeline_mode = #tpu.pipeline_mode<synchronous>, transform_indices = @transform_2, window_bounds = array<i64: 128, 512>}, {pipeline_mode = #tpu.pipeline_mode<synchronous>, transform_indices = @transform_3, window_bounds = array<i64: 1, 512>}, {pipeline_mode = #tpu.pipeline_mode<synchronous>, transform_indices = @transform_4, window_bounds = array<i64: 128, 512>}, {pipeline_mode = #tpu.pipeline_mode<synchronous>, transform_indices = @transform_5, window_bounds = array<i64: 128, 512>}, {pipeline_mode = #tpu.pipeline_mode<synchronous>, transform_indices = @transform_6, window_bounds = array<i64: 1, 512>}, {pipeline_mode = #tpu.pipeline_mode<synchronous>, transform_indices = @transform_7, window_bounds = array<i64: 128, 128>}, {pipeline_mode = #tpu.pipeline_mode<synchronous>, transform_indices = @transform_8, window_bounds = array<i64: 1, 128>}, {pipeline_mode = #tpu.pipeline_mode<synchronous>, transform_indices = @transform_9, window_bounds = array<i64: 128, 128>}, {pipeline_mode = #tpu.pipeline_mode<synchronous>, transform_indices = @transform_10, window_bounds = array<i64: 8, 128>}, {pipeline_mode = #tpu.pipeline_mode<synchronous>, transform_indices = @transform_11, window_bounds = array<i64: 1, 128>}, {pipeline_mode = #tpu.pipeline_mode<synchronous>, transform_indices = @transform_12, window_bounds = array<i64: 1, 128>}]} {
    %0 = tpu.iota {dimensions = array<i32: 1>} : vector<1x512xi32>
    %c128_i32 = arith.constant 128 : i32
    %c0_i32 = arith.constant 0 : i32
    %1 = arith.cmpi eq, %c128_i32, %c0_i32 : i32
    %c1_i32 = arith.constant 1 : i32
    %2 = arith.select %1, %c1_i32, %c128_i32 : i32
    %3 = vector.broadcast %2 : i32 to vector<1x512xi32>
    %4 = arith.remsi %0, %3 : vector<1x512xi32>
    %c0_i32_0 = arith.constant 0 : i32
    %5 = vector.broadcast %c0_i32_0 : i32 to vector<1x512xi32>
    %6 = arith.cmpi ne, %4, %5 : vector<1x512xi32>
    %c0_i32_1 = arith.constant 0 : i32
    %7 = vector.broadcast %c0_i32_1 : i32 to vector<1x512xi32>
    %8 = arith.cmpi slt, %4, %7 : vector<1x512xi32>
    %c0_i32_2 = arith.constant 0 : i32
    %9 = arith.cmpi slt, %2, %c0_i32_2 : i32
    %10 = vector.broadcast %9 : i1 to vector<1x512xi1>
    %11 = vector.broadcast %10 : vector<1x512xi1> to vector<1x512xi1>
    %12 = arith.xori %8, %11 : vector<1x512xi1>
    %13 = arith.andi %12, %6 : vector<1x512xi1>
    %14 = vector.broadcast %2 : i32 to vector<1x512xi32>
    %15 = arith.addi %4, %14 : vector<1x512xi32>
    %16 = arith.select %13, %15, %4 : vector<1x512xi1>, vector<1x512xi32>
    %c32_i32 = arith.constant 32 : i32
    %17 = vector.broadcast %c32_i32 : i32 to vector<1x512xi32>
    %18 = arith.cmpi slt, %16, %17 : vector<1x512xi32>
    %19 = tpu.iota {dimensions = array<i32: 1>} : vector<8x128xi32>
    %c32_i32_3 = arith.constant 32 : i32
    %20 = vector.broadcast %c32_i32_3 : i32 to vector<8x128xi32>
    %21 = arith.cmpi slt, %19, %20 : vector<8x128xi32>
    %22 = tpu.iota {dimensions = array<i32: 1>} : vector<1x128xi32>
    %23 = arith.sitofp %22 : vector<1x128xi32> to vector<1x128xf32>
    %c0 = arith.constant 0 : index
    %c0_4 = arith.constant 0 : index
    %24 = vector.load %arg1[%c0, %c0_4] : memref<8x32xf32, #tpu.memory_space<vmem>>, vector<8x32xf32>
    %c0_5 = arith.constant 0 : index
    %c0_6 = arith.constant 0 : index
    %25 = vector.load %arg2[%c0_5, %c0_6] : memref<32x512xf32, #tpu.memory_space<vmem>>, vector<32x512xf32>
    %cst = arith.constant dense<0.000000e+00> : vector<8x512xf32>
    %26 = tpu.matmul %24, %25, %cst {dimension_numbers = #tpu.dot_dimension_numbers<[1], [0], [0], [1], [0, 0, 1, 1], [], []>} : vector<8x32xf32>, vector<32x512xf32>, vector<8x512xf32> -> vector<8x512xf32>
    %c0_7 = arith.constant 0 : index
    %c0_8 = arith.constant 0 : index
    %27 = vector.load %arg4[%c0_7, %c0_8] : memref<1x512xf32, #tpu.memory_space<vmem>>, vector<1x512xf32>
    %28 = vector.broadcast %27 : vector<1x512xf32> to vector<8x512xf32>
    %29 = arith.addf %26, %28 : vector<8x512xf32>
    %c0_9 = arith.constant 0 : index
    %c0_10 = arith.constant 0 : index
    %30 = vector.load %arg16[%c0_9, %c0_10] : memref<8x512xf32, #tpu.memory_space<vmem>>, vector<8x512xf32>
    tpu.vector_store %arg16[%c0_9, %c0_10], %29 {strides = array<i32>} : memref<8x512xf32, #tpu.memory_space<vmem>>, vector<8x512xf32>,
    %cst_11 = arith.constant 0.000000e+00 : f32
    %31 = vector.broadcast %cst_11 : f32 to vector<1x128xf32>
    %c0_i32_12 = arith.constant 0 : i32
    %32 = arith.index_cast %c0_i32_12 : i32 to index
    %c0_13 = arith.constant 0 : index
    %33 = vector.load %arg16[%32, %c0_13] : memref<8x512xf32, #tpu.memory_space<vmem>>, vector<1x512xf32>
    %c7_i32 = arith.constant 7 : i32
    %34 = arith.subi %c7_i32, %c0_i32_12 : i32
    %35 = arith.index_cast %34 : i32 to index
    %c0_14 = arith.constant 0 : index
    %36 = vector.load %arg16[%35, %c0_14] : memref<8x512xf32, #tpu.memory_space<vmem>>, vector<1x512xf32>
    %37 = arith.select %18, %33, %36 : vector<1x512xi1>, vector<1x512xf32>
    %c0_15 = arith.constant 0 : index
    %c0_16 = arith.constant 0 : index
    %38 = vector.load %arg3[%c0_15, %c0_16] : memref<128x512xf32, #tpu.memory_space<vmem>>, vector<128x512xf32>
    %cst_17 = arith.constant dense<0.000000e+00> : vector<1x512xf32>
    %39 = tpu.matmul %31, %38, %cst_17 {dimension_numbers = #tpu.dot_dimension_numbers<[1], [0], [0], [1], [0, 0, 1, 1], [], []>} : vector<1x128xf32>, vector<128x512xf32>, vector<1x512xf32> -> vector<1x512xf32>
    %40 = arith.addf %37, %39 : vector<1x512xf32>
    %41 = vector.extract_strided_slice %40 {offsets = [0, 0], sizes = [1, 128], strides = [1, 1]} : vector<1x512xf32> to vector<1x128xf32>
    %42 = arith.negf %41 : vector<1x128xf32>
    %43 = math.exp %42 : vector<1x128xf32>
    %cst_18 = arith.constant 1.000000e+00 : f32
    %44 = vector.broadcast %cst_18 : f32 to vector<1x128xf32>
    %45 = arith.addf %44, %43 : vector<1x128xf32>
    %46 = arith.divf %44, %45 : vector<1x128xf32>
    %47 = vector.extract_strided_slice %40 {offsets = [0, 128], sizes = [1, 128], strides = [1, 1]} : vector<1x512xf32> to vector<1x128xf32>
    %48 = arith.negf %47 : vector<1x128xf32>
    %49 = math.exp %48 : vector<1x128xf32>
    %cst_19 = arith.constant 1.000000e+00 : f32
    %50 = vector.broadcast %cst_19 : f32 to vector<1x128xf32>
    %51 = arith.addf %50, %49 : vector<1x128xf32>
    %52 = arith.divf %50, %51 : vector<1x128xf32>
    %53 = vector.extract_strided_slice %40 {offsets = [0, 256], sizes = [1, 128], strides = [1, 1]} : vector<1x512xf32> to vector<1x128xf32>
    %54 = math.tanh %53 : vector<1x128xf32>
    %55 = vector.extract_strided_slice %40 {offsets = [0, 384], sizes = [1, 128], strides = [1, 1]} : vector<1x512xf32> to vector<1x128xf32>
    %56 = arith.negf %55 : vector<1x128xf32>
    %57 = math.exp %56 : vector<1x128xf32>
    %cst_20 = arith.constant 1.000000e+00 : f32
    %58 = vector.broadcast %cst_20 : f32 to vector<1x128xf32>
    %59 = arith.addf %58, %57 : vector<1x128xf32>
    %60 = arith.divf %58, %59 : vector<1x128xf32>
    %61 = arith.mulf %52, %31 : vector<1x128xf32>
    %62 = arith.mulf %46, %54 : vector<1x128xf32>
    %63 = arith.addf %61, %62 : vector<1x128xf32>
    %64 = math.tanh %63 : vector<1x128xf32>
    %65 = arith.mulf %60, %64 : vector<1x128xf32>
    %66 = arith.index_cast %c0_i32_12 : i32 to index
    %c0_21 = arith.constant 0 : index
    %67 = vector.load %arg14[%66, %c0_21] : memref<8x128xf32, #tpu.memory_space<vmem>>, vector<1x128xf32>
    tpu.vector_store %arg14[%66, %c0_21], %65 {strides = array<i32>} : memref<8x128xf32, #tpu.memory_space<vmem>>, vector<1x128xf32>,
    %c7_i32_22 = arith.constant 7 : i32
    %68 = arith.subi %c7_i32_22, %c0_i32_12 : i32
    %69 = arith.index_cast %68 : i32 to index
    %c0_23 = arith.constant 0 : index
    %70 = vector.load %arg15[%69, %c0_23] : memref<8x128xf32, #tpu.memory_space<vmem>>, vector<1x128xf32>
    tpu.vector_store %arg15[%69, %c0_23], %65 {strides = array<i32>} : memref<8x128xf32, #tpu.memory_space<vmem>>, vector<1x128xf32>,
    %c1_i32_24 = arith.constant 1 : i32
    %71 = arith.index_cast %c1_i32_24 : i32 to index
    %c0_25 = arith.constant 0 : index
    %72 = vector.load %arg16[%71, %c0_25] : memref<8x512xf32, #tpu.memory_space<vmem>>, vector<1x512xf32>
    %c7_i32_26 = arith.constant 7 : i32
    %73 = arith.subi %c7_i32_26, %c1_i32_24 : i32
    %74 = arith.index_cast %73 : i32 to index
    %c0_27 = arith.constant 0 : index
    %75 = vector.load %arg16[%74, %c0_27] : memref<8x512xf32, #tpu.memory_space<vmem>>, vector<1x512xf32>
    %76 = arith.select %18, %72, %75 : vector<1x512xi1>, vector<1x512xf32>
    %c0_28 = arith.constant 0 : index
    %c0_29 = arith.constant 0 : index
    %77 = vector.load %arg3[%c0_28, %c0_29] : memref<128x512xf32, #tpu.memory_space<vmem>>, vector<128x512xf32>
    %cst_30 = arith.constant dense<0.000000e+00> : vector<1x512xf32>
    %78 = tpu.matmul %65, %77, %cst_30 {dimension_numbers = #tpu.dot_dimension_numbers<[1], [0], [0], [1], [0, 0, 1, 1], [], []>} : vector<1x128xf32>, vector<128x512xf32>, vector<1x512xf32> -> vector<1x512xf32>
    %79 = arith.addf %76, %78 : vector<1x512xf32>
    %80 = vector.extract_strided_slice %79 {offsets = [0, 0], sizes = [1, 128], strides = [1, 1]} : vector<1x512xf32> to vector<1x128xf32>
    %81 = arith.negf %80 : vector<1x128xf32>
    %82 = math.exp %81 : vector<1x128xf32>
    %cst_31 = arith.constant 1.000000e+00 : f32
    %83 = vector.broadcast %cst_31 : f32 to vector<1x128xf32>
    %84 = arith.addf %83, %82 : vector<1x128xf32>
    %85 = arith.divf %83, %84 : vector<1x128xf32>
    %86 = vector.extract_strided_slice %79 {offsets = [0, 128], sizes = [1, 128], strides = [1, 1]} : vector<1x512xf32> to vector<1x128xf32>
    %87 = arith.negf %86 : vector<1x128xf32>
    %88 = math.exp %87 : vector<1x128xf32>
    %cst_32 = arith.constant 1.000000e+00 : f32
    %89 = vector.broadcast %cst_32 : f32 to vector<1x128xf32>
    %90 = arith.addf %89, %88 : vector<1x128xf32>
    %91 = arith.divf %89, %90 : vector<1x128xf32>
    %92 = vector.extract_strided_slice %79 {offsets = [0, 256], sizes = [1, 128], strides = [1, 1]} : vector<1x512xf32> to vector<1x128xf32>
    %93 = math.tanh %92 : vector<1x128xf32>
    %94 = vector.extract_strided_slice %79 {offsets = [0, 384], sizes = [1, 128], strides = [1, 1]} : vector<1x512xf32> to vector<1x128xf32>
    %95 = arith.negf %94 : vector<1x128xf32>
    %96 = math.exp %95 : vector<1x128xf32>
    %cst_33 = arith.constant 1.000000e+00 : f32
    %97 = vector.broadcast %cst_33 : f32 to vector<1x128xf32>
    %98 = arith.addf %97, %96 : vector<1x128xf32>
    %99 = arith.divf %97, %98 : vector<1x128xf32>
    %100 = arith.mulf %91, %63 : vector<1x128xf32>
    %101 = arith.mulf %85, %93 : vector<1x128xf32>
    %102 = arith.addf %100, %101 : vector<1x128xf32>
    %103 = math.tanh %102 : vector<1x128xf32>
    %104 = arith.mulf %99, %103 : vector<1x128xf32>
    %105 = arith.index_cast %c1_i32_24 : i32 to index
    %c0_34 = arith.constant 0 : index
    %106 = vector.load %arg14[%105, %c0_34] : memref<8x128xf32, #tpu.memory_space<vmem>>, vector<1x128xf32>
    tpu.vector_store %arg14[%105, %c0_34], %104 {strides = array<i32>} : memref<8x128xf32, #tpu.memory_space<vmem>>, vector<1x128xf32>,
    %c7_i32_35 = arith.constant 7 : i32
    %107 = arith.subi %c7_i32_35, %c1_i32_24 : i32
    %108 = arith.index_cast %107 : i32 to index
    %c0_36 = arith.constant 0 : index
    %109 = vector.load %arg15[%108, %c0_36] : memref<8x128xf32, #tpu.memory_space<vmem>>, vector<1x128xf32>
    tpu.vector_store %arg15[%108, %c0_36], %104 {strides = array<i32>} : memref<8x128xf32, #tpu.memory_space<vmem>>, vector<1x128xf32>,
    %c2_i32 = arith.constant 2 : i32
    %110 = arith.index_cast %c2_i32 : i32 to index
    %c0_37 = arith.constant 0 : index
    %111 = vector.load %arg16[%110, %c0_37] : memref<8x512xf32, #tpu.memory_space<vmem>>, vector<1x512xf32>
    %c7_i32_38 = arith.constant 7 : i32
    %112 = arith.subi %c7_i32_38, %c2_i32 : i32
    %113 = arith.index_cast %112 : i32 to index
    %c0_39 = arith.constant 0 : index
    %114 = vector.load %arg16[%113, %c0_39] : memref<8x512xf32, #tpu.memory_space<vmem>>, vector<1x512xf32>
    %115 = arith.select %18, %111, %114 : vector<1x512xi1>, vector<1x512xf32>
    %c0_40 = arith.constant 0 : index
    %c0_41 = arith.constant 0 : index
    %116 = vector.load %arg3[%c0_40, %c0_41] : memref<128x512xf32, #tpu.memory_space<vmem>>, vector<128x512xf32>
    %cst_42 = arith.constant dense<0.000000e+00> : vector<1x512xf32>
    %117 = tpu.matmul %104, %116, %cst_42 {dimension_numbers = #tpu.dot_dimension_numbers<[1], [0], [0], [1], [0, 0, 1, 1], [], []>} : vector<1x128xf32>, vector<128x512xf32>, vector<1x512xf32> -> vector<1x512xf32>
    %118 = arith.addf %115, %117 : vector<1x512xf32>
    %119 = vector.extract_strided_slice %118 {offsets = [0, 0], sizes = [1, 128], strides = [1, 1]} : vector<1x512xf32> to vector<1x128xf32>
    %120 = arith.negf %119 : vector<1x128xf32>
    %121 = math.exp %120 : vector<1x128xf32>
    %cst_43 = arith.constant 1.000000e+00 : f32
    %122 = vector.broadcast %cst_43 : f32 to vector<1x128xf32>
    %123 = arith.addf %122, %121 : vector<1x128xf32>
    %124 = arith.divf %122, %123 : vector<1x128xf32>
    %125 = vector.extract_strided_slice %118 {offsets = [0, 128], sizes = [1, 128], strides = [1, 1]} : vector<1x512xf32> to vector<1x128xf32>
    %126 = arith.negf %125 : vector<1x128xf32>
    %127 = math.exp %126 : vector<1x128xf32>
    %cst_44 = arith.constant 1.000000e+00 : f32
    %128 = vector.broadcast %cst_44 : f32 to vector<1x128xf32>
    %129 = arith.addf %128, %127 : vector<1x128xf32>
    %130 = arith.divf %128, %129 : vector<1x128xf32>
    %131 = vector.extract_strided_slice %118 {offsets = [0, 256], sizes = [1, 128], strides = [1, 1]} : vector<1x512xf32> to vector<1x128xf32>
    %132 = math.tanh %131 : vector<1x128xf32>
    %133 = vector.extract_strided_slice %118 {offsets = [0, 384], sizes = [1, 128], strides = [1, 1]} : vector<1x512xf32> to vector<1x128xf32>
    %134 = arith.negf %133 : vector<1x128xf32>
    %135 = math.exp %134 : vector<1x128xf32>
    %cst_45 = arith.constant 1.000000e+00 : f32
    %136 = vector.broadcast %cst_45 : f32 to vector<1x128xf32>
    %137 = arith.addf %136, %135 : vector<1x128xf32>
    %138 = arith.divf %136, %137 : vector<1x128xf32>
    %139 = arith.mulf %130, %102 : vector<1x128xf32>
    %140 = arith.mulf %124, %132 : vector<1x128xf32>
    %141 = arith.addf %139, %140 : vector<1x128xf32>
    %142 = math.tanh %141 : vector<1x128xf32>
    %143 = arith.mulf %138, %142 : vector<1x128xf32>
    %144 = arith.index_cast %c2_i32 : i32 to index
    %c0_46 = arith.constant 0 : index
    %145 = vector.load %arg14[%144, %c0_46] : memref<8x128xf32, #tpu.memory_space<vmem>>, vector<1x128xf32>
    tpu.vector_store %arg14[%144, %c0_46], %143 {strides = array<i32>} : memref<8x128xf32, #tpu.memory_space<vmem>>, vector<1x128xf32>,
    %c7_i32_47 = arith.constant 7 : i32
    %146 = arith.subi %c7_i32_47, %c2_i32 : i32
    %147 = arith.index_cast %146 : i32 to index
    %c0_48 = arith.constant 0 : index
    %148 = vector.load %arg15[%147, %c0_48] : memref<8x128xf32, #tpu.memory_space<vmem>>, vector<1x128xf32>
    tpu.vector_store %arg15[%147, %c0_48], %143 {strides = array<i32>} : memref<8x128xf32, #tpu.memory_space<vmem>>, vector<1x128xf32>,
    %c3_i32 = arith.constant 3 : i32
    %149 = arith.index_cast %c3_i32 : i32 to index
    %c0_49 = arith.constant 0 : index
    %150 = vector.load %arg16[%149, %c0_49] : memref<8x512xf32, #tpu.memory_space<vmem>>, vector<1x512xf32>
    %c7_i32_50 = arith.constant 7 : i32
    %151 = arith.subi %c7_i32_50, %c3_i32 : i32
    %152 = arith.index_cast %151 : i32 to index
    %c0_51 = arith.constant 0 : index
    %153 = vector.load %arg16[%152, %c0_51] : memref<8x512xf32, #tpu.memory_space<vmem>>, vector<1x512xf32>
    %154 = arith.select %18, %150, %153 : vector<1x512xi1>, vector<1x512xf32>
    %c0_52 = arith.constant 0 : index
    %c0_53 = arith.constant 0 : index
    %155 = vector.load %arg3[%c0_52, %c0_53] : memref<128x512xf32, #tpu.memory_space<vmem>>, vector<128x512xf32>
    %cst_54 = arith.constant dense<0.000000e+00> : vector<1x512xf32>
    %156 = tpu.matmul %143, %155, %cst_54 {dimension_numbers = #tpu.dot_dimension_numbers<[1], [0], [0], [1], [0, 0, 1, 1], [], []>} : vector<1x128xf32>, vector<128x512xf32>, vector<1x512xf32> -> vector<1x512xf32>
    %157 = arith.addf %154, %156 : vector<1x512xf32>
    %158 = vector.extract_strided_slice %157 {offsets = [0, 0], sizes = [1, 128], strides = [1, 1]} : vector<1x512xf32> to vector<1x128xf32>
    %159 = arith.negf %158 : vector<1x128xf32>
    %160 = math.exp %159 : vector<1x128xf32>
    %cst_55 = arith.constant 1.000000e+00 : f32
    %161 = vector.broadcast %cst_55 : f32 to vector<1x128xf32>
    %162 = arith.addf %161, %160 : vector<1x128xf32>
    %163 = arith.divf %161, %162 : vector<1x128xf32>
    %164 = vector.extract_strided_slice %157 {offsets = [0, 128], sizes = [1, 128], strides = [1, 1]} : vector<1x512xf32> to vector<1x128xf32>
    %165 = arith.negf %164 : vector<1x128xf32>
    %166 = math.exp %165 : vector<1x128xf32>
    %cst_56 = arith.constant 1.000000e+00 : f32
    %167 = vector.broadcast %cst_56 : f32 to vector<1x128xf32>
    %168 = arith.addf %167, %166 : vector<1x128xf32>
    %169 = arith.divf %167, %168 : vector<1x128xf32>
    %170 = vector.extract_strided_slice %157 {offsets = [0, 256], sizes = [1, 128], strides = [1, 1]} : vector<1x512xf32> to vector<1x128xf32>
    %171 = math.tanh %170 : vector<1x128xf32>
    %172 = vector.extract_strided_slice %157 {offsets = [0, 384], sizes = [1, 128], strides = [1, 1]} : vector<1x512xf32> to vector<1x128xf32>
    %173 = arith.negf %172 : vector<1x128xf32>
    %174 = math.exp %173 : vector<1x128xf32>
    %cst_57 = arith.constant 1.000000e+00 : f32
    %175 = vector.broadcast %cst_57 : f32 to vector<1x128xf32>
    %176 = arith.addf %175, %174 : vector<1x128xf32>
    %177 = arith.divf %175, %176 : vector<1x128xf32>
    %178 = arith.mulf %169, %141 : vector<1x128xf32>
    %179 = arith.mulf %163, %171 : vector<1x128xf32>
    %180 = arith.addf %178, %179 : vector<1x128xf32>
    %181 = math.tanh %180 : vector<1x128xf32>
    %182 = arith.mulf %177, %181 : vector<1x128xf32>
    %183 = arith.index_cast %c3_i32 : i32 to index
    %c0_58 = arith.constant 0 : index
    %184 = vector.load %arg14[%183, %c0_58] : memref<8x128xf32, #tpu.memory_space<vmem>>, vector<1x128xf32>
    tpu.vector_store %arg14[%183, %c0_58], %182 {strides = array<i32>} : memref<8x128xf32, #tpu.memory_space<vmem>>, vector<1x128xf32>,
    %c7_i32_59 = arith.constant 7 : i32
    %185 = arith.subi %c7_i32_59, %c3_i32 : i32
    %186 = arith.index_cast %185 : i32 to index
    %c0_60 = arith.constant 0 : index
    %187 = vector.load %arg15[%186, %c0_60] : memref<8x128xf32, #tpu.memory_space<vmem>>, vector<1x128xf32>
    tpu.vector_store %arg15[%186, %c0_60], %182 {strides = array<i32>} : memref<8x128xf32, #tpu.memory_space<vmem>>, vector<1x128xf32>,
    %c4_i32 = arith.constant 4 : i32
    %188 = arith.index_cast %c4_i32 : i32 to index
    %c0_61 = arith.constant 0 : index
    %189 = vector.load %arg16[%188, %c0_61] : memref<8x512xf32, #tpu.memory_space<vmem>>, vector<1x512xf32>
    %c7_i32_62 = arith.constant 7 : i32
    %190 = arith.subi %c7_i32_62, %c4_i32 : i32
    %191 = arith.index_cast %190 : i32 to index
    %c0_63 = arith.constant 0 : index
    %192 = vector.load %arg16[%191, %c0_63] : memref<8x512xf32, #tpu.memory_space<vmem>>, vector<1x512xf32>
    %193 = arith.select %18, %189, %192 : vector<1x512xi1>, vector<1x512xf32>
    %c0_64 = arith.constant 0 : index
    %c0_65 = arith.constant 0 : index
    %194 = vector.load %arg3[%c0_64, %c0_65] : memref<128x512xf32, #tpu.memory_space<vmem>>, vector<128x512xf32>
    %cst_66 = arith.constant dense<0.000000e+00> : vector<1x512xf32>
    %195 = tpu.matmul %182, %194, %cst_66 {dimension_numbers = #tpu.dot_dimension_numbers<[1], [0], [0], [1], [0, 0, 1, 1], [], []>} : vector<1x128xf32>, vector<128x512xf32>, vector<1x512xf32> -> vector<1x512xf32>
    %196 = arith.addf %193, %195 : vector<1x512xf32>
    %197 = vector.extract_strided_slice %196 {offsets = [0, 0], sizes = [1, 128], strides = [1, 1]} : vector<1x512xf32> to vector<1x128xf32>
    %198 = arith.negf %197 : vector<1x128xf32>
    %199 = math.exp %198 : vector<1x128xf32>
    %cst_67 = arith.constant 1.000000e+00 : f32
    %200 = vector.broadcast %cst_67 : f32 to vector<1x128xf32>
    %201 = arith.addf %200, %199 : vector<1x128xf32>
    %202 = arith.divf %200, %201 : vector<1x128xf32>
    %203 = vector.extract_strided_slice %196 {offsets = [0, 128], sizes = [1, 128], strides = [1, 1]} : vector<1x512xf32> to vector<1x128xf32>
    %204 = arith.negf %203 : vector<1x128xf32>
    %205 = math.exp %204 : vector<1x128xf32>
    %cst_68 = arith.constant 1.000000e+00 : f32
    %206 = vector.broadcast %cst_68 : f32 to vector<1x128xf32>
    %207 = arith.addf %206, %205 : vector<1x128xf32>
    %208 = arith.divf %206, %207 : vector<1x128xf32>
    %209 = vector.extract_strided_slice %196 {offsets = [0, 256], sizes = [1, 128], strides = [1, 1]} : vector<1x512xf32> to vector<1x128xf32>
    %210 = math.tanh %209 : vector<1x128xf32>
    %211 = vector.extract_strided_slice %196 {offsets = [0, 384], sizes = [1, 128], strides = [1, 1]} : vector<1x512xf32> to vector<1x128xf32>
    %212 = arith.negf %211 : vector<1x128xf32>
    %213 = math.exp %212 : vector<1x128xf32>
    %cst_69 = arith.constant 1.000000e+00 : f32
    %214 = vector.broadcast %cst_69 : f32 to vector<1x128xf32>
    %215 = arith.addf %214, %213 : vector<1x128xf32>
    %216 = arith.divf %214, %215 : vector<1x128xf32>
    %217 = arith.mulf %208, %180 : vector<1x128xf32>
    %218 = arith.mulf %202, %210 : vector<1x128xf32>
    %219 = arith.addf %217, %218 : vector<1x128xf32>
    %220 = math.tanh %219 : vector<1x128xf32>
    %221 = arith.mulf %216, %220 : vector<1x128xf32>
    %222 = arith.index_cast %c4_i32 : i32 to index
    %c0_70 = arith.constant 0 : index
    %223 = vector.load %arg14[%222, %c0_70] : memref<8x128xf32, #tpu.memory_space<vmem>>, vector<1x128xf32>
    tpu.vector_store %arg14[%222, %c0_70], %221 {strides = array<i32>} : memref<8x128xf32, #tpu.memory_space<vmem>>, vector<1x128xf32>,
    %c7_i32_71 = arith.constant 7 : i32
    %224 = arith.subi %c7_i32_71, %c4_i32 : i32
    %225 = arith.index_cast %224 : i32 to index
    %c0_72 = arith.constant 0 : index
    %226 = vector.load %arg15[%225, %c0_72] : memref<8x128xf32, #tpu.memory_space<vmem>>, vector<1x128xf32>
    tpu.vector_store %arg15[%225, %c0_72], %221 {strides = array<i32>} : memref<8x128xf32, #tpu.memory_space<vmem>>, vector<1x128xf32>,
    %c5_i32 = arith.constant 5 : i32
    %227 = arith.index_cast %c5_i32 : i32 to index
    %c0_73 = arith.constant 0 : index
    %228 = vector.load %arg16[%227, %c0_73] : memref<8x512xf32, #tpu.memory_space<vmem>>, vector<1x512xf32>
    %c7_i32_74 = arith.constant 7 : i32
    %229 = arith.subi %c7_i32_74, %c5_i32 : i32
    %230 = arith.index_cast %229 : i32 to index
    %c0_75 = arith.constant 0 : index
    %231 = vector.load %arg16[%230, %c0_75] : memref<8x512xf32, #tpu.memory_space<vmem>>, vector<1x512xf32>
    %232 = arith.select %18, %228, %231 : vector<1x512xi1>, vector<1x512xf32>
    %c0_76 = arith.constant 0 : index
    %c0_77 = arith.constant 0 : index
    %233 = vector.load %arg3[%c0_76, %c0_77] : memref<128x512xf32, #tpu.memory_space<vmem>>, vector<128x512xf32>
    %cst_78 = arith.constant dense<0.000000e+00> : vector<1x512xf32>
    %234 = tpu.matmul %221, %233, %cst_78 {dimension_numbers = #tpu.dot_dimension_numbers<[1], [0], [0], [1], [0, 0, 1, 1], [], []>} : vector<1x128xf32>, vector<128x512xf32>, vector<1x512xf32> -> vector<1x512xf32>
    %235 = arith.addf %232, %234 : vector<1x512xf32>
    %236 = vector.extract_strided_slice %235 {offsets = [0, 0], sizes = [1, 128], strides = [1, 1]} : vector<1x512xf32> to vector<1x128xf32>
    %237 = arith.negf %236 : vector<1x128xf32>
    %238 = math.exp %237 : vector<1x128xf32>
    %cst_79 = arith.constant 1.000000e+00 : f32
    %239 = vector.broadcast %cst_79 : f32 to vector<1x128xf32>
    %240 = arith.addf %239, %238 : vector<1x128xf32>
    %241 = arith.divf %239, %240 : vector<1x128xf32>
    %242 = vector.extract_strided_slice %235 {offsets = [0, 128], sizes = [1, 128], strides = [1, 1]} : vector<1x512xf32> to vector<1x128xf32>
    %243 = arith.negf %242 : vector<1x128xf32>
    %244 = math.exp %243 : vector<1x128xf32>
    %cst_80 = arith.constant 1.000000e+00 : f32
    %245 = vector.broadcast %cst_80 : f32 to vector<1x128xf32>
    %246 = arith.addf %245, %244 : vector<1x128xf32>
    %247 = arith.divf %245, %246 : vector<1x128xf32>
    %248 = vector.extract_strided_slice %235 {offsets = [0, 256], sizes = [1, 128], strides = [1, 1]} : vector<1x512xf32> to vector<1x128xf32>
    %249 = math.tanh %248 : vector<1x128xf32>
    %250 = vector.extract_strided_slice %235 {offsets = [0, 384], sizes = [1, 128], strides = [1, 1]} : vector<1x512xf32> to vector<1x128xf32>
    %251 = arith.negf %250 : vector<1x128xf32>
    %252 = math.exp %251 : vector<1x128xf32>
    %cst_81 = arith.constant 1.000000e+00 : f32
    %253 = vector.broadcast %cst_81 : f32 to vector<1x128xf32>
    %254 = arith.addf %253, %252 : vector<1x128xf32>
    %255 = arith.divf %253, %254 : vector<1x128xf32>
    %256 = arith.mulf %247, %219 : vector<1x128xf32>
    %257 = arith.mulf %241, %249 : vector<1x128xf32>
    %258 = arith.addf %256, %257 : vector<1x128xf32>
    %259 = math.tanh %258 : vector<1x128xf32>
    %260 = arith.mulf %255, %259 : vector<1x128xf32>
    %261 = arith.index_cast %c5_i32 : i32 to index
    %c0_82 = arith.constant 0 : index
    %262 = vector.load %arg14[%261, %c0_82] : memref<8x128xf32, #tpu.memory_space<vmem>>, vector<1x128xf32>
    tpu.vector_store %arg14[%261, %c0_82], %260 {strides = array<i32>} : memref<8x128xf32, #tpu.memory_space<vmem>>, vector<1x128xf32>,
    %c7_i32_83 = arith.constant 7 : i32
    %263 = arith.subi %c7_i32_83, %c5_i32 : i32
    %264 = arith.index_cast %263 : i32 to index
    %c0_84 = arith.constant 0 : index
    %265 = vector.load %arg15[%264, %c0_84] : memref<8x128xf32, #tpu.memory_space<vmem>>, vector<1x128xf32>
    tpu.vector_store %arg15[%264, %c0_84], %260 {strides = array<i32>} : memref<8x128xf32, #tpu.memory_space<vmem>>, vector<1x128xf32>,
    %c6_i32 = arith.constant 6 : i32
    %266 = arith.index_cast %c6_i32 : i32 to index
    %c0_85 = arith.constant 0 : index
    %267 = vector.load %arg16[%266, %c0_85] : memref<8x512xf32, #tpu.memory_space<vmem>>, vector<1x512xf32>
    %c7_i32_86 = arith.constant 7 : i32
    %268 = arith.subi %c7_i32_86, %c6_i32 : i32
    %269 = arith.index_cast %268 : i32 to index
    %c0_87 = arith.constant 0 : index
    %270 = vector.load %arg16[%269, %c0_87] : memref<8x512xf32, #tpu.memory_space<vmem>>, vector<1x512xf32>
    %271 = arith.select %18, %267, %270 : vector<1x512xi1>, vector<1x512xf32>
    %c0_88 = arith.constant 0 : index
    %c0_89 = arith.constant 0 : index
    %272 = vector.load %arg3[%c0_88, %c0_89] : memref<128x512xf32, #tpu.memory_space<vmem>>, vector<128x512xf32>
    %cst_90 = arith.constant dense<0.000000e+00> : vector<1x512xf32>
    %273 = tpu.matmul %260, %272, %cst_90 {dimension_numbers = #tpu.dot_dimension_numbers<[1], [0], [0], [1], [0, 0, 1, 1], [], []>} : vector<1x128xf32>, vector<128x512xf32>, vector<1x512xf32> -> vector<1x512xf32>
    %274 = arith.addf %271, %273 : vector<1x512xf32>
    %275 = vector.extract_strided_slice %274 {offsets = [0, 0], sizes = [1, 128], strides = [1, 1]} : vector<1x512xf32> to vector<1x128xf32>
    %276 = arith.negf %275 : vector<1x128xf32>
    %277 = math.exp %276 : vector<1x128xf32>
    %cst_91 = arith.constant 1.000000e+00 : f32
    %278 = vector.broadcast %cst_91 : f32 to vector<1x128xf32>
    %279 = arith.addf %278, %277 : vector<1x128xf32>
    %280 = arith.divf %278, %279 : vector<1x128xf32>
    %281 = vector.extract_strided_slice %274 {offsets = [0, 128], sizes = [1, 128], strides = [1, 1]} : vector<1x512xf32> to vector<1x128xf32>
    %282 = arith.negf %281 : vector<1x128xf32>
    %283 = math.exp %282 : vector<1x128xf32>
    %cst_92 = arith.constant 1.000000e+00 : f32
    %284 = vector.broadcast %cst_92 : f32 to vector<1x128xf32>
    %285 = arith.addf %284, %283 : vector<1x128xf32>
    %286 = arith.divf %284, %285 : vector<1x128xf32>
    %287 = vector.extract_strided_slice %274 {offsets = [0, 256], sizes = [1, 128], strides = [1, 1]} : vector<1x512xf32> to vector<1x128xf32>
    %288 = math.tanh %287 : vector<1x128xf32>
    %289 = vector.extract_strided_slice %274 {offsets = [0, 384], sizes = [1, 128], strides = [1, 1]} : vector<1x512xf32> to vector<1x128xf32>
    %290 = arith.negf %289 : vector<1x128xf32>
    %291 = math.exp %290 : vector<1x128xf32>
    %cst_93 = arith.constant 1.000000e+00 : f32
    %292 = vector.broadcast %cst_93 : f32 to vector<1x128xf32>
    %293 = arith.addf %292, %291 : vector<1x128xf32>
    %294 = arith.divf %292, %293 : vector<1x128xf32>
    %295 = arith.mulf %286, %258 : vector<1x128xf32>
    %296 = arith.mulf %280, %288 : vector<1x128xf32>
    %297 = arith.addf %295, %296 : vector<1x128xf32>
    %298 = math.tanh %297 : vector<1x128xf32>
    %299 = arith.mulf %294, %298 : vector<1x128xf32>
    %300 = arith.index_cast %c6_i32 : i32 to index
    %c0_94 = arith.constant 0 : index
    %301 = vector.load %arg14[%300, %c0_94] : memref<8x128xf32, #tpu.memory_space<vmem>>, vector<1x128xf32>
    tpu.vector_store %arg14[%300, %c0_94], %299 {strides = array<i32>} : memref<8x128xf32, #tpu.memory_space<vmem>>, vector<1x128xf32>,
    %c7_i32_95 = arith.constant 7 : i32
    %302 = arith.subi %c7_i32_95, %c6_i32 : i32
    %303 = arith.index_cast %302 : i32 to index
    %c0_96 = arith.constant 0 : index
    %304 = vector.load %arg15[%303, %c0_96] : memref<8x128xf32, #tpu.memory_space<vmem>>, vector<1x128xf32>
    tpu.vector_store %arg15[%303, %c0_96], %299 {strides = array<i32>} : memref<8x128xf32, #tpu.memory_space<vmem>>, vector<1x128xf32>,
    %c7_i32_97 = arith.constant 7 : i32
    %305 = arith.index_cast %c7_i32_97 : i32 to index
    %c0_98 = arith.constant 0 : index
    %306 = vector.load %arg16[%305, %c0_98] : memref<8x512xf32, #tpu.memory_space<vmem>>, vector<1x512xf32>
    %c7_i32_99 = arith.constant 7 : i32
    %307 = arith.subi %c7_i32_99, %c7_i32_97 : i32
    %308 = arith.index_cast %307 : i32 to index
    %c0_100 = arith.constant 0 : index
    %309 = vector.load %arg16[%308, %c0_100] : memref<8x512xf32, #tpu.memory_space<vmem>>, vector<1x512xf32>
    %310 = arith.select %18, %306, %309 : vector<1x512xi1>, vector<1x512xf32>
    %c0_101 = arith.constant 0 : index
    %c0_102 = arith.constant 0 : index
    %311 = vector.load %arg3[%c0_101, %c0_102] : memref<128x512xf32, #tpu.memory_space<vmem>>, vector<128x512xf32>
    %cst_103 = arith.constant dense<0.000000e+00> : vector<1x512xf32>
    %312 = tpu.matmul %299, %311, %cst_103 {dimension_numbers = #tpu.dot_dimension_numbers<[1], [0], [0], [1], [0, 0, 1, 1], [], []>} : vector<1x128xf32>, vector<128x512xf32>, vector<1x512xf32> -> vector<1x512xf32>
    %313 = arith.addf %310, %312 : vector<1x512xf32>
    %314 = vector.extract_strided_slice %313 {offsets = [0, 0], sizes = [1, 128], strides = [1, 1]} : vector<1x512xf32> to vector<1x128xf32>
    %315 = arith.negf %314 : vector<1x128xf32>
    %316 = math.exp %315 : vector<1x128xf32>
    %cst_104 = arith.constant 1.000000e+00 : f32
    %317 = vector.broadcast %cst_104 : f32 to vector<1x128xf32>
    %318 = arith.addf %317, %316 : vector<1x128xf32>
    %319 = arith.divf %317, %318 : vector<1x128xf32>
    %320 = vector.extract_strided_slice %313 {offsets = [0, 128], sizes = [1, 128], strides = [1, 1]} : vector<1x512xf32> to vector<1x128xf32>
    %321 = arith.negf %320 : vector<1x128xf32>
    %322 = math.exp %321 : vector<1x128xf32>
    %cst_105 = arith.constant 1.000000e+00 : f32
    %323 = vector.broadcast %cst_105 : f32 to vector<1x128xf32>
    %324 = arith.addf %323, %322 : vector<1x128xf32>
    %325 = arith.divf %323, %324 : vector<1x128xf32>
    %326 = vector.extract_strided_slice %313 {offsets = [0, 256], sizes = [1, 128], strides = [1, 1]} : vector<1x512xf32> to vector<1x128xf32>
    %327 = math.tanh %326 : vector<1x128xf32>
    %328 = vector.extract_strided_slice %313 {offsets = [0, 384], sizes = [1, 128], strides = [1, 1]} : vector<1x512xf32> to vector<1x128xf32>
    %329 = arith.negf %328 : vector<1x128xf32>
    %330 = math.exp %329 : vector<1x128xf32>
    %cst_106 = arith.constant 1.000000e+00 : f32
    %331 = vector.broadcast %cst_106 : f32 to vector<1x128xf32>
    %332 = arith.addf %331, %330 : vector<1x128xf32>
    %333 = arith.divf %331, %332 : vector<1x128xf32>
    %334 = arith.mulf %325, %297 : vector<1x128xf32>
    %335 = arith.mulf %319, %327 : vector<1x128xf32>
    %336 = arith.addf %334, %335 : vector<1x128xf32>
    %337 = math.tanh %336 : vector<1x128xf32>
    %338 = arith.mulf %333, %337 : vector<1x128xf32>
    %339 = arith.index_cast %c7_i32_97 : i32 to index
    %c0_107 = arith.constant 0 : index
    %340 = vector.load %arg14[%339, %c0_107] : memref<8x128xf32, #tpu.memory_space<vmem>>, vector<1x128xf32>
    tpu.vector_store %arg14[%339, %c0_107], %338 {strides = array<i32>} : memref<8x128xf32, #tpu.memory_space<vmem>>, vector<1x128xf32>,
    %c7_i32_108 = arith.constant 7 : i32
    %341 = arith.subi %c7_i32_108, %c7_i32_97 : i32
    %342 = arith.index_cast %341 : i32 to index
    %c0_109 = arith.constant 0 : index
    %343 = vector.load %arg15[%342, %c0_109] : memref<8x128xf32, #tpu.memory_space<vmem>>, vector<1x128xf32>
    tpu.vector_store %arg15[%342, %c0_109], %338 {strides = array<i32>} : memref<8x128xf32, #tpu.memory_space<vmem>>, vector<1x128xf32>,
    %c8_i32 = arith.constant 8 : i32
    %c0_110 = arith.constant 0 : index
    %c0_111 = arith.constant 0 : index
    %344 = vector.load %arg14[%c0_110, %c0_111] : memref<8x128xf32, #tpu.memory_space<vmem>>, vector<8x128xf32>
    %c0_112 = arith.constant 0 : index
    %c0_113 = arith.constant 0 : index
    %345 = vector.load %arg15[%c0_112, %c0_113] : memref<8x128xf32, #tpu.memory_space<vmem>>, vector<8x128xf32>
    %346 = arith.select %21, %344, %345 : vector<8x128xi1>, vector<8x128xf32>
    %c0_114 = arith.constant 0 : index
    %c0_115 = arith.constant 0 : index
    %347 = vector.load %arg14[%c0_114, %c0_115] : memref<8x128xf32, #tpu.memory_space<vmem>>, vector<8x128xf32>
    tpu.vector_store %arg14[%c0_114, %c0_115], %346 {strides = array<i32>} : memref<8x128xf32, #tpu.memory_space<vmem>>, vector<8x128xf32>,
    %c0_116 = arith.constant 0 : index
    %c0_117 = arith.constant 0 : index
    %348 = vector.load %arg14[%c0_116, %c0_117] : memref<8x128xf32, #tpu.memory_space<vmem>>, vector<8x128xf32>
    %c0_118 = arith.constant 0 : index
    %c0_119 = arith.constant 0 : index
    %349 = vector.load %arg5[%c0_118, %c0_119] : memref<128x512xf32, #tpu.memory_space<vmem>>, vector<128x512xf32>
    %cst_120 = arith.constant dense<0.000000e+00> : vector<8x512xf32>
    %350 = tpu.matmul %348, %349, %cst_120 {dimension_numbers = #tpu.dot_dimension_numbers<[1], [0], [0], [1], [0, 0, 1, 1], [], []>} : vector<8x128xf32>, vector<128x512xf32>, vector<8x512xf32> -> vector<8x512xf32>
    %c0_121 = arith.constant 0 : index
    %c0_122 = arith.constant 0 : index
    %351 = vector.load %arg7[%c0_121, %c0_122] : memref<1x512xf32, #tpu.memory_space<vmem>>, vector<1x512xf32>
    %352 = vector.broadcast %351 : vector<1x512xf32> to vector<8x512xf32>
    %353 = arith.addf %350, %352 : vector<8x512xf32>
    %c0_123 = arith.constant 0 : index
    %c0_124 = arith.constant 0 : index
    %354 = vector.load %arg16[%c0_123, %c0_124] : memref<8x512xf32, #tpu.memory_space<vmem>>, vector<8x512xf32>
    tpu.vector_store %arg16[%c0_123, %c0_124], %353 {strides = array<i32>} : memref<8x512xf32, #tpu.memory_space<vmem>>, vector<8x512xf32>,
    %cst_125 = arith.constant 0.000000e+00 : f32
    %355 = vector.broadcast %cst_125 : f32 to vector<1x128xf32>
    %c0_i32_126 = arith.constant 0 : i32
    %356 = arith.index_cast %c0_i32_126 : i32 to index
    %c0_127 = arith.constant 0 : index
    %357 = vector.load %arg16[%356, %c0_127] : memref<8x512xf32, #tpu.memory_space<vmem>>, vector<1x512xf32>
    %c7_i32_128 = arith.constant 7 : i32
    %358 = arith.subi %c7_i32_128, %c0_i32_126 : i32
    %359 = arith.index_cast %358 : i32 to index
    %c0_129 = arith.constant 0 : index
    %360 = vector.load %arg16[%359, %c0_129] : memref<8x512xf32, #tpu.memory_space<vmem>>, vector<1x512xf32>
    %361 = arith.select %18, %357, %360 : vector<1x512xi1>, vector<1x512xf32>
    %c0_130 = arith.constant 0 : index
    %c0_131 = arith.constant 0 : index
    %362 = vector.load %arg6[%c0_130, %c0_131] : memref<128x512xf32, #tpu.memory_space<vmem>>, vector<128x512xf32>
    %cst_132 = arith.constant dense<0.000000e+00> : vector<1x512xf32>
    %363 = tpu.matmul %355, %362, %cst_132 {dimension_numbers = #tpu.dot_dimension_numbers<[1], [0], [0], [1], [0, 0, 1, 1], [], []>} : vector<1x128xf32>, vector<128x512xf32>, vector<1x512xf32> -> vector<1x512xf32>
    %364 = arith.addf %361, %363 : vector<1x512xf32>
    %365 = vector.extract_strided_slice %364 {offsets = [0, 0], sizes = [1, 128], strides = [1, 1]} : vector<1x512xf32> to vector<1x128xf32>
    %366 = arith.negf %365 : vector<1x128xf32>
    %367 = math.exp %366 : vector<1x128xf32>
    %cst_133 = arith.constant 1.000000e+00 : f32
    %368 = vector.broadcast %cst_133 : f32 to vector<1x128xf32>
    %369 = arith.addf %368, %367 : vector<1x128xf32>
    %370 = arith.divf %368, %369 : vector<1x128xf32>
    %371 = vector.extract_strided_slice %364 {offsets = [0, 128], sizes = [1, 128], strides = [1, 1]} : vector<1x512xf32> to vector<1x128xf32>
    %372 = arith.negf %371 : vector<1x128xf32>
    %373 = math.exp %372 : vector<1x128xf32>
    %cst_134 = arith.constant 1.000000e+00 : f32
    %374 = vector.broadcast %cst_134 : f32 to vector<1x128xf32>
    %375 = arith.addf %374, %373 : vector<1x128xf32>
    %376 = arith.divf %374, %375 : vector<1x128xf32>
    %377 = vector.extract_strided_slice %364 {offsets = [0, 256], sizes = [1, 128], strides = [1, 1]} : vector<1x512xf32> to vector<1x128xf32>
    %378 = math.tanh %377 : vector<1x128xf32>
    %379 = vector.extract_strided_slice %364 {offsets = [0, 384], sizes = [1, 128], strides = [1, 1]} : vector<1x512xf32> to vector<1x128xf32>
    %380 = arith.negf %379 : vector<1x128xf32>
    %381 = math.exp %380 : vector<1x128xf32>
    %cst_135 = arith.constant 1.000000e+00 : f32
    %382 = vector.broadcast %cst_135 : f32 to vector<1x128xf32>
    %383 = arith.addf %382, %381 : vector<1x128xf32>
    %384 = arith.divf %382, %383 : vector<1x128xf32>
    %385 = arith.mulf %376, %355 : vector<1x128xf32>
    %386 = arith.mulf %370, %378 : vector<1x128xf32>
    %387 = arith.addf %385, %386 : vector<1x128xf32>
    %388 = math.tanh %387 : vector<1x128xf32>
    %389 = arith.mulf %384, %388 : vector<1x128xf32>
    %390 = arith.index_cast %c0_i32_126 : i32 to index
    %c0_136 = arith.constant 0 : index
    %391 = vector.load %arg14[%390, %c0_136] : memref<8x128xf32, #tpu.memory_space<vmem>>, vector<1x128xf32>
    tpu.vector_store %arg14[%390, %c0_136], %389 {strides = array<i32>} : memref<8x128xf32, #tpu.memory_space<vmem>>, vector<1x128xf32>,
    %c7_i32_137 = arith.constant 7 : i32
    %392 = arith.subi %c7_i32_137, %c0_i32_126 : i32
    %393 = arith.index_cast %392 : i32 to index
    %c0_138 = arith.constant 0 : index
    %394 = vector.load %arg15[%393, %c0_138] : memref<8x128xf32, #tpu.memory_space<vmem>>, vector<1x128xf32>
    tpu.vector_store %arg15[%393, %c0_138], %389 {strides = array<i32>} : memref<8x128xf32, #tpu.memory_space<vmem>>, vector<1x128xf32>,
    %c1_i32_139 = arith.constant 1 : i32
    %395 = arith.index_cast %c1_i32_139 : i32 to index
    %c0_140 = arith.constant 0 : index
    %396 = vector.load %arg16[%395, %c0_140] : memref<8x512xf32, #tpu.memory_space<vmem>>, vector<1x512xf32>
    %c7_i32_141 = arith.constant 7 : i32
    %397 = arith.subi %c7_i32_141, %c1_i32_139 : i32
    %398 = arith.index_cast %397 : i32 to index
    %c0_142 = arith.constant 0 : index
    %399 = vector.load %arg16[%398, %c0_142] : memref<8x512xf32, #tpu.memory_space<vmem>>, vector<1x512xf32>
    %400 = arith.select %18, %396, %399 : vector<1x512xi1>, vector<1x512xf32>
    %c0_143 = arith.constant 0 : index
    %c0_144 = arith.constant 0 : index
    %401 = vector.load %arg6[%c0_143, %c0_144] : memref<128x512xf32, #tpu.memory_space<vmem>>, vector<128x512xf32>
    %cst_145 = arith.constant dense<0.000000e+00> : vector<1x512xf32>
    %402 = tpu.matmul %389, %401, %cst_145 {dimension_numbers = #tpu.dot_dimension_numbers<[1], [0], [0], [1], [0, 0, 1, 1], [], []>} : vector<1x128xf32>, vector<128x512xf32>, vector<1x512xf32> -> vector<1x512xf32>
    %403 = arith.addf %400, %402 : vector<1x512xf32>
    %404 = vector.extract_strided_slice %403 {offsets = [0, 0], sizes = [1, 128], strides = [1, 1]} : vector<1x512xf32> to vector<1x128xf32>
    %405 = arith.negf %404 : vector<1x128xf32>
    %406 = math.exp %405 : vector<1x128xf32>
    %cst_146 = arith.constant 1.000000e+00 : f32
    %407 = vector.broadcast %cst_146 : f32 to vector<1x128xf32>
    %408 = arith.addf %407, %406 : vector<1x128xf32>
    %409 = arith.divf %407, %408 : vector<1x128xf32>
    %410 = vector.extract_strided_slice %403 {offsets = [0, 128], sizes = [1, 128], strides = [1, 1]} : vector<1x512xf32> to vector<1x128xf32>
    %411 = arith.negf %410 : vector<1x128xf32>
    %412 = math.exp %411 : vector<1x128xf32>
    %cst_147 = arith.constant 1.000000e+00 : f32
    %413 = vector.broadcast %cst_147 : f32 to vector<1x128xf32>
    %414 = arith.addf %413, %412 : vector<1x128xf32>
    %415 = arith.divf %413, %414 : vector<1x128xf32>
    %416 = vector.extract_strided_slice %403 {offsets = [0, 256], sizes = [1, 128], strides = [1, 1]} : vector<1x512xf32> to vector<1x128xf32>
    %417 = math.tanh %416 : vector<1x128xf32>
    %418 = vector.extract_strided_slice %403 {offsets = [0, 384], sizes = [1, 128], strides = [1, 1]} : vector<1x512xf32> to vector<1x128xf32>
    %419 = arith.negf %418 : vector<1x128xf32>
    %420 = math.exp %419 : vector<1x128xf32>
    %cst_148 = arith.constant 1.000000e+00 : f32
    %421 = vector.broadcast %cst_148 : f32 to vector<1x128xf32>
    %422 = arith.addf %421, %420 : vector<1x128xf32>
    %423 = arith.divf %421, %422 : vector<1x128xf32>
    %424 = arith.mulf %415, %387 : vector<1x128xf32>
    %425 = arith.mulf %409, %417 : vector<1x128xf32>
    %426 = arith.addf %424, %425 : vector<1x128xf32>
    %427 = math.tanh %426 : vector<1x128xf32>
    %428 = arith.mulf %423, %427 : vector<1x128xf32>
    %429 = arith.index_cast %c1_i32_139 : i32 to index
    %c0_149 = arith.constant 0 : index
    %430 = vector.load %arg14[%429, %c0_149] : memref<8x128xf32, #tpu.memory_space<vmem>>, vector<1x128xf32>
    tpu.vector_store %arg14[%429, %c0_149], %428 {strides = array<i32>} : memref<8x128xf32, #tpu.memory_space<vmem>>, vector<1x128xf32>,
    %c7_i32_150 = arith.constant 7 : i32
    %431 = arith.subi %c7_i32_150, %c1_i32_139 : i32
    %432 = arith.index_cast %431 : i32 to index
    %c0_151 = arith.constant 0 : index
    %433 = vector.load %arg15[%432, %c0_151] : memref<8x128xf32, #tpu.memory_space<vmem>>, vector<1x128xf32>
    tpu.vector_store %arg15[%432, %c0_151], %428 {strides = array<i32>} : memref<8x128xf32, #tpu.memory_space<vmem>>, vector<1x128xf32>,
    %c2_i32_152 = arith.constant 2 : i32
    %434 = arith.index_cast %c2_i32_152 : i32 to index
    %c0_153 = arith.constant 0 : index
    %435 = vector.load %arg16[%434, %c0_153] : memref<8x512xf32, #tpu.memory_space<vmem>>, vector<1x512xf32>
    %c7_i32_154 = arith.constant 7 : i32
    %436 = arith.subi %c7_i32_154, %c2_i32_152 : i32
    %437 = arith.index_cast %436 : i32 to index
    %c0_155 = arith.constant 0 : index
    %438 = vector.load %arg16[%437, %c0_155] : memref<8x512xf32, #tpu.memory_space<vmem>>, vector<1x512xf32>
    %439 = arith.select %18, %435, %438 : vector<1x512xi1>, vector<1x512xf32>
    %c0_156 = arith.constant 0 : index
    %c0_157 = arith.constant 0 : index
    %440 = vector.load %arg6[%c0_156, %c0_157] : memref<128x512xf32, #tpu.memory_space<vmem>>, vector<128x512xf32>
    %cst_158 = arith.constant dense<0.000000e+00> : vector<1x512xf32>
    %441 = tpu.matmul %428, %440, %cst_158 {dimension_numbers = #tpu.dot_dimension_numbers<[1], [0], [0], [1], [0, 0, 1, 1], [], []>} : vector<1x128xf32>, vector<128x512xf32>, vector<1x512xf32> -> vector<1x512xf32>
    %442 = arith.addf %439, %441 : vector<1x512xf32>
    %443 = vector.extract_strided_slice %442 {offsets = [0, 0], sizes = [1, 128], strides = [1, 1]} : vector<1x512xf32> to vector<1x128xf32>
    %444 = arith.negf %443 : vector<1x128xf32>
    %445 = math.exp %444 : vector<1x128xf32>
    %cst_159 = arith.constant 1.000000e+00 : f32
    %446 = vector.broadcast %cst_159 : f32 to vector<1x128xf32>
    %447 = arith.addf %446, %445 : vector<1x128xf32>
    %448 = arith.divf %446, %447 : vector<1x128xf32>
    %449 = vector.extract_strided_slice %442 {offsets = [0, 128], sizes = [1, 128], strides = [1, 1]} : vector<1x512xf32> to vector<1x128xf32>
    %450 = arith.negf %449 : vector<1x128xf32>
    %451 = math.exp %450 : vector<1x128xf32>
    %cst_160 = arith.constant 1.000000e+00 : f32
    %452 = vector.broadcast %cst_160 : f32 to vector<1x128xf32>
    %453 = arith.addf %452, %451 : vector<1x128xf32>
    %454 = arith.divf %452, %453 : vector<1x128xf32>
    %455 = vector.extract_strided_slice %442 {offsets = [0, 256], sizes = [1, 128], strides = [1, 1]} : vector<1x512xf32> to vector<1x128xf32>
    %456 = math.tanh %455 : vector<1x128xf32>
    %457 = vector.extract_strided_slice %442 {offsets = [0, 384], sizes = [1, 128], strides = [1, 1]} : vector<1x512xf32> to vector<1x128xf32>
    %458 = arith.negf %457 : vector<1x128xf32>
    %459 = math.exp %458 : vector<1x128xf32>
    %cst_161 = arith.constant 1.000000e+00 : f32
    %460 = vector.broadcast %cst_161 : f32 to vector<1x128xf32>
    %461 = arith.addf %460, %459 : vector<1x128xf32>
    %462 = arith.divf %460, %461 : vector<1x128xf32>
    %463 = arith.mulf %454, %426 : vector<1x128xf32>
    %464 = arith.mulf %448, %456 : vector<1x128xf32>
    %465 = arith.addf %463, %464 : vector<1x128xf32>
    %466 = math.tanh %465 : vector<1x128xf32>
    %467 = arith.mulf %462, %466 : vector<1x128xf32>
    %468 = arith.index_cast %c2_i32_152 : i32 to index
    %c0_162 = arith.constant 0 : index
    %469 = vector.load %arg14[%468, %c0_162] : memref<8x128xf32, #tpu.memory_space<vmem>>, vector<1x128xf32>
    tpu.vector_store %arg14[%468, %c0_162], %467 {strides = array<i32>} : memref<8x128xf32, #tpu.memory_space<vmem>>, vector<1x128xf32>,
    %c7_i32_163 = arith.constant 7 : i32
    %470 = arith.subi %c7_i32_163, %c2_i32_152 : i32
    %471 = arith.index_cast %470 : i32 to index
    %c0_164 = arith.constant 0 : index
    %472 = vector.load %arg15[%471, %c0_164] : memref<8x128xf32, #tpu.memory_space<vmem>>, vector<1x128xf32>
    tpu.vector_store %arg15[%471, %c0_164], %467 {strides = array<i32>} : memref<8x128xf32, #tpu.memory_space<vmem>>, vector<1x128xf32>,
    %c3_i32_165 = arith.constant 3 : i32
    %473 = arith.index_cast %c3_i32_165 : i32 to index
    %c0_166 = arith.constant 0 : index
    %474 = vector.load %arg16[%473, %c0_166] : memref<8x512xf32, #tpu.memory_space<vmem>>, vector<1x512xf32>
    %c7_i32_167 = arith.constant 7 : i32
    %475 = arith.subi %c7_i32_167, %c3_i32_165 : i32
    %476 = arith.index_cast %475 : i32 to index
    %c0_168 = arith.constant 0 : index
    %477 = vector.load %arg16[%476, %c0_168] : memref<8x512xf32, #tpu.memory_space<vmem>>, vector<1x512xf32>
    %478 = arith.select %18, %474, %477 : vector<1x512xi1>, vector<1x512xf32>
    %c0_169 = arith.constant 0 : index
    %c0_170 = arith.constant 0 : index
    %479 = vector.load %arg6[%c0_169, %c0_170] : memref<128x512xf32, #tpu.memory_space<vmem>>, vector<128x512xf32>
    %cst_171 = arith.constant dense<0.000000e+00> : vector<1x512xf32>
    %480 = tpu.matmul %467, %479, %cst_171 {dimension_numbers = #tpu.dot_dimension_numbers<[1], [0], [0], [1], [0, 0, 1, 1], [], []>} : vector<1x128xf32>, vector<128x512xf32>, vector<1x512xf32> -> vector<1x512xf32>
    %481 = arith.addf %478, %480 : vector<1x512xf32>
    %482 = vector.extract_strided_slice %481 {offsets = [0, 0], sizes = [1, 128], strides = [1, 1]} : vector<1x512xf32> to vector<1x128xf32>
    %483 = arith.negf %482 : vector<1x128xf32>
    %484 = math.exp %483 : vector<1x128xf32>
    %cst_172 = arith.constant 1.000000e+00 : f32
    %485 = vector.broadcast %cst_172 : f32 to vector<1x128xf32>
    %486 = arith.addf %485, %484 : vector<1x128xf32>
    %487 = arith.divf %485, %486 : vector<1x128xf32>
    %488 = vector.extract_strided_slice %481 {offsets = [0, 128], sizes = [1, 128], strides = [1, 1]} : vector<1x512xf32> to vector<1x128xf32>
    %489 = arith.negf %488 : vector<1x128xf32>
    %490 = math.exp %489 : vector<1x128xf32>
    %cst_173 = arith.constant 1.000000e+00 : f32
    %491 = vector.broadcast %cst_173 : f32 to vector<1x128xf32>
    %492 = arith.addf %491, %490 : vector<1x128xf32>
    %493 = arith.divf %491, %492 : vector<1x128xf32>
    %494 = vector.extract_strided_slice %481 {offsets = [0, 256], sizes = [1, 128], strides = [1, 1]} : vector<1x512xf32> to vector<1x128xf32>
    %495 = math.tanh %494 : vector<1x128xf32>
    %496 = vector.extract_strided_slice %481 {offsets = [0, 384], sizes = [1, 128], strides = [1, 1]} : vector<1x512xf32> to vector<1x128xf32>
    %497 = arith.negf %496 : vector<1x128xf32>
    %498 = math.exp %497 : vector<1x128xf32>
    %cst_174 = arith.constant 1.000000e+00 : f32
    %499 = vector.broadcast %cst_174 : f32 to vector<1x128xf32>
    %500 = arith.addf %499, %498 : vector<1x128xf32>
    %501 = arith.divf %499, %500 : vector<1x128xf32>
    %502 = arith.mulf %493, %465 : vector<1x128xf32>
    %503 = arith.mulf %487, %495 : vector<1x128xf32>
    %504 = arith.addf %502, %503 : vector<1x128xf32>
    %505 = math.tanh %504 : vector<1x128xf32>
    %506 = arith.mulf %501, %505 : vector<1x128xf32>
    %507 = arith.index_cast %c3_i32_165 : i32 to index
    %c0_175 = arith.constant 0 : index
    %508 = vector.load %arg14[%507, %c0_175] : memref<8x128xf32, #tpu.memory_space<vmem>>, vector<1x128xf32>
    tpu.vector_store %arg14[%507, %c0_175], %506 {strides = array<i32>} : memref<8x128xf32, #tpu.memory_space<vmem>>, vector<1x128xf32>,
    %c7_i32_176 = arith.constant 7 : i32
    %509 = arith.subi %c7_i32_176, %c3_i32_165 : i32
    %510 = arith.index_cast %509 : i32 to index
    %c0_177 = arith.constant 0 : index
    %511 = vector.load %arg15[%510, %c0_177] : memref<8x128xf32, #tpu.memory_space<vmem>>, vector<1x128xf32>
    tpu.vector_store %arg15[%510, %c0_177], %506 {strides = array<i32>} : memref<8x128xf32, #tpu.memory_space<vmem>>, vector<1x128xf32>,
    %c4_i32_178 = arith.constant 4 : i32
    %512 = arith.index_cast %c4_i32_178 : i32 to index
    %c0_179 = arith.constant 0 : index
    %513 = vector.load %arg16[%512, %c0_179] : memref<8x512xf32, #tpu.memory_space<vmem>>, vector<1x512xf32>
    %c7_i32_180 = arith.constant 7 : i32
    %514 = arith.subi %c7_i32_180, %c4_i32_178 : i32
    %515 = arith.index_cast %514 : i32 to index
    %c0_181 = arith.constant 0 : index
    %516 = vector.load %arg16[%515, %c0_181] : memref<8x512xf32, #tpu.memory_space<vmem>>, vector<1x512xf32>
    %517 = arith.select %18, %513, %516 : vector<1x512xi1>, vector<1x512xf32>
    %c0_182 = arith.constant 0 : index
    %c0_183 = arith.constant 0 : index
    %518 = vector.load %arg6[%c0_182, %c0_183] : memref<128x512xf32, #tpu.memory_space<vmem>>, vector<128x512xf32>
    %cst_184 = arith.constant dense<0.000000e+00> : vector<1x512xf32>
    %519 = tpu.matmul %506, %518, %cst_184 {dimension_numbers = #tpu.dot_dimension_numbers<[1], [0], [0], [1], [0, 0, 1, 1], [], []>} : vector<1x128xf32>, vector<128x512xf32>, vector<1x512xf32> -> vector<1x512xf32>
    %520 = arith.addf %517, %519 : vector<1x512xf32>
    %521 = vector.extract_strided_slice %520 {offsets = [0, 0], sizes = [1, 128], strides = [1, 1]} : vector<1x512xf32> to vector<1x128xf32>
    %522 = arith.negf %521 : vector<1x128xf32>
    %523 = math.exp %522 : vector<1x128xf32>
    %cst_185 = arith.constant 1.000000e+00 : f32
    %524 = vector.broadcast %cst_185 : f32 to vector<1x128xf32>
    %525 = arith.addf %524, %523 : vector<1x128xf32>
    %526 = arith.divf %524, %525 : vector<1x128xf32>
    %527 = vector.extract_strided_slice %520 {offsets = [0, 128], sizes = [1, 128], strides = [1, 1]} : vector<1x512xf32> to vector<1x128xf32>
    %528 = arith.negf %527 : vector<1x128xf32>
    %529 = math.exp %528 : vector<1x128xf32>
    %cst_186 = arith.constant 1.000000e+00 : f32
    %530 = vector.broadcast %cst_186 : f32 to vector<1x128xf32>
    %531 = arith.addf %530, %529 : vector<1x128xf32>
    %532 = arith.divf %530, %531 : vector<1x128xf32>
    %533 = vector.extract_strided_slice %520 {offsets = [0, 256], sizes = [1, 128], strides = [1, 1]} : vector<1x512xf32> to vector<1x128xf32>
    %534 = math.tanh %533 : vector<1x128xf32>
    %535 = vector.extract_strided_slice %520 {offsets = [0, 384], sizes = [1, 128], strides = [1, 1]} : vector<1x512xf32> to vector<1x128xf32>
    %536 = arith.negf %535 : vector<1x128xf32>
    %537 = math.exp %536 : vector<1x128xf32>
    %cst_187 = arith.constant 1.000000e+00 : f32
    %538 = vector.broadcast %cst_187 : f32 to vector<1x128xf32>
    %539 = arith.addf %538, %537 : vector<1x128xf32>
    %540 = arith.divf %538, %539 : vector<1x128xf32>
    %541 = arith.mulf %532, %504 : vector<1x128xf32>
    %542 = arith.mulf %526, %534 : vector<1x128xf32>
    %543 = arith.addf %541, %542 : vector<1x128xf32>
    %544 = math.tanh %543 : vector<1x128xf32>
    %545 = arith.mulf %540, %544 : vector<1x128xf32>
    %546 = arith.index_cast %c4_i32_178 : i32 to index
    %c0_188 = arith.constant 0 : index
    %547 = vector.load %arg14[%546, %c0_188] : memref<8x128xf32, #tpu.memory_space<vmem>>, vector<1x128xf32>
    tpu.vector_store %arg14[%546, %c0_188], %545 {strides = array<i32>} : memref<8x128xf32, #tpu.memory_space<vmem>>, vector<1x128xf32>,
    %c7_i32_189 = arith.constant 7 : i32
    %548 = arith.subi %c7_i32_189, %c4_i32_178 : i32
    %549 = arith.index_cast %548 : i32 to index
    %c0_190 = arith.constant 0 : index
    %550 = vector.load %arg15[%549, %c0_190] : memref<8x128xf32, #tpu.memory_space<vmem>>, vector<1x128xf32>
    tpu.vector_store %arg15[%549, %c0_190], %545 {strides = array<i32>} : memref<8x128xf32, #tpu.memory_space<vmem>>, vector<1x128xf32>,
    %c5_i32_191 = arith.constant 5 : i32
    %551 = arith.index_cast %c5_i32_191 : i32 to index
    %c0_192 = arith.constant 0 : index
    %552 = vector.load %arg16[%551, %c0_192] : memref<8x512xf32, #tpu.memory_space<vmem>>, vector<1x512xf32>
    %c7_i32_193 = arith.constant 7 : i32
    %553 = arith.subi %c7_i32_193, %c5_i32_191 : i32
    %554 = arith.index_cast %553 : i32 to index
    %c0_194 = arith.constant 0 : index
    %555 = vector.load %arg16[%554, %c0_194] : memref<8x512xf32, #tpu.memory_space<vmem>>, vector<1x512xf32>
    %556 = arith.select %18, %552, %555 : vector<1x512xi1>, vector<1x512xf32>
    %c0_195 = arith.constant 0 : index
    %c0_196 = arith.constant 0 : index
    %557 = vector.load %arg6[%c0_195, %c0_196] : memref<128x512xf32, #tpu.memory_space<vmem>>, vector<128x512xf32>
    %cst_197 = arith.constant dense<0.000000e+00> : vector<1x512xf32>
    %558 = tpu.matmul %545, %557, %cst_197 {dimension_numbers = #tpu.dot_dimension_numbers<[1], [0], [0], [1], [0, 0, 1, 1], [], []>} : vector<1x128xf32>, vector<128x512xf32>, vector<1x512xf32> -> vector<1x512xf32>
    %559 = arith.addf %556, %558 : vector<1x512xf32>
    %560 = vector.extract_strided_slice %559 {offsets = [0, 0], sizes = [1, 128], strides = [1, 1]} : vector<1x512xf32> to vector<1x128xf32>
    %561 = arith.negf %560 : vector<1x128xf32>
    %562 = math.exp %561 : vector<1x128xf32>
    %cst_198 = arith.constant 1.000000e+00 : f32
    %563 = vector.broadcast %cst_198 : f32 to vector<1x128xf32>
    %564 = arith.addf %563, %562 : vector<1x128xf32>
    %565 = arith.divf %563, %564 : vector<1x128xf32>
    %566 = vector.extract_strided_slice %559 {offsets = [0, 128], sizes = [1, 128], strides = [1, 1]} : vector<1x512xf32> to vector<1x128xf32>
    %567 = arith.negf %566 : vector<1x128xf32>
    %568 = math.exp %567 : vector<1x128xf32>
    %cst_199 = arith.constant 1.000000e+00 : f32
    %569 = vector.broadcast %cst_199 : f32 to vector<1x128xf32>
    %570 = arith.addf %569, %568 : vector<1x128xf32>
    %571 = arith.divf %569, %570 : vector<1x128xf32>
    %572 = vector.extract_strided_slice %559 {offsets = [0, 256], sizes = [1, 128], strides = [1, 1]} : vector<1x512xf32> to vector<1x128xf32>
    %573 = math.tanh %572 : vector<1x128xf32>
    %574 = vector.extract_strided_slice %559 {offsets = [0, 384], sizes = [1, 128], strides = [1, 1]} : vector<1x512xf32> to vector<1x128xf32>
    %575 = arith.negf %574 : vector<1x128xf32>
    %576 = math.exp %575 : vector<1x128xf32>
    %cst_200 = arith.constant 1.000000e+00 : f32
    %577 = vector.broadcast %cst_200 : f32 to vector<1x128xf32>
    %578 = arith.addf %577, %576 : vector<1x128xf32>
    %579 = arith.divf %577, %578 : vector<1x128xf32>
    %580 = arith.mulf %571, %543 : vector<1x128xf32>
    %581 = arith.mulf %565, %573 : vector<1x128xf32>
    %582 = arith.addf %580, %581 : vector<1x128xf32>
    %583 = math.tanh %582 : vector<1x128xf32>
    %584 = arith.mulf %579, %583 : vector<1x128xf32>
    %585 = arith.index_cast %c5_i32_191 : i32 to index
    %c0_201 = arith.constant 0 : index
    %586 = vector.load %arg14[%585, %c0_201] : memref<8x128xf32, #tpu.memory_space<vmem>>, vector<1x128xf32>
    tpu.vector_store %arg14[%585, %c0_201], %584 {strides = array<i32>} : memref<8x128xf32, #tpu.memory_space<vmem>>, vector<1x128xf32>,
    %c7_i32_202 = arith.constant 7 : i32
    %587 = arith.subi %c7_i32_202, %c5_i32_191 : i32
    %588 = arith.index_cast %587 : i32 to index
    %c0_203 = arith.constant 0 : index
    %589 = vector.load %arg15[%588, %c0_203] : memref<8x128xf32, #tpu.memory_space<vmem>>, vector<1x128xf32>
    tpu.vector_store %arg15[%588, %c0_203], %584 {strides = array<i32>} : memref<8x128xf32, #tpu.memory_space<vmem>>, vector<1x128xf32>,
    %c6_i32_204 = arith.constant 6 : i32
    %590 = arith.index_cast %c6_i32_204 : i32 to index
    %c0_205 = arith.constant 0 : index
    %591 = vector.load %arg16[%590, %c0_205] : memref<8x512xf32, #tpu.memory_space<vmem>>, vector<1x512xf32>
    %c7_i32_206 = arith.constant 7 : i32
    %592 = arith.subi %c7_i32_206, %c6_i32_204 : i32
    %593 = arith.index_cast %592 : i32 to index
    %c0_207 = arith.constant 0 : index
    %594 = vector.load %arg16[%593, %c0_207] : memref<8x512xf32, #tpu.memory_space<vmem>>, vector<1x512xf32>
    %595 = arith.select %18, %591, %594 : vector<1x512xi1>, vector<1x512xf32>
    %c0_208 = arith.constant 0 : index
    %c0_209 = arith.constant 0 : index
    %596 = vector.load %arg6[%c0_208, %c0_209] : memref<128x512xf32, #tpu.memory_space<vmem>>, vector<128x512xf32>
    %cst_210 = arith.constant dense<0.000000e+00> : vector<1x512xf32>
    %597 = tpu.matmul %584, %596, %cst_210 {dimension_numbers = #tpu.dot_dimension_numbers<[1], [0], [0], [1], [0, 0, 1, 1], [], []>} : vector<1x128xf32>, vector<128x512xf32>, vector<1x512xf32> -> vector<1x512xf32>
    %598 = arith.addf %595, %597 : vector<1x512xf32>
    %599 = vector.extract_strided_slice %598 {offsets = [0, 0], sizes = [1, 128], strides = [1, 1]} : vector<1x512xf32> to vector<1x128xf32>
    %600 = arith.negf %599 : vector<1x128xf32>
    %601 = math.exp %600 : vector<1x128xf32>
    %cst_211 = arith.constant 1.000000e+00 : f32
    %602 = vector.broadcast %cst_211 : f32 to vector<1x128xf32>
    %603 = arith.addf %602, %601 : vector<1x128xf32>
    %604 = arith.divf %602, %603 : vector<1x128xf32>
    %605 = vector.extract_strided_slice %598 {offsets = [0, 128], sizes = [1, 128], strides = [1, 1]} : vector<1x512xf32> to vector<1x128xf32>
    %606 = arith.negf %605 : vector<1x128xf32>
    %607 = math.exp %606 : vector<1x128xf32>
    %cst_212 = arith.constant 1.000000e+00 : f32
    %608 = vector.broadcast %cst_212 : f32 to vector<1x128xf32>
    %609 = arith.addf %608, %607 : vector<1x128xf32>
    %610 = arith.divf %608, %609 : vector<1x128xf32>
    %611 = vector.extract_strided_slice %598 {offsets = [0, 256], sizes = [1, 128], strides = [1, 1]} : vector<1x512xf32> to vector<1x128xf32>
    %612 = math.tanh %611 : vector<1x128xf32>
    %613 = vector.extract_strided_slice %598 {offsets = [0, 384], sizes = [1, 128], strides = [1, 1]} : vector<1x512xf32> to vector<1x128xf32>
    %614 = arith.negf %613 : vector<1x128xf32>
    %615 = math.exp %614 : vector<1x128xf32>
    %cst_213 = arith.constant 1.000000e+00 : f32
    %616 = vector.broadcast %cst_213 : f32 to vector<1x128xf32>
    %617 = arith.addf %616, %615 : vector<1x128xf32>
    %618 = arith.divf %616, %617 : vector<1x128xf32>
    %619 = arith.mulf %610, %582 : vector<1x128xf32>
    %620 = arith.mulf %604, %612 : vector<1x128xf32>
    %621 = arith.addf %619, %620 : vector<1x128xf32>
    %622 = math.tanh %621 : vector<1x128xf32>
    %623 = arith.mulf %618, %622 : vector<1x128xf32>
    %624 = arith.index_cast %c6_i32_204 : i32 to index
    %c0_214 = arith.constant 0 : index
    %625 = vector.load %arg14[%624, %c0_214] : memref<8x128xf32, #tpu.memory_space<vmem>>, vector<1x128xf32>
    tpu.vector_store %arg14[%624, %c0_214], %623 {strides = array<i32>} : memref<8x128xf32, #tpu.memory_space<vmem>>, vector<1x128xf32>,
    %c7_i32_215 = arith.constant 7 : i32
    %626 = arith.subi %c7_i32_215, %c6_i32_204 : i32
    %627 = arith.index_cast %626 : i32 to index
    %c0_216 = arith.constant 0 : index
    %628 = vector.load %arg15[%627, %c0_216] : memref<8x128xf32, #tpu.memory_space<vmem>>, vector<1x128xf32>
    tpu.vector_store %arg15[%627, %c0_216], %623 {strides = array<i32>} : memref<8x128xf32, #tpu.memory_space<vmem>>, vector<1x128xf32>,
    %c7_i32_217 = arith.constant 7 : i32
    %629 = arith.index_cast %c7_i32_217 : i32 to index
    %c0_218 = arith.constant 0 : index
    %630 = vector.load %arg16[%629, %c0_218] : memref<8x512xf32, #tpu.memory_space<vmem>>, vector<1x512xf32>
    %c7_i32_219 = arith.constant 7 : i32
    %631 = arith.subi %c7_i32_219, %c7_i32_217 : i32
    %632 = arith.index_cast %631 : i32 to index
    %c0_220 = arith.constant 0 : index
    %633 = vector.load %arg16[%632, %c0_220] : memref<8x512xf32, #tpu.memory_space<vmem>>, vector<1x512xf32>
    %634 = arith.select %18, %630, %633 : vector<1x512xi1>, vector<1x512xf32>
    %c0_221 = arith.constant 0 : index
    %c0_222 = arith.constant 0 : index
    %635 = vector.load %arg6[%c0_221, %c0_222] : memref<128x512xf32, #tpu.memory_space<vmem>>, vector<128x512xf32>
    %cst_223 = arith.constant dense<0.000000e+00> : vector<1x512xf32>
    %636 = tpu.matmul %623, %635, %cst_223 {dimension_numbers = #tpu.dot_dimension_numbers<[1], [0], [0], [1], [0, 0, 1, 1], [], []>} : vector<1x128xf32>, vector<128x512xf32>, vector<1x512xf32> -> vector<1x512xf32>
    %637 = arith.addf %634, %636 : vector<1x512xf32>
    %638 = vector.extract_strided_slice %637 {offsets = [0, 0], sizes = [1, 128], strides = [1, 1]} : vector<1x512xf32> to vector<1x128xf32>
    %639 = arith.negf %638 : vector<1x128xf32>
    %640 = math.exp %639 : vector<1x128xf32>
    %cst_224 = arith.constant 1.000000e+00 : f32
    %641 = vector.broadcast %cst_224 : f32 to vector<1x128xf32>
    %642 = arith.addf %641, %640 : vector<1x128xf32>
    %643 = arith.divf %641, %642 : vector<1x128xf32>
    %644 = vector.extract_strided_slice %637 {offsets = [0, 128], sizes = [1, 128], strides = [1, 1]} : vector<1x512xf32> to vector<1x128xf32>
    %645 = arith.negf %644 : vector<1x128xf32>
    %646 = math.exp %645 : vector<1x128xf32>
    %cst_225 = arith.constant 1.000000e+00 : f32
    %647 = vector.broadcast %cst_225 : f32 to vector<1x128xf32>
    %648 = arith.addf %647, %646 : vector<1x128xf32>
    %649 = arith.divf %647, %648 : vector<1x128xf32>
    %650 = vector.extract_strided_slice %637 {offsets = [0, 256], sizes = [1, 128], strides = [1, 1]} : vector<1x512xf32> to vector<1x128xf32>
    %651 = math.tanh %650 : vector<1x128xf32>
    %652 = vector.extract_strided_slice %637 {offsets = [0, 384], sizes = [1, 128], strides = [1, 1]} : vector<1x512xf32> to vector<1x128xf32>
    %653 = arith.negf %652 : vector<1x128xf32>
    %654 = math.exp %653 : vector<1x128xf32>
    %cst_226 = arith.constant 1.000000e+00 : f32
    %655 = vector.broadcast %cst_226 : f32 to vector<1x128xf32>
    %656 = arith.addf %655, %654 : vector<1x128xf32>
    %657 = arith.divf %655, %656 : vector<1x128xf32>
    %658 = arith.mulf %649, %621 : vector<1x128xf32>
    %659 = arith.mulf %643, %651 : vector<1x128xf32>
    %660 = arith.addf %658, %659 : vector<1x128xf32>
    %661 = math.tanh %660 : vector<1x128xf32>
    %662 = arith.mulf %657, %661 : vector<1x128xf32>
    %663 = arith.index_cast %c7_i32_217 : i32 to index
    %c0_227 = arith.constant 0 : index
    %664 = vector.load %arg14[%663, %c0_227] : memref<8x128xf32, #tpu.memory_space<vmem>>, vector<1x128xf32>
    tpu.vector_store %arg14[%663, %c0_227], %662 {strides = array<i32>} : memref<8x128xf32, #tpu.memory_space<vmem>>, vector<1x128xf32>,
    %c7_i32_228 = arith.constant 7 : i32
    %665 = arith.subi %c7_i32_228, %c7_i32_217 : i32
    %666 = arith.index_cast %665 : i32 to index
    %c0_229 = arith.constant 0 : index
    %667 = vector.load %arg15[%666, %c0_229] : memref<8x128xf32, #tpu.memory_space<vmem>>, vector<1x128xf32>
    tpu.vector_store %arg15[%666, %c0_229], %662 {strides = array<i32>} : memref<8x128xf32, #tpu.memory_space<vmem>>, vector<1x128xf32>,
    %c8_i32_230 = arith.constant 8 : i32
    %c0_231 = arith.constant 0 : index
    %c0_232 = arith.constant 0 : index
    %668 = vector.load %arg14[%c0_231, %c0_232] : memref<8x128xf32, #tpu.memory_space<vmem>>, vector<8x128xf32>
    %c0_233 = arith.constant 0 : index
    %c0_234 = arith.constant 0 : index
    %669 = vector.load %arg15[%c0_233, %c0_234] : memref<8x128xf32, #tpu.memory_space<vmem>>, vector<8x128xf32>
    %670 = arith.select %21, %668, %669 : vector<8x128xi1>, vector<8x128xf32>
    %c0_235 = arith.constant 0 : index
    %c0_236 = arith.constant 0 : index
    %671 = vector.load %arg14[%c0_235, %c0_236] : memref<8x128xf32, #tpu.memory_space<vmem>>, vector<8x128xf32>
    tpu.vector_store %arg14[%c0_235, %c0_236], %670 {strides = array<i32>} : memref<8x128xf32, #tpu.memory_space<vmem>>, vector<8x128xf32>,
    %c0_237 = arith.constant 0 : index
    %c0_238 = arith.constant 0 : index
    %672 = vector.load %arg14[%c0_237, %c0_238] : memref<8x128xf32, #tpu.memory_space<vmem>>, vector<8x128xf32>
    %c0_239 = arith.constant 0 : index
    %c0_240 = arith.constant 0 : index
    %673 = vector.load %arg8[%c0_239, %c0_240] : memref<128x128xf32, #tpu.memory_space<vmem>>, vector<128x128xf32>
    %cst_241 = arith.constant dense<0.000000e+00> : vector<8x128xf32>
    %674 = tpu.matmul %672, %673, %cst_241 {dimension_numbers = #tpu.dot_dimension_numbers<[1], [0], [0], [1], [0, 0, 1, 1], [], []>} : vector<8x128xf32>, vector<128x128xf32>, vector<8x128xf32> -> vector<8x128xf32>
    %c0_242 = arith.constant 0 : index
    %c0_243 = arith.constant 0 : index
    %675 = vector.load %arg9[%c0_242, %c0_243] : memref<1x128xf32, #tpu.memory_space<vmem>>, vector<1x128xf32>
    %676 = vector.broadcast %675 : vector<1x128xf32> to vector<8x128xf32>
    %677 = arith.addf %674, %676 : vector<8x128xf32>
    %c0_244 = arith.constant 0 : index
    %c0_245 = arith.constant 0 : index
    %678 = vector.load %arg17[%c0_244, %c0_245] : memref<8x128xf32, #tpu.memory_space<vmem>>, vector<8x128xf32>
    tpu.vector_store %arg17[%c0_244, %c0_245], %677 {strides = array<i32>} : memref<8x128xf32, #tpu.memory_space<vmem>>, vector<8x128xf32>,
    %679 = tpu.iota {dimensions = array<i32: 0>} : vector<128x1xi32>
    %c3_i32_246 = arith.constant 3 : i32
    %680 = vector.broadcast %c3_i32_246 : i32 to vector<128x1xi32>
    %681 = arith.cmpi eq, %679, %680 : vector<128x1xi32>
    %cst_247 = arith.constant 0.000000e+00 : f32
    %cst_248 = arith.constant -1.000000e+04 : f32
    %682 = vector.broadcast %cst_247 : f32 to vector<128x1xf32>
    %683 = vector.broadcast %cst_248 : f32 to vector<128x1xf32>
    %684 = arith.select %681, %682, %683 : vector<128x1xi1>, vector<128x1xf32>
    %c0_i32_249 = arith.constant 0 : i32
    %c0_250 = arith.constant 0 : index
    %c0_251 = arith.constant 0 : index
    %685 = vector.load %arg10[%c0_250, %c0_251] : memref<128x128xf32, #tpu.memory_space<vmem>>, vector<128x128xf32>
    %686 = tpu.iota {dimensions = array<i32: 0>} : vector<128x128xi32>
    %687 = arith.sitofp %686 : vector<128x128xi32> to vector<128x128xf32>
    %688 = vector.broadcast %684 : vector<128x1xf32> to vector<128x128xf32>
    %689 = arith.addf %685, %688 : vector<128x128xf32>
    %cst_252 = arith.constant dense<0xFF800000> : vector<128xf32>
    %690 = vector.multi_reduction <maximumf>, %689, %cst_252 [0] : vector<128x128xf32> to vector<128xf32>
    %691 = vector.shape_cast %690 : vector<128xf32> to vector<1x128xf32>
    %692 = vector.broadcast %691 : vector<1x128xf32> to vector<128x128xf32>
    %693 = arith.cmpf oeq, %689, %692 : vector<128x128xf32>
    %cst_253 = arith.constant 1.280000e+02 : f32
    %694 = vector.broadcast %cst_253 : f32 to vector<128x128xf32>
    %695 = arith.select %693, %687, %694 : vector<128x128xi1>, vector<128x128xf32>
    %cst_254 = arith.constant dense<0x7F800000> : vector<128xf32>
    %696 = vector.multi_reduction <minimumf>, %695, %cst_254 [0] : vector<128x128xf32> to vector<128xf32>
    %697 = vector.shape_cast %696 : vector<128xf32> to vector<1x128xf32>
    %698 = arith.index_cast %c0_i32_249 : i32 to index
    %c0_255 = arith.constant 0 : index
    %699 = vector.load %arg18[%698, %c0_255] : memref<8x128xf32, #tpu.memory_space<vmem>>, vector<1x128xf32>
    tpu.vector_store %arg18[%698, %c0_255], %697 {strides = array<i32>} : memref<8x128xf32, #tpu.memory_space<vmem>>, vector<1x128xf32>,
    %700 = arith.index_cast %c0_i32_249 : i32 to index
    %c0_256 = arith.constant 0 : index
    %701 = vector.load %arg17[%700, %c0_256] : memref<8x128xf32, #tpu.memory_space<vmem>>, vector<1x128xf32>
    %702 = arith.addf %691, %701 : vector<1x128xf32>
    %703 = tpu.transpose %702, [1, 0] : vector<1x128xf32> -> vector<128x1xf32>
    %c1_i32_257 = arith.constant 1 : i32
    %c0_258 = arith.constant 0 : index
    %c0_259 = arith.constant 0 : index
    %704 = vector.load %arg10[%c0_258, %c0_259] : memref<128x128xf32, #tpu.memory_space<vmem>>, vector<128x128xf32>
    %705 = tpu.iota {dimensions = array<i32: 0>} : vector<128x128xi32>
    %706 = arith.sitofp %705 : vector<128x128xi32> to vector<128x128xf32>
    %707 = vector.broadcast %703 : vector<128x1xf32> to vector<128x128xf32>
    %708 = arith.addf %704, %707 : vector<128x128xf32>
    %cst_260 = arith.constant dense<0xFF800000> : vector<128xf32>
    %709 = vector.multi_reduction <maximumf>, %708, %cst_260 [0] : vector<128x128xf32> to vector<128xf32>
    %710 = vector.shape_cast %709 : vector<128xf32> to vector<1x128xf32>
    %711 = vector.broadcast %710 : vector<1x128xf32> to vector<128x128xf32>
    %712 = arith.cmpf oeq, %708, %711 : vector<128x128xf32>
    %cst_261 = arith.constant 1.280000e+02 : f32
    %713 = vector.broadcast %cst_261 : f32 to vector<128x128xf32>
    %714 = arith.select %712, %706, %713 : vector<128x128xi1>, vector<128x128xf32>
    %cst_262 = arith.constant dense<0x7F800000> : vector<128xf32>
    %715 = vector.multi_reduction <minimumf>, %714, %cst_262 [0] : vector<128x128xf32> to vector<128xf32>
    %716 = vector.shape_cast %715 : vector<128xf32> to vector<1x128xf32>
    %717 = arith.index_cast %c1_i32_257 : i32 to index
    %c0_263 = arith.constant 0 : index
    %718 = vector.load %arg18[%717, %c0_263] : memref<8x128xf32, #tpu.memory_space<vmem>>, vector<1x128xf32>
    tpu.vector_store %arg18[%717, %c0_263], %716 {strides = array<i32>} : memref<8x128xf32, #tpu.memory_space<vmem>>, vector<1x128xf32>,
    %719 = arith.index_cast %c1_i32_257 : i32 to index
    %c0_264 = arith.constant 0 : index
    %720 = vector.load %arg17[%719, %c0_264] : memref<8x128xf32, #tpu.memory_space<vmem>>, vector<1x128xf32>
    %721 = arith.addf %710, %720 : vector<1x128xf32>
    %722 = tpu.transpose %721, [1, 0] : vector<1x128xf32> -> vector<128x1xf32>
    %c2_i32_265 = arith.constant 2 : i32
    %c0_266 = arith.constant 0 : index
    %c0_267 = arith.constant 0 : index
    %723 = vector.load %arg10[%c0_266, %c0_267] : memref<128x128xf32, #tpu.memory_space<vmem>>, vector<128x128xf32>
    %724 = tpu.iota {dimensions = array<i32: 0>} : vector<128x128xi32>
    %725 = arith.sitofp %724 : vector<128x128xi32> to vector<128x128xf32>
    %726 = vector.broadcast %722 : vector<128x1xf32> to vector<128x128xf32>
    %727 = arith.addf %723, %726 : vector<128x128xf32>
    %cst_268 = arith.constant dense<0xFF800000> : vector<128xf32>
    %728 = vector.multi_reduction <maximumf>, %727, %cst_268 [0] : vector<128x128xf32> to vector<128xf32>
    %729 = vector.shape_cast %728 : vector<128xf32> to vector<1x128xf32>
    %730 = vector.broadcast %729 : vector<1x128xf32> to vector<128x128xf32>
    %731 = arith.cmpf oeq, %727, %730 : vector<128x128xf32>
    %cst_269 = arith.constant 1.280000e+02 : f32
    %732 = vector.broadcast %cst_269 : f32 to vector<128x128xf32>
    %733 = arith.select %731, %725, %732 : vector<128x128xi1>, vector<128x128xf32>
    %cst_270 = arith.constant dense<0x7F800000> : vector<128xf32>
    %734 = vector.multi_reduction <minimumf>, %733, %cst_270 [0] : vector<128x128xf32> to vector<128xf32>
    %735 = vector.shape_cast %734 : vector<128xf32> to vector<1x128xf32>
    %736 = arith.index_cast %c2_i32_265 : i32 to index
    %c0_271 = arith.constant 0 : index
    %737 = vector.load %arg18[%736, %c0_271] : memref<8x128xf32, #tpu.memory_space<vmem>>, vector<1x128xf32>
    tpu.vector_store %arg18[%736, %c0_271], %735 {strides = array<i32>} : memref<8x128xf32, #tpu.memory_space<vmem>>, vector<1x128xf32>,
    %738 = arith.index_cast %c2_i32_265 : i32 to index
    %c0_272 = arith.constant 0 : index
    %739 = vector.load %arg17[%738, %c0_272] : memref<8x128xf32, #tpu.memory_space<vmem>>, vector<1x128xf32>
    %740 = arith.addf %729, %739 : vector<1x128xf32>
    %741 = tpu.transpose %740, [1, 0] : vector<1x128xf32> -> vector<128x1xf32>
    %c3_i32_273 = arith.constant 3 : i32
    %c0_274 = arith.constant 0 : index
    %c0_275 = arith.constant 0 : index
    %742 = vector.load %arg10[%c0_274, %c0_275] : memref<128x128xf32, #tpu.memory_space<vmem>>, vector<128x128xf32>
    %743 = tpu.iota {dimensions = array<i32: 0>} : vector<128x128xi32>
    %744 = arith.sitofp %743 : vector<128x128xi32> to vector<128x128xf32>
    %745 = vector.broadcast %741 : vector<128x1xf32> to vector<128x128xf32>
    %746 = arith.addf %742, %745 : vector<128x128xf32>
    %cst_276 = arith.constant dense<0xFF800000> : vector<128xf32>
    %747 = vector.multi_reduction <maximumf>, %746, %cst_276 [0] : vector<128x128xf32> to vector<128xf32>
    %748 = vector.shape_cast %747 : vector<128xf32> to vector<1x128xf32>
    %749 = vector.broadcast %748 : vector<1x128xf32> to vector<128x128xf32>
    %750 = arith.cmpf oeq, %746, %749 : vector<128x128xf32>
    %cst_277 = arith.constant 1.280000e+02 : f32
    %751 = vector.broadcast %cst_277 : f32 to vector<128x128xf32>
    %752 = arith.select %750, %744, %751 : vector<128x128xi1>, vector<128x128xf32>
    %cst_278 = arith.constant dense<0x7F800000> : vector<128xf32>
    %753 = vector.multi_reduction <minimumf>, %752, %cst_278 [0] : vector<128x128xf32> to vector<128xf32>
    %754 = vector.shape_cast %753 : vector<128xf32> to vector<1x128xf32>
    %755 = arith.index_cast %c3_i32_273 : i32 to index
    %c0_279 = arith.constant 0 : index
    %756 = vector.load %arg18[%755, %c0_279] : memref<8x128xf32, #tpu.memory_space<vmem>>, vector<1x128xf32>
    tpu.vector_store %arg18[%755, %c0_279], %754 {strides = array<i32>} : memref<8x128xf32, #tpu.memory_space<vmem>>, vector<1x128xf32>,
    %757 = arith.index_cast %c3_i32_273 : i32 to index
    %c0_280 = arith.constant 0 : index
    %758 = vector.load %arg17[%757, %c0_280] : memref<8x128xf32, #tpu.memory_space<vmem>>, vector<1x128xf32>
    %759 = arith.addf %748, %758 : vector<1x128xf32>
    %760 = tpu.transpose %759, [1, 0] : vector<1x128xf32> -> vector<128x1xf32>
    %c4_i32_281 = arith.constant 4 : i32
    %c0_282 = arith.constant 0 : index
    %c0_283 = arith.constant 0 : index
    %761 = vector.load %arg10[%c0_282, %c0_283] : memref<128x128xf32, #tpu.memory_space<vmem>>, vector<128x128xf32>
    %762 = tpu.iota {dimensions = array<i32: 0>} : vector<128x128xi32>
    %763 = arith.sitofp %762 : vector<128x128xi32> to vector<128x128xf32>
    %764 = vector.broadcast %760 : vector<128x1xf32> to vector<128x128xf32>
    %765 = arith.addf %761, %764 : vector<128x128xf32>
    %cst_284 = arith.constant dense<0xFF800000> : vector<128xf32>
    %766 = vector.multi_reduction <maximumf>, %765, %cst_284 [0] : vector<128x128xf32> to vector<128xf32>
    %767 = vector.shape_cast %766 : vector<128xf32> to vector<1x128xf32>
    %768 = vector.broadcast %767 : vector<1x128xf32> to vector<128x128xf32>
    %769 = arith.cmpf oeq, %765, %768 : vector<128x128xf32>
    %cst_285 = arith.constant 1.280000e+02 : f32
    %770 = vector.broadcast %cst_285 : f32 to vector<128x128xf32>
    %771 = arith.select %769, %763, %770 : vector<128x128xi1>, vector<128x128xf32>
    %cst_286 = arith.constant dense<0x7F800000> : vector<128xf32>
    %772 = vector.multi_reduction <minimumf>, %771, %cst_286 [0] : vector<128x128xf32> to vector<128xf32>
    %773 = vector.shape_cast %772 : vector<128xf32> to vector<1x128xf32>
    %774 = arith.index_cast %c4_i32_281 : i32 to index
    %c0_287 = arith.constant 0 : index
    %775 = vector.load %arg18[%774, %c0_287] : memref<8x128xf32, #tpu.memory_space<vmem>>, vector<1x128xf32>
    tpu.vector_store %arg18[%774, %c0_287], %773 {strides = array<i32>} : memref<8x128xf32, #tpu.memory_space<vmem>>, vector<1x128xf32>,
    %776 = arith.index_cast %c4_i32_281 : i32 to index
    %c0_288 = arith.constant 0 : index
    %777 = vector.load %arg17[%776, %c0_288] : memref<8x128xf32, #tpu.memory_space<vmem>>, vector<1x128xf32>
    %778 = arith.addf %767, %777 : vector<1x128xf32>
    %779 = tpu.transpose %778, [1, 0] : vector<1x128xf32> -> vector<128x1xf32>
    %c5_i32_289 = arith.constant 5 : i32
    %c0_290 = arith.constant 0 : index
    %c0_291 = arith.constant 0 : index
    %780 = vector.load %arg10[%c0_290, %c0_291] : memref<128x128xf32, #tpu.memory_space<vmem>>, vector<128x128xf32>
    %781 = tpu.iota {dimensions = array<i32: 0>} : vector<128x128xi32>
    %782 = arith.sitofp %781 : vector<128x128xi32> to vector<128x128xf32>
    %783 = vector.broadcast %779 : vector<128x1xf32> to vector<128x128xf32>
    %784 = arith.addf %780, %783 : vector<128x128xf32>
    %cst_292 = arith.constant dense<0xFF800000> : vector<128xf32>
    %785 = vector.multi_reduction <maximumf>, %784, %cst_292 [0] : vector<128x128xf32> to vector<128xf32>
    %786 = vector.shape_cast %785 : vector<128xf32> to vector<1x128xf32>
    %787 = vector.broadcast %786 : vector<1x128xf32> to vector<128x128xf32>
    %788 = arith.cmpf oeq, %784, %787 : vector<128x128xf32>
    %cst_293 = arith.constant 1.280000e+02 : f32
    %789 = vector.broadcast %cst_293 : f32 to vector<128x128xf32>
    %790 = arith.select %788, %782, %789 : vector<128x128xi1>, vector<128x128xf32>
    %cst_294 = arith.constant dense<0x7F800000> : vector<128xf32>
    %791 = vector.multi_reduction <minimumf>, %790, %cst_294 [0] : vector<128x128xf32> to vector<128xf32>
    %792 = vector.shape_cast %791 : vector<128xf32> to vector<1x128xf32>
    %793 = arith.index_cast %c5_i32_289 : i32 to index
    %c0_295 = arith.constant 0 : index
    %794 = vector.load %arg18[%793, %c0_295] : memref<8x128xf32, #tpu.memory_space<vmem>>, vector<1x128xf32>
    tpu.vector_store %arg18[%793, %c0_295], %792 {strides = array<i32>} : memref<8x128xf32, #tpu.memory_space<vmem>>, vector<1x128xf32>,
    %795 = arith.index_cast %c5_i32_289 : i32 to index
    %c0_296 = arith.constant 0 : index
    %796 = vector.load %arg17[%795, %c0_296] : memref<8x128xf32, #tpu.memory_space<vmem>>, vector<1x128xf32>
    %797 = arith.addf %786, %796 : vector<1x128xf32>
    %798 = tpu.transpose %797, [1, 0] : vector<1x128xf32> -> vector<128x1xf32>
    %c6_i32_297 = arith.constant 6 : i32
    %c0_298 = arith.constant 0 : index
    %c0_299 = arith.constant 0 : index
    %799 = vector.load %arg10[%c0_298, %c0_299] : memref<128x128xf32, #tpu.memory_space<vmem>>, vector<128x128xf32>
    %800 = tpu.iota {dimensions = array<i32: 0>} : vector<128x128xi32>
    %801 = arith.sitofp %800 : vector<128x128xi32> to vector<128x128xf32>
    %802 = vector.broadcast %798 : vector<128x1xf32> to vector<128x128xf32>
    %803 = arith.addf %799, %802 : vector<128x128xf32>
    %cst_300 = arith.constant dense<0xFF800000> : vector<128xf32>
    %804 = vector.multi_reduction <maximumf>, %803, %cst_300 [0] : vector<128x128xf32> to vector<128xf32>
    %805 = vector.shape_cast %804 : vector<128xf32> to vector<1x128xf32>
    %806 = vector.broadcast %805 : vector<1x128xf32> to vector<128x128xf32>
    %807 = arith.cmpf oeq, %803, %806 : vector<128x128xf32>
    %cst_301 = arith.constant 1.280000e+02 : f32
    %808 = vector.broadcast %cst_301 : f32 to vector<128x128xf32>
    %809 = arith.select %807, %801, %808 : vector<128x128xi1>, vector<128x128xf32>
    %cst_302 = arith.constant dense<0x7F800000> : vector<128xf32>
    %810 = vector.multi_reduction <minimumf>, %809, %cst_302 [0] : vector<128x128xf32> to vector<128xf32>
    %811 = vector.shape_cast %810 : vector<128xf32> to vector<1x128xf32>
    %812 = arith.index_cast %c6_i32_297 : i32 to index
    %c0_303 = arith.constant 0 : index
    %813 = vector.load %arg18[%812, %c0_303] : memref<8x128xf32, #tpu.memory_space<vmem>>, vector<1x128xf32>
    tpu.vector_store %arg18[%812, %c0_303], %811 {strides = array<i32>} : memref<8x128xf32, #tpu.memory_space<vmem>>, vector<1x128xf32>,
    %814 = arith.index_cast %c6_i32_297 : i32 to index
    %c0_304 = arith.constant 0 : index
    %815 = vector.load %arg17[%814, %c0_304] : memref<8x128xf32, #tpu.memory_space<vmem>>, vector<1x128xf32>
    %816 = arith.addf %805, %815 : vector<1x128xf32>
    %817 = tpu.transpose %816, [1, 0] : vector<1x128xf32> -> vector<128x1xf32>
    %c7_i32_305 = arith.constant 7 : i32
    %c0_306 = arith.constant 0 : index
    %c0_307 = arith.constant 0 : index
    %818 = vector.load %arg10[%c0_306, %c0_307] : memref<128x128xf32, #tpu.memory_space<vmem>>, vector<128x128xf32>
    %819 = tpu.iota {dimensions = array<i32: 0>} : vector<128x128xi32>
    %820 = arith.sitofp %819 : vector<128x128xi32> to vector<128x128xf32>
    %821 = vector.broadcast %817 : vector<128x1xf32> to vector<128x128xf32>
    %822 = arith.addf %818, %821 : vector<128x128xf32>
    %cst_308 = arith.constant dense<0xFF800000> : vector<128xf32>
    %823 = vector.multi_reduction <maximumf>, %822, %cst_308 [0] : vector<128x128xf32> to vector<128xf32>
    %824 = vector.shape_cast %823 : vector<128xf32> to vector<1x128xf32>
    %825 = vector.broadcast %824 : vector<1x128xf32> to vector<128x128xf32>
    %826 = arith.cmpf oeq, %822, %825 : vector<128x128xf32>
    %cst_309 = arith.constant 1.280000e+02 : f32
    %827 = vector.broadcast %cst_309 : f32 to vector<128x128xf32>
    %828 = arith.select %826, %820, %827 : vector<128x128xi1>, vector<128x128xf32>
    %cst_310 = arith.constant dense<0x7F800000> : vector<128xf32>
    %829 = vector.multi_reduction <minimumf>, %828, %cst_310 [0] : vector<128x128xf32> to vector<128xf32>
    %830 = vector.shape_cast %829 : vector<128xf32> to vector<1x128xf32>
    %831 = arith.index_cast %c7_i32_305 : i32 to index
    %c0_311 = arith.constant 0 : index
    %832 = vector.load %arg18[%831, %c0_311] : memref<8x128xf32, #tpu.memory_space<vmem>>, vector<1x128xf32>
    tpu.vector_store %arg18[%831, %c0_311], %830 {strides = array<i32>} : memref<8x128xf32, #tpu.memory_space<vmem>>, vector<1x128xf32>,
    %833 = arith.index_cast %c7_i32_305 : i32 to index
    %c0_312 = arith.constant 0 : index
    %834 = vector.load %arg17[%833, %c0_312] : memref<8x128xf32, #tpu.memory_space<vmem>>, vector<1x128xf32>
    %835 = arith.addf %824, %834 : vector<1x128xf32>
    %836 = tpu.transpose %835, [1, 0] : vector<1x128xf32> -> vector<128x1xf32>
    %c8_i32_313 = arith.constant 8 : i32
    %c0_314 = arith.constant 0 : index
    %c0_315 = arith.constant 0 : index
    %837 = vector.load %arg10[%c0_314, %c0_315] : memref<128x128xf32, #tpu.memory_space<vmem>>, vector<128x128xf32>
    %838 = vector.extract_strided_slice %837 {offsets = [0, 4], sizes = [128, 1], strides = [1, 1]} : vector<128x128xf32> to vector<128x1xf32>
    %839 = arith.addf %836, %838 : vector<128x1xf32>
    %840 = tpu.transpose %839, [1, 0] : vector<128x1xf32> -> vector<1x128xf32>
    %c0_316 = arith.constant 0 : index
    %c0_317 = arith.constant 0 : index
    %841 = vector.load %arg12[%c0_316, %c0_317] : memref<1x128xf32, #tpu.memory_space<vmem>>, vector<1x128xf32>
    tpu.vector_store %arg12[%c0_316, %c0_317], %840 {strides = array<i32>} : memref<1x128xf32, #tpu.memory_space<vmem>>, vector<1x128xf32>,
    %cst_318 = arith.constant dense<0xFF800000> : vector<1xf32>
    %842 = vector.multi_reduction <maximumf>, %840, %cst_318 [1] : vector<1x128xf32> to vector<1xf32>
    %843 = vector.shape_cast %842 : vector<1xf32> to vector<1x1xf32>
    %844 = vector.broadcast %843 : vector<1x1xf32> to vector<1x128xf32>
    %845 = arith.cmpf oeq, %840, %844 : vector<1x128xf32>
    %cst_319 = arith.constant 1.280000e+02 : f32
    %846 = vector.broadcast %cst_319 : f32 to vector<1x128xf32>
    %847 = arith.select %845, %23, %846 : vector<1x128xi1>, vector<1x128xf32>
    %cst_320 = arith.constant dense<0x7F800000> : vector<1xf32>
    %848 = vector.multi_reduction <minimumf>, %847, %cst_320 [1] : vector<1x128xf32> to vector<1xf32>
    %849 = vector.shape_cast %848 : vector<1xf32> to vector<1x1xf32>
    %850 = vector.broadcast %849 : vector<1x1xf32> to vector<1x128xf32>
    %851 = arith.cmpf oeq, %23, %850 : vector<1x128xf32>
    %852 = arith.extui %851 : vector<1x128xi1> to vector<1x128xi32>
    %853 = arith.sitofp %852 : vector<1x128xi32> to vector<1x128xf32>
    %c0_i32_321 = arith.constant 0 : i32
    %c7_i32_322 = arith.constant 7 : i32
    %854 = arith.subi %c7_i32_322, %c0_i32_321 : i32
    %855 = arith.index_cast %854 : i32 to index
    %c0_323 = arith.constant 0 : index
    %856 = vector.load %arg11[%855, %c0_323] : memref<8x128xf32, #tpu.memory_space<vmem>>, vector<1x128xf32>
    tpu.vector_store %arg11[%855, %c0_323], %853 {strides = array<i32>} : memref<8x128xf32, #tpu.memory_space<vmem>>, vector<1x128xf32>,
    %857 = arith.index_cast %854 : i32 to index
    %c0_324 = arith.constant 0 : index
    %858 = vector.load %arg18[%857, %c0_324] : memref<8x128xf32, #tpu.memory_space<vmem>>, vector<1x128xf32>
    %859 = arith.mulf %858, %853 : vector<1x128xf32>
    %cst_325 = arith.constant dense<0.000000e+00> : vector<1xf32>
    %860 = vector.multi_reduction <add>, %859, %cst_325 [1] : vector<1x128xf32> to vector<1xf32>
    %861 = vector.shape_cast %860 : vector<1xf32> to vector<1x1xf32>
    %862 = vector.broadcast %861 : vector<1x1xf32> to vector<1x128xf32>
    %863 = arith.cmpf oeq, %23, %862 : vector<1x128xf32>
    %864 = arith.extui %863 : vector<1x128xi1> to vector<1x128xi32>
    %865 = arith.sitofp %864 : vector<1x128xi32> to vector<1x128xf32>
    %c1_i32_326 = arith.constant 1 : i32
    %c7_i32_327 = arith.constant 7 : i32
    %866 = arith.subi %c7_i32_327, %c1_i32_326 : i32
    %867 = arith.index_cast %866 : i32 to index
    %c0_328 = arith.constant 0 : index
    %868 = vector.load %arg11[%867, %c0_328] : memref<8x128xf32, #tpu.memory_space<vmem>>, vector<1x128xf32>
    tpu.vector_store %arg11[%867, %c0_328], %865 {strides = array<i32>} : memref<8x128xf32, #tpu.memory_space<vmem>>, vector<1x128xf32>,
    %869 = arith.index_cast %866 : i32 to index
    %c0_329 = arith.constant 0 : index
    %870 = vector.load %arg18[%869, %c0_329] : memref<8x128xf32, #tpu.memory_space<vmem>>, vector<1x128xf32>
    %871 = arith.mulf %870, %865 : vector<1x128xf32>
    %cst_330 = arith.constant dense<0.000000e+00> : vector<1xf32>
    %872 = vector.multi_reduction <add>, %871, %cst_330 [1] : vector<1x128xf32> to vector<1xf32>
    %873 = vector.shape_cast %872 : vector<1xf32> to vector<1x1xf32>
    %874 = vector.broadcast %873 : vector<1x1xf32> to vector<1x128xf32>
    %875 = arith.cmpf oeq, %23, %874 : vector<1x128xf32>
    %876 = arith.extui %875 : vector<1x128xi1> to vector<1x128xi32>
    %877 = arith.sitofp %876 : vector<1x128xi32> to vector<1x128xf32>
    %c2_i32_331 = arith.constant 2 : i32
    %c7_i32_332 = arith.constant 7 : i32
    %878 = arith.subi %c7_i32_332, %c2_i32_331 : i32
    %879 = arith.index_cast %878 : i32 to index
    %c0_333 = arith.constant 0 : index
    %880 = vector.load %arg11[%879, %c0_333] : memref<8x128xf32, #tpu.memory_space<vmem>>, vector<1x128xf32>
    tpu.vector_store %arg11[%879, %c0_333], %877 {strides = array<i32>} : memref<8x128xf32, #tpu.memory_space<vmem>>, vector<1x128xf32>,
    %881 = arith.index_cast %878 : i32 to index
    %c0_334 = arith.constant 0 : index
    %882 = vector.load %arg18[%881, %c0_334] : memref<8x128xf32, #tpu.memory_space<vmem>>, vector<1x128xf32>
    %883 = arith.mulf %882, %877 : vector<1x128xf32>
    %cst_335 = arith.constant dense<0.000000e+00> : vector<1xf32>
    %884 = vector.multi_reduction <add>, %883, %cst_335 [1] : vector<1x128xf32> to vector<1xf32>
    %885 = vector.shape_cast %884 : vector<1xf32> to vector<1x1xf32>
    %886 = vector.broadcast %885 : vector<1x1xf32> to vector<1x128xf32>
    %887 = arith.cmpf oeq, %23, %886 : vector<1x128xf32>
    %888 = arith.extui %887 : vector<1x128xi1> to vector<1x128xi32>
    %889 = arith.sitofp %888 : vector<1x128xi32> to vector<1x128xf32>
    %c3_i32_336 = arith.constant 3 : i32
    %c7_i32_337 = arith.constant 7 : i32
    %890 = arith.subi %c7_i32_337, %c3_i32_336 : i32
    %891 = arith.index_cast %890 : i32 to index
    %c0_338 = arith.constant 0 : index
    %892 = vector.load %arg11[%891, %c0_338] : memref<8x128xf32, #tpu.memory_space<vmem>>, vector<1x128xf32>
    tpu.vector_store %arg11[%891, %c0_338], %889 {strides = array<i32>} : memref<8x128xf32, #tpu.memory_space<vmem>>, vector<1x128xf32>,
    %893 = arith.index_cast %890 : i32 to index
    %c0_339 = arith.constant 0 : index
    %894 = vector.load %arg18[%893, %c0_339] : memref<8x128xf32, #tpu.memory_space<vmem>>, vector<1x128xf32>
    %895 = arith.mulf %894, %889 : vector<1x128xf32>
    %cst_340 = arith.constant dense<0.000000e+00> : vector<1xf32>
    %896 = vector.multi_reduction <add>, %895, %cst_340 [1] : vector<1x128xf32> to vector<1xf32>
    %897 = vector.shape_cast %896 : vector<1xf32> to vector<1x1xf32>
    %898 = vector.broadcast %897 : vector<1x1xf32> to vector<1x128xf32>
    %899 = arith.cmpf oeq, %23, %898 : vector<1x128xf32>
    %900 = arith.extui %899 : vector<1x128xi1> to vector<1x128xi32>
    %901 = arith.sitofp %900 : vector<1x128xi32> to vector<1x128xf32>
    %c4_i32_341 = arith.constant 4 : i32
    %c7_i32_342 = arith.constant 7 : i32
    %902 = arith.subi %c7_i32_342, %c4_i32_341 : i32
    %903 = arith.index_cast %902 : i32 to index
    %c0_343 = arith.constant 0 : index
    %904 = vector.load %arg11[%903, %c0_343] : memref<8x128xf32, #tpu.memory_space<vmem>>, vector<1x128xf32>
    tpu.vector_store %arg11[%903, %c0_343], %901 {strides = array<i32>} : memref<8x128xf32, #tpu.memory_space<vmem>>, vector<1x128xf32>,
    %905 = arith.index_cast %902 : i32 to index
    %c0_344 = arith.constant 0 : index
    %906 = vector.load %arg18[%905, %c0_344] : memref<8x128xf32, #tpu.memory_space<vmem>>, vector<1x128xf32>
    %907 = arith.mulf %906, %901 : vector<1x128xf32>
    %cst_345 = arith.constant dense<0.000000e+00> : vector<1xf32>
    %908 = vector.multi_reduction <add>, %907, %cst_345 [1] : vector<1x128xf32> to vector<1xf32>
    %909 = vector.shape_cast %908 : vector<1xf32> to vector<1x1xf32>
    %910 = vector.broadcast %909 : vector<1x1xf32> to vector<1x128xf32>
    %911 = arith.cmpf oeq, %23, %910 : vector<1x128xf32>
    %912 = arith.extui %911 : vector<1x128xi1> to vector<1x128xi32>
    %913 = arith.sitofp %912 : vector<1x128xi32> to vector<1x128xf32>
    %c5_i32_346 = arith.constant 5 : i32
    %c7_i32_347 = arith.constant 7 : i32
    %914 = arith.subi %c7_i32_347, %c5_i32_346 : i32
    %915 = arith.index_cast %914 : i32 to index
    %c0_348 = arith.constant 0 : index
    %916 = vector.load %arg11[%915, %c0_348] : memref<8x128xf32, #tpu.memory_space<vmem>>, vector<1x128xf32>
    tpu.vector_store %arg11[%915, %c0_348], %913 {strides = array<i32>} : memref<8x128xf32, #tpu.memory_space<vmem>>, vector<1x128xf32>,
    %917 = arith.index_cast %914 : i32 to index
    %c0_349 = arith.constant 0 : index
    %918 = vector.load %arg18[%917, %c0_349] : memref<8x128xf32, #tpu.memory_space<vmem>>, vector<1x128xf32>
    %919 = arith.mulf %918, %913 : vector<1x128xf32>
    %cst_350 = arith.constant dense<0.000000e+00> : vector<1xf32>
    %920 = vector.multi_reduction <add>, %919, %cst_350 [1] : vector<1x128xf32> to vector<1xf32>
    %921 = vector.shape_cast %920 : vector<1xf32> to vector<1x1xf32>
    %922 = vector.broadcast %921 : vector<1x1xf32> to vector<1x128xf32>
    %923 = arith.cmpf oeq, %23, %922 : vector<1x128xf32>
    %924 = arith.extui %923 : vector<1x128xi1> to vector<1x128xi32>
    %925 = arith.sitofp %924 : vector<1x128xi32> to vector<1x128xf32>
    %c6_i32_351 = arith.constant 6 : i32
    %c7_i32_352 = arith.constant 7 : i32
    %926 = arith.subi %c7_i32_352, %c6_i32_351 : i32
    %927 = arith.index_cast %926 : i32 to index
    %c0_353 = arith.constant 0 : index
    %928 = vector.load %arg11[%927, %c0_353] : memref<8x128xf32, #tpu.memory_space<vmem>>, vector<1x128xf32>
    tpu.vector_store %arg11[%927, %c0_353], %925 {strides = array<i32>} : memref<8x128xf32, #tpu.memory_space<vmem>>, vector<1x128xf32>,
    %929 = arith.index_cast %926 : i32 to index
    %c0_354 = arith.constant 0 : index
    %930 = vector.load %arg18[%929, %c0_354] : memref<8x128xf32, #tpu.memory_space<vmem>>, vector<1x128xf32>
    %931 = arith.mulf %930, %925 : vector<1x128xf32>
    %cst_355 = arith.constant dense<0.000000e+00> : vector<1xf32>
    %932 = vector.multi_reduction <add>, %931, %cst_355 [1] : vector<1x128xf32> to vector<1xf32>
    %933 = vector.shape_cast %932 : vector<1xf32> to vector<1x1xf32>
    %934 = vector.broadcast %933 : vector<1x1xf32> to vector<1x128xf32>
    %935 = arith.cmpf oeq, %23, %934 : vector<1x128xf32>
    %936 = arith.extui %935 : vector<1x128xi1> to vector<1x128xi32>
    %937 = arith.sitofp %936 : vector<1x128xi32> to vector<1x128xf32>
    %c7_i32_356 = arith.constant 7 : i32
    %c7_i32_357 = arith.constant 7 : i32
    %938 = arith.subi %c7_i32_357, %c7_i32_356 : i32
    %939 = arith.index_cast %938 : i32 to index
    %c0_358 = arith.constant 0 : index
    %940 = vector.load %arg11[%939, %c0_358] : memref<8x128xf32, #tpu.memory_space<vmem>>, vector<1x128xf32>
    tpu.vector_store %arg11[%939, %c0_358], %937 {strides = array<i32>} : memref<8x128xf32, #tpu.memory_space<vmem>>, vector<1x128xf32>,
    %941 = arith.index_cast %938 : i32 to index
    %c0_359 = arith.constant 0 : index
    %942 = vector.load %arg18[%941, %c0_359] : memref<8x128xf32, #tpu.memory_space<vmem>>, vector<1x128xf32>
    %943 = arith.mulf %942, %937 : vector<1x128xf32>
    %cst_360 = arith.constant dense<0.000000e+00> : vector<1xf32>
    %944 = vector.multi_reduction <add>, %943, %cst_360 [1] : vector<1x128xf32> to vector<1xf32>
    %945 = vector.shape_cast %944 : vector<1xf32> to vector<1x1xf32>
    %946 = vector.broadcast %945 : vector<1x1xf32> to vector<1x128xf32>
    %947 = arith.cmpf oeq, %23, %946 : vector<1x128xf32>
    %948 = arith.extui %947 : vector<1x128xi1> to vector<1x128xi32>
    %949 = arith.sitofp %948 : vector<1x128xi32> to vector<1x128xf32>
    %c8_i32_361 = arith.constant 8 : i32
    %c0_362 = arith.constant 0 : index
    %c0_363 = arith.constant 0 : index
    %950 = vector.load %arg13[%c0_362, %c0_363] : memref<1x128xf32, #tpu.memory_space<vmem>>, vector<1x128xf32>
    tpu.vector_store %arg13[%c0_362, %c0_363], %949 {strides = array<i32>} : memref<1x128xf32, #tpu.memory_space<vmem>>, vector<1x128xf32>,
    return
  }
  func.func @transform_0(%arg0: i32) -> (i32, i32) {
    %c0_i32 = arith.constant 0 : i32
    %c0_i32_0 = arith.constant 0 : i32
    %c0_i32_1 = arith.constant 0 : i32
    return %c0_i32, %c0_i32_0 : i32, i32
  }
  func.func @transform_1(%arg0: i32) -> (i32, i32) {
    %c0_i32 = arith.constant 0 : i32
    %c0_i32_0 = arith.constant 0 : i32
    %c0_i32_1 = arith.constant 0 : i32
    return %c0_i32, %c0_i32_0 : i32, i32
  }
  func.func @transform_2(%arg0: i32) -> (i32, i32) {
    %c0_i32 = arith.constant 0 : i32
    %c0_i32_0 = arith.constant 0 : i32
    %c0_i32_1 = arith.constant 0 : i32
    return %c0_i32, %c0_i32_0 : i32, i32
  }
  func.func @transform_3(%arg0: i32) -> (i32, i32) {
    %c0_i32 = arith.constant 0 : i32
    %c0_i32_0 = arith.constant 0 : i32
    %c0_i32_1 = arith.constant 0 : i32
    return %c0_i32, %c0_i32_0 : i32, i32
  }
  func.func @transform_4(%arg0: i32) -> (i32, i32) {
    %c0_i32 = arith.constant 0 : i32
    %c0_i32_0 = arith.constant 0 : i32
    %c0_i32_1 = arith.constant 0 : i32
    return %c0_i32, %c0_i32_0 : i32, i32
  }
  func.func @transform_5(%arg0: i32) -> (i32, i32) {
    %c0_i32 = arith.constant 0 : i32
    %c0_i32_0 = arith.constant 0 : i32
    %c0_i32_1 = arith.constant 0 : i32
    return %c0_i32, %c0_i32_0 : i32, i32
  }
  func.func @transform_6(%arg0: i32) -> (i32, i32) {
    %c0_i32 = arith.constant 0 : i32
    %c0_i32_0 = arith.constant 0 : i32
    %c0_i32_1 = arith.constant 0 : i32
    return %c0_i32, %c0_i32_0 : i32, i32
  }
  func.func @transform_7(%arg0: i32) -> (i32, i32) {
    %c0_i32 = arith.constant 0 : i32
    %c0_i32_0 = arith.constant 0 : i32
    %c0_i32_1 = arith.constant 0 : i32
    return %c0_i32, %c0_i32_0 : i32, i32
  }
  func.func @transform_8(%arg0: i32) -> (i32, i32) {
    %c0_i32 = arith.constant 0 : i32
    %c0_i32_0 = arith.constant 0 : i32
    %c0_i32_1 = arith.constant 0 : i32
    return %c0_i32, %c0_i32_0 : i32, i32
  }
  func.func @transform_9(%arg0: i32) -> (i32, i32) {
    %c0_i32 = arith.constant 0 : i32
    %c0_i32_0 = arith.constant 0 : i32
    %c0_i32_1 = arith.constant 0 : i32
    return %c0_i32, %c0_i32_0 : i32, i32
  }
  func.func @transform_10(%arg0: i32) -> (i32, i32) {
    %c0_i32 = arith.constant 0 : i32
    %c0_i32_0 = arith.constant 0 : i32
    %c0_i32_1 = arith.constant 0 : i32
    return %c0_i32, %c0_i32_0 : i32, i32
  }
  func.func @transform_11(%arg0: i32) -> (i32, i32) {
    %c0_i32 = arith.constant 0 : i32
    %c0_i32_0 = arith.constant 0 : i32
    %c0_i32_1 = arith.constant 0 : i32
    return %c0_i32, %c0_i32_0 : i32, i32
  }
  func.func @transform_12(%arg0: i32) -> (i32, i32) {
    %c0_i32 = arith.constant 0 : i32
    %c0_i32_0 = arith.constant 0 : i32
    %c0_i32_1 = arith.constant 0 : i32
    return %c0_i32, %c0_i32_0 : i32, i32
  }
}

</mosaic_0001>

<llo_original>
// kernel: _bilstm_crf_device.1
$region0: #{_bilstm_crf_device.1}
  #allocation0 [shape = 'u32[]', space=smem, size = 0x4, offset = 0x4, fixed_abs, tag = 'smem constant byte address 0x4 - core index']
  #allocation1 [shape = 'u32[144,128]{1,0:T(1,128)}', space=vmem, size = 0x12000, scoped, tag = 'internal scratch']
  #allocation2 [shape = 'f32[8,128]{1,0:T(8,128)}', space=vmem, size = 0x1000, scoped, tag = 'scratch operand']
  #allocation3 [shape = 'f32[8,128]{1,0:T(8,128)}', space=vmem, size = 0x1000, scoped, tag = 'scratch operand']
  #allocation4 [shape = 'f32[8,512]{1,0:T(8,128)}', space=vmem, size = 0x4000, scoped, tag = 'scratch operand']
  #allocation5 [shape = 'f32[8,128]{1,0:T(8,128)}', space=vmem, size = 0x1000, scoped, tag = 'scratch operand']
  #allocation6 [shape = 'f32[8,128]{1,0:T(8,128)}', space=vmem, size = 0x1000, scoped, tag = 'scratch operand']
  %s0 = inlined_call_operand.hbm [shape: f32[8,32], index: 0, kind: input, shape index: {}]
  %s1 = inlined_call_operand.hbm [shape: f32[32,512], index: 1, kind: input, shape index: {}]
  %s2 = inlined_call_operand.hbm [shape: f32[128,512], index: 2, kind: input, shape index: {}]
  %s3 = inlined_call_operand.vmem [shape: f32[1,512], index: 3, kind: input, shape index: {}]
  %s4 = inlined_call_operand.hbm [shape: f32[128,512], index: 4, kind: input, shape index: {}]
  %s5 = inlined_call_operand.hbm [shape: f32[128,512], index: 5, kind: input, shape index: {}]
  %s6 = inlined_call_operand.vmem [shape: f32[1,512], index: 6, kind: input, shape index: {}]
  %s7 = inlined_call_operand.hbm [shape: f32[128,128], index: 7, kind: input, shape index: {}]
  %s8 = inlined_call_operand.vmem [shape: f32[1,128], index: 8, kind: input, shape index: {}]
  %s9 = inlined_call_operand.hbm [shape: f32[128,128], index: 9, kind: input, shape index: {}]
  %s10 = inlined_call_operand.vmem [shape: f32[8,128], index: 10, kind: output, shape index: {0}]
  %s11 = inlined_call_operand.vmem [shape: f32[1,128], index: 11, kind: output, shape index: {1}]
  %s12 = inlined_call_operand.vmem [shape: f32[1,128], index: 12, kind: output, shape index: {2}]
  %13 = xla_tuple %s10, %s11, %s12
  %s14 = sld [smem:[#allocation0]]
  $region94: #{_bilstm_crf_device.1} parent=0
    _
  %s16 = ssub.s32 1, %s14
  %s17 = scalar_select 0, %s16, %s14
  $region1: #{_bilstm_crf_device.1} parent=0
    #allocation7 [shape = 'u8[4096]{0}', space=vmem, size = 0x1000, scoped, tag = 'input window, operand 0, single buffered']
    #allocation8 [shape = 's32[1]{0}', space=sflag, size = 0x4, scoped, tag = 'scoped memory for _bilstm_crf_device.1']
    #allocation9 [shape = 'u8[65536]{0}', space=vmem, size = 0x10000, scoped, tag = 'input window, operand 1, single buffered']
    #allocation10 [shape = 's32[1]{0}', space=sflag, size = 0x4, scoped, tag = 'scoped memory for _bilstm_crf_device.1']
    #allocation11 [shape = 'u8[262144]{0}', space=vmem, size = 0x40000, scoped, tag = 'input window, operand 2, single buffered']
    #allocation12 [shape = 'u8[262144]{0}', space=vmem, size = 0x40000, scoped, tag = 'input window, operand 4, single buffered']
    #allocation13 [shape = 's32[1]{0}', space=sflag, size = 0x4, scoped, tag = 'scoped memory for _bilstm_crf_device.1']
    #allocation14 [shape = 'u8[262144]{0}', space=vmem, size = 0x40000, scoped, tag = 'input window, operand 5, single buffered']
    #allocation15 [shape = 'u8[65536]{0}', space=vmem, size = 0x10000, scoped, tag = 'input window, operand 7, single buffered']
    #allocation16 [shape = 's32[1]{0}', space=sflag, size = 0x4, scoped, tag = 'scoped memory for _bilstm_crf_device.1']
    #allocation17 [shape = 'u8[65536]{0}', space=vmem, size = 0x10000, scoped, tag = 'input window, operand 9, single buffered']
    %18 = vsyncpa [#allocation8], 0
    %19 = vsyncpa [#allocation10], 0
    %20 = vsyncpa [#allocation13], 0
    %21 = vsyncpa [#allocation16], 0
    // Predicated region
    $region2: #{_bilstm_crf_device.1} parent=1 // pred_check
      _
    $region3: #{_bilstm_crf_device.1} parent=1 // pred_check_branch
      %23 = sbr.rel (0) target = $region5
    $region4: #{_bilstm_crf_device.1} parent=1 // pred_region
      %s25 = ssub.s32 128, 128
      %26 = vsyncadd [#allocation8], %s25
      %s28 = sshll.u32 [#allocation7], 4
      %s29 = int_to_ptr.vmem [resolvable:$true] %s28
      %31 = dma.hbm_to_vmem [thread:$0]  %s0, 128, %s29, [#allocation8]
    $region5: #{_bilstm_crf_device.1} parent=1 // pred_fallthru
      _
    // Predicated region
    $region6: #{_bilstm_crf_device.1} parent=1 // pred_check
      _
    $region7: #{_bilstm_crf_device.1} parent=1 // pred_check_branch
      %33 = sbr.rel (0) target = $region9
    $region8: #{_bilstm_crf_device.1} parent=1 // pred_region
      %s35 = ssub.s32 2048, 2048
      %36 = vsyncadd [#allocation10], %s35
      %s37 = sshll.u32 [#allocation9], 4
      %s38 = int_to_ptr.vmem [resolvable:$true] %s37
      %43 = dma.hbm_to_vmem [thread:$0]  %s1, 2048, %s38, [#allocation10], 512, 512, 32
    $region9: #{_bilstm_crf_device.1} parent=1 // pred_fallthru
      _
    // Predicated region
    $region10: #{_bilstm_crf_device.1} parent=1 // pred_check
      _
    $region11: #{_bilstm_crf_device.1} parent=1 // pred_check_branch
      %45 = sbr.rel (0) target = $region13
    $region12: #{_bilstm_crf_device.1} parent=1 // pred_region
      %s47 = ssub.s32 8192, 8192
      %48 = vsyncadd [#allocation10], %s47
      %s49 = sshll.u32 [#allocation11], 4
      %s50 = int_to_ptr.vmem [resolvable:$true] %s49
      %55 = dma.hbm_to_vmem [thread:$0]  %s2, 8192, %s50, [#allocation10], 512, 512, 32
    $region13: #{_bilstm_crf_device.1} parent=1 // pred_fallthru
      _
    // Predicated region
    $region14: #{_bilstm_crf_device.1} parent=1 // pred_check
      _
    $region15: #{_bilstm_crf_device.1} parent=1 // pred_check_branch
      %57 = sbr.rel (0) target = $region17
    $region16: #{_bilstm_crf_device.1} parent=1 // pred_region
      _
    $region17: #{_bilstm_crf_device.1} parent=1 // pred_fallthru
      _
    // Predicated region
    $region18: #{_bilstm_crf_device.1} parent=1 // pred_check
      _
    $region19: #{_bilstm_crf_device.1} parent=1 // pred_check_branch
      %59 = sbr.rel (0) target = $region21
    $region20: #{_bilstm_crf_device.1} parent=1 // pred_region
      %s61 = ssub.s32 8192, 8192
      %62 = vsyncadd [#allocation13], %s61
      %s63 = sshll.u32 [#allocation12], 4
      %s64 = int_to_ptr.vmem [resolvable:$true] %s63
      %69 = dma.hbm_to_vmem [thread:$0]  %s4, 8192, %s64, [#allocation13], 512, 512, 32
    $region21: #{_bilstm_crf_device.1} parent=1 // pred_fallthru
      _
    // Predicated region
    $region22: #{_bilstm_crf_device.1} parent=1 // pred_check
      _
    $region23: #{_bilstm_crf_device.1} parent=1 // pred_check_branch
      %71 = sbr.rel (0) target = $region25
    $region24: #{_bilstm_crf_device.1} parent=1 // pred_region
      %s73 = ssub.s32 8192, 8192
      %74 = vsyncadd [#allocation13], %s73
      %s75 = sshll.u32 [#allocation14], 4
      %s76 = int_to_ptr.vmem [resolvable:$true] %s75
      %81 = dma.hbm_to_vmem [thread:$0]  %s5, 8192, %s76, [#allocation13], 512, 512, 32
    $region25: #{_bilstm_crf_device.1} parent=1 // pred_fallthru
      _
    // Predicated region
    $region26: #{_bilstm_crf_device.1} parent=1 // pred_check
      _
    $region27: #{_bilstm_crf_device.1} parent=1 // pred_check_branch
      %83 = sbr.rel (0) target = $region29
    $region28: #{_bilstm_crf_device.1} parent=1 // pred_region
      _
    $region29: #{_bilstm_crf_device.1} parent=1 // pred_fallthru
      _
    // Predicated region
    $region30: #{_bilstm_crf_device.1} parent=1 // pred_check
      _
    $region31: #{_bilstm_crf_device.1} parent=1 // pred_check_branch
      %85 = sbr.rel (0) target = $region33
    $region32: #{_bilstm_crf_device.1} parent=1 // pred_region
      %s87 = ssub.s32 2048, 2048
      %88 = vsyncadd [#allocation16], %s87
      %s89 = sshll.u32 [#allocation15], 4
      %s90 = int_to_ptr.vmem [resolvable:$true] %s89
      %95 = dma.hbm_to_vmem [thread:$0]  %s7, 2048, %s90, [#allocation16], 128, 128, 8
    $region33: #{_bilstm_crf_device.1} parent=1 // pred_fallthru
      _
    // Predicated region
    $region34: #{_bilstm_crf_device.1} parent=1 // pred_check
      _
    $region35: #{_bilstm_crf_device.1} parent=1 // pred_check_branch
      %97 = sbr.rel (0) target = $region37
    $region36: #{_bilstm_crf_device.1} parent=1 // pred_region
      _
    $region37: #{_bilstm_crf_device.1} parent=1 // pred_fallthru
      _
    // Predicated region
    $region38: #{_bilstm_crf_device.1} parent=1 // pred_check
      _
    $region39: #{_bilstm_crf_device.1} parent=1 // pred_check_branch
      %99 = sbr.rel (0) target = $region41
    $region40: #{_bilstm_crf_device.1} parent=1 // pred_region
      %s101 = ssub.s32 2048, 2048
      %102 = vsyncadd [#allocation16], %s101
      %s103 = sshll.u32 [#allocation17], 4
      %s104 = int_to_ptr.vmem [resolvable:$true] %s103
      %109 = dma.hbm_to_vmem [thread:$0]  %s9, 2048, %s104, [#allocation16], 128, 128, 8
    $region41: #{_bilstm_crf_device.1} parent=1 // pred_fallthru
      _
    // Predicated region
    $region42: #{_bilstm_crf_device.1} parent=1 // pred_check
      _
    $region43: #{_bilstm_crf_device.1} parent=1 // pred_check_branch
      %111 = sbr.rel (0) target = $region45
    $region44: #{_bilstm_crf_device.1} parent=1 // pred_region
      %112 = dma.done [#allocation8], 128
    $region45: #{_bilstm_crf_device.1} parent=1 // pred_fallthru
      _
    // Predicated region
    $region46: #{_bilstm_crf_device.1} parent=1 // pred_check
      _
    $region47: #{_bilstm_crf_device.1} parent=1 // pred_check_branch
      %114 = sbr.rel (0) target = $region49
    $region48: #{_bilstm_crf_device.1} parent=1 // pred_region
      %115 = dma.done [#allocation10], 2048
    $region49: #{_bilstm_crf_device.1} parent=1 // pred_fallthru
      _
    // Predicated region
    $region50: #{_bilstm_crf_device.1} parent=1 // pred_check
      _
    $region51: #{_bilstm_crf_device.1} parent=1 // pred_check_branch
      %117 = sbr.rel (0) target = $region53
    $region52: #{_bilstm_crf_device.1} parent=1 // pred_region
      %118 = dma.done [#allocation10], 8192
    $region53: #{_bilstm_crf_device.1} parent=1 // pred_fallthru
      _
    // Predicated region
    $region54: #{_bilstm_crf_device.1} parent=1 // pred_check
      _
    $region55: #{_bilstm_crf_device.1} parent=1 // pred_check_branch
      %120 = sbr.rel (0) target = $region57
    $region56: #{_bilstm_crf_device.1} parent=1 // pred_region
      %121 = dma.done [#allocation13], 8192
    $region57: #{_bilstm_crf_device.1} parent=1 // pred_fallthru
      _
    // Predicated region
    $region58: #{_bilstm_crf_device.1} parent=1 // pred_check
      _
    $region59: #{_bilstm_crf_device.1} parent=1 // pred_check_branch
      %123 = sbr.rel (0) target = $region61
    $region60: #{_bilstm_crf_device.1} parent=1 // pred_region
      %124 = dma.done [#allocation13], 8192
    $region61: #{_bilstm_crf_device.1} parent=1 // pred_fallthru
      _
    // Predicated region
    $region62: #{_bilstm_crf_device.1} parent=1 // pred_check
      _
    $region63: #{_bilstm_crf_device.1} parent=1 // pred_check_branch
      %126 = sbr.rel (0) target = $region65
    $region64: #{_bilstm_crf_device.1} parent=1 // pred_region
      %127 = dma.done [#allocation16], 2048
    $region65: #{_bilstm_crf_device.1} parent=1 // pred_fallthru
      _
    // Predicated region
    $region66: #{_bilstm_crf_device.1} parent=1 // pred_check
      _
    $region67: #{_bilstm_crf_device.1} parent=1 // pred_check_branch
      %129 = sbr.rel (0) target = $region69
    $region68: #{_bilstm_crf_device.1} parent=1 // pred_region
      %130 = dma.done [#allocation16], 2048
    $region69: #{_bilstm_crf_device.1} parent=1 // pred_fallthru
      _
    %v131 = vlaneseq
    %v132 = vand.u32 %v131, 127
    %v133 = vadd.s32 %v132, 128
    %v134 = vadd.s32 %v132, 256
    %v135 = vadd.s32 %v132, 384
    %vm136 = vcmp.lt.s32.totalorder %v132, 0
    %v137 = vsub.s32 0, %v132
    %v138 = vsel %vm136, %v137, %v132
    %v139 = vshrl.u32 %v138, 7
    %v140 = vand.u32 %v138, 127
    %v141 = vsub.s32 0, %v140
    %v142 = vsel %vm136, %v141, %v140
    %vm143 = vcmp.lt.s32.totalorder %v133, 0
    %v144 = vsub.s32 0, %v133
    %v145 = vsel %vm143, %v144, %v133
    %v146 = vshrl.u32 %v145, 7
    %v147 = vand.u32 %v145, 127
    %v148 = vsub.s32 0, %v147
    %v149 = vsel %vm143, %v148, %v147
    %vm150 = vcmp.lt.s32.totalorder %v134, 0
    %v151 = vsub.s32 0, %v134
    %v152 = vsel %vm150, %v151, %v134
    %v153 = vshrl.u32 %v152, 7
    %v154 = vand.u32 %v152, 127
    %v155 = vsub.s32 0, %v154
    %v156 = vsel %vm150, %v155, %v154
    %vm157 = vcmp.lt.s32.totalorder %v135, 0
    %v158 = vsub.s32 0, %v135
    %v159 = vsel %vm157, %v158, %v135
    %v160 = vshrl.u32 %v159, 7
    %v161 = vand.u32 %v159, 127
    %v162 = vsub.s32 0, %v161
    %v163 = vsel %vm157, %v162, %v161
    %vm164 = vcmp.ne.s32.totalorder %v142, 0
    %vm165 = vcmp.ne.s32.totalorder %v149, 0
    %vm166 = vcmp.ne.s32.totalorder %v156, 0
    %vm167 = vcmp.ne.s32.totalorder %v163, 0
    %vm168 = vcmp.lt.s32.totalorder %v142, 0
    %vm169 = vcmp.lt.s32.totalorder %v149, 0
    %vm170 = vcmp.lt.s32.totalorder %v156, 0
    %vm171 = vcmp.lt.s32.totalorder %v163, 0
    %vm172 = vmand %vm168, %vm164
    %vm173 = vmand %vm169, %vm165
    %vm174 = vmand %vm170, %vm166
    %vm175 = vmand %vm171, %vm167
    %v176 = vadd.s32 %v142, 128
    %v177 = vadd.s32 %v149, 128
    %v178 = vadd.s32 %v156, 128
    %v179 = vadd.s32 %v163, 128
    %v180 = vsel %vm172, %v176, %v142
    %v181 = vsel %vm173, %v177, %v149
    %v182 = vsel %vm174, %v178, %v156
    %v183 = vsel %vm175, %v179, %v163
    %vm184 = vcmp.lt.s32.totalorder %v180, 32
    %vm185 = vcmp.lt.s32.totalorder %v181, 32
    %vm186 = vcmp.lt.s32.totalorder %v182, 32
    %vm187 = vcmp.lt.s32.totalorder %v183, 32
    %vm188 = vcmp.lt.s32.totalorder %v132, 32
    %v189 = vcvt.s32.f32 %v132
    %v190 = vld [vmem:[#allocation7] sm:$0xff]
    %v191 = vld [vmem:[#allocation9] sm:$0xff]
    %v192 = vld [vmem:[#allocation9 + $0x8] sm:$0xff]
    %v193 = vld [vmem:[#allocation9 + $0x10] sm:$0xff]
    %v194 = vld [vmem:[#allocation9 + $0x18] sm:$0xff]
    %v195 = vld [vmem:[#allocation9 + $0x20] sm:$0xff]
    %v196 = vld [vmem:[#allocation9 + $0x28] sm:$0xff]
    %v197 = vld [vmem:[#allocation9 + $0x30] sm:$0xff]
    %v198 = vld [vmem:[#allocation9 + $0x38] sm:$0xff]
    %v199 = vld [vmem:[#allocation9 + $0x40] sm:$0xff]
    %v200 = vld [vmem:[#allocation9 + $0x48] sm:$0xff]
    %v201 = vld [vmem:[#allocation9 + $0x50] sm:$0xff]
    %v202 = vld [vmem:[#allocation9 + $0x58] sm:$0xff]
    %v203 = vld [vmem:[#allocation9 + $0x60] sm:$0xff]
    %v204 = vld [vmem:[#allocation9 + $0x68] sm:$0xff]
    %v205 = vld [vmem:[#allocation9 + $0x70] sm:$0xff]
    %v206 = vld [vmem:[#allocation9 + $0x78] sm:$0xff]
    %v207 = vld [vmem:[%s3] sm:$0xf]
    %v209 = vlaneseq
    %v210 = vshrl.u32 %v209, 7
    %v211 = vsub.s32 0, %v210
    %v212 = vrot.slane %v207, %v211
    %v213 = vlaneseq
    %v214 = vshrl.u32 %v213, 7
    %v215 = vsub.s32 1, %v214
    %v216 = vrot.slane %v207, %v215
    %v217 = vlaneseq
    %v218 = vshrl.u32 %v217, 7
    %v219 = vsub.s32 2, %v218
    %v220 = vrot.slane %v207, %v219
    %v221 = vlaneseq
    %v222 = vshrl.u32 %v221, 7
    %v223 = vsub.s32 3, %v222
    %v224 = vrot.slane %v207, %v223
    %vm229 = vcmask 261120
    %v231 = vsel %vm229, %v190, 0
    %233 = vmatprep.subr.mxu0 %v192
    %234 = vmatpush1.msra.mxu0 %v191
    %235 = vmatprep.subr.mxu0 %v196
    %236 = vmatpush1.msra.mxu0 %v195
    %237 = vmatprep.subr.mxu0 %v200
    %238 = vmatpush1.msra.mxu0 %v199
    %239 = vmatprep.subr.mxu0 %v204
    %240 = vmatpush1.msra.mxu0 %v203
    %241 = vmatprep.subr.mxu0 0.0
    %242 = vmatpush1.msra.mxu0 0.0
    %243 = vmatprep.subr.mxu0 0.0
    %244 = vmatpush1.msra.mxu0 0.0
    %245 = vmatprep.subr.mxu0 0.0
    %246 = vmatpush1.msra.mxu0 0.0
    %247 = vmatprep.subr.mxu0 0.0
    %248 = vmatpush1.msra.mxu0 0.0
    %249 = vmatprep.subr.mxu0 0.0
    %250 = vmatpush1.msra.mxu0 0.0
    %251 = vmatprep.subr.mxu0 0.0
    %252 = vmatpush1.msra.mxu0 0.0
    %253 = vmatprep.subr.mxu0 0.0
    %254 = vmatpush1.msra.mxu0 0.0
    %255 = vmatprep.subr.mxu0 0.0
    %256 = vmatpush1.msra.mxu0 0.0
    %257 = vmatprep.subr.mxu0 0.0
    %258 = vmatpush1.msra.mxu0 0.0
    %259 = vmatprep.subr.mxu0 0.0
    %260 = vmatpush1.msra.mxu0 0.0
    %261 = vmatprep.subr.mxu0 0.0
    %262 = vmatpush1.msra.mxu0 0.0
    %263 = vmatprep.subr.mxu0 0.0
    %264 = vmatpush1.msra.mxu0 0.0
    %265 = vmatprep.subr.mxu0 0.0
    %266 = vmatpush1.msra.mxu0 0.0
    %267 = vmatprep.subr.mxu0 0.0
    %268 = vmatpush1.msra.mxu0 0.0
    %269 = vmatprep.subr.mxu0 0.0
    %270 = vmatpush1.msra.mxu0 0.0
    %271 = vmatprep.subr.mxu0 0.0
    %272 = vmatpush1.msra.mxu0 0.0
    %273 = vmatprep.subr.mxu0 0.0
    %274 = vmatpush1.msra.mxu0 0.0
    %275 = vmatprep.subr.mxu0 0.0
    %276 = vmatpush1.msra.mxu0 0.0
    %277 = vmatprep.subr.mxu0 0.0
    %278 = vmatpush1.msra.mxu0 0.0
    %279 = vmatprep.subr.mxu0 0.0
    %280 = vmatpush1.msra.mxu0 0.0
    %281 = vmatprep.subr.mxu0 0.0
    %282 = vmatpush1.msra.mxu0 0.0
    %283 = vmatprep.subr.mxu0 0.0
    %284 = vmatpush1.msra.mxu0 0.0
    %285 = vmatprep.subr.mxu0 0.0
    %286 = vmatpush1.msra.mxu0 0.0
    %287 = vmatprep.subr.mxu0 0.0
    %288 = vmatpush1.msra.mxu0 0.0
    %289 = vmatprep.subr.mxu0 0.0
    %290 = vmatpush1.msra.mxu0 0.0
    %291 = vmatprep.subr.mxu0 0.0
    %292 = vmatpush1.msra.mxu0 0.0
    %293 = vmatprep.subr.mxu0 0.0
    %294 = vmatpush1.msra.mxu0 0.0
    %295 = vmatprep.subr.mxu0 0.0
    %296 = vmatpush1.msra.mxu0 0.0
    %297 = vmatprep.mubr.f32.mxu0 0.0
    %298 = vmatmul.mubr.f32.gmra.mrb[0].mxu0 %v231
    %v299 = vpop.f32.mrb[0].mxu0
    %v300 = vadd.f32 %v212, %v299
    %v301 = vpop.f32.mrb[0].mxu0
    %v302 = vadd.f32 %v216, %v301
    %303 = vdwg.mxu0
    %304 = vmatprep.subr.mxu0 %v194
    %305 = vmatpush1.msra.mxu0 %v193
    %306 = vmatprep.subr.mxu0 %v198
    %307 = vmatpush1.msra.mxu0 %v197
    %308 = vmatprep.subr.mxu0 %v202
    %309 = vmatpush1.msra.mxu0 %v201
    %310 = vmatprep.subr.mxu0 %v206
    %311 = vmatpush1.msra.mxu0 %v205
    %312 = vmatprep.subr.mxu0 0.0
    %313 = vmatpush1.msra.mxu0 0.0
    %314 = vmatprep.subr.mxu0 0.0
    %315 = vmatpush1.msra.mxu0 0.0
    %316 = vmatprep.subr.mxu0 0.0
    %317 = vmatpush1.msra.mxu0 0.0
    %318 = vmatprep.subr.mxu0 0.0
    %319 = vmatpush1.msra.mxu0 0.0
    %320 = vmatprep.subr.mxu0 0.0
    %321 = vmatpush1.msra.mxu0 0.0
    %322 = vmatprep.subr.mxu0 0.0
    %323 = vmatpush1.msra.mxu0 0.0
    %324 = vmatprep.subr.mxu0 0.0
    %325 = vmatpush1.msra.mxu0 0.0
    %326 = vmatprep.subr.mxu0 0.0
    %327 = vmatpush1.msra.mxu0 0.0
    %328 = vmatprep.subr.mxu0 0.0
    %329 = vmatpush1.msra.mxu0 0.0
    %330 = vmatprep.subr.mxu0 0.0
    %331 = vmatpush1.msra.mxu0 0.0
    %332 = vmatprep.subr.mxu0 0.0
    %333 = vmatpush1.msra.mxu0 0.0
    %334 = vmatprep.subr.mxu0 0.0
    %335 = vmatpush1.msra.mxu0 0.0
    %336 = vmatprep.subr.mxu0 0.0
    %337 = vmatpush1.msra.mxu0 0.0
    %338 = vmatprep.subr.mxu0 0.0
    %339 = vmatpush1.msra.mxu0 0.0
    %340 = vmatprep.subr.mxu0 0.0
    %341 = vmatpush1.msra.mxu0 0.0
    %342 = vmatprep.subr.mxu0 0.0
    %343 = vmatpush1.msra.mxu0 0.0
    %344 = vmatprep.subr.mxu0 0.0
    %345 = vmatpush1.msra.mxu0 0.0
    %346 = vmatprep.subr.mxu0 0.0
    %347 = vmatpush1.msra.mxu0 0.0
    %348 = vmatprep.subr.mxu0 0.0
    %349 = vmatpush1.msra.mxu0 0.0
    %350 = vmatprep.subr.mxu0 0.0
    %351 = vmatpush1.msra.mxu0 0.0
    %352 = vmatprep.subr.mxu0 0.0
    %353 = vmatpush1.msra.mxu0 0.0
    %354 = vmatprep.subr.mxu0 0.0
    %355 = vmatpush1.msra.mxu0 0.0
    %356 = vmatprep.subr.mxu0 0.0
    %357 = vmatpush1.msra.mxu0 0.0
    %358 = vmatprep.subr.mxu0 0.0
    %359 = vmatpush1.msra.mxu0 0.0
    %360 = vmatprep.subr.mxu0 0.0
    %361 = vmatpush1.msra.mxu0 0.0
    %362 = vmatprep.subr.mxu0 0.0
    %363 = vmatpush1.msra.mxu0 0.0
    %364 = vmatprep.subr.mxu0 0.0
    %365 = vmatpush1.msra.mxu0 0.0
    %366 = vmatprep.subr.mxu0 0.0
    %367 = vmatpush1.msra.mxu0 0.0
    %368 = vmatprep.mubr.f32.mxu0 0.0
    %369 = vmatmul.mubr.f32.gmra.mrb[0].mxu0 %v231
    %v370 = vpop.f32.mrb[0].mxu0
    %v371 = vadd.f32 %v220, %v370
    %v372 = vpop.f32.mrb[0].mxu0
    %v373 = vadd.f32 %v224, %v372
    %374 = vdwg.mxu0
    %375 = vst [vmem:[#allocation4] sm:$0xff] %v300
    %376 = vst [vmem:[#allocation4 + $0x8] sm:$0xff] %v302
    %377 = vst [vmem:[#allocation4 + $0x10] sm:$0xff] %v371
    %378 = vst [vmem:[#allocation4 + $0x18] sm:$0xff] %v373
    %v379 = vld [vmem:[#allocation4] ss:$8 sm:$0xf]
    %s380 = scalar_lea.vmem [#allocation4], 7
    %v381 = vld [vmem:[%s380] ss:$8 sm:$0xf]
    %v383 = vlaneseq
    %v384 = vshrl.u32 %v383, 7
    %v385 = vsub.s32 0, %v384
    %v386 = vrot.slane %v379, %v385
    %v387 = vlaneseq
    %v388 = vshrl.u32 %v387, 7
    %v389 = vsub.s32 1, %v388
    %v390 = vrot.slane %v379, %v389
    %v391 = vlaneseq
    %v392 = vshrl.u32 %v391, 7
    %v393 = vsub.s32 2, %v392
    %v394 = vrot.slane %v379, %v393
    %v395 = vlaneseq
    %v396 = vshrl.u32 %v395, 7
    %v397 = vsub.s32 3, %v396
    %v398 = vrot.slane %v379, %v397
    %v404 = vlaneseq
    %v405 = vshrl.u32 %v404, 7
    %v406 = vsub.s32 0, %v405
    %v407 = vrot.slane %v381, %v406
    %v408 = vlaneseq
    %v409 = vshrl.u32 %v408, 7
    %v410 = vsub.s32 1, %v409
    %v411 = vrot.slane %v381, %v410
    %v412 = vlaneseq
    %v413 = vshrl.u32 %v412, 7
    %v414 = vsub.s32 2, %v413
    %v415 = vrot.slane %v381, %v414
    %v416 = vlaneseq
    %v417 = vshrl.u32 %v416, 7
    %v418 = vsub.s32 3, %v417
    %v419 = vrot.slane %v381, %v418
    %v424 = vsel %vm184, %v386, %v407
    %v425 = vsel %vm185, %v390, %v411
    %v426 = vsel %vm186, %v394, %v415
    %v427 = vsel %vm187, %v398, %v419
    %v428 = vld [vmem:[#allocation11] sm:$0xff]
    %v429 = vld [vmem:[#allocation11 + $0x8] sm:$0xff]
    %v430 = vld [vmem:[#allocation11 + $0x10] sm:$0xff]
    %v431 = vld [vmem:[#allocation11 + $0x18] sm:$0xff]
    %v432 = vld [vmem:[#allocation11 + $0x20] sm:$0xff]
    %v433 = vld [vmem:[#allocation11 + $0x28] sm:$0xff]
    %v434 = vld [vmem:[#allocation11 + $0x30] sm:$0xff]
    %v435 = vld [vmem:[#allocation11 + $0x38] sm:$0xff]
    %v436 = vld [vmem:[#allocation11 + $0x40] sm:$0xff]
    %v437 = vld [vmem:[#allocation11 + $0x48] sm:$0xff]
    %v438 = vld [vmem:[#allocation11 + $0x50] sm:$0xff]
    %v439 = vld [vmem:[#allocation11 + $0x58] sm:$0xff]
    %v440 = vld [vmem:[#allocation11 + $0x60] sm:$0xff]
    %v441 = vld [vmem:[#allocation11 + $0x68] sm:$0xff]
    %v442 = vld [vmem:[#allocation11 + $0x70] sm:$0xff]
    %v443 = vld [vmem:[#allocation11 + $0x78] sm:$0xff]
    %v444 = vld [vmem:[#allocation11 + $0x80] sm:$0xff]
    %v445 = vld [vmem:[#allocation11 + $0x88] sm:$0xff]
    %v446 = vld [vmem:[#allocation11 + $0x90] sm:$0xff]
    %v447 = vld [vmem:[#allocation11 + $0x98] sm:$0xff]
    %v448 = vld [vmem:[#allocation11 + $0xa0] sm:$0xff]
    %v449 = vld [vmem:[#allocation11 + $0xa8] sm:$0xff]
    %v450 = vld [vmem:[#allocation11 + $0xb0] sm:$0xff]
    %v451 = vld [vmem:[#allocation11 + $0xb8] sm:$0xff]
    %v452 = vld [vmem:[#allocation11 + $0xc0] sm:$0xff]
    %v453 = vld [vmem:[#allocation11 + $0xc8] sm:$0xff]
    %v454 = vld [vmem:[#allocation11 + $0xd0] sm:$0xff]
    %v455 = vld [vmem:[#allocation11 + $0xd8] sm:$0xff]
    %v456 = vld [vmem:[#allocation11 + $0xe0] sm:$0xff]
    %v457 = vld [vmem:[#allocation11 + $0xe8] sm:$0xff]
    %v458 = vld [vmem:[#allocation11 + $0xf0] sm:$0xff]
    %v459 = vld [vmem:[#allocation11 + $0xf8] sm:$0xff]
    %v460 = vld [vmem:[#allocation11 + $0x100] sm:$0xff]
    %v461 = vld [vmem:[#allocation11 + $0x108] sm:$0xff]
    %v462 = vld [vmem:[#allocation11 + $0x110] sm:$0xff]
    %v463 = vld [vmem:[#allocation11 + $0x118] sm:$0xff]
    %v464 = vld [vmem:[#allocation11 + $0x120] sm:$0xff]
    %v465 = vld [vmem:[#allocation11 + $0x128] sm:$0xff]
    %v466 = vld [vmem:[#allocation11 + $0x130] sm:$0xff]
    %v467 = vld [vmem:[#allocation11 + $0x138] sm:$0xff]
    %v468 = vld [vmem:[#allocation11 + $0x140] sm:$0xff]
    %v469 = vld [vmem:[#allocation11 + $0x148] sm:$0xff]
    %v470 = vld [vmem:[#allocation11 + $0x150] sm:$0xff]
    %v471 = vld [vmem:[#allocation11 + $0x158] sm:$0xff]
    %v472 = vld [vmem:[#allocation11 + $0x160] sm:$0xff]
    %v473 = vld [vmem:[#allocation11 + $0x168] sm:$0xff]
    %v474 = vld [vmem:[#allocation11 + $0x170] sm:$0xff]
    %v475 = vld [vmem:[#allocation11 + $0x178] sm:$0xff]
    %v476 = vld [vmem:[#allocation11 + $0x180] sm:$0xff]
    %v477 = vld [vmem:[#allocation11 + $0x188] sm:$0xff]
    %v478 = vld [vmem:[#allocation11 + $0x190] sm:$0xff]
    %v479 = vld [vmem:[#allocation11 + $0x198] sm:$0xff]
    %v480 = vld [vmem:[#allocation11 + $0x1a0] sm:$0xff]
    %v481 = vld [vmem:[#allocation11 + $0x1a8] sm:$0xff]
    %v482 = vld [vmem:[#allocation11 + $0x1b0] sm:$0xff]
    %v483 = vld [vmem:[#allocation11 + $0x1b8] sm:$0xff]
    %v484 = vld [vmem:[#allocation11 + $0x1c0] sm:$0xff]
    %v485 = vld [vmem:[#allocation11 + $0x1c8] sm:$0xff]
    %v486 = vld [vmem:[#allocation11 + $0x1d0] sm:$0xff]
    %v487 = vld [vmem:[#allocation11 + $0x1d8] sm:$0xff]
    %v488 = vld [vmem:[#allocation11 + $0x1e0] sm:$0xff]
    %v489 = vld [vmem:[#allocation11 + $0x1e8] sm:$0xff]
    %v490 = vld [vmem:[#allocation11 + $0x1f0] sm:$0xff]
    %v491 = vld [vmem:[#allocation11 + $0x1f8] sm:$0xff]
    %492 = vmatprep.subr.mxu0 %v429
    %493 = vmatpush1.msra.mxu0 %v428
    %494 = vmatprep.subr.mxu0 %v433
    %495 = vmatpush1.msra.mxu0 %v432
    %496 = vmatprep.subr.mxu0 %v437
    %497 = vmatpush1.msra.mxu0 %v436
    %498 = vmatprep.subr.mxu0 %v441
    %499 = vmatpush1.msra.mxu0 %v440
    %500 = vmatprep.subr.mxu0 %v445
    %501 = vmatpush1.msra.mxu0 %v444
    %502 = vmatprep.subr.mxu0 %v449
    %503 = vmatpush1.msra.mxu0 %v448
    %504 = vmatprep.subr.mxu0 %v453
    %505 = vmatpush1.msra.mxu0 %v452
    %506 = vmatprep.subr.mxu0 %v457
    %507 = vmatpush1.msra.mxu0 %v456
    %508 = vmatprep.subr.mxu0 %v461
    %509 = vmatpush1.msra.mxu0 %v460
    %510 = vmatprep.subr.mxu0 %v465
    %511 = vmatpush1.msra.mxu0 %v464
    %512 = vmatprep.subr.mxu0 %v469
    %513 = vmatpush1.msra.mxu0 %v468
    %514 = vmatprep.subr.mxu0 %v473
    %515 = vmatpush1.msra.mxu0 %v472
    %516 = vmatprep.subr.mxu0 %v477
    %517 = vmatpush1.msra.mxu0 %v476
    %518 = vmatprep.subr.mxu0 %v481
    %519 = vmatpush1.msra.mxu0 %v480
    %520 = vmatprep.subr.mxu0 %v485
    %521 = vmatpush1.msra.mxu0 %v484
    %522 = vmatprep.subr.mxu0 %v489
    %523 = vmatpush1.msra.mxu0 %v488
    %524 = vmatprep.subr.mxu0 0.0
    %525 = vmatpush1.msra.mxu0 0.0
    %526 = vmatprep.subr.mxu0 0.0
    %527 = vmatpush1.msra.mxu0 0.0
    %528 = vmatprep.subr.mxu0 0.0
    %529 = vmatpush1.msra.mxu0 0.0
    %530 = vmatprep.subr.mxu0 0.0
    %531 = vmatpush1.msra.mxu0 0.0
    %532 = vmatprep.subr.mxu0 0.0
    %533 = vmatpush1.msra.mxu0 0.0
    %534 = vmatprep.subr.mxu0 0.0
    %535 = vmatpush1.msra.mxu0 0.0
    %536 = vmatprep.subr.mxu0 0.0
    %537 = vmatpush1.msra.mxu0 0.0
    %538 = vmatprep.subr.mxu0 0.0
    %539 = vmatpush1.msra.mxu0 0.0
    %540 = vmatprep.subr.mxu0 0.0
    %541 = vmatpush1.msra.mxu0 0.0
    %542 = vmatprep.subr.mxu0 0.0
    %543 = vmatpush1.msra.mxu0 0.0
    %544 = vmatprep.subr.mxu0 0.0
    %545 = vmatpush1.msra.mxu0 0.0
    %546 = vmatprep.subr.mxu0 0.0
    %547 = vmatpush1.msra.mxu0 0.0
    %548 = vmatprep.subr.mxu0 0.0
    %549 = vmatpush1.msra.mxu0 0.0
    %550 = vmatprep.subr.mxu0 0.0
    %551 = vmatpush1.msra.mxu0 0.0
    %552 = vmatprep.subr.mxu0 0.0
    %553 = vmatpush1.msra.mxu0 0.0
    %554 = vmatprep.subr.mxu0 0.0
    %555 = vmatpush1.msra.mxu0 0.0
    %556 = vmatprep.mubr.f32.mxu0 0.0
    %557 = vmatmul.mubr.f32.gmra.mrb[0].mxu0 0.0
    %v558 = vpop.f32.mrb[0].mxu0
    %v559 = vadd.f32 0.0, %v558
    %v560 = vpop.f32.mrb[0].mxu0
    %v561 = vadd.f32 0.0, %v560
    %562 = vdwg.mxu0
    %563 = vmatprep.subr.mxu0 %v431
    %564 = vmatpush1.msra.mxu0 %v430
    %565 = vmatprep.subr.mxu0 %v435
    %566 = vmatpush1.msra.mxu0 %v434
    %567 = vmatprep.subr.mxu0 %v439
    %568 = vmatpush1.msra.mxu0 %v438
    %569 = vmatprep.subr.mxu0 %v443
    %570 = vmatpush1.msra.mxu0 %v442
    %571 = vmatprep.subr.mxu0 %v447
    %572 = vmatpush1.msra.mxu0 %v446
    %573 = vmatprep.subr.mxu0 %v451
    %574 = vmatpush1.msra.mxu0 %v450
    %575 = vmatprep.subr.mxu0 %v455
    %576 = vmatpush1.msra.mxu0 %v454
    %577 = vmatprep.subr.mxu0 %v459
    %578 = vmatpush1.msra.mxu0 %v458
    %579 = vmatprep.subr.mxu0 %v463
    %580 = vmatpush1.msra.mxu0 %v462
    %581 = vmatprep.subr.mxu0 %v467
    %582 = vmatpush1.msra.mxu0 %v466
    %583 = vmatprep.subr.mxu0 %v471
    %584 = vmatpush1.msra.mxu0 %v470
    %585 = vmatprep.subr.mxu0 %v475
    %586 = vmatpush1.msra.mxu0 %v474
    %587 = vmatprep.subr.mxu0 %v479
    %588 = vmatpush1.msra.mxu0 %v478
    %589 = vmatprep.subr.mxu0 %v483
    %590 = vmatpush1.msra.mxu0 %v482
    %591 = vmatprep.subr.mxu0 %v487
    %592 = vmatpush1.msra.mxu0 %v486
    %593 = vmatprep.subr.mxu0 %v491
    %594 = vmatpush1.msra.mxu0 %v490
    %595 = vmatprep.subr.mxu0 0.0
    %596 = vmatpush1.msra.mxu0 0.0
    %597 = vmatprep.subr.mxu0 0.0
    %598 = vmatpush1.msra.mxu0 0.0
    %599 = vmatprep.subr.mxu0 0.0
    %600 = vmatpush1.msra.mxu0 0.0
    %601 = vmatprep.subr.mxu0 0.0
    %602 = vmatpush1.msra.mxu0 0.0
    %603 = vmatprep.subr.mxu0 0.0
    %604 = vmatpush1.msra.mxu0 0.0
    %605 = vmatprep.subr.mxu0 0.0
    %606 = vmatpush1.msra.mxu0 0.0
    %607 = vmatprep.subr.mxu0 0.0
    %608 = vmatpush1.msra.mxu0 0.0
    %609 = vmatprep.subr.mxu0 0.0
    %610 = vmatpush1.msra.mxu0 0.0
    %611 = vmatprep.subr.mxu0 0.0
    %612 = vmatpush1.msra.mxu0 0.0
    %613 = vmatprep.subr.mxu0 0.0
    %614 = vmatpush1.msra.mxu0 0.0
    %615 = vmatprep.subr.mxu0 0.0
    %616 = vmatpush1.msra.mxu0 0.0
    %617 = vmatprep.subr.mxu0 0.0
    %618 = vmatpush1.msra.mxu0 0.0
    %619 = vmatprep.subr.mxu0 0.0
    %620 = vmatpush1.msra.mxu0 0.0
    %621 = vmatprep.subr.mxu0 0.0
    %622 = vmatpush1.msra.mxu0 0.0
    %623 = vmatprep.subr.mxu0 0.0
    %624 = vmatpush1.msra.mxu0 0.0
    %625 = vmatprep.subr.mxu0 0.0
    %626 = vmatpush1.msra.mxu0 0.0
    %627 = vmatprep.mubr.f32.mxu0 0.0
    %628 = vmatmul.mubr.f32.gmra.mrb[0].mxu0 0.0
    %v629 = vpop.f32.mrb[0].mxu0
    %v630 = vadd.f32 0.0, %v629
    %v631 = vpop.f32.mrb[0].mxu0
    %v632 = vadd.f32 0.0, %v631
    %633 = vdwg.mxu0
    %v634 = vadd.f32 %v424, %v559
    %v635 = vadd.f32 %v425, %v561
    %v636 = vadd.f32 %v426, %v630
    %v637 = vadd.f32 %v427, %v632
    %v638 = vxor.u32 %v634, 2147483648
    %v639 = vmul.f32 %v638, 1.442695
    %v640 = vpow.pop %v639
    %v641 = vadd.f32 %v640, 1.0
    %v642 = vrcp.pop %v641
    %v643 = vmul.f32 1.0, %v642
    %v644 = vxor.u32 %v635, 2147483648
    %v645 = vmul.f32 %v644, 1.442695
    %v646 = vpow.pop %v645
    %v647 = vadd.f32 %v646, 1.0
    %v648 = vrcp.pop %v647
    %v649 = vmul.f32 1.0, %v648
    %v650 = vtanh.pop %v636
    %v651 = vxor.u32 %v637, 2147483648
    %v652 = vmul.f32 %v651, 1.442695
    %v653 = vpow.pop %v652
    %v654 = vadd.f32 %v653, 1.0
    %v655 = vrcp.pop %v654
    %v656 = vmul.f32 1.0, %v655
    %v657 = vmul.f32 %v649, 0.0
    %v658 = vmul.f32 %v643, %v650
    %v659 = vadd.f32 %v657, %v658
    %v660 = vtanh.pop %v659
    %v661 = vmul.f32 %v656, %v660
    %662 = vst [vmem:[#allocation2] sm:$0x1] %v661
    %663 = vst [vmem:[#allocation3 + $0x7] sm:$0x1] %v661
    %s664 = scalar_lea.vmem [#allocation4], 1
    %v665 = vld [vmem:[%s664] ss:$8 sm:$0xf]
    %s666 = scalar_lea.vmem [#allocation4], 6
    %v667 = vld [vmem:[%s666] ss:$8 sm:$0xf]
    %v669 = vlaneseq
    %v670 = vshrl.u32 %v669, 7
    %v671 = vsub.s32 0, %v670
    %v672 = vrot.slane %v665, %v671
    %v673 = vlaneseq
    %v674 = vshrl.u32 %v673, 7
    %v675 = vsub.s32 1, %v674
    %v676 = vrot.slane %v665, %v675
    %v677 = vlaneseq
    %v678 = vshrl.u32 %v677, 7
    %v679 = vsub.s32 2, %v678
    %v680 = vrot.slane %v665, %v679
    %v681 = vlaneseq
    %v682 = vshrl.u32 %v681, 7
    %v683 = vsub.s32 3, %v682
    %v684 = vrot.slane %v665, %v683
    %v690 = vlaneseq
    %v691 = vshrl.u32 %v690, 7
    %v692 = vsub.s32 0, %v691
    %v693 = vrot.slane %v667, %v692
    %v694 = vlaneseq
    %v695 = vshrl.u32 %v694, 7
    %v696 = vsub.s32 1, %v695
    %v697 = vrot.slane %v667, %v696
    %v698 = vlaneseq
    %v699 = vshrl.u32 %v698, 7
    %v700 = vsub.s32 2, %v699
    %v701 = vrot.slane %v667, %v700
    %v702 = vlaneseq
    %v703 = vshrl.u32 %v702, 7
    %v704 = vsub.s32 3, %v703
    %v705 = vrot.slane %v667, %v704
    %v710 = vsel %vm184, %v672, %v693
    %v711 = vsel %vm185, %v676, %v697
    %v712 = vsel %vm186, %v680, %v701
    %v713 = vsel %vm187, %v684, %v705
    %v714 = vld [vmem:[#allocation11] sm:$0xff]
    %v715 = vld [vmem:[#allocation11 + $0x8] sm:$0xff]
    %v716 = vld [vmem:[#allocation11 + $0x10] sm:$0xff]
    %v717 = vld [vmem:[#allocation11 + $0x18] sm:$0xff]
    %v718 = vld [vmem:[#allocation11 + $0x20] sm:$0xff]
    %v719 = vld [vmem:[#allocation11 + $0x28] sm:$0xff]
    %v720 = vld [vmem:[#allocation11 + $0x30] sm:$0xff]
    %v721 = vld [vmem:[#allocation11 + $0x38] sm:$0xff]
    %v722 = vld [vmem:[#allocation11 + $0x40] sm:$0xff]
    %v723 = vld [vmem:[#allocation11 + $0x48] sm:$0xff]
    %v724 = vld [vmem:[#allocation11 + $0x50] sm:$0xff]
    %v725 = vld [vmem:[#allocation11 + $0x58] sm:$0xff]
    %v726 = vld [vmem:[#allocation11 + $0x60] sm:$0xff]
    %v727 = vld [vmem:[#allocation11 + $0x68] sm:$0xff]
    %v728 = vld [vmem:[#allocation11 + $0x70] sm:$0xff]
    %v729 = vld [vmem:[#allocation11 + $0x78] sm:$0xff]
    %v730 = vld [vmem:[#allocation11 + $0x80] sm:$0xff]
    %v731 = vld [vmem:[#allocation11 + $0x88] sm:$0xff]
    %v732 = vld [vmem:[#allocation11 + $0x90] sm:$0xff]
    %v733 = vld [vmem:[#allocation11 + $0x98] sm:$0xff]
    %v734 = vld [vmem:[#allocation11 + $0xa0] sm:$0xff]
    %v735 = vld [vmem:[#allocation11 + $0xa8] sm:$0xff]
    %v736 = vld [vmem:[#allocation11 + $0xb0] sm:$0xff]
    %v737 = vld [vmem:[#allocation11 + $0xb8] sm:$0xff]
    %v738 = vld [vmem:[#allocation11 + $0xc0] sm:$0xff]
    %v739 = vld [vmem:[#allocation11 + $0xc8] sm:$0xff]
    %v740 = vld [vmem:[#allocation11 + $0xd0] sm:$0xff]
    %v741 = vld [vmem:[#allocation11 + $0xd8] sm:$0xff]
    %v742 = vld [vmem:[#allocation11 + $0xe0] sm:$0xff]
    %v743 = vld [vmem:[#allocation11 + $0xe8] sm:$0xff]
    %v744 = vld [vmem:[#allocation11 + $0xf0] sm:$0xff]
    %v745 = vld [vmem:[#allocation11 + $0xf8] sm:$0xff]
    %v746 = vld [vmem:[#allocation11 + $0x100] sm:$0xff]
    %v747 = vld [vmem:[#allocation11 + $0x108] sm:$0xff]
    %v748 = vld [vmem:[#allocation11 + $0x110] sm:$0xff]
    %v749 = vld [vmem:[#allocation11 + $0x118] sm:$0xff]
    %v750 = vld [vmem:[#allocation11 + $0x120] sm:$0xff]
    %v751 = vld [vmem:[#allocation11 + $0x128] sm:$0xff]
    %v752 = vld [vmem:[#allocation11 + $0x130] sm:$0xff]
    %v753 = vld [vmem:[#allocation11 + $0x138] sm:$0xff]
    %v754 = vld [vmem:[#allocation11 + $0x140] sm:$0xff]
    %v755 = vld [vmem:[#allocation11 + $0x148] sm:$0xff]
    %v756 = vld [vmem:[#allocation11 + $0x150] sm:$0xff]
    %v757 = vld [vmem:[#allocation11 + $0x158] sm:$0xff]
    %v758 = vld [vmem:[#allocation11 + $0x160] sm:$0xff]
    %v759 = vld [vmem:[#allocation11 + $0x168] sm:$0xff]
    %v760 = vld [vmem:[#allocation11 + $0x170] sm:$0xff]
    %v761 = vld [vmem:[#allocation11 + $0x178] sm:$0xff]
    %v762 = vld [vmem:[#allocation11 + $0x180] sm:$0xff]
    %v763 = vld [vmem:[#allocation11 + $0x188] sm:$0xff]
    %v764 = vld [vmem:[#allocation11 + $0x190] sm:$0xff]
    %v765 = vld [vmem:[#allocation11 + $0x198] sm:$0xff]
    %v766 = vld [vmem:[#allocation11 + $0x1a0] sm:$0xff]
    %v767 = vld [vmem:[#allocation11 + $0x1a8] sm:$0xff]
    %v768 = vld [vmem:[#allocation11 + $0x1b0] sm:$0xff]
    %v769 = vld [vmem:[#allocation11 + $0x1b8] sm:$0xff]
    %v770 = vld [vmem:[#allocation11 + $0x1c0] sm:$0xff]
    %v771 = vld [vmem:[#allocation11 + $0x1c8] sm:$0xff]
    %v772 = vld [vmem:[#allocation11 + $0x1d0] sm:$0xff]
    %v773 = vld [vmem:[#allocation11 + $0x1d8] sm:$0xff]
    %v774 = vld [vmem:[#allocation11 + $0x1e0] sm:$0xff]
    %v775 = vld [vmem:[#allocation11 + $0x1e8] sm:$0xff]
    %v776 = vld [vmem:[#allocation11 + $0x1f0] sm:$0xff]
    %v777 = vld [vmem:[#allocation11 + $0x1f8] sm:$0xff]
    %778 = vmatprep.subr.mxu0 %v715
    %779 = vmatpush1.msra.mxu0 %v714
    %780 = vmatprep.subr.mxu0 %v719
    %781 = vmatpush1.msra.mxu0 %v718
    %782 = vmatprep.subr.mxu0 %v723
    %783 = vmatpush1.msra.mxu0 %v722
    %784 = vmatprep.subr.mxu0 %v727
    %785 = vmatpush1.msra.mxu0 %v726
    %786 = vmatprep.subr.mxu0 %v731
    %787 = vmatpush1.msra.mxu0 %v730
    %788 = vmatprep.subr.mxu0 %v735
    %789 = vmatpush1.msra.mxu0 %v734
    %790 = vmatprep.subr.mxu0 %v739
    %791 = vmatpush1.msra.mxu0 %v738
    %792 = vmatprep.subr.mxu0 %v743
    %793 = vmatpush1.msra.mxu0 %v742
    %794 = vmatprep.subr.mxu0 %v747
    %795 = vmatpush1.msra.mxu0 %v746
    %796 = vmatprep.subr.mxu0 %v751
    %797 = vmatpush1.msra.mxu0 %v750
    %798 = vmatprep.subr.mxu0 %v755
    %799 = vmatpush1.msra.mxu0 %v754
    %800 = vmatprep.subr.mxu0 %v759
    %801 = vmatpush1.msra.mxu0 %v758
    %802 = vmatprep.subr.mxu0 %v763
    %803 = vmatpush1.msra.mxu0 %v762
    %804 = vmatprep.subr.mxu0 %v767
    %805 = vmatpush1.msra.mxu0 %v766
    %806 = vmatprep.subr.mxu0 %v771
    %807 = vmatpush1.msra.mxu0 %v770
    %808 = vmatprep.subr.mxu0 %v775
    %809 = vmatpush1.msra.mxu0 %v774
    %810 = vmatprep.subr.mxu0 0.0
    %811 = vmatpush1.msra.mxu0 0.0
    %812 = vmatprep.subr.mxu0 0.0
    %813 = vmatpush1.msra.mxu0 0.0
    %814 = vmatprep.subr.mxu0 0.0
    %815 = vmatpush1.msra.mxu0 0.0
    %816 = vmatprep.subr.mxu0 0.0
    %817 = vmatpush1.msra.mxu0 0.0
    %818 = vmatprep.subr.mxu0 0.0
    %819 = vmatpush1.msra.mxu0 0.0
    %820 = vmatprep.subr.mxu0 0.0
    %821 = vmatpush1.msra.mxu0 0.0
    %822 = vmatprep.subr.mxu0 0.0
    %823 = vmatpush1.msra.mxu0 0.0
    %824 = vmatprep.subr.mxu0 0.0
    %825 = vmatpush1.msra.mxu0 0.0
    %826 = vmatprep.subr.mxu0 0.0
    %827 = vmatpush1.msra.mxu0 0.0
    %828 = vmatprep.subr.mxu0 0.0
    %829 = vmatpush1.msra.mxu0 0.0
    %830 = vmatprep.subr.mxu0 0.0
    %831 = vmatpush1.msra.mxu0 0.0
    %832 = vmatprep.subr.mxu0 0.0
    %833 = vmatpush1.msra.mxu0 0.0
    %834 = vmatprep.subr.mxu0 0.0
    %835 = vmatpush1.msra.mxu0 0.0
    %836 = vmatprep.subr.mxu0 0.0
    %837 = vmatpush1.msra.mxu0 0.0
    %838 = vmatprep.subr.mxu0 0.0
    %839 = vmatpush1.msra.mxu0 0.0
    %840 = vmatprep.subr.mxu0 0.0
    %841 = vmatpush1.msra.mxu0 0.0
    %842 = vmatprep.mubr.f32.mxu0 0.0
    %843 = vmatmul.mubr.f32.gmra.mrb[0].mxu0 %v661
    %v844 = vpop.f32.mrb[0].mxu0
    %v845 = vadd.f32 0.0, %v844
    %v846 = vpop.f32.mrb[0].mxu0
    %v847 = vadd.f32 0.0, %v846
    %848 = vdwg.mxu0
    %849 = vmatprep.subr.mxu0 %v717
    %850 = vmatpush1.msra.mxu0 %v716
    %851 = vmatprep.subr.mxu0 %v721
    %852 = vmatpush1.msra.mxu0 %v720
    %853 = vmatprep.subr.mxu0 %v725
    %854 = vmatpush1.msra.mxu0 %v724
    %855 = vmatprep.subr.mxu0 %v729
    %856 = vmatpush1.msra.mxu0 %v728
    %857 = vmatprep.subr.mxu0 %v733
    %858 = vmatpush1.msra.mxu0 %v732
    %859 = vmatprep.subr.mxu0 %v737
    %860 = vmatpush1.msra.mxu0 %v736
    %861 = vmatprep.subr.mxu0 %v741
    %862 = vmatpush1.msra.mxu0 %v740
    %863 = vmatprep.subr.mxu0 %v745
    %864 = vmatpush1.msra.mxu0 %v744
    %865 = vmatprep.subr.mxu0 %v749
    %866 = vmatpush1.msra.mxu0 %v748
    %867 = vmatprep.subr.mxu0 %v753
    %868 = vmatpush1.msra.mxu0 %v752
    %869 = vmatprep.subr.mxu0 %v757
    %870 = vmatpush1.msra.mxu0 %v756
    %871 = vmatprep.subr.mxu0 %v761
    %872 = vmatpush1.msra.mxu0 %v760
    %873 = vmatprep.subr.mxu0 %v765
    %874 = vmatpush1.msra.mxu0 %v764
    %875 = vmatprep.subr.mxu0 %v769
    %876 = vmatpush1.msra.mxu0 %v768
    %877 = vmatprep.subr.mxu0 %v773
    %878 = vmatpush1.msra.mxu0 %v772
    %879 = vmatprep.subr.mxu0 %v777
    %880 = vmatpush1.msra.mxu0 %v776
    %881 = vmatprep.subr.mxu0 0.0
    %882 = vmatpush1.msra.mxu0 0.0
    %883 = vmatprep.subr.mxu0 0.0
    %884 = vmatpush1.msra.mxu0 0.0
    %885 = vmatprep.subr.mxu0 0.0
    %886 = vmatpush1.msra.mxu0 0.0
    %887 = vmatprep.subr.mxu0 0.0
    %888 = vmatpush1.msra.mxu0 0.0
    %889 = vmatprep.subr.mxu0 0.0
    %890 = vmatpush1.msra.mxu0 0.0
    %891 = vmatprep.subr.mxu0 0.0
    %892 = vmatpush1.msra.mxu0 0.0
    %893 = vmatprep.subr.mxu0 0.0
    %894 = vmatpush1.msra.mxu0 0.0
    %895 = vmatprep.subr.mxu0 0.0
    %896 = vmatpush1.msra.mxu0 0.0
    %897 = vmatprep.subr.mxu0 0.0
    %898 = vmatpush1.msra.mxu0 0.0
    %899 = vmatprep.subr.mxu0 0.0
    %900 = vmatpush1.msra.mxu0 0.0
    %901 = vmatprep.subr.mxu0 0.0
    %902 = vmatpush1.msra.mxu0 0.0
    %903 = vmatprep.subr.mxu0 0.0
    %904 = vmatpush1.msra.mxu0 0.0
    %905 = vmatprep.subr.mxu0 0.0
    %906 = vmatpush1.msra.mxu0 0.0
    %907 = vmatprep.subr.mxu0 0.0
    %908 = vmatpush1.msra.mxu0 0.0
    %909 = vmatprep.subr.mxu0 0.0
    %910 = vmatpush1.msra.mxu0 0.0
    %911 = vmatprep.subr.mxu0 0.0
    %912 = vmatpush1.msra.mxu0 0.0
    %913 = vmatprep.mubr.f32.mxu0 0.0
    %914 = vmatmul.mubr.f32.gmra.mrb[0].mxu0 %v661
    %v915 = vpop.f32.mrb[0].mxu0
    %v916 = vadd.f32 0.0, %v915
    %v917 = vpop.f32.mrb[0].mxu0
    %v918 = vadd.f32 0.0, %v917
    %919 = vdwg.mxu0
    %v920 = vadd.f32 %v710, %v845
    %v921 = vadd.f32 %v711, %v847
    %v922 = vadd.f32 %v712, %v916
    %v923 = vadd.f32 %v713, %v918
    %v924 = vxor.u32 %v920, 2147483648
    %v925 = vmul.f32 %v924, 1.442695
    %v926 = vpow.pop %v925
    %v927 = vadd.f32 %v926, 1.0
    %v928 = vrcp.pop %v927
    %v929 = vmul.f32 1.0, %v928
    %v930 = vxor.u32 %v921, 2147483648
    %v931 = vmul.f32 %v930, 1.442695
    %v932 = vpow.pop %v931
    %v933 = vadd.f32 %v932, 1.0
    %v934 = vrcp.pop %v933
    %v935 = vmul.f32 1.0, %v934
    %v936 = vtanh.pop %v922
    %v937 = vxor.u32 %v923, 2147483648
    %v938 = vmul.f32 %v937, 1.442695
    %v939 = vpow.pop %v938
    %v940 = vadd.f32 %v939, 1.0
    %v941 = vrcp.pop %v940
    %v942 = vmul.f32 1.0, %v941
    %v943 = vmul.f32 %v935, %v659
    %v944 = vmul.f32 %v929, %v936
    %v945 = vadd.f32 %v943, %v944
    %v946 = vtanh.pop %v945
    %v947 = vmul.f32 %v942, %v946
    %948 = vst [vmem:[#allocation2 + $0x1] sm:$0x1] %v947
    %949 = vst [vmem:[#allocation3 + $0x6] sm:$0x1] %v947
    %s950 = scalar_lea.vmem [#allocation4], 2
    %v951 = vld [vmem:[%s950] ss:$8 sm:$0xf]
    %s952 = scalar_lea.vmem [#allocation4], 5
    %v953 = vld [vmem:[%s952] ss:$8 sm:$0xf]
    %v955 = vlaneseq
    %v956 = vshrl.u32 %v955, 7
    %v957 = vsub.s32 0, %v956
    %v958 = vrot.slane %v951, %v957
    %v959 = vlaneseq
    %v960 = vshrl.u32 %v959, 7
    %v961 = vsub.s32 1, %v960
    %v962 = vrot.slane %v951, %v961
    %v963 = vlaneseq
    %v964 = vshrl.u32 %v963, 7
    %v965 = vsub.s32 2, %v964
    %v966 = vrot.slane %v951, %v965
    %v967 = vlaneseq
    %v968 = vshrl.u32 %v967, 7
    %v969 = vsub.s32 3, %v968
    %v970 = vrot.slane %v951, %v969
    %v976 = vlaneseq
    %v977 = vshrl.u32 %v976, 7
    %v978 = vsub.s32 0, %v977
    %v979 = vrot.slane %v953, %v978
    %v980 = vlaneseq
    %v981 = vshrl.u32 %v980, 7
    %v982 = vsub.s32 1, %v981
    %v983 = vrot.slane %v953, %v982
    %v984 = vlaneseq
    %v985 = vshrl.u32 %v984, 7
    %v986 = vsub.s32 2, %v985
    %v987 = vrot.slane %v953, %v986
    %v988 = vlaneseq
    %v989 = vshrl.u32 %v988, 7
    %v990 = vsub.s32 3, %v989
    %v991 = vrot.slane %v953, %v990
    %v996 = vsel %vm184, %v958, %v979
    %v997 = vsel %vm185, %v962, %v983
    %v998 = vsel %vm186, %v966, %v987
    %v999 = vsel %vm187, %v970, %v991
    %v1000 = vld [vmem:[#allocation11] sm:$0xff]
    %v1001 = vld [vmem:[#allocation11 + $0x8] sm:$0xff]
    %v1002 = vld [vmem:[#allocation11 + $0x10] sm:$0xff]
    %v1003 = vld [vmem:[#allocation11 + $0x18] sm:$0xff]
    %v1004 = vld [vmem:[#allocation11 + $0x20] sm:$0xff]
    %v1005 = vld [vmem:[#allocation11 + $0x28] sm:$0xff]
    %v1006 = vld [vmem:[#allocation11 + $0x30] sm:$0xff]
    %v1007 = vld [vmem:[#allocation11 + $0x38] sm:$0xff]
    %v1008 = vld [vmem:[#allocation11 + $0x40] sm:$0xff]
    %v1009 = vld [vmem:[#allocation11 + $0x48] sm:$0xff]
    %v1010 = vld [vmem:[#allocation11 + $0x50] sm:$0xff]
    %v1011 = vld [vmem:[#allocation11 + $0x58] sm:$0xff]
    %v1012 = vld [vmem:[#allocation11 + $0x60] sm:$0xff]
    %v1013 = vld [vmem:[#allocation11 + $0x68] sm:$0xff]
    %v1014 = vld [vmem:[#allocation11 + $0x70] sm:$0xff]
    %v1015 = vld [vmem:[#allocation11 + $0x78] sm:$0xff]
    %v1016 = vld [vmem:[#allocation11 + $0x80] sm:$0xff]
    %v1017 = vld [vmem:[#allocation11 + $0x88] sm:$0xff]
    %v1018 = vld [vmem:[#allocation11 + $0x90] sm:$0xff]
    %v1019 = vld [vmem:[#allocation11 + $0x98] sm:$0xff]
    %v1020 = vld [vmem:[#allocation11 + $0xa0] sm:$0xff]
    %v1021 = vld [vmem:[#allocation11 + $0xa8] sm:$0xff]
    %v1022 = vld [vmem:[#allocation11 + $0xb0] sm:$0xff]
    %v1023 = vld [vmem:[#allocation11 + $0xb8] sm:$0xff]
    %v1024 = vld [vmem:[#allocation11 + $0xc0] sm:$0xff]
    %v1025 = vld [vmem:[#allocation11 + $0xc8] sm:$0xff]
    %v1026 = vld [vmem:[#allocation11 + $0xd0] sm:$0xff]
    %v1027 = vld [vmem:[#allocation11 + $0xd8] sm:$0xff]
    %v1028 = vld [vmem:[#allocation11 + $0xe0] sm:$0xff]
    %v1029 = vld [vmem:[#allocation11 + $0xe8] sm:$0xff]
    %v1030 = vld [vmem:[#allocation11 + $0xf0] sm:$0xff]
    %v1031 = vld [vmem:[#allocation11 + $0xf8] sm:$0xff]
    %v1032 = vld [vmem:[#allocation11 + $0x100] sm:$0xff]
    %v1033 = vld [vmem:[#allocation11 + $0x108] sm:$0xff]
    %v1034 = vld [vmem:[#allocation11 + $0x110] sm:$0xff]
    %v1035 = vld [vmem:[#allocation11 + $0x118] sm:$0xff]
    %v1036 = vld [vmem:[#allocation11 + $0x120] sm:$0xff]
    %v1037 = vld [vmem:[#allocation11 + $0x128] sm:$0xff]
    %v1038 = vld [vmem:[#allocation11 + $0x130] sm:$0xff]
    %v1039 = vld [vmem:[#allocation11 + $0x138] sm:$0xff]
    %v1040 = vld [vmem:[#allocation11 + $0x140] sm:$0xff]
    %v1041 = vld [vmem:[#allocation11 + $0x148] sm:$0xff]
    %v1042 = vld [vmem:[#allocation11 + $0x150] sm:$0xff]
    %v1043 = vld [vmem:[#allocation11 + $0x158] sm:$0xff]
    %v1044 = vld [vmem:[#allocation11 + $0x160] sm:$0xff]
    %v1045 = vld [vmem:[#allocation11 + $0x168] sm:$0xff]
    %v1046 = vld [vmem:[#allocation11 + $0x170] sm:$0xff]
    %v1047 = vld [vmem:[#allocation11 + $0x178] sm:$0xff]
    %v1048 = vld [vmem:[#allocation11 + $0x180] sm:$0xff]
    %v1049 = vld [vmem:[#allocation11 + $0x188] sm:$0xff]
    %v1050 = vld [vmem:[#allocation11 + $0x190] sm:$0xff]
    %v1051 = vld [vmem:[#allocation11 + $0x198] sm:$0xff]
    %v1052 = vld [vmem:[#allocation11 + $0x1a0] sm:$0xff]
    %v1053 = vld [vmem:[#allocation11 + $0x1a8] sm:$0xff]
    %v1054 = vld [vmem:[#allocation11 + $0x1b0] sm:$0xff]
    %v1055 = vld [vmem:[#allocation11 + $0x1b8] sm:$0xff]
    %v1056 = vld [vmem:[#allocation11 + $0x1c0] sm:$0xff]
    %v1057 = vld [vmem:[#allocation11 + $0x1c8] sm:$0xff]
    %v1058 = vld [vmem:[#allocation11 + $0x1d0] sm:$0xff]
    %v1059 = vld [vmem:[#allocation11 + $0x1d8] sm:$0xff]
    %v1060 = vld [vmem:[#allocation11 + $0x1e0] sm:$0xff]
    %v1061 = vld [vmem:[#allocation11 + $0x1e8] sm:$0xff]
    %v1062 = vld [vmem:[#allocation11 + $0x1f0] sm:$0xff]
    %v1063 = vld [vmem:[#allocation11 + $0x1f8] sm:$0xff]
    %1064 = vmatprep.subr.mxu0 %v1001
    %1065 = vmatpush1.msra.mxu0 %v1000
    %1066 = vmatprep.subr.mxu0 %v1005
    %1067 = vmatpush1.msra.mxu0 %v1004
    %1068 = vmatprep.subr.mxu0 %v1009
    %1069 = vmatpush1.msra.mxu0 %v1008
    %1070 = vmatprep.subr.mxu0 %v1013
    %1071 = vmatpush1.msra.mxu0 %v1012
    %1072 = vmatprep.subr.mxu0 %v1017
    %1073 = vmatpush1.msra.mxu0 %v1016
    %1074 = vmatprep.subr.mxu0 %v1021
    %1075 = vmatpush1.msra.mxu0 %v1020
    %1076 = vmatprep.subr.mxu0 %v1025
    %1077 = vmatpush1.msra.mxu0 %v1024
    %1078 = vmatprep.subr.mxu0 %v1029
    %1079 = vmatpush1.msra.mxu0 %v1028
    %1080 = vmatprep.subr.mxu0 %v1033
    %1081 = vmatpush1.msra.mxu0 %v1032
    %1082 = vmatprep.subr.mxu0 %v1037
    %1083 = vmatpush1.msra.mxu0 %v1036
    %1084 = vmatprep.subr.mxu0 %v1041
    %1085 = vmatpush1.msra.mxu0 %v1040
    %1086 = vmatprep.subr.mxu0 %v1045
    %1087 = vmatpush1.msra.mxu0 %v1044
    %1088 = vmatprep.subr.mxu0 %v1049
    %1089 = vmatpush1.msra.mxu0 %v1048
    %1090 = vmatprep.subr.mxu0 %v1053
    %1091 = vmatpush1.msra.mxu0 %v1052
    %1092 = vmatprep.subr.mxu0 %v1057
    %1093 = vmatpush1.msra.mxu0 %v1056
    %1094 = vmatprep.subr.mxu0 %v1061
    %1095 = vmatpush1.msra.mxu0 %v1060
    %1096 = vmatprep.subr.mxu0 0.0
    %1097 = vmatpush1.msra.mxu0 0.0
    %1098 = vmatprep.subr.mxu0 0.0
    %1099 = vmatpush1.msra.mxu0 0.0
    %1100 = vmatprep.subr.mxu0 0.0
    %1101 = vmatpush1.msra.mxu0 0.0
    %1102 = vmatprep.subr.mxu0 0.0
    %1103 = vmatpush1.msra.mxu0 0.0
    %1104 = vmatprep.subr.mxu0 0.0
    %1105 = vmatpush1.msra.mxu0 0.0
    %1106 = vmatprep.subr.mxu0 0.0
    %1107 = vmatpush1.msra.mxu0 0.0
    %1108 = vmatprep.subr.mxu0 0.0
    %1109 = vmatpush1.msra.mxu0 0.0
    %1110 = vmatprep.subr.mxu0 0.0
    %1111 = vmatpush1.msra.mxu0 0.0
    %1112 = vmatprep.subr.mxu0 0.0
    %1113 = vmatpush1.msra.mxu0 0.0
    %1114 = vmatprep.subr.mxu0 0.0
    %1115 = vmatpush1.msra.mxu0 0.0
    %1116 = vmatprep.subr.mxu0 0.0
    %1117 = vmatpush1.msra.mxu0 0.0
    %1118 = vmatprep.subr.mxu0 0.0
    %1119 = vmatpush1.msra.mxu0 0.0
    %1120 = vmatprep.subr.mxu0 0.0
    %1121 = vmatpush1.msra.mxu0 0.0
    %1122 = vmatprep.subr.mxu0 0.0
    %1123 = vmatpush1.msra.mxu0 0.0
    %1124 = vmatprep.subr.mxu0 0.0
    %1125 = vmatpush1.msra.mxu0 0.0
    %1126 = vmatprep.subr.mxu0 0.0
    %1127 = vmatpush1.msra.mxu0 0.0
    %1128 = vmatprep.mubr.f32.mxu0 0.0
    %1129 = vmatmul.mubr.f32.gmra.mrb[0].mxu0 %v947
    %v1130 = vpop.f32.mrb[0].mxu0
    %v1131 = vadd.f32 0.0, %v1130
    %v1132 = vpop.f32.mrb[0].mxu0
    %v1133 = vadd.f32 0.0, %v1132
    %1134 = vdwg.mxu0
    %1135 = vmatprep.subr.mxu0 %v1003
    %1136 = vmatpush1.msra.mxu0 %v1002
    %1137 = vmatprep.subr.mxu0 %v1007
    %1138 = vmatpush1.msra.mxu0 %v1006
    %1139 = vmatprep.subr.mxu0 %v1011
    %1140 = vmatpush1.msra.mxu0 %v1010
    %1141 = vmatprep.subr.mxu0 %v1015
    %1142 = vmatpush1.msra.mxu0 %v1014
    %1143 = vmatprep.subr.mxu0 %v1019
    %1144 = vmatpush1.msra.mxu0 %v1018
    %1145 = vmatprep.subr.mxu0 %v1023
    %1146 = vmatpush1.msra.mxu0 %v1022
    %1147 = vmatprep.subr.mxu0 %v1027
    %1148 = vmatpush1.msra.mxu0 %v1026
    %1149 = vmatprep.subr.mxu0 %v1031
    %1150 = vmatpush1.msra.mxu0 %v1030
    %1151 = vmatprep.subr.mxu0 %v1035
    %1152 = vmatpush1.msra.mxu0 %v1034
    %1153 = vmatprep.subr.mxu0 %v1039
    %1154 = vmatpush1.msra.mxu0 %v1038
    %1155 = vmatprep.subr.mxu0 %v1043
    %1156 = vmatpush1.msra.mxu0 %v1042
    %1157 = vmatprep.subr.mxu0 %v1047
    %1158 = vmatpush1.msra.mxu0 %v1046
    %1159 = vmatprep.subr.mxu0 %v1051
    %1160 = vmatpush1.msra.mxu0 %v1050
    %1161 = vmatprep.subr.mxu0 %v1055
    %1162 = vmatpush1.msra.mxu0 %v1054
    %1163 = vmatprep.subr.mxu0 %v1059
    %1164 = vmatpush1.msra.mxu0 %v1058
    %1165 = vmatprep.subr.mxu0 %v1063
    %1166 = vmatpush1.msra.mxu0 %v1062
    %1167 = vmatprep.subr.mxu0 0.0
    %1168 = vmatpush1.msra.mxu0 0.0
    %1169 = vmatprep.subr.mxu0 0.0
    %1170 = vmatpush1.msra.mxu0 0.0
    %1171 = vmatprep.subr.mxu0 0.0
    %1172 = vmatpush1.msra.mxu0 0.0
    %1173 = vmatprep.subr.mxu0 0.0
    %1174 = vmatpush1.msra.mxu0 0.0
    %1175 = vmatprep.subr.mxu0 0.0
    %1176 = vmatpush1.msra.mxu0 0.0
    %1177 = vmatprep.subr.mxu0 0.0
    %1178 = vmatpush1.msra.mxu0 0.0
    %1179 = vmatprep.subr.mxu0 0.0
    %1180 = vmatpush1.msra.mxu0 0.0
    %1181 = vmatprep.subr.mxu0 0.0
    %1182 = vmatpush1.msra.mxu0 0.0
    %1183 = vmatprep.subr.mxu0 0.0
    %1184 = vmatpush1.msra.mxu0 0.0
    %1185 = vmatprep.subr.mxu0 0.0
    %1186 = vmatpush1.msra.mxu0 0.0
    %1187 = vmatprep.subr.mxu0 0.0
    %1188 = vmatpush1.msra.mxu0 0.0
    %1189 = vmatprep.subr.mxu0 0.0
    %1190 = vmatpush1.msra.mxu0 0.0
    %1191 = vmatprep.subr.mxu0 0.0
    %1192 = vmatpush1.msra.mxu0 0.0
    %1193 = vmatprep.subr.mxu0 0.0
    %1194 = vmatpush1.msra.mxu0 0.0
    %1195 = vmatprep.subr.mxu0 0.0
    %1196 = vmatpush1.msra.mxu0 0.0
    %1197 = vmatprep.subr.mxu0 0.0
    %1198 = vmatpush1.msra.mxu0 0.0
    %1199 = vmatprep.mubr.f32.mxu0 0.0
    %1200 = vmatmul.mubr.f32.gmra.mrb[0].mxu0 %v947
    %v1201 = vpop.f32.mrb[0].mxu0
    %v1202 = vadd.f32 0.0, %v1201
    %v1203 = vpop.f32.mrb[0].mxu0
    %v1204 = vadd.f32 0.0, %v1203
    %1205 = vdwg.mxu0
    %v1206 = vadd.f32 %v996, %v1131
    %v1207 = vadd.f32 %v997, %v1133
    %v1208 = vadd.f32 %v998, %v1202
    %v1209 = vadd.f32 %v999, %v1204
    %v1210 = vxor.u32 %v1206, 2147483648
    %v1211 = vmul.f32 %v1210, 1.442695
    %v1212 = vpow.pop %v1211
    %v1213 = vadd.f32 %v1212, 1.0
    %v1214 = vrcp.pop %v1213
    %v1215 = vmul.f32 1.0, %v1214
    %v1216 = vxor.u32 %v1207, 2147483648
    %v1217 = vmul.f32 %v1216, 1.442695
    %v1218 = vpow.pop %v1217
    %v1219 = vadd.f32 %v1218, 1.0
    %v1220 = vrcp.pop %v1219
    %v1221 = vmul.f32 1.0, %v1220
    %v1222 = vtanh.pop %v1208
    %v1223 = vxor.u32 %v1209, 2147483648
    %v1224 = vmul.f32 %v1223, 1.442695
    %v1225 = vpow.pop %v1224
    %v1226 = vadd.f32 %v1225, 1.0
    %v1227 = vrcp.pop %v1226
    %v1228 = vmul.f32 1.0, %v1227
    %v1229 = vmul.f32 %v1221, %v945
    %v1230 = vmul.f32 %v1215, %v1222
    %v1231 = vadd.f32 %v1229, %v1230
    %v1232 = vtanh.pop %v1231
    %v1233 = vmul.f32 %v1228, %v1232
    %1234 = vst [vmem:[#allocation2 + $0x2] sm:$0x1] %v1233
    %1235 = vst [vmem:[#allocation3 + $0x5] sm:$0x1] %v1233
    %s1236 = scalar_lea.vmem [#allocation4], 3
    %v1237 = vld [vmem:[%s1236] ss:$8 sm:$0xf]
    %s1238 = scalar_lea.vmem [#allocation4], 4
    %v1239 = vld [vmem:[%s1238] ss:$8 sm:$0xf]
    %v1241 = vlaneseq
    %v1242 = vshrl.u32 %v1241, 7
    %v1243 = vsub.s32 0, %v1242
    %v1244 = vrot.slane %v1237, %v1243
    %v1245 = vlaneseq
    %v1246 = vshrl.u32 %v1245, 7
    %v1247 = vsub.s32 1, %v1246
    %v1248 = vrot.slane %v1237, %v1247
    %v1249 = vlaneseq
    %v1250 = vshrl.u32 %v1249, 7
    %v1251 = vsub.s32 2, %v1250
    %v1252 = vrot.slane %v1237, %v1251
    %v1253 = vlaneseq
    %v1254 = vshrl.u32 %v1253, 7
    %v1255 = vsub.s32 3, %v1254
    %v1256 = vrot.slane %v1237, %v1255
    %v1262 = vlaneseq
    %v1263 = vshrl.u32 %v1262, 7
    %v1264 = vsub.s32 0, %v1263
    %v1265 = vrot.slane %v1239, %v1264
    %v1266 = vlaneseq
    %v1267 = vshrl.u32 %v1266, 7
    %v1268 = vsub.s32 1, %v1267
    %v1269 = vrot.slane %v1239, %v1268
    %v1270 = vlaneseq
    %v1271 = vshrl.u32 %v1270, 7
    %v1272 = vsub.s32 2, %v1271
    %v1273 = vrot.slane %v1239, %v1272
    %v1274 = vlaneseq
    %v1275 = vshrl.u32 %v1274, 7
    %v1276 = vsub.s32 3, %v1275
    %v1277 = vrot.slane %v1239, %v1276
    %v1282 = vsel %vm184, %v1244, %v1265
    %v1283 = vsel %vm185, %v1248, %v1269
    %v1284 = vsel %vm186, %v1252, %v1273
    %v1285 = vsel %vm187, %v1256, %v1277
    %v1286 = vld [vmem:[#allocation11] sm:$0xff]
    %v1287 = vld [vmem:[#allocation11 + $0x8] sm:$0xff]
    %v1288 = vld [vmem:[#allocation11 + $0x10] sm:$0xff]
    %v1289 = vld [vmem:[#allocation11 + $0x18] sm:$0xff]
    %v1290 = vld [vmem:[#allocation11 + $0x20] sm:$0xff]
    %v1291 = vld [vmem:[#allocation11 + $0x28] sm:$0xff]
    %v1292 = vld [vmem:[#allocation11 + $0x30] sm:$0xff]
    %v1293 = vld [vmem:[#allocation11 + $0x38] sm:$0xff]
    %v1294 = vld [vmem:[#allocation11 + $0x40] sm:$0xff]
    %v1295 = vld [vmem:[#allocation11 + $0x48] sm:$0xff]
    %v1296 = vld [vmem:[#allocation11 + $0x50] sm:$0xff]
    %v1297 = vld [vmem:[#allocation11 + $0x58] sm:$0xff]
    %v1298 = vld [vmem:[#allocation11 + $0x60] sm:$0xff]
    %v1299 = vld [vmem:[#allocation11 + $0x68] sm:$0xff]
    %v1300 = vld [vmem:[#allocation11 + $0x70] sm:$0xff]
    %v1301 = vld [vmem:[#allocation11 + $0x78] sm:$0xff]
    %v1302 = vld [vmem:[#allocation11 + $0x80] sm:$0xff]
    %v1303 = vld [vmem:[#allocation11 + $0x88] sm:$0xff]
    %v1304 = vld [vmem:[#allocation11 + $0x90] sm:$0xff]
    %v1305 = vld [vmem:[#allocation11 + $0x98] sm:$0xff]
    %v1306 = vld [vmem:[#allocation11 + $0xa0] sm:$0xff]
    %v1307 = vld [vmem:[#allocation11 + $0xa8] sm:$0xff]
    %v1308 = vld [vmem:[#allocation11 + $0xb0] sm:$0xff]
    %v1309 = vld [vmem:[#allocation11 + $0xb8] sm:$0xff]
    %v1310 = vld [vmem:[#allocation11 + $0xc0] sm:$0xff]
    %v1311 = vld [vmem:[#allocation11 + $0xc8] sm:$0xff]
    %v1312 = vld [vmem:[#allocation11 + $0xd0] sm:$0xff]
    %v1313 = vld [vmem:[#allocation11 + $0xd8] sm:$0xff]
    %v1314 = vld [vmem:[#allocation11 + $0xe0] sm:$0xff]
    %v1315 = vld [vmem:[#allocation11 + $0xe8] sm:$0xff]
    %v1316 = vld [vmem:[#allocation11 + $0xf0] sm:$0xff]
    %v1317 = vld [vmem:[#allocation11 + $0xf8] sm:$0xff]
    %v1318 = vld [vmem:[#allocation11 + $0x100] sm:$0xff]
    %v1319 = vld [vmem:[#allocation11 + $0x108] sm:$0xff]
    %v1320 = vld [vmem:[#allocation11 + $0x110] sm:$0xff]
    %v1321 = vld [vmem:[#allocation11 + $0x118] sm:$0xff]
    %v1322 = vld [vmem:[#allocation11 + $0x120] sm:$0xff]
    %v1323 = vld [vmem:[#allocation11 + $0x128] sm:$0xff]
    %v1324 = vld [vmem:[#allocation11 + $0x130] sm:$0xff]
    %v1325 = vld [vmem:[#allocation11 + $0x138] sm:$0xff]
    %v1326 = vld [vmem:[#allocation11 + $0x140] sm:$0xff]
    %v1327 = vld [vmem:[#allocation11 + $0x148] sm:$0xff]
    %v1328 = vld [vmem:[#allocation11 + $0x150] sm:$0xff]
    %v1329 = vld [vmem:[#allocation11 + $0x158] sm:$0xff]
    %v1330 = vld [vmem:[#allocation11 + $0x160] sm:$0xff]
    %v1331 = vld [vmem:[#allocation11 + $0x168] sm:$0xff]
    %v1332 = vld [vmem:[#allocation11 + $0x170] sm:$0xff]
    %v1333 = vld [vmem:[#allocation11 + $0x178] sm:$0xff]
    %v1334 = vld [vmem:[#allocation11 + $0x180] sm:$0xff]
    %v1335 = vld [vmem:[#allocation11 + $0x188] sm:$0xff]
    %v1336 = vld [vmem:[#allocation11 + $0x190] sm:$0xff]
    %v1337 = vld [vmem:[#allocation11 + $0x198] sm:$0xff]
    %v1338 = vld [vmem:[#allocation11 + $0x1a0] sm:$0xff]
    %v1339 = vld [vmem:[#allocation11 + $0x1a8] sm:$0xff]
    %v1340 = vld [vmem:[#allocation11 + $0x1b0] sm:$0xff]
    %v1341 = vld [vmem:[#allocation11 + $0x1b8] sm:$0xff]
    %v1342 = vld [vmem:[#allocation11 + $0x1c0] sm:$0xff]
    %v1343 = vld [vmem:[#allocation11 + $0x1c8] sm:$0xff]
    %v1344 = vld [vmem:[#allocation11 + $0x1d0] sm:$0xff]
    %v1345 = vld [vmem:[#allocation11 + $0x1d8] sm:$0xff]
    %v1346 = vld [vmem:[#allocation11 + $0x1e0] sm:$0xff]
    %v1347 = vld [vmem:[#allocation11 + $0x1e8] sm:$0xff]
    %v1348 = vld [vmem:[#allocation11 + $0x1f0] sm:$0xff]
    %v1349 = vld [vmem:[#allocation11 + $0x1f8] sm:$0xff]
    %1350 = vmatprep.subr.mxu0 %v1287
    %1351 = vmatpush1.msra.mxu0 %v1286
    %1352 = vmatprep.subr.mxu0 %v1291
    %1353 = vmatpush1.msra.mxu0 %v1290
    %1354 = vmatprep.subr.mxu0 %v1295
    %1355 = vmatpush1.msra.mxu0 %v1294
    %1356 = vmatprep.subr.mxu0 %v1299
    %1357 = vmatpush1.msra.mxu0 %v1298
    %1358 = vmatprep.subr.mxu0 %v1303
    %1359 = vmatpush1.msra.mxu0 %v1302
    %1360 = vmatprep.subr.mxu0 %v1307
    %1361 = vmatpush1.msra.mxu0 %v1306
    %1362 = vmatprep.subr.mxu0 %v1311
    %1363 = vmatpush1.msra.mxu0 %v1310
    %1364 = vmatprep.subr.mxu0 %v1315
    %1365 = vmatpush1.msra.mxu0 %v1314
    %1366 = vmatprep.subr.mxu0 %v1319
    %1367 = vmatpush1.msra.mxu0 %v1318
    %1368 = vmatprep.subr.mxu0 %v1323
    %1369 = vmatpush1.msra.mxu0 %v1322
    %1370 = vmatprep.subr.mxu0 %v1327
    %1371 = vmatpush1.msra.mxu0 %v1326
    %1372 = vmatprep.subr.mxu0 %v1331
    %1373 = vmatpush1.msra.mxu0 %v1330
    %1374 = vmatprep.subr.mxu0 %v1335
    %1375 = vmatpush1.msra.mxu0 %v1334
    %1376 = vmatprep.subr.mxu0 %v1339
    %1377 = vmatpush1.msra.mxu0 %v1338
    %1378 = vmatprep.subr.mxu0 %v1343
    %1379 = vmatpush1.msra.mxu0 %v1342
    %1380 = vmatprep.subr.mxu0 %v1347
    %1381 = vmatpush1.msra.mxu0 %v1346
    %1382 = vmatprep.subr.mxu0 0.0
    %1383 = vmatpush1.msra.mxu0 0.0
    %1384 = vmatprep.subr.mxu0 0.0
    %1385 = vmatpush1.msra.mxu0 0.0
    %1386 = vmatprep.subr.mxu0 0.0
    %1387 = vmatpush1.msra.mxu0 0.0
    %1388 = vmatprep.subr.mxu0 0.0
    %1389 = vmatpush1.msra.mxu0 0.0
    %1390 = vmatprep.subr.mxu0 0.0
    %1391 = vmatpush1.msra.mxu0 0.0
    %1392 = vmatprep.subr.mxu0 0.0
    %1393 = vmatpush1.msra.mxu0 0.0
    %1394 = vmatprep.subr.mxu0 0.0
    %1395 = vmatpush1.msra.mxu0 0.0
    %1396 = vmatprep.subr.mxu0 0.0
    %1397 = vmatpush1.msra.mxu0 0.0
    %1398 = vmatprep.subr.mxu0 0.0
    %1399 = vmatpush1.msra.mxu0 0.0
    %1400 = vmatprep.subr.mxu0 0.0
    %1401 = vmatpush1.msra.mxu0 0.0
    %1402 = vmatprep.subr.mxu0 0.0
    %1403 = vmatpush1.msra.mxu0 0.0
    %1404 = vmatprep.subr.mxu0 0.0
    %1405 = vmatpush1.msra.mxu0 0.0
    %1406 = vmatprep.subr.mxu0 0.0
    %1407 = vmatpush1.msra.mxu0 0.0
    %1408 = vmatprep.subr.mxu0 0.0
    %1409 = vmatpush1.msra.mxu0 0.0
    %1410 = vmatprep.subr.mxu0 0.0
    %1411 = vmatpush1.msra.mxu0 0.0
    %1412 = vmatprep.subr.mxu0 0.0
    %1413 = vmatpush1.msra.mxu0 0.0
    %1414 = vmatprep.mubr.f32.mxu0 0.0
    %1415 = vmatmul.mubr.f32.gmra.mrb[0].mxu0 %v1233
    %v1416 = vpop.f32.mrb[0].mxu0
    %v1417 = vadd.f32 0.0, %v1416
    %v1418 = vpop.f32.mrb[0].mxu0
    %v1419 = vadd.f32 0.0, %v1418
    %1420 = vdwg.mxu0
    %1421 = vmatprep.subr.mxu0 %v1289
    %1422 = vmatpush1.msra.mxu0 %v1288
    %1423 = vmatprep.subr.mxu0 %v1293
    %1424 = vmatpush1.msra.mxu0 %v1292
    %1425 = vmatprep.subr.mxu0 %v1297
    %1426 = vmatpush1.msra.mxu0 %v1296
    %1427 = vmatprep.subr.mxu0 %v1301
    %1428 = vmatpush1.msra.mxu0 %v1300
    %1429 = vmatprep.subr.mxu0 %v1305
    %1430 = vmatpush1.msra.mxu0 %v1304
    %1431 = vmatprep.subr.mxu0 %v1309
    %1432 = vmatpush1.msra.mxu0 %v1308
    %1433 = vmatprep.subr.mxu0 %v1313
    %1434 = vmatpush1.msra.mxu0 %v1312
    %1435 = vmatprep.subr.mxu0 %v1317
    %1436 = vmatpush1.msra.mxu0 %v1316
    %1437 = vmatprep.subr.mxu0 %v1321
    %1438 = vmatpush1.msra.mxu0 %v1320
    %1439 = vmatprep.subr.mxu0 %v1325
    %1440 = vmatpush1.msra.mxu0 %v1324
    %1441 = vmatprep.subr.mxu0 %v1329
    %1442 = vmatpush1.msra.mxu0 %v1328
    %1443 = vmatprep.subr.mxu0 %v1333
    %1444 = vmatpush1.msra.mxu0 %v1332
    %1445 = vmatprep.subr.mxu0 %v1337
    %1446 = vmatpush1.msra.mxu0 %v1336
    %1447 = vmatprep.subr.mxu0 %v1341
    %1448 = vmatpush1.msra.mxu0 %v1340
    %1449 = vmatprep.subr.mxu0 %v1345
    %1450 = vmatpush1.msra.mxu0 %v1344
    %1451 = vmatprep.subr.mxu0 %v1349
    %1452 = vmatpush1.msra.mxu0 %v1348
    %1453 = vmatprep.subr.mxu0 0.0
    %1454 = vmatpush1.msra.mxu0 0.0
    %1455 = vmatprep.subr.mxu0 0.0
    %1456 = vmatpush1.msra.mxu0 0.0
    %1457 = vmatprep.subr.mxu0 0.0
    %1458 = vmatpush1.msra.mxu0 0.0
    %1459 = vmatprep.subr.mxu0 0.0
    %1460 = vmatpush1.msra.mxu0 0.0
    %1461 = vmatprep.subr.mxu0 0.0
    %1462 = vmatpush1.msra.mxu0 0.0
    %1463 = vmatprep.subr.mxu0 0.0
    %1464 = vmatpush1.msra.mxu0 0.0
    %1465 = vmatprep.subr.mxu0 0.0
    %1466 = vmatpush1.msra.mxu0 0.0
    %1467 = vmatprep.subr.mxu0 0.0
    %1468 = vmatpush1.msra.mxu0 0.0
    %1469 = vmatprep.subr.mxu0 0.0
    %1470 = vmatpush1.msra.mxu0 0.0
    %1471 = vmatprep.subr.mxu0 0.0
    %1472 = vmatpush1.msra.mxu0 0.0
    %1473 = vmatprep.subr.mxu0 0.0
    %1474 = vmatpush1.msra.mxu0 0.0
    %1475 = vmatprep.subr.mxu0 0.0
    %1476 = vmatpush1.msra.mxu0 0.0
    %1477 = vmatprep.subr.mxu0 0.0
    %1478 = vmatpush1.msra.mxu0 0.0
    %1479 = vmatprep.subr.mxu0 0.0
    %1480 = vmatpush1.msra.mxu0 0.0
    %1481 = vmatprep.subr.mxu0 0.0
    %1482 = vmatpush1.msra.mxu0 0.0
    %1483 = vmatprep.subr.mxu0 0.0
    %1484 = vmatpush1.msra.mxu0 0.0
    %1485 = vmatprep.mubr.f32.mxu0 0.0
    %1486 = vmatmul.mubr.f32.gmra.mrb[0].mxu0 %v1233
    %v1487 = vpop.f32.mrb[0].mxu0
    %v1488 = vadd.f32 0.0, %v1487
    %v1489 = vpop.f32.mrb[0].mxu0
    %v1490 = vadd.f32 0.0, %v1489
    %1491 = vdwg.mxu0
    %v1492 = vadd.f32 %v1282, %v1417
    %v1493 = vadd.f32 %v1283, %v1419
    %v1494 = vadd.f32 %v1284, %v1488
    %v1495 = vadd.f32 %v1285, %v1490
    %v1496 = vxor.u32 %v1492, 2147483648
    %v1497 = vmul.f32 %v1496, 1.442695
    %v1498 = vpow.pop %v1497
    %v1499 = vadd.f32 %v1498, 1.0
    %v1500 = vrcp.pop %v1499
    %v1501 = vmul.f32 1.0, %v1500
    %v1502 = vxor.u32 %v1493, 2147483648
    %v1503 = vmul.f32 %v1502, 1.442695
    %v1504 = vpow.pop %v1503
    %v1505 = vadd.f32 %v1504, 1.0
    %v1506 = vrcp.pop %v1505
    %v1507 = vmul.f32 1.0, %v1506
    %v1508 = vtanh.pop %v1494
    %v1509 = vxor.u32 %v1495, 2147483648
    %v1510 = vmul.f32 %v1509, 1.442695
    %v1511 = vpow.pop %v1510
    %v1512 = vadd.f32 %v1511, 1.0
    %v1513 = vrcp.pop %v1512
    %v1514 = vmul.f32 1.0, %v1513
    %v1515 = vmul.f32 %v1507, %v1231
    %v1516 = vmul.f32 %v1501, %v1508
    %v1517 = vadd.f32 %v1515, %v1516
    %v1518 = vtanh.pop %v1517
    %v1519 = vmul.f32 %v1514, %v1518
    %1520 = vst [vmem:[#allocation2 + $0x3] sm:$0x1] %v1519
    %1521 = vst [vmem:[#allocation3 + $0x4] sm:$0x1] %v1519
    %v1522 = vld [vmem:[%s1238] ss:$8 sm:$0xf]
    %v1523 = vld [vmem:[%s1236] ss:$8 sm:$0xf]
    %v1525 = vlaneseq
    %v1526 = vshrl.u32 %v1525, 7
    %v1527 = vsub.s32 0, %v1526
    %v1528 = vrot.slane %v1522, %v1527
    %v1529 = vlaneseq
    %v1530 = vshrl.u32 %v1529, 7
    %v1531 = vsub.s32 1, %v1530
    %v1532 = vrot.slane %v1522, %v1531
    %v1533 = vlaneseq
    %v1534 = vshrl.u32 %v1533, 7
    %v1535 = vsub.s32 2, %v1534
    %v1536 = vrot.slane %v1522, %v1535
    %v1537 = vlaneseq
    %v1538 = vshrl.u32 %v1537, 7
    %v1539 = vsub.s32 3, %v1538
    %v1540 = vrot.slane %v1522, %v1539
    %v1546 = vlaneseq
    %v1547 = vshrl.u32 %v1546, 7
    %v1548 = vsub.s32 0, %v1547
    %v1549 = vrot.slane %v1523, %v1548
    %v1550 = vlaneseq
    %v1551 = vshrl.u32 %v1550, 7
    %v1552 = vsub.s32 1, %v1551
    %v1553 = vrot.slane %v1523, %v1552
    %v1554 = vlaneseq
    %v1555 = vshrl.u32 %v1554, 7
    %v1556 = vsub.s32 2, %v1555
    %v1557 = vrot.slane %v1523, %v1556
    %v1558 = vlaneseq
    %v1559 = vshrl.u32 %v1558, 7
    %v1560 = vsub.s32 3, %v1559
    %v1561 = vrot.slane %v1523, %v1560
    %v1566 = vsel %vm184, %v1528, %v1549
    %v1567 = vsel %vm185, %v1532, %v1553
    %v1568 = vsel %vm186, %v1536, %v1557
    %v1569 = vsel %vm187, %v1540, %v1561
    %v1570 = vld [vmem:[#allocation11] sm:$0xff]
    %v1571 = vld [vmem:[#allocation11 + $0x8] sm:$0xff]
    %v1572 = vld [vmem:[#allocation11 + $0x10] sm:$0xff]
    %v1573 = vld [vmem:[#allocation11 + $0x18] sm:$0xff]
    %v1574 = vld [vmem:[#allocation11 + $0x20] sm:$0xff]
    %v1575 = vld [vmem:[#allocation11 + $0x28] sm:$0xff]
    %v1576 = vld [vmem:[#allocation11 + $0x30] sm:$0xff]
    %v1577 = vld [vmem:[#allocation11 + $0x38] sm:$0xff]
    %v1578 = vld [vmem:[#allocation11 + $0x40] sm:$0xff]
    %v1579 = vld [vmem:[#allocation11 + $0x48] sm:$0xff]
    %v1580 = vld [vmem:[#allocation11 + $0x50] sm:$0xff]
    %v1581 = vld [vmem:[#allocation11 + $0x58] sm:$0xff]
    %v1582 = vld [vmem:[#allocation11 + $0x60] sm:$0xff]
    %v1583 = vld [vmem:[#allocation11 + $0x68] sm:$0xff]
    %v1584 = vld [vmem:[#allocation11 + $0x70] sm:$0xff]
    %v1585 = vld [vmem:[#allocation11 + $0x78] sm:$0xff]
    %v1586 = vld [vmem:[#allocation11 + $0x80] sm:$0xff]
    %v1587 = vld [vmem:[#allocation11 + $0x88] sm:$0xff]
    %v1588 = vld [vmem:[#allocation11 + $0x90] sm:$0xff]
    %v1589 = vld [vmem:[#allocation11 + $0x98] sm:$0xff]
    %v1590 = vld [vmem:[#allocation11 + $0xa0] sm:$0xff]
    %v1591 = vld [vmem:[#allocation11 + $0xa8] sm:$0xff]
    %v1592 = vld [vmem:[#allocation11 + $0xb0] sm:$0xff]
    %v1593 = vld [vmem:[#allocation11 + $0xb8] sm:$0xff]
    %v1594 = vld [vmem:[#allocation11 + $0xc0] sm:$0xff]
    %v1595 = vld [vmem:[#allocation11 + $0xc8] sm:$0xff]
    %v1596 = vld [vmem:[#allocation11 + $0xd0] sm:$0xff]
    %v1597 = vld [vmem:[#allocation11 + $0xd8] sm:$0xff]
    %v1598 = vld [vmem:[#allocation11 + $0xe0] sm:$0xff]
    %v1599 = vld [vmem:[#allocation11 + $0xe8] sm:$0xff]
    %v1600 = vld [vmem:[#allocation11 + $0xf0] sm:$0xff]
    %v1601 = vld [vmem:[#allocation11 + $0xf8] sm:$0xff]
    %v1602 = vld [vmem:[#allocation11 + $0x100] sm:$0xff]
    %v1603 = vld [vmem:[#allocation11 + $0x108] sm:$0xff]
    %v1604 = vld [vmem:[#allocation11 + $0x110] sm:$0xff]
    %v1605 = vld [vmem:[#allocation11 + $0x118] sm:$0xff]
    %v1606 = vld [vmem:[#allocation11 + $0x120] sm:$0xff]
    %v1607 = vld [vmem:[#allocation11 + $0x128] sm:$0xff]
    %v1608 = vld [vmem:[#allocation11 + $0x130] sm:$0xff]
    %v1609 = vld [vmem:[#allocation11 + $0x138] sm:$0xff]
    %v1610 = vld [vmem:[#allocation11 + $0x140] sm:$0xff]
    %v1611 = vld [vmem:[#allocation11 + $0x148] sm:$0xff]
    %v1612 = vld [vmem:[#allocation11 + $0x150] sm:$0xff]
    %v1613 = vld [vmem:[#allocation11 + $0x158] sm:$0xff]
    %v1614 = vld [vmem:[#allocation11 + $0x160] sm:$0xff]
    %v1615 = vld [vmem:[#allocation11 + $0x168] sm:$0xff]
    %v1616 = vld [vmem:[#allocation11 + $0x170] sm:$0xff]
    %v1617 = vld [vmem:[#allocation11 + $0x178] sm:$0xff]
    %v1618 = vld [vmem:[#allocation11 + $0x180] sm:$0xff]
    %v1619 = vld [vmem:[#allocation11 + $0x188] sm:$0xff]
    %v1620 = vld [vmem:[#allocation11 + $0x190] sm:$0xff]
    %v1621 = vld [vmem:[#allocation11 + $0x198] sm:$0xff]
    %v1622 = vld [vmem:[#allocation11 + $0x1a0] sm:$0xff]
    %v1623 = vld [vmem:[#allocation11 + $0x1a8] sm:$0xff]
    %v1624 = vld [vmem:[#allocation11 + $0x1b0] sm:$0xff]
    %v1625 = vld [vmem:[#allocation11 + $0x1b8] sm:$0xff]
    %v1626 = vld [vmem:[#allocation11 + $0x1c0] sm:$0xff]
    %v1627 = vld [vmem:[#allocation11 + $0x1c8] sm:$0xff]
    %v1628 = vld [vmem:[#allocation11 + $0x1d0] sm:$0xff]
    %v1629 = vld [vmem:[#allocation11 + $0x1d8] sm:$0xff]
    %v1630 = vld [vmem:[#allocation11 + $0x1e0] sm:$0xff]
    %v1631 = vld [vmem:[#allocation11 + $0x1e8] sm:$0xff]
    %v1632 = vld [vmem:[#allocation11 + $0x1f0] sm:$0xff]
    %v1633 = vld [vmem:[#allocation11 + $0x1f8] sm:$0xff]
    %1634 = vmatprep.subr.mxu0 %v1571
    %1635 = vmatpush1.msra.mxu0 %v1570
    %1636 = vmatprep.subr.mxu0 %v1575
    %1637 = vmatpush1.msra.mxu0 %v1574
    %1638 = vmatprep.subr.mxu0 %v1579
    %1639 = vmatpush1.msra.mxu0 %v1578
    %1640 = vmatprep.subr.mxu0 %v1583
    %1641 = vmatpush1.msra.mxu0 %v1582
    %1642 = vmatprep.subr.mxu0 %v1587
    %1643 = vmatpush1.msra.mxu0 %v1586
    %1644 = vmatprep.subr.mxu0 %v1591
    %1645 = vmatpush1.msra.mxu0 %v1590
    %1646 = vmatprep.subr.mxu0 %v1595
    %1647 = vmatpush1.msra.mxu0 %v1594
    %1648 = vmatprep.subr.mxu0 %v1599
    %1649 = vmatpush1.msra.mxu0 %v1598
    %1650 = vmatprep.subr.mxu0 %v1603
    %1651 = vmatpush1.msra.mxu0 %v1602
    %1652 = vmatprep.subr.mxu0 %v1607
    %1653 = vmatpush1.msra.mxu0 %v1606
    %1654 = vmatprep.subr.mxu0 %v1611
    %1655 = vmatpush1.msra.mxu0 %v1610
    %1656 = vmatprep.subr.mxu0 %v1615
    %1657 = vmatpush1.msra.mxu0 %v1614
    %1658 = vmatprep.subr.mxu0 %v1619
    %1659 = vmatpush1.msra.mxu0 %v1618
    %1660 = vmatprep.subr.mxu0 %v1623
    %1661 = vmatpush1.msra.mxu0 %v1622
    %1662 = vmatprep.subr.mxu0 %v1627
    %1663 = vmatpush1.msra.mxu0 %v1626
    %1664 = vmatprep.subr.mxu0 %v1631
    %1665 = vmatpush1.msra.mxu0 %v1630
    %1666 = vmatprep.subr.mxu0 0.0
    %1667 = vmatpush1.msra.mxu0 0.0
    %1668 = vmatprep.subr.mxu0 0.0
    %1669 = vmatpush1.msra.mxu0 0.0
    %1670 = vmatprep.subr.mxu0 0.0
    %1671 = vmatpush1.msra.mxu0 0.0
    %1672 = vmatprep.subr.mxu0 0.0
    %1673 = vmatpush1.msra.mxu0 0.0
    %1674 = vmatprep.subr.mxu0 0.0
    %1675 = vmatpush1.msra.mxu0 0.0
    %1676 = vmatprep.subr.mxu0 0.0
    %1677 = vmatpush1.msra.mxu0 0.0
    %1678 = vmatprep.subr.mxu0 0.0
    %1679 = vmatpush1.msra.mxu0 0.0
    %1680 = vmatprep.subr.mxu0 0.0
    %1681 = vmatpush1.msra.mxu0 0.0
    %1682 = vmatprep.subr.mxu0 0.0
    %1683 = vmatpush1.msra.mxu0 0.0
    %1684 = vmatprep.subr.mxu0 0.0
    %1685 = vmatpush1.msra.mxu0 0.0
    %1686 = vmatprep.subr.mxu0 0.0
    %1687 = vmatpush1.msra.mxu0 0.0
    %1688 = vmatprep.subr.mxu0 0.0
    %1689 = vmatpush1.msra.mxu0 0.0
    %1690 = vmatprep.subr.mxu0 0.0
    %1691 = vmatpush1.msra.mxu0 0.0
    %1692 = vmatprep.subr.mxu0 0.0
    %1693 = vmatpush1.msra.mxu0 0.0
    %1694 = vmatprep.subr.mxu0 0.0
    %1695 = vmatpush1.msra.mxu0 0.0
    %1696 = vmatprep.subr.mxu0 0.0
    %1697 = vmatpush1.msra.mxu0 0.0
    %1698 = vmatprep.mubr.f32.mxu0 0.0
    %1699 = vmatmul.mubr.f32.gmra.mrb[0].mxu0 %v1519
    %v1700 = vpop.f32.mrb[0].mxu0
    %v1701 = vadd.f32 0.0, %v1700
    %v1702 = vpop.f32.mrb[0].mxu0
    %v1703 = vadd.f32 0.0, %v1702
    %1704 = vdwg.mxu0
    %1705 = vmatprep.subr.mxu0 %v1573
    %1706 = vmatpush1.msra.mxu0 %v1572
    %1707 = vmatprep.subr.mxu0 %v1577
    %1708 = vmatpush1.msra.mxu0 %v1576
    %1709 = vmatprep.subr.mxu0 %v1581
    %1710 = vmatpush1.msra.mxu0 %v1580
    %1711 = vmatprep.subr.mxu0 %v1585
    %1712 = vmatpush1.msra.mxu0 %v1584
    %1713 = vmatprep.subr.mxu0 %v1589
    %1714 = vmatpush1.msra.mxu0 %v1588
    %1715 = vmatprep.subr.mxu0 %v1593
    %1716 = vmatpush1.msra.mxu0 %v1592
    %1717 = vmatprep.subr.mxu0 %v1597
    %1718 = vmatpush1.msra.mxu0 %v1596
    %1719 = vmatprep.subr.mxu0 %v1601
    %1720 = vmatpush1.msra.mxu0 %v1600
    %1721 = vmatprep.subr.mxu0 %v1605
    %1722 = vmatpush1.msra.mxu0 %v1604
    %1723 = vmatprep.subr.mxu0 %v1609
    %1724 = vmatpush1.msra.mxu0 %v1608
    %1725 = vmatprep.subr.mxu0 %v1613
    %1726 = vmatpush1.msra.mxu0 %v1612
    %1727 = vmatprep.subr.mxu0 %v1617
    %1728 = vmatpush1.msra.mxu0 %v1616
    %1729 = vmatprep.subr.mxu0 %v1621
    %1730 = vmatpush1.msra.mxu0 %v1620
    %1731 = vmatprep.subr.mxu0 %v1625
    %1732 = vmatpush1.msra.mxu0 %v1624
    %1733 = vmatprep.subr.mxu0 %v1629
    %1734 = vmatpush1.msra.mxu0 %v1628
    %1735 = vmatprep.subr.mxu0 %v1633
    %1736 = vmatpush1.msra.mxu0 %v1632
    %1737 = vmatprep.subr.mxu0 0.0
    %1738 = vmatpush1.msra.mxu0 0.0
    %1739 = vmatprep.subr.mxu0 0.0
    %1740 = vmatpush1.msra.mxu0 0.0
    %1741 = vmatprep.subr.mxu0 0.0
    %1742 = vmatpush1.msra.mxu0 0.0
    %1743 = vmatprep.subr.mxu0 0.0
    %1744 = vmatpush1.msra.mxu0 0.0
    %1745 = vmatprep.subr.mxu0 0.0
    %1746 = vmatpush1.msra.mxu0 0.0
    %1747 = vmatprep.subr.mxu0 0.0
    %1748 = vmatpush1.msra.mxu0 0.0
    %1749 = vmatprep.subr.mxu0 0.0
    %1750 = vmatpush1.msra.mxu0 0.0
    %1751 = vmatprep.subr.mxu0 0.0
    %1752 = vmatpush1.msra.mxu0 0.0
    %1753 = vmatprep.subr.mxu0 0.0
    %1754 = vmatpush1.msra.mxu0 0.0
    %1755 = vmatprep.subr.mxu0 0.0
    %1756 = vmatpush1.msra.mxu0 0.0
    %1757 = vmatprep.subr.mxu0 0.0
    %1758 = vmatpush1.msra.mxu0 0.0
    %1759 = vmatprep.subr.mxu0 0.0
    %1760 = vmatpush1.msra.mxu0 0.0
    %1761 = vmatprep.subr.mxu0 0.0
    %1762 = vmatpush1.msra.mxu0 0.0
    %1763 = vmatprep.subr.mxu0 0.0
    %1764 = vmatpush1.msra.mxu0 0.0
    %1765 = vmatprep.subr.mxu0 0.0
    %1766 = vmatpush1.msra.mxu0 0.0
    %1767 = vmatprep.subr.mxu0 0.0
    %1768 = vmatpush1.msra.mxu0 0.0
    %1769 = vmatprep.mubr.f32.mxu0 0.0
    %1770 = vmatmul.mubr.f32.gmra.mrb[0].mxu0 %v1519
    %v1771 = vpop.f32.mrb[0].mxu0
    %v1772 = vadd.f32 0.0, %v1771
    %v1773 = vpop.f32.mrb[0].mxu0
    %v1774 = vadd.f32 0.0, %v1773
    %1775 = vdwg.mxu0
    %v1776 = vadd.f32 %v1566, %v1701
    %v1777 = vadd.f32 %v1567, %v1703
    %v1778 = vadd.f32 %v1568, %v1772
    %v1779 = vadd.f32 %v1569, %v1774
    %v1780 = vxor.u32 %v1776, 2147483648
    %v1781 = vmul.f32 %v1780, 1.442695
    %v1782 = vpow.pop %v1781
    %v1783 = vadd.f32 %v1782, 1.0
    %v1784 = vrcp.pop %v1783
    %v1785 = vmul.f32 1.0, %v1784
    %v1786 = vxor.u32 %v1777, 2147483648
    %v1787 = vmul.f32 %v1786, 1.442695
    %v1788 = vpow.pop %v1787
    %v1789 = vadd.f32 %v1788, 1.0
    %v1790 = vrcp.pop %v1789
    %v1791 = vmul.f32 1.0, %v1790
    %v1792 = vtanh.pop %v1778
    %v1793 = vxor.u32 %v1779, 2147483648
    %v1794 = vmul.f32 %v1793, 1.442695
    %v1795 = vpow.pop %v1794
    %v1796 = vadd.f32 %v1795, 1.0
    %v1797 = vrcp.pop %v1796
    %v1798 = vmul.f32 1.0, %v1797
    %v1799 = vmul.f32 %v1791, %v1517
    %v1800 = vmul.f32 %v1785, %v1792
    %v1801 = vadd.f32 %v1799, %v1800
    %v1802 = vtanh.pop %v1801
    %v1803 = vmul.f32 %v1798, %v1802
    %1804 = vst [vmem:[#allocation2 + $0x4] sm:$0x1] %v1803
    %1805 = vst [vmem:[#allocation3 + $0x3] sm:$0x1] %v1803
    %v1806 = vld [vmem:[%s952] ss:$8 sm:$0xf]
    %v1807 = vld [vmem:[%s950] ss:$8 sm:$0xf]
    %v1809 = vlaneseq
    %v1810 = vshrl.u32 %v1809, 7
    %v1811 = vsub.s32 0, %v1810
    %v1812 = vrot.slane %v1806, %v1811
    %v1813 = vlaneseq
    %v1814 = vshrl.u32 %v1813, 7
    %v1815 = vsub.s32 1, %v1814
    %v1816 = vrot.slane %v1806, %v1815
    %v1817 = vlaneseq
    %v1818 = vshrl.u32 %v1817, 7
    %v1819 = vsub.s32 2, %v1818
    %v1820 = vrot.slane %v1806, %v1819
    %v1821 = vlaneseq
    %v1822 = vshrl.u32 %v1821, 7
    %v1823 = vsub.s32 3, %v1822
    %v1824 = vrot.slane %v1806, %v1823
    %v1830 = vlaneseq
    %v1831 = vshrl.u32 %v1830, 7
    %v1832 = vsub.s32 0, %v1831
    %v1833 = vrot.slane %v1807, %v1832
    %v1834 = vlaneseq
    %v1835 = vshrl.u32 %v1834, 7
    %v1836 = vsub.s32 1, %v1835
    %v1837 = vrot.slane %v1807, %v1836
    %v1838 = vlaneseq
    %v1839 = vshrl.u32 %v1838, 7
    %v1840 = vsub.s32 2, %v1839
    %v1841 = vrot.slane %v1807, %v1840
    %v1842 = vlaneseq
    %v1843 = vshrl.u32 %v1842, 7
    %v1844 = vsub.s32 3, %v1843
    %v1845 = vrot.slane %v1807, %v1844
    %v1850 = vsel %vm184, %v1812, %v1833
    %v1851 = vsel %vm185, %v1816, %v1837
    %v1852 = vsel %vm186, %v1820, %v1841
    %v1853 = vsel %vm187, %v1824, %v1845
    %v1854 = vld [vmem:[#allocation11] sm:$0xff]
    %v1855 = vld [vmem:[#allocation11 + $0x8] sm:$0xff]
    %v1856 = vld [vmem:[#allocation11 + $0x10] sm:$0xff]
    %v1857 = vld [vmem:[#allocation11 + $0x18] sm:$0xff]
    %v1858 = vld [vmem:[#allocation11 + $0x20] sm:$0xff]
    %v1859 = vld [vmem:[#allocation11 + $0x28] sm:$0xff]
    %v1860 = vld [vmem:[#allocation11 + $0x30] sm:$0xff]
    %v1861 = vld [vmem:[#allocation11 + $0x38] sm:$0xff]
    %v1862 = vld [vmem:[#allocation11 + $0x40] sm:$0xff]
    %v1863 = vld [vmem:[#allocation11 + $0x48] sm:$0xff]
    %v1864 = vld [vmem:[#allocation11 + $0x50] sm:$0xff]
    %v1865 = vld [vmem:[#allocation11 + $0x58] sm:$0xff]
    %v1866 = vld [vmem:[#allocation11 + $0x60] sm:$0xff]
    %v1867 = vld [vmem:[#allocation11 + $0x68] sm:$0xff]
    %v1868 = vld [vmem:[#allocation11 + $0x70] sm:$0xff]
    %v1869 = vld [vmem:[#allocation11 + $0x78] sm:$0xff]
    %v1870 = vld [vmem:[#allocation11 + $0x80] sm:$0xff]
    %v1871 = vld [vmem:[#allocation11 + $0x88] sm:$0xff]
    %v1872 = vld [vmem:[#allocation11 + $0x90] sm:$0xff]
    %v1873 = vld [vmem:[#allocation11 + $0x98] sm:$0xff]
    %v1874 = vld [vmem:[#allocation11 + $0xa0] sm:$0xff]
    %v1875 = vld [vmem:[#allocation11 + $0xa8] sm:$0xff]
    %v1876 = vld [vmem:[#allocation11 + $0xb0] sm:$0xff]
    %v1877 = vld [vmem:[#allocation11 + $0xb8] sm:$0xff]
    %v1878 = vld [vmem:[#allocation11 + $0xc0] sm:$0xff]
    %v1879 = vld [vmem:[#allocation11 + $0xc8] sm:$0xff]
    %v1880 = vld [vmem:[#allocation11 + $0xd0] sm:$0xff]
    %v1881 = vld [vmem:[#allocation11 + $0xd8] sm:$0xff]
    %v1882 = vld [vmem:[#allocation11 + $0xe0] sm:$0xff]
    %v1883 = vld [vmem:[#allocation11 + $0xe8] sm:$0xff]
    %v1884 = vld [vmem:[#allocation11 + $0xf0] sm:$0xff]
    %v1885 = vld [vmem:[#allocation11 + $0xf8] sm:$0xff]
    %v1886 = vld [vmem:[#allocation11 + $0x100] sm:$0xff]
    %v1887 = vld [vmem:[#allocation11 + $0x108] sm:$0xff]
    %v1888 = vld [vmem:[#allocation11 + $0x110] sm:$0xff]
    %v1889 = vld [vmem:[#allocation11 + $0x118] sm:$0xff]
    %v1890 = vld [vmem:[#allocation11 + $0x120] sm:$0xff]
    %v1891 = vld [vmem:[#allocation11 + $0x128] sm:$0xff]
    %v1892 = vld [vmem:[#allocation11 + $0x130] sm:$0xff]
    %v1893 = vld [vmem:[#allocation11 + $0x138] sm:$0xff]
    %v1894 = vld [vmem:[#allocation11 + $0x140] sm:$0xff]
    %v1895 = vld [vmem:[#allocation11 + $0x148] sm:$0xff]
    %v1896 = vld [vmem:[#allocation11 + $0x150] sm:$0xff]
    %v1897 = vld [vmem:[#allocation11 + $0x158] sm:$0xff]
    %v1898 = vld [vmem:[#allocation11 + $0x160] sm:$0xff]
    %v1899 = vld [vmem:[#allocation11 + $0x168] sm:$0xff]
    %v1900 = vld [vmem:[#allocation11 + $0x170] sm:$0xff]
    %v1901 = vld [vmem:[#allocation11 + $0x178] sm:$0xff]
    %v1902 = vld [vmem:[#allocation11 + $0x180] sm:$0xff]
    %v1903 = vld [vmem:[#allocation11 + $0x188] sm:$0xff]
    %v1904 = vld [vmem:[#allocation11 + $0x190] sm:$0xff]
    %v1905 = vld [vmem:[#allocation11 + $0x198] sm:$0xff]
    %v1906 = vld [vmem:[#allocation11 + $0x1a0] sm:$0xff]
    %v1907 = vld [vmem:[#allocation11 + $0x1a8] sm:$0xff]
    %v1908 = vld [vmem:[#allocation11 + $0x1b0] sm:$0xff]
    %v1909 = vld [vmem:[#allocation11 + $0x1b8] sm:$0xff]
    %v1910 = vld [vmem:[#allocation11 + $0x1c0] sm:$0xff]
    %v1911 = vld [vmem:[#allocation11 + $0x1c8] sm:$0xff]
    %v1912 = vld [vmem:[#allocation11 + $0x1d0] sm:$0xff]
    %v1913 = vld [vmem:[#allocation11 + $0x1d8] sm:$0xff]
    %v1914 = vld [vmem:[#allocation11 + $0x1e0] sm:$0xff]
    %v1915 = vld [vmem:[#allocation11 + $0x1e8] sm:$0xff]
    %v1916 = vld [vmem:[#allocation11 + $0x1f0] sm:$0xff]
    %v1917 = vld [vmem:[#allocation11 + $0x1f8] sm:$0xff]
    %1918 = vmatprep.subr.mxu0 %v1855
    %1919 = vmatpush1.msra.mxu0 %v1854
    %1920 = vmatprep.subr.mxu0 %v1859
    %1921 = vmatpush1.msra.mxu0 %v1858
    %1922 = vmatprep.subr.mxu0 %v1863
    %1923 = vmatpush1.msra.mxu0 %v1862
    %1924 = vmatprep.subr.mxu0 %v1867
    %1925 = vmatpush1.msra.mxu0 %v1866
    %1926 = vmatprep.subr.mxu0 %v1871
    %1927 = vmatpush1.msra.mxu0 %v1870
    %1928 = vmatprep.subr.mxu0 %v1875
    %1929 = vmatpush1.msra.mxu0 %v1874
    %1930 = vmatprep.subr.mxu0 %v1879
    %1931 = vmatpush1.msra.mxu0 %v1878
    %1932 = vmatprep.subr.mxu0 %v1883
    %1933 = vmatpush1.msra.mxu0 %v1882
    %1934 = vmatprep.subr.mxu0 %v1887
    %1935 = vmatpush1.msra.mxu0 %v1886
    %1936 = vmatprep.subr.mxu0 %v1891
    %1937 = vmatpush1.msra.mxu0 %v1890
    %1938 = vmatprep.subr.mxu0 %v1895
    %1939 = vmatpush1.msra.mxu0 %v1894
    %1940 = vmatprep.subr.mxu0 %v1899
    %1941 = vmatpush1.msra.mxu0 %v1898
    %1942 = vmatprep.subr.mxu0 %v1903
    %1943 = vmatpush1.msra.mxu0 %v1902
    %1944 = vmatprep.subr.mxu0 %v1907
    %1945 = vmatpush1.msra.mxu0 %v1906
    %1946 = vmatprep.subr.mxu0 %v1911
    %1947 = vmatpush1.msra.mxu0 %v1910
    %1948 = vmatprep.subr.mxu0 %v1915
    %1949 = vmatpush1.msra.mxu0 %v1914
    %1950 = vmatprep.subr.mxu0 0.0
    %1951 = vmatpush1.msra.mxu0 0.0
    %1952 = vmatprep.subr.mxu0 0.0
    %1953 = vmatpush1.msra.mxu0 0.0
    %1954 = vmatprep.subr.mxu0 0.0
    %1955 = vmatpush1.msra.mxu0 0.0
    %1956 = vmatprep.subr.mxu0 0.0
    %1957 = vmatpush1.msra.mxu0 0.0
    %1958 = vmatprep.subr.mxu0 0.0
    %1959 = vmatpush1.msra.mxu0 0.0
    %1960 = vmatprep.subr.mxu0 0.0
    %1961 = vmatpush1.msra.mxu0 0.0
    %1962 = vmatprep.subr.mxu0 0.0
    %1963 = vmatpush1.msra.mxu0 0.0
    %1964 = vmatprep.subr.mxu0 0.0
    %1965 = vmatpush1.msra.mxu0 0.0
    %1966 = vmatprep.subr.mxu0 0.0
    %1967 = vmatpush1.msra.mxu0 0.0
    %1968 = vmatprep.subr.mxu0 0.0
    %1969 = vmatpush1.msra.mxu0 0.0
    %1970 = vmatprep.subr.mxu0 0.0
    %1971 = vmatpush1.msra.mxu0 0.0
    %1972 = vmatprep.subr.mxu0 0.0
    %1973 = vmatpush1.msra.mxu0 0.0
    %1974 = vmatprep.subr.mxu0 0.0
    %1975 = vmatpush1.msra.mxu0 0.0
    %1976 = vmatprep.subr.mxu0 0.0
    %1977 = vmatpush1.msra.mxu0 0.0
    %1978 = vmatprep.subr.mxu0 0.0
    %1979 = vmatpush1.msra.mxu0 0.0
    %1980 = vmatprep.subr.mxu0 0.0
    %1981 = vmatpush1.msra.mxu0 0.0
    %1982 = vmatprep.mubr.f32.mxu0 0.0
    %1983 = vmatmul.mubr.f32.gmra.mrb[0].mxu0 %v1803
    %v1984 = vpop.f32.mrb[0].mxu0
    %v1985 = vadd.f32 0.0, %v1984
    %v1986 = vpop.f32.mrb[0].mxu0
    %v1987 = vadd.f32 0.0, %v1986
    %1988 = vdwg.mxu0
    %1989 = vmatprep.subr.mxu0 %v1857
    %1990 = vmatpush1.msra.mxu0 %v1856
    %1991 = vmatprep.subr.mxu0 %v1861
    %1992 = vmatpush1.msra.mxu0 %v1860
    %1993 = vmatprep.subr.mxu0 %v1865
    %1994 = vmatpush1.msra.mxu0 %v1864
    %1995 = vmatprep.subr.mxu0 %v1869
    %1996 = vmatpush1.msra.mxu0 %v1868
    %1997 = vmatprep.subr.mxu0 %v1873
    %1998 = vmatpush1.msra.mxu0 %v1872
    %1999 = vmatprep.subr.mxu0 %v1877
    %2000 = vmatpush1.msra.mxu0 %v1876
    %2001 = vmatprep.subr.mxu0 %v1881
    %2002 = vmatpush1.msra.mxu0 %v1880
    %2003 = vmatprep.subr.mxu0 %v1885
    %2004 = vmatpush1.msra.mxu0 %v1884
    %2005 = vmatprep.subr.mxu0 %v1889
    %2006 = vmatpush1.msra.mxu0 %v1888
    %2007 = vmatprep.subr.mxu0 %v1893
    %2008 = vmatpush1.msra.mxu0 %v1892
    %2009 = vmatprep.subr.mxu0 %v1897
    %2010 = vmatpush1.msra.mxu0 %v1896
    %2011 = vmatprep.subr.mxu0 %v1901
    %2012 = vmatpush1.msra.mxu0 %v1900
    %2013 = vmatprep.subr.mxu0 %v1905
    %2014 = vmatpush1.msra.mxu0 %v1904
    %2015 = vmatprep.subr.mxu0 %v1909
    %2016 = vmatpush1.msra.mxu0 %v1908
    %2017 = vmatprep.subr.mxu0 %v1913
    %2018 = vmatpush1.msra.mxu0 %v1912
    %2019 = vmatprep.subr.mxu0 %v1917
    %2020 = vmatpush1.msra.mxu0 %v1916
    %2021 = vmatprep.subr.mxu0 0.0
    %2022 = vmatpush1.msra.mxu0 0.0
    %2023 = vmatprep.subr.mxu0 0.0
    %2024 = vmatpush1.msra.mxu0 0.0
    %2025 = vmatprep.subr.mxu0 0.0
    %2026 = vmatpush1.msra.mxu0 0.0
    %2027 = vmatprep.subr.mxu0 0.0
    %2028 = vmatpush1.msra.mxu0 0.0
    %2029 = vmatprep.subr.mxu0 0.0
    %2030 = vmatpush1.msra.mxu0 0.0
    %2031 = vmatprep.subr.mxu0 0.0
    %2032 = vmatpush1.msra.mxu0 0.0
    %2033 = vmatprep.subr.mxu0 0.0
    %2034 = vmatpush1.msra.mxu0 0.0
    %2035 = vmatprep.subr.mxu0 0.0
    %2036 = vmatpush1.msra.mxu0 0.0
    %2037 = vmatprep.subr.mxu0 0.0
    %2038 = vmatpush1.msra.mxu0 0.0
    %2039 = vmatprep.subr.mxu0 0.0
    %2040 = vmatpush1.msra.mxu0 0.0
    %2041 = vmatprep.subr.mxu0 0.0
    %2042 = vmatpush1.msra.mxu0 0.0
    %2043 = vmatprep.subr.mxu0 0.0
    %2044 = vmatpush1.msra.mxu0 0.0
    %2045 = vmatprep.subr.mxu0 0.0
    %2046 = vmatpush1.msra.mxu0 0.0
    %2047 = vmatprep.subr.mxu0 0.0
    %2048 = vmatpush1.msra.mxu0 0.0
    %2049 = vmatprep.subr.mxu0 0.0
    %2050 = vmatpush1.msra.mxu0 0.0
    %2051 = vmatprep.subr.mxu0 0.0
    %2052 = vmatpush1.msra.mxu0 0.0
    %2053 = vmatprep.mubr.f32.mxu0 0.0
    %2054 = vmatmul.mubr.f32.gmra.mrb[0].mxu0 %v1803
    %v2055 = vpop.f32.mrb[0].mxu0
    %v2056 = vadd.f32 0.0, %v2055
    %v2057 = vpop.f32.mrb[0].mxu0
    %v2058 = vadd.f32 0.0, %v2057
    %2059 = vdwg.mxu0
    %v2060 = vadd.f32 %v1850, %v1985
    %v2061 = vadd.f32 %v1851, %v1987
    %v2062 = vadd.f32 %v1852, %v2056
    %v2063 = vadd.f32 %v1853, %v2058
    %v2064 = vxor.u32 %v2060, 2147483648
    %v2065 = vmul.f32 %v2064, 1.442695
    %v2066 = vpow.pop %v2065
    %v2067 = vadd.f32 %v2066, 1.0
    %v2068 = vrcp.pop %v2067
    %v2069 = vmul.f32 1.0, %v2068
    %v2070 = vxor.u32 %v2061, 2147483648
    %v2071 = vmul.f32 %v2070, 1.442695
    %v2072 = vpow.pop %v2071
    %v2073 = vadd.f32 %v2072, 1.0
    %v2074 = vrcp.pop %v2073
    %v2075 = vmul.f32 1.0, %v2074
    %v2076 = vtanh.pop %v2062
    %v2077 = vxor.u32 %v2063, 2147483648
    %v2078 = vmul.f32 %v2077, 1.442695
    %v2079 = vpow.pop %v2078
    %v2080 = vadd.f32 %v2079, 1.0
    %v2081 = vrcp.pop %v2080
    %v2082 = vmul.f32 1.0, %v2081
    %v2083 = vmul.f32 %v2075, %v1801
    %v2084 = vmul.f32 %v2069, %v2076
    %v2085 = vadd.f32 %v2083, %v2084
    %v2086 = vtanh.pop %v2085
    %v2087 = vmul.f32 %v2082, %v2086
    %2088 = vst [vmem:[#allocation2 + $0x5] sm:$0x1] %v2087
    %2089 = vst [vmem:[#allocation3 + $0x2] sm:$0x1] %v2087
    %v2090 = vld [vmem:[%s666] ss:$8 sm:$0xf]
    %v2091 = vld [vmem:[%s664] ss:$8 sm:$0xf]
    %v2093 = vlaneseq
    %v2094 = vshrl.u32 %v2093, 7
    %v2095 = vsub.s32 0, %v2094
    %v2096 = vrot.slane %v2090, %v2095
    %v2097 = vlaneseq
    %v2098 = vshrl.u32 %v2097, 7
    %v2099 = vsub.s32 1, %v2098
    %v2100 = vrot.slane %v2090, %v2099
    %v2101 = vlaneseq
    %v2102 = vshrl.u32 %v2101, 7
    %v2103 = vsub.s32 2, %v2102
    %v2104 = vrot.slane %v2090, %v2103
    %v2105 = vlaneseq
    %v2106 = vshrl.u32 %v2105, 7
    %v2107 = vsub.s32 3, %v2106
    %v2108 = vrot.slane %v2090, %v2107
    %v2114 = vlaneseq
    %v2115 = vshrl.u32 %v2114, 7
    %v2116 = vsub.s32 0, %v2115
    %v2117 = vrot.slane %v2091, %v2116
    %v2118 = vlaneseq
    %v2119 = vshrl.u32 %v2118, 7
    %v2120 = vsub.s32 1, %v2119
    %v2121 = vrot.slane %v2091, %v2120
    %v2122 = vlaneseq
    %v2123 = vshrl.u32 %v2122, 7
    %v2124 = vsub.s32 2, %v2123
    %v2125 = vrot.slane %v2091, %v2124
    %v2126 = vlaneseq
    %v2127 = vshrl.u32 %v2126, 7
    %v2128 = vsub.s32 3, %v2127
    %v2129 = vrot.slane %v2091, %v2128
    %v2134 = vsel %vm184, %v2096, %v2117
    %v2135 = vsel %vm185, %v2100, %v2121
    %v2136 = vsel %vm186, %v2104, %v2125
    %v2137 = vsel %vm187, %v2108, %v2129
    %v2138 = vld [vmem:[#allocation11] sm:$0xff]
    %v2139 = vld [vmem:[#allocation11 + $0x8] sm:$0xff]
    %v2140 = vld [vmem:[#allocation11 + $0x10] sm:$0xff]
    %v2141 = vld [vmem:[#allocation11 + $0x18] sm:$0xff]
    %v2142 = vld [vmem:[#allocation11 + $0x20] sm:$0xff]
    %v2143 = vld [vmem:[#allocation11 + $0x28] sm:$0xff]
    %v2144 = vld [vmem:[#allocation11 + $0x30] sm:$0xff]
    %v2145 = vld [vmem:[#allocation11 + $0x38] sm:$0xff]
    %v2146 = vld [vmem:[#allocation11 + $0x40] sm:$0xff]
    %v2147 = vld [vmem:[#allocation11 + $0x48] sm:$0xff]
    %v2148 = vld [vmem:[#allocation11 + $0x50] sm:$0xff]
    %v2149 = vld [vmem:[#allocation11 + $0x58] sm:$0xff]
    %v2150 = vld [vmem:[#allocation11 + $0x60] sm:$0xff]
    %v2151 = vld [vmem:[#allocation11 + $0x68] sm:$0xff]
    %v2152 = vld [vmem:[#allocation11 + $0x70] sm:$0xff]
    %v2153 = vld [vmem:[#allocation11 + $0x78] sm:$0xff]
    %v2154 = vld [vmem:[#allocation11 + $0x80] sm:$0xff]
    %v2155 = vld [vmem:[#allocation11 + $0x88] sm:$0xff]
    %v2156 = vld [vmem:[#allocation11 + $0x90] sm:$0xff]
    %v2157 = vld [vmem:[#allocation11 + $0x98] sm:$0xff]
    %v2158 = vld [vmem:[#allocation11 + $0xa0] sm:$0xff]
    %v2159 = vld [vmem:[#allocation11 + $0xa8] sm:$0xff]
    %v2160 = vld [vmem:[#allocation11 + $0xb0] sm:$0xff]
    %v2161 = vld [vmem:[#allocation11 + $0xb8] sm:$0xff]
    %v2162 = vld [vmem:[#allocation11 + $0xc0] sm:$0xff]
    %v2163 = vld [vmem:[#allocation11 + $0xc8] sm:$0xff]
    %v2164 = vld [vmem:[#allocation11 + $0xd0] sm:$0xff]
    %v2165 = vld [vmem:[#allocation11 + $0xd8] sm:$0xff]
    %v2166 = vld [vmem:[#allocation11 + $0xe0] sm:$0xff]
    %v2167 = vld [vmem:[#allocation11 + $0xe8] sm:$0xff]
    %v2168 = vld [vmem:[#allocation11 + $0xf0] sm:$0xff]
    %v2169 = vld [vmem:[#allocation11 + $0xf8] sm:$0xff]
    %v2170 = vld [vmem:[#allocation11 + $0x100] sm:$0xff]
    %v2171 = vld [vmem:[#allocation11 + $0x108] sm:$0xff]
    %v2172 = vld [vmem:[#allocation11 + $0x110] sm:$0xff]
    %v2173 = vld [vmem:[#allocation11 + $0x118] sm:$0xff]
    %v2174 = vld [vmem:[#allocation11 + $0x120] sm:$0xff]
    %v2175 = vld [vmem:[#allocation11 + $0x128] sm:$0xff]
    %v2176 = vld [vmem:[#allocation11 + $0x130] sm:$0xff]
    %v2177 = vld [vmem:[#allocation11 + $0x138] sm:$0xff]
    %v2178 = vld [vmem:[#allocation11 + $0x140] sm:$0xff]
    %v2179 = vld [vmem:[#allocation11 + $0x148] sm:$0xff]
    %v2180 = vld [vmem:[#allocation11 + $0x150] sm:$0xff]
    %v2181 = vld [vmem:[#allocation11 + $0x158] sm:$0xff]
    %v2182 = vld [vmem:[#allocation11 + $0x160] sm:$0xff]
    %v2183 = vld [vmem:[#allocation11 + $0x168] sm:$0xff]
    %v2184 = vld [vmem:[#allocation11 + $0x170] sm:$0xff]
    %v2185 = vld [vmem:[#allocation11 + $0x178] sm:$0xff]
    %v2186 = vld [vmem:[#allocation11 + $0x180] sm:$0xff]
    %v2187 = vld [vmem:[#allocation11 + $0x188] sm:$0xff]
    %v2188 = vld [vmem:[#allocation11 + $0x190] sm:$0xff]
    %v2189 = vld [vmem:[#allocation11 + $0x198] sm:$0xff]
    %v2190 = vld [vmem:[#allocation11 + $0x1a0] sm:$0xff]
    %v2191 = vld [vmem:[#allocation11 + $0x1a8] sm:$0xff]
    %v2192 = vld [vmem:[#allocation11 + $0x1b0] sm:$0xff]
    %v2193 = vld [vmem:[#allocation11 + $0x1b8] sm:$0xff]
    %v2194 = vld [vmem:[#allocation11 + $0x1c0] sm:$0xff]
    %v2195 = vld [vmem:[#allocation11 + $0x1c8] sm:$0xff]
    %v2196 = vld [vmem:[#allocation11 + $0x1d0] sm:$0xff]
    %v2197 = vld [vmem:[#allocation11 + $0x1d8] sm:$0xff]
    %v2198 = vld [vmem:[#allocation11 + $0x1e0] sm:$0xff]
    %v2199 = vld [vmem:[#allocation11 + $0x1e8] sm:$0xff]
    %v2200 = vld [vmem:[#allocation11 + $0x1f0] sm:$0xff]
    %v2201 = vld [vmem:[#allocation11 + $0x1f8] sm:$0xff]
    %2202 = vmatprep.subr.mxu0 %v2139
    %2203 = vmatpush1.msra.mxu0 %v2138
    %2204 = vmatprep.subr.mxu0 %v2143
    %2205 = vmatpush1.msra.mxu0 %v2142
    %2206 = vmatprep.subr.mxu0 %v2147
    %2207 = vmatpush1.msra.mxu0 %v2146
    %2208 = vmatprep.subr.mxu0 %v2151
    %2209 = vmatpush1.msra.mxu0 %v2150
    %2210 = vmatprep.subr.mxu0 %v2155
    %2211 = vmatpush1.msra.mxu0 %v2154
    %2212 = vmatprep.subr.mxu0 %v2159
    %2213 = vmatpush1.msra.mxu0 %v2158
    %2214 = vmatprep.subr.mxu0 %v2163
    %2215 = vmatpush1.msra.mxu0 %v2162
    %2216 = vmatprep.subr.mxu0 %v2167
    %2217 = vmatpush1.msra.mxu0 %v2166
    %2218 = vmatprep.subr.mxu0 %v2171
    %2219 = vmatpush1.msra.mxu0 %v2170
    %2220 = vmatprep.subr.mxu0 %v2175
    %2221 = vmatpush1.msra.mxu0 %v2174
    %2222 = vmatprep.subr.mxu0 %v2179
    %2223 = vmatpush1.msra.mxu0 %v2178
    %2224 = vmatprep.subr.mxu0 %v2183
    %2225 = vmatpush1.msra.mxu0 %v2182
    %2226 = vmatprep.subr.mxu0 %v2187
    %2227 = vmatpush1.msra.mxu0 %v2186
    %2228 = vmatprep.subr.mxu0 %v2191
    %2229 = vmatpush1.msra.mxu0 %v2190
    %2230 = vmatprep.subr.mxu0 %v2195
    %2231 = vmatpush1.msra.mxu0 %v2194
    %2232 = vmatprep.subr.mxu0 %v2199
    %2233 = vmatpush1.msra.mxu0 %v2198
    %2234 = vmatprep.subr.mxu0 0.0
    %2235 = vmatpush1.msra.mxu0 0.0
    %2236 = vmatprep.subr.mxu0 0.0
    %2237 = vmatpush1.msra.mxu0 0.0
    %2238 = vmatprep.subr.mxu0 0.0
    %2239 = vmatpush1.msra.mxu0 0.0
    %2240 = vmatprep.subr.mxu0 0.0
    %2241 = vmatpush1.msra.mxu0 0.0
    %2242 = vmatprep.subr.mxu0 0.0
    %2243 = vmatpush1.msra.mxu0 0.0
    %2244 = vmatprep.subr.mxu0 0.0
    %2245 = vmatpush1.msra.mxu0 0.0
    %2246 = vmatprep.subr.mxu0 0.0
    %2247 = vmatpush1.msra.mxu0 0.0
    %2248 = vmatprep.subr.mxu0 0.0
    %2249 = vmatpush1.msra.mxu0 0.0
    %2250 = vmatprep.subr.mxu0 0.0
    %2251 = vmatpush1.msra.mxu0 0.0
    %2252 = vmatprep.subr.mxu0 0.0
    %2253 = vmatpush1.msra.mxu0 0.0
    %2254 = vmatprep.subr.mxu0 0.0
    %2255 = vmatpush1.msra.mxu0 0.0
    %2256 = vmatprep.subr.mxu0 0.0
    %2257 = vmatpush1.msra.mxu0 0.0
    %2258 = vmatprep.subr.mxu0 0.0
    %2259 = vmatpush1.msra.mxu0 0.0
    %2260 = vmatprep.subr.mxu0 0.0
    %2261 = vmatpush1.msra.mxu0 0.0
    %2262 = vmatprep.subr.mxu0 0.0
    %2263 = vmatpush1.msra.mxu0 0.0
    %2264 = vmatprep.subr.mxu0 0.0
    %2265 = vmatpush1.msra.mxu0 0.0
    %2266 = vmatprep.mubr.f32.mxu0 0.0
    %2267 = vmatmul.mubr.f32.gmra.mrb[0].mxu0 %v2087
    %v2268 = vpop.f32.mrb[0].mxu0
    %v2269 = vadd.f32 0.0, %v2268
    %v2270 = vpop.f32.mrb[0].mxu0
    %v2271 = vadd.f32 0.0, %v2270
    %2272 = vdwg.mxu0
    %2273 = vmatprep.subr.mxu0 %v2141
    %2274 = vmatpush1.msra.mxu0 %v2140
    %2275 = vmatprep.subr.mxu0 %v2145
    %2276 = vmatpush1.msra.mxu0 %v2144
    %2277 = vmatprep.subr.mxu0 %v2149
    %2278 = vmatpush1.msra.mxu0 %v2148
    %2279 = vmatprep.subr.mxu0 %v2153
    %2280 = vmatpush1.msra.mxu0 %v2152
    %2281 = vmatprep.subr.mxu0 %v2157
    %2282 = vmatpush1.msra.mxu0 %v2156
    %2283 = vmatprep.subr.mxu0 %v2161
    %2284 = vmatpush1.msra.mxu0 %v2160
    %2285 = vmatprep.subr.mxu0 %v2165
    %2286 = vmatpush1.msra.mxu0 %v2164
    %2287 = vmatprep.subr.mxu0 %v2169
    %2288 = vmatpush1.msra.mxu0 %v2168
    %2289 = vmatprep.subr.mxu0 %v2173
    %2290 = vmatpush1.msra.mxu0 %v2172
    %2291 = vmatprep.subr.mxu0 %v2177
    %2292 = vmatpush1.msra.mxu0 %v2176
    %2293 = vmatprep.subr.mxu0 %v2181
    %2294 = vmatpush1.msra.mxu0 %v2180
    %2295 = vmatprep.subr.mxu0 %v2185
    %2296 = vmatpush1.msra.mxu0 %v2184
    %2297 = vmatprep.subr.mxu0 %v2189
    %2298 = vmatpush1.msra.mxu0 %v2188
    %2299 = vmatprep.subr.mxu0 %v2193
    %2300 = vmatpush1.msra.mxu0 %v2192
    %2301 = vmatprep.subr.mxu0 %v2197
    %2302 = vmatpush1.msra.mxu0 %v2196
    %2303 = vmatprep.subr.mxu0 %v2201
    %2304 = vmatpush1.msra.mxu0 %v2200
    %2305 = vmatprep.subr.mxu0 0.0
    %2306 = vmatpush1.msra.mxu0 0.0
    %2307 = vmatprep.subr.mxu0 0.0
    %2308 = vmatpush1.msra.mxu0 0.0
    %2309 = vmatprep.subr.mxu0 0.0
    %2310 = vmatpush1.msra.mxu0 0.0
    %2311 = vmatprep.subr.mxu0 0.0
    %2312 = vmatpush1.msra.mxu0 0.0
    %2313 = vmatprep.subr.mxu0 0.0
    %2314 = vmatpush1.msra.mxu0 0.0
    %2315 = vmatprep.subr.mxu0 0.0
    %2316 = vmatpush1.msra.mxu0 0.0
    %2317 = vmatprep.subr.mxu0 0.0
    %2318 = vmatpush1.msra.mxu0 0.0
    %2319 = vmatprep.subr.mxu0 0.0
    %2320 = vmatpush1.msra.mxu0 0.0
    %2321 = vmatprep.subr.mxu0 0.0
    %2322 = vmatpush1.msra.mxu0 0.0
    %2323 = vmatprep.subr.mxu0 0.0
    %2324 = vmatpush1.msra.mxu0 0.0
    %2325 = vmatprep.subr.mxu0 0.0
    %2326 = vmatpush1.msra.mxu0 0.0
    %2327 = vmatprep.subr.mxu0 0.0
    %2328 = vmatpush1.msra.mxu0 0.0
    %2329 = vmatprep.subr.mxu0 0.0
    %2330 = vmatpush1.msra.mxu0 0.0
    %2331 = vmatprep.subr.mxu0 0.0
    %2332 = vmatpush1.msra.mxu0 0.0
    %2333 = vmatprep.subr.mxu0 0.0
    %2334 = vmatpush1.msra.mxu0 0.0
    %2335 = vmatprep.subr.mxu0 0.0
    %2336 = vmatpush1.msra.mxu0 0.0
    %2337 = vmatprep.mubr.f32.mxu0 0.0
    %2338 = vmatmul.mubr.f32.gmra.mrb[0].mxu0 %v2087
    %v2339 = vpop.f32.mrb[0].mxu0
    %v2340 = vadd.f32 0.0, %v2339
    %v2341 = vpop.f32.mrb[0].mxu0
    %v2342 = vadd.f32 0.0, %v2341
    %2343 = vdwg.mxu0
    %v2344 = vadd.f32 %v2134, %v2269
    %v2345 = vadd.f32 %v2135, %v2271
    %v2346 = vadd.f32 %v2136, %v2340
    %v2347 = vadd.f32 %v2137, %v2342
    %v2348 = vxor.u32 %v2344, 2147483648
    %v2349 = vmul.f32 %v2348, 1.442695
    %v2350 = vpow.pop %v2349
    %v2351 = vadd.f32 %v2350, 1.0
    %v2352 = vrcp.pop %v2351
    %v2353 = vmul.f32 1.0, %v2352
    %v2354 = vxor.u32 %v2345, 2147483648
    %v2355 = vmul.f32 %v2354, 1.442695
    %v2356 = vpow.pop %v2355
    %v2357 = vadd.f32 %v2356, 1.0
    %v2358 = vrcp.pop %v2357
    %v2359 = vmul.f32 1.0, %v2358
    %v2360 = vtanh.pop %v2346
    %v2361 = vxor.u32 %v2347, 2147483648
    %v2362 = vmul.f32 %v2361, 1.442695
    %v2363 = vpow.pop %v2362
    %v2364 = vadd.f32 %v2363, 1.0
    %v2365 = vrcp.pop %v2364
    %v2366 = vmul.f32 1.0, %v2365
    %v2367 = vmul.f32 %v2359, %v2085
    %v2368 = vmul.f32 %v2353, %v2360
    %v2369 = vadd.f32 %v2367, %v2368
    %v2370 = vtanh.pop %v2369
    %v2371 = vmul.f32 %v2366, %v2370
    %2372 = vst [vmem:[#allocation2 + $0x6] sm:$0x1] %v2371
    %2373 = vst [vmem:[#allocation3 + $0x1] sm:$0x1] %v2371
    %v2374 = vld [vmem:[%s380] ss:$8 sm:$0xf]
    %v2375 = vld [vmem:[#allocation4] ss:$8 sm:$0xf]
    %v2377 = vlaneseq
    %v2378 = vshrl.u32 %v2377, 7
    %v2379 = vsub.s32 0, %v2378
    %v2380 = vrot.slane %v2374, %v2379
    %v2381 = vlaneseq
    %v2382 = vshrl.u32 %v2381, 7
    %v2383 = vsub.s32 1, %v2382
    %v2384 = vrot.slane %v2374, %v2383
    %v2385 = vlaneseq
    %v2386 = vshrl.u32 %v2385, 7
    %v2387 = vsub.s32 2, %v2386
    %v2388 = vrot.slane %v2374, %v2387
    %v2389 = vlaneseq
    %v2390 = vshrl.u32 %v2389, 7
    %v2391 = vsub.s32 3, %v2390
    %v2392 = vrot.slane %v2374, %v2391
    %v2398 = vlaneseq
    %v2399 = vshrl.u32 %v2398, 7
    %v2400 = vsub.s32 0, %v2399
    %v2401 = vrot.slane %v2375, %v2400
    %v2402 = vlaneseq
    %v2403 = vshrl.u32 %v2402, 7
    %v2404 = vsub.s32 1, %v2403
    %v2405 = vrot.slane %v2375, %v2404
    %v2406 = vlaneseq
    %v2407 = vshrl.u32 %v2406, 7
    %v2408 = vsub.s32 2, %v2407
    %v2409 = vrot.slane %v2375, %v2408
    %v2410 = vlaneseq
    %v2411 = vshrl.u32 %v2410, 7
    %v2412 = vsub.s32 3, %v2411
    %v2413 = vrot.slane %v2375, %v2412
    %v2418 = vsel %vm184, %v2380, %v2401
    %v2419 = vsel %vm185, %v2384, %v2405
    %v2420 = vsel %vm186, %v2388, %v2409
    %v2421 = vsel %vm187, %v2392, %v2413
    %v2422 = vld [vmem:[#allocation11] sm:$0xff]
    %v2423 = vld [vmem:[#allocation11 + $0x8] sm:$0xff]
    %v2424 = vld [vmem:[#allocation11 + $0x10] sm:$0xff]
    %v2425 = vld [vmem:[#allocation11 + $0x18] sm:$0xff]
    %v2426 = vld [vmem:[#allocation11 + $0x20] sm:$0xff]
    %v2427 = vld [vmem:[#allocation11 + $0x28] sm:$0xff]
    %v2428 = vld [vmem:[#allocation11 + $0x30] sm:$0xff]
    %v2429 = vld [vmem:[#allocation11 + $0x38] sm:$0xff]
    %v2430 = vld [vmem:[#allocation11 + $0x40] sm:$0xff]
    %v2431 = vld [vmem:[#allocation11 + $0x48] sm:$0xff]
    %v2432 = vld [vmem:[#allocation11 + $0x50] sm:$0xff]
    %v2433 = vld [vmem:[#allocation11 + $0x58] sm:$0xff]
    %v2434 = vld [vmem:[#allocation11 + $0x60] sm:$0xff]
    %v2435 = vld [vmem:[#allocation11 + $0x68] sm:$0xff]
    %v2436 = vld [vmem:[#allocation11 + $0x70] sm:$0xff]
    %v2437 = vld [vmem:[#allocation11 + $0x78] sm:$0xff]
    %v2438 = vld [vmem:[#allocation11 + $0x80] sm:$0xff]
    %v2439 = vld [vmem:[#allocation11 + $0x88] sm:$0xff]
    %v2440 = vld [vmem:[#allocation11 + $0x90] sm:$0xff]
    %v2441 = vld [vmem:[#allocation11 + $0x98] sm:$0xff]
    %v2442 = vld [vmem:[#allocation11 + $0xa0] sm:$0xff]
    %v2443 = vld [vmem:[#allocation11 + $0xa8] sm:$0xff]
    %v2444 = vld [vmem:[#allocation11 + $0xb0] sm:$0xff]
    %v2445 = vld [vmem:[#allocation11 + $0xb8] sm:$0xff]
    %v2446 = vld [vmem:[#allocation11 + $0xc0] sm:$0xff]
    %v2447 = vld [vmem:[#allocation11 + $0xc8] sm:$0xff]
    %v2448 = vld [vmem:[#allocation11 + $0xd0] sm:$0xff]
    %v2449 = vld [vmem:[#allocation11 + $0xd8] sm:$0xff]
    %v2450 = vld [vmem:[#allocation11 + $0xe0] sm:$0xff]
    %v2451 = vld [vmem:[#allocation11 + $0xe8] sm:$0xff]
    %v2452 = vld [vmem:[#allocation11 + $0xf0] sm:$0xff]
    %v2453 = vld [vmem:[#allocation11 + $0xf8] sm:$0xff]
    %v2454 = vld [vmem:[#allocation11 + $0x100] sm:$0xff]
    %v2455 = vld [vmem:[#allocation11 + $0x108] sm:$0xff]
    %v2456 = vld [vmem:[#allocation11 + $0x110] sm:$0xff]
    %v2457 = vld [vmem:[#allocation11 + $0x118] sm:$0xff]
    %v2458 = vld [vmem:[#allocation11 + $0x120] sm:$0xff]
    %v2459 = vld [vmem:[#allocation11 + $0x128] sm:$0xff]
    %v2460 = vld [vmem:[#allocation11 + $0x130] sm:$0xff]
    %v2461 = vld [vmem:[#allocation11 + $0x138] sm:$0xff]
    %v2462 = vld [vmem:[#allocation11 + $0x140] sm:$0xff]
    %v2463 = vld [vmem:[#allocation11 + $0x148] sm:$0xff]
    %v2464 = vld [vmem:[#allocation11 + $0x150] sm:$0xff]
    %v2465 = vld [vmem:[#allocation11 + $0x158] sm:$0xff]
    %v2466 = vld [vmem:[#allocation11 + $0x160] sm:$0xff]
    %v2467 = vld [vmem:[#allocation11 + $0x168] sm:$0xff]
    %v2468 = vld [vmem:[#allocation11 + $0x170] sm:$0xff]
    %v2469 = vld [vmem:[#allocation11 + $0x178] sm:$0xff]
    %v2470 = vld [vmem:[#allocation11 + $0x180] sm:$0xff]
    %v2471 = vld [vmem:[#allocation11 + $0x188] sm:$0xff]
    %v2472 = vld [vmem:[#allocation11 + $0x190] sm:$0xff]
    %v2473 = vld [vmem:[#allocation11 + $0x198] sm:$0xff]
    %v2474 = vld [vmem:[#allocation11 + $0x1a0] sm:$0xff]
    %v2475 = vld [vmem:[#allocation11 + $0x1a8] sm:$0xff]
    %v2476 = vld [vmem:[#allocation11 + $0x1b0] sm:$0xff]
    %v2477 = vld [vmem:[#allocation11 + $0x1b8] sm:$0xff]
    %v2478 = vld [vmem:[#allocation11 + $0x1c0] sm:$0xff]
    %v2479 = vld [vmem:[#allocation11 + $0x1c8] sm:$0xff]
    %v2480 = vld [vmem:[#allocation11 + $0x1d0] sm:$0xff]
    %v2481 = vld [vmem:[#allocation11 + $0x1d8] sm:$0xff]
    %v2482 = vld [vmem:[#allocation11 + $0x1e0] sm:$0xff]
    %v2483 = vld [vmem:[#allocation11 + $0x1e8] sm:$0xff]
    %v2484 = vld [vmem:[#allocation11 + $0x1f0] sm:$0xff]
    %v2485 = vld [vmem:[#allocation11 + $0x1f8] sm:$0xff]
    %2486 = vmatprep.subr.mxu0 %v2423
    %2487 = vmatpush1.msra.mxu0 %v2422
    %2488 = vmatprep.subr.mxu0 %v2427
    %2489 = vmatpush1.msra.mxu0 %v2426
    %2490 = vmatprep.subr.mxu0 %v2431
    %2491 = vmatpush1.msra.mxu0 %v2430
    %2492 = vmatprep.subr.mxu0 %v2435
    %2493 = vmatpush1.msra.mxu0 %v2434
    %2494 = vmatprep.subr.mxu0 %v2439
    %2495 = vmatpush1.msra.mxu0 %v2438
    %2496 = vmatprep.subr.mxu0 %v2443
    %2497 = vmatpush1.msra.mxu0 %v2442
    %2498 = vmatprep.subr.mxu0 %v2447
    %2499 = vmatpush1.msra.mxu0 %v2446
    %2500 = vmatprep.subr.mxu0 %v2451
    %2501 = vmatpush1.msra.mxu0 %v2450
    %2502 = vmatprep.subr.mxu0 %v2455
    %2503 = vmatpush1.msra.mxu0 %v2454
    %2504 = vmatprep.subr.mxu0 %v2459
    %2505 = vmatpush1.msra.mxu0 %v2458
    %2506 = vmatprep.subr.mxu0 %v2463
    %2507 = vmatpush1.msra.mxu0 %v2462
    %2508 = vmatprep.subr.mxu0 %v2467
    %2509 = vmatpush1.msra.mxu0 %v2466
    %2510 = vmatprep.subr.mxu0 %v2471
    %2511 = vmatpush1.msra.mxu0 %v2470
    %2512 = vmatprep.subr.mxu0 %v2475
    %2513 = vmatpush1.msra.mxu0 %v2474
    %2514 = vmatprep.subr.mxu0 %v2479
    %2515 = vmatpush1.msra.mxu0 %v2478
    %2516 = vmatprep.subr.mxu0 %v2483
    %2517 = vmatpush1.msra.mxu0 %v2482
    %2518 = vmatprep.subr.mxu0 0.0
    %2519 = vmatpush1.msra.mxu0 0.0
    %2520 = vmatprep.subr.mxu0 0.0
    %2521 = vmatpush1.msra.mxu0 0.0
    %2522 = vmatprep.subr.mxu0 0.0
    %2523 = vmatpush1.msra.mxu0 0.0
    %2524 = vmatprep.subr.mxu0 0.0
    %2525 = vmatpush1.msra.mxu0 0.0
    %2526 = vmatprep.subr.mxu0 0.0
    %2527 = vmatpush1.msra.mxu0 0.0
    %2528 = vmatprep.subr.mxu0 0.0
    %2529 = vmatpush1.msra.mxu0 0.0
    %2530 = vmatprep.subr.mxu0 0.0
    %2531 = vmatpush1.msra.mxu0 0.0
    %2532 = vmatprep.subr.mxu0 0.0
    %2533 = vmatpush1.msra.mxu0 0.0
    %2534 = vmatprep.subr.mxu0 0.0
    %2535 = vmatpush1.msra.mxu0 0.0
    %2536 = vmatprep.subr.mxu0 0.0
    %2537 = vmatpush1.msra.mxu0 0.0
    %2538 = vmatprep.subr.mxu0 0.0
    %2539 = vmatpush1.msra.mxu0 0.0
    %2540 = vmatprep.subr.mxu0 0.0
    %2541 = vmatpush1.msra.mxu0 0.0
    %2542 = vmatprep.subr.mxu0 0.0
    %2543 = vmatpush1.msra.mxu0 0.0
    %2544 = vmatprep.subr.mxu0 0.0
    %2545 = vmatpush1.msra.mxu0 0.0
    %2546 = vmatprep.subr.mxu0 0.0
    %2547 = vmatpush1.msra.mxu0 0.0
    %2548 = vmatprep.subr.mxu0 0.0
    %2549 = vmatpush1.msra.mxu0 0.0
    %2550 = vmatprep.mubr.f32.mxu0 0.0
    %2551 = vmatmul.mubr.f32.gmra.mrb[0].mxu0 %v2371
    %v2552 = vpop.f32.mrb[0].mxu0
    %v2553 = vadd.f32 0.0, %v2552
    %v2554 = vpop.f32.mrb[0].mxu0
    %v2555 = vadd.f32 0.0, %v2554
    %2556 = vdwg.mxu0
    %2557 = vmatprep.subr.mxu0 %v2425
    %2558 = vmatpush1.msra.mxu0 %v2424
    %2559 = vmatprep.subr.mxu0 %v2429
    %2560 = vmatpush1.msra.mxu0 %v2428
    %2561 = vmatprep.subr.mxu0 %v2433
    %2562 = vmatpush1.msra.mxu0 %v2432
    %2563 = vmatprep.subr.mxu0 %v2437
    %2564 = vmatpush1.msra.mxu0 %v2436
    %2565 = vmatprep.subr.mxu0 %v2441
    %2566 = vmatpush1.msra.mxu0 %v2440
    %2567 = vmatprep.subr.mxu0 %v2445
    %2568 = vmatpush1.msra.mxu0 %v2444
    %2569 = vmatprep.subr.mxu0 %v2449
    %2570 = vmatpush1.msra.mxu0 %v2448
    %2571 = vmatprep.subr.mxu0 %v2453
    %2572 = vmatpush1.msra.mxu0 %v2452
    %2573 = vmatprep.subr.mxu0 %v2457
    %2574 = vmatpush1.msra.mxu0 %v2456
    %2575 = vmatprep.subr.mxu0 %v2461
    %2576 = vmatpush1.msra.mxu0 %v2460
    %2577 = vmatprep.subr.mxu0 %v2465
    %2578 = vmatpush1.msra.mxu0 %v2464
    %2579 = vmatprep.subr.mxu0 %v2469
    %2580 = vmatpush1.msra.mxu0 %v2468
    %2581 = vmatprep.subr.mxu0 %v2473
    %2582 = vmatpush1.msra.mxu0 %v2472
    %2583 = vmatprep.subr.mxu0 %v2477
    %2584 = vmatpush1.msra.mxu0 %v2476
    %2585 = vmatprep.subr.mxu0 %v2481
    %2586 = vmatpush1.msra.mxu0 %v2480
    %2587 = vmatprep.subr.mxu0 %v2485
    %2588 = vmatpush1.msra.mxu0 %v2484
    %2589 = vmatprep.subr.mxu0 0.0
    %2590 = vmatpush1.msra.mxu0 0.0
    %2591 = vmatprep.subr.mxu0 0.0
    %2592 = vmatpush1.msra.mxu0 0.0
    %2593 = vmatprep.subr.mxu0 0.0
    %2594 = vmatpush1.msra.mxu0 0.0
    %2595 = vmatprep.subr.mxu0 0.0
    %2596 = vmatpush1.msra.mxu0 0.0
    %2597 = vmatprep.subr.mxu0 0.0
    %2598 = vmatpush1.msra.mxu0 0.0
    %2599 = vmatprep.subr.mxu0 0.0
    %2600 = vmatpush1.msra.mxu0 0.0
    %2601 = vmatprep.subr.mxu0 0.0
    %2602 = vmatpush1.msra.mxu0 0.0
    %2603 = vmatprep.subr.mxu0 0.0
    %2604 = vmatpush1.msra.mxu0 0.0
    %2605 = vmatprep.subr.mxu0 0.0
    %2606 = vmatpush1.msra.mxu0 0.0
    %2607 = vmatprep.subr.mxu0 0.0
    %2608 = vmatpush1.msra.mxu0 0.0
    %2609 = vmatprep.subr.mxu0 0.0
    %2610 = vmatpush1.msra.mxu0 0.0
    %2611 = vmatprep.subr.mxu0 0.0
    %2612 = vmatpush1.msra.mxu0 0.0
    %2613 = vmatprep.subr.mxu0 0.0
    %2614 = vmatpush1.msra.mxu0 0.0
    %2615 = vmatprep.subr.mxu0 0.0
    %2616 = vmatpush1.msra.mxu0 0.0
    %2617 = vmatprep.subr.mxu0 0.0
    %2618 = vmatpush1.msra.mxu0 0.0
    %2619 = vmatprep.subr.mxu0 0.0
    %2620 = vmatpush1.msra.mxu0 0.0
    %2621 = vmatprep.mubr.f32.mxu0 0.0
    %2622 = vmatmul.mubr.f32.gmra.mrb[0].mxu0 %v2371
    %v2623 = vpop.f32.mrb[0].mxu0
    %v2624 = vadd.f32 0.0, %v2623
    %v2625 = vpop.f32.mrb[0].mxu0
    %v2626 = vadd.f32 0.0, %v2625
    %2627 = vdwg.mxu0
    %v2628 = vadd.f32 %v2418, %v2553
    %v2629 = vadd.f32 %v2419, %v2555
    %v2630 = vadd.f32 %v2420, %v2624
    %v2631 = vadd.f32 %v2421, %v2626
    %v2632 = vxor.u32 %v2628, 2147483648
    %v2633 = vmul.f32 %v2632, 1.442695
    %v2634 = vpow.pop %v2633
    %v2635 = vadd.f32 %v2634, 1.0
    %v2636 = vrcp.pop %v2635
    %v2637 = vmul.f32 1.0, %v2636
    %v2638 = vxor.u32 %v2629, 2147483648
    %v2639 = vmul.f32 %v2638, 1.442695
    %v2640 = vpow.pop %v2639
    %v2641 = vadd.f32 %v2640, 1.0
    %v2642 = vrcp.pop %v2641
    %v2643 = vmul.f32 1.0, %v2642
    %v2644 = vtanh.pop %v2630
    %v2645 = vxor.u32 %v2631, 2147483648
    %v2646 = vmul.f32 %v2645, 1.442695
    %v2647 = vpow.pop %v2646
    %v2648 = vadd.f32 %v2647, 1.0
    %v2649 = vrcp.pop %v2648
    %v2650 = vmul.f32 1.0, %v2649
    %v2651 = vmul.f32 %v2643, %v2369
    %v2652 = vmul.f32 %v2637, %v2644
    %v2653 = vadd.f32 %v2651, %v2652
    %v2654 = vtanh.pop %v2653
    %v2655 = vmul.f32 %v2650, %v2654
    %2656 = vst [vmem:[#allocation2 + $0x7] sm:$0x1] %v2655
    %2657 = vst [vmem:[#allocation3] sm:$0x1] %v2655
    %v2658 = vld [vmem:[#allocation2] sm:$0xff]
    %v2659 = vld [vmem:[#allocation3] sm:$0xff]
    %v2660 = vsel %vm188, %v2658, %v2659
    %2661 = vst [vmem:[#allocation2] sm:$0xff] %v2660
    %v2662 = vld [vmem:[#allocation2] sm:$0xff]
    %v2663 = vld [vmem:[#allocation12] sm:$0xff]
    %v2664 = vld [vmem:[#allocation12 + $0x8] sm:$0xff]
    %v2665 = vld [vmem:[#allocation12 + $0x10] sm:$0xff]
    %v2666 = vld [vmem:[#allocation12 + $0x18] sm:$0xff]
    %v2667 = vld [vmem:[#allocation12 + $0x20] sm:$0xff]
    %v2668 = vld [vmem:[#allocation12 + $0x28] sm:$0xff]
    %v2669 = vld [vmem:[#allocation12 + $0x30] sm:$0xff]
    %v2670 = vld [vmem:[#allocation12 + $0x38] sm:$0xff]
    %v2671 = vld [vmem:[#allocation12 + $0x40] sm:$0xff]
    %v2672 = vld [vmem:[#allocation12 + $0x48] sm:$0xff]
    %v2673 = vld [vmem:[#allocation12 + $0x50] sm:$0xff]
    %v2674 = vld [vmem:[#allocation12 + $0x58] sm:$0xff]
    %v2675 = vld [vmem:[#allocation12 + $0x60] sm:$0xff]
    %v2676 = vld [vmem:[#allocation12 + $0x68] sm:$0xff]
    %v2677 = vld [vmem:[#allocation12 + $0x70] sm:$0xff]
    %v2678 = vld [vmem:[#allocation12 + $0x78] sm:$0xff]
    %v2679 = vld [vmem:[#allocation12 + $0x80] sm:$0xff]
    %v2680 = vld [vmem:[#allocation12 + $0x88] sm:$0xff]
    %v2681 = vld [vmem:[#allocation12 + $0x90] sm:$0xff]
    %v2682 = vld [vmem:[#allocation12 + $0x98] sm:$0xff]
    %v2683 = vld [vmem:[#allocation12 + $0xa0] sm:$0xff]
    %v2684 = vld [vmem:[#allocation12 + $0xa8] sm:$0xff]
    %v2685 = vld [vmem:[#allocation12 + $0xb0] sm:$0xff]
    %v2686 = vld [vmem:[#allocation12 + $0xb8] sm:$0xff]
    %v2687 = vld [vmem:[#allocation12 + $0xc0] sm:$0xff]
    %v2688 = vld [vmem:[#allocation12 + $0xc8] sm:$0xff]
    %v2689 = vld [vmem:[#allocation12 + $0xd0] sm:$0xff]
    %v2690 = vld [vmem:[#allocation12 + $0xd8] sm:$0xff]
    %v2691 = vld [vmem:[#allocation12 + $0xe0] sm:$0xff]
    %v2692 = vld [vmem:[#allocation12 + $0xe8] sm:$0xff]
    %v2693 = vld [vmem:[#allocation12 + $0xf0] sm:$0xff]
    %v2694 = vld [vmem:[#allocation12 + $0xf8] sm:$0xff]
    %v2695 = vld [vmem:[#allocation12 + $0x100] sm:$0xff]
    %v2696 = vld [vmem:[#allocation12 + $0x108] sm:$0xff]
    %v2697 = vld [vmem:[#allocation12 + $0x110] sm:$0xff]
    %v2698 = vld [vmem:[#allocation12 + $0x118] sm:$0xff]
    %v2699 = vld [vmem:[#allocation12 + $0x120] sm:$0xff]
    %v2700 = vld [vmem:[#allocation12 + $0x128] sm:$0xff]
    %v2701 = vld [vmem:[#allocation12 + $0x130] sm:$0xff]
    %v2702 = vld [vmem:[#allocation12 + $0x138] sm:$0xff]
    %v2703 = vld [vmem:[#allocation12 + $0x140] sm:$0xff]
    %v2704 = vld [vmem:[#allocation12 + $0x148] sm:$0xff]
    %v2705 = vld [vmem:[#allocation12 + $0x150] sm:$0xff]
    %v2706 = vld [vmem:[#allocation12 + $0x158] sm:$0xff]
    %v2707 = vld [vmem:[#allocation12 + $0x160] sm:$0xff]
    %v2708 = vld [vmem:[#allocation12 + $0x168] sm:$0xff]
    %v2709 = vld [vmem:[#allocation12 + $0x170] sm:$0xff]
    %v2710 = vld [vmem:[#allocation12 + $0x178] sm:$0xff]
    %v2711 = vld [vmem:[#allocation12 + $0x180] sm:$0xff]
    %v2712 = vld [vmem:[#allocation12 + $0x188] sm:$0xff]
    %v2713 = vld [vmem:[#allocation12 + $0x190] sm:$0xff]
    %v2714 = vld [vmem:[#allocation12 + $0x198] sm:$0xff]
    %v2715 = vld [vmem:[#allocation12 + $0x1a0] sm:$0xff]
    %v2716 = vld [vmem:[#allocation12 + $0x1a8] sm:$0xff]
    %v2717 = vld [vmem:[#allocation12 + $0x1b0] sm:$0xff]
    %v2718 = vld [vmem:[#allocation12 + $0x1b8] sm:$0xff]
    %v2719 = vld [vmem:[#allocation12 + $0x1c0] sm:$0xff]
    %v2720 = vld [vmem:[#allocation12 + $0x1c8] sm:$0xff]
    %v2721 = vld [vmem:[#allocation12 + $0x1d0] sm:$0xff]
    %v2722 = vld [vmem:[#allocation12 + $0x1d8] sm:$0xff]
    %v2723 = vld [vmem:[#allocation12 + $0x1e0] sm:$0xff]
    %v2724 = vld [vmem:[#allocation12 + $0x1e8] sm:$0xff]
    %v2725 = vld [vmem:[#allocation12 + $0x1f0] sm:$0xff]
    %v2726 = vld [vmem:[#allocation12 + $0x1f8] sm:$0xff]
    %v2727 = vld [vmem:[%s6] sm:$0xf]
    %v2729 = vlaneseq
    %v2730 = vshrl.u32 %v2729, 7
    %v2731 = vsub.s32 0, %v2730
    %v2732 = vrot.slane %v2727, %v2731
    %v2733 = vlaneseq
    %v2734 = vshrl.u32 %v2733, 7
    %v2735 = vsub.s32 1, %v2734
    %v2736 = vrot.slane %v2727, %v2735
    %v2737 = vlaneseq
    %v2738 = vshrl.u32 %v2737, 7
    %v2739 = vsub.s32 2, %v2738
    %v2740 = vrot.slane %v2727, %v2739
    %v2741 = vlaneseq
    %v2742 = vshrl.u32 %v2741, 7
    %v2743 = vsub.s32 3, %v2742
    %v2744 = vrot.slane %v2727, %v2743
    %2749 = vmatprep.subr.mxu0 %v2664
    %2750 = vmatpush1.msra.mxu0 %v2663
    %2751 = vmatprep.subr.mxu0 %v2668
    %2752 = vmatpush1.msra.mxu0 %v2667
    %2753 = vmatprep.subr.mxu0 %v2672
    %2754 = vmatpush1.msra.mxu0 %v2671
    %2755 = vmatprep.subr.mxu0 %v2676
    %2756 = vmatpush1.msra.mxu0 %v2675
    %2757 = vmatprep.subr.mxu0 %v2680
    %2758 = vmatpush1.msra.mxu0 %v2679
    %2759 = vmatprep.subr.mxu0 %v2684
    %2760 = vmatpush1.msra.mxu0 %v2683
    %2761 = vmatprep.subr.mxu0 %v2688
    %2762 = vmatpush1.msra.mxu0 %v2687
    %2763 = vmatprep.subr.mxu0 %v2692
    %2764 = vmatpush1.msra.mxu0 %v2691
    %2765 = vmatprep.subr.mxu0 %v2696
    %2766 = vmatpush1.msra.mxu0 %v2695
    %2767 = vmatprep.subr.mxu0 %v2700
    %2768 = vmatpush1.msra.mxu0 %v2699
    %2769 = vmatprep.subr.mxu0 %v2704
    %2770 = vmatpush1.msra.mxu0 %v2703
    %2771 = vmatprep.subr.mxu0 %v2708
    %2772 = vmatpush1.msra.mxu0 %v2707
    %2773 = vmatprep.subr.mxu0 %v2712
    %2774 = vmatpush1.msra.mxu0 %v2711
    %2775 = vmatprep.subr.mxu0 %v2716
    %2776 = vmatpush1.msra.mxu0 %v2715
    %2777 = vmatprep.subr.mxu0 %v2720
    %2778 = vmatpush1.msra.mxu0 %v2719
    %2779 = vmatprep.subr.mxu0 %v2724
    %2780 = vmatpush1.msra.mxu0 %v2723
    %2781 = vmatprep.subr.mxu0 0.0
    %2782 = vmatpush1.msra.mxu0 0.0
    %2783 = vmatprep.subr.mxu0 0.0
    %2784 = vmatpush1.msra.mxu0 0.0
    %2785 = vmatprep.subr.mxu0 0.0
    %2786 = vmatpush1.msra.mxu0 0.0
    %2787 = vmatprep.subr.mxu0 0.0
    %2788 = vmatpush1.msra.mxu0 0.0
    %2789 = vmatprep.subr.mxu0 0.0
    %2790 = vmatpush1.msra.mxu0 0.0
    %2791 = vmatprep.subr.mxu0 0.0
    %2792 = vmatpush1.msra.mxu0 0.0
    %2793 = vmatprep.subr.mxu0 0.0
    %2794 = vmatpush1.msra.mxu0 0.0
    %2795 = vmatprep.subr.mxu0 0.0
    %2796 = vmatpush1.msra.mxu0 0.0
    %2797 = vmatprep.subr.mxu0 0.0
    %2798 = vmatpush1.msra.mxu0 0.0
    %2799 = vmatprep.subr.mxu0 0.0
    %2800 = vmatpush1.msra.mxu0 0.0
    %2801 = vmatprep.subr.mxu0 0.0
    %2802 = vmatpush1.msra.mxu0 0.0
    %2803 = vmatprep.subr.mxu0 0.0
    %2804 = vmatpush1.msra.mxu0 0.0
    %2805 = vmatprep.subr.mxu0 0.0
    %2806 = vmatpush1.msra.mxu0 0.0
    %2807 = vmatprep.subr.mxu0 0.0
    %2808 = vmatpush1.msra.mxu0 0.0
    %2809 = vmatprep.subr.mxu0 0.0
    %2810 = vmatpush1.msra.mxu0 0.0
    %2811 = vmatprep.subr.mxu0 0.0
    %2812 = vmatpush1.msra.mxu0 0.0
    %2813 = vmatprep.mubr.f32.mxu0 0.0
    %2814 = vmatmul.mubr.f32.gmra.mrb[0].mxu0 %v2662
    %v2815 = vpop.f32.mrb[0].mxu0
    %v2816 = vadd.f32 %v2732, %v2815
    %v2817 = vpop.f32.mrb[0].mxu0
    %v2818 = vadd.f32 %v2736, %v2817
    %2819 = vdwg.mxu0
    %2820 = vmatprep.subr.mxu0 %v2666
    %2821 = vmatpush1.msra.mxu0 %v2665
    %2822 = vmatprep.subr.mxu0 %v2670
    %2823 = vmatpush1.msra.mxu0 %v2669
    %2824 = vmatprep.subr.mxu0 %v2674
    %2825 = vmatpush1.msra.mxu0 %v2673
    %2826 = vmatprep.subr.mxu0 %v2678
    %2827 = vmatpush1.msra.mxu0 %v2677
    %2828 = vmatprep.subr.mxu0 %v2682
    %2829 = vmatpush1.msra.mxu0 %v2681
    %2830 = vmatprep.subr.mxu0 %v2686
    %2831 = vmatpush1.msra.mxu0 %v2685
    %2832 = vmatprep.subr.mxu0 %v2690
    %2833 = vmatpush1.msra.mxu0 %v2689
    %2834 = vmatprep.subr.mxu0 %v2694
    %2835 = vmatpush1.msra.mxu0 %v2693
    %2836 = vmatprep.subr.mxu0 %v2698
    %2837 = vmatpush1.msra.mxu0 %v2697
    %2838 = vmatprep.subr.mxu0 %v2702
    %2839 = vmatpush1.msra.mxu0 %v2701
    %2840 = vmatprep.subr.mxu0 %v2706
    %2841 = vmatpush1.msra.mxu0 %v2705
    %2842 = vmatprep.subr.mxu0 %v2710
    %2843 = vmatpush1.msra.mxu0 %v2709
    %2844 = vmatprep.subr.mxu0 %v2714
    %2845 = vmatpush1.msra.mxu0 %v2713
    %2846 = vmatprep.subr.mxu0 %v2718
    %2847 = vmatpush1.msra.mxu0 %v2717
    %2848 = vmatprep.subr.mxu0 %v2722
    %2849 = vmatpush1.msra.mxu0 %v2721
    %2850 = vmatprep.subr.mxu0 %v2726
    %2851 = vmatpush1.msra.mxu0 %v2725
    %2852 = vmatprep.subr.mxu0 0.0
    %2853 = vmatpush1.msra.mxu0 0.0
    %2854 = vmatprep.subr.mxu0 0.0
    %2855 = vmatpush1.msra.mxu0 0.0
    %2856 = vmatprep.subr.mxu0 0.0
    %2857 = vmatpush1.msra.mxu0 0.0
    %2858 = vmatprep.subr.mxu0 0.0
    %2859 = vmatpush1.msra.mxu0 0.0
    %2860 = vmatprep.subr.mxu0 0.0
    %2861 = vmatpush1.msra.mxu0 0.0
    %2862 = vmatprep.subr.mxu0 0.0
    %2863 = vmatpush1.msra.mxu0 0.0
    %2864 = vmatprep.subr.mxu0 0.0
    %2865 = vmatpush1.msra.mxu0 0.0
    %2866 = vmatprep.subr.mxu0 0.0
    %2867 = vmatpush1.msra.mxu0 0.0
    %2868 = vmatprep.subr.mxu0 0.0
    %2869 = vmatpush1.msra.mxu0 0.0
    %2870 = vmatprep.subr.mxu0 0.0
    %2871 = vmatpush1.msra.mxu0 0.0
    %2872 = vmatprep.subr.mxu0 0.0
    %2873 = vmatpush1.msra.mxu0 0.0
    %2874 = vmatprep.subr.mxu0 0.0
    %2875 = vmatpush1.msra.mxu0 0.0
    %2876 = vmatprep.subr.mxu0 0.0
    %2877 = vmatpush1.msra.mxu0 0.0
    %2878 = vmatprep.subr.mxu0 0.0
    %2879 = vmatpush1.msra.mxu0 0.0
    %2880 = vmatprep.subr.mxu0 0.0
    %2881 = vmatpush1.msra.mxu0 0.0
    %2882 = vmatprep.subr.mxu0 0.0
    %2883 = vmatpush1.msra.mxu0 0.0
    %2884 = vmatprep.mubr.f32.mxu0 0.0
    %2885 = vmatmul.mubr.f32.gmra.mrb[0].mxu0 %v2662
    %v2886 = vpop.f32.mrb[0].mxu0
    %v2887 = vadd.f32 %v2740, %v2886
    %v2888 = vpop.f32.mrb[0].mxu0
    %v2889 = vadd.f32 %v2744, %v2888
    %2890 = vdwg.mxu0
    %2891 = vst [vmem:[#allocation4] sm:$0xff] %v2816
    %2892 = vst [vmem:[#allocation4 + $0x8] sm:$0xff] %v2818
    %2893 = vst [vmem:[#allocation4 + $0x10] sm:$0xff] %v2887
    %2894 = vst [vmem:[#allocation4 + $0x18] sm:$0xff] %v2889
    %v2895 = vld [vmem:[#allocation4] ss:$8 sm:$0xf]
    %v2896 = vld [vmem:[%s380] ss:$8 sm:$0xf]
    %v2898 = vlaneseq
    %v2899 = vshrl.u32 %v2898, 7
    %v2900 = vsub.s32 0, %v2899
    %v2901 = vrot.slane %v2895, %v2900
    %v2902 = vlaneseq
    %v2903 = vshrl.u32 %v2902, 7
    %v2904 = vsub.s32 1, %v2903
    %v2905 = vrot.slane %v2895, %v2904
    %v2906 = vlaneseq
    %v2907 = vshrl.u32 %v2906, 7
    %v2908 = vsub.s32 2, %v2907
    %v2909 = vrot.slane %v2895, %v2908
    %v2910 = vlaneseq
    %v2911 = vshrl.u32 %v2910, 7
    %v2912 = vsub.s32 3, %v2911
    %v2913 = vrot.slane %v2895, %v2912
    %v2919 = vlaneseq
    %v2920 = vshrl.u32 %v2919, 7
    %v2921 = vsub.s32 0, %v2920
    %v2922 = vrot.slane %v2896, %v2921
    %v2923 = vlaneseq
    %v2924 = vshrl.u32 %v2923, 7
    %v2925 = vsub.s32 1, %v2924
    %v2926 = vrot.slane %v2896, %v2925
    %v2927 = vlaneseq
    %v2928 = vshrl.u32 %v2927, 7
    %v2929 = vsub.s32 2, %v2928
    %v2930 = vrot.slane %v2896, %v2929
    %v2931 = vlaneseq
    %v2932 = vshrl.u32 %v2931, 7
    %v2933 = vsub.s32 3, %v2932
    %v2934 = vrot.slane %v2896, %v2933
    %v2939 = vsel %vm184, %v2901, %v2922
    %v2940 = vsel %vm185, %v2905, %v2926
    %v2941 = vsel %vm186, %v2909, %v2930
    %v2942 = vsel %vm187, %v2913, %v2934
    %v2943 = vld [vmem:[#allocation14] sm:$0xff]
    %v2944 = vld [vmem:[#allocation14 + $0x8] sm:$0xff]
    %v2945 = vld [vmem:[#allocation14 + $0x10] sm:$0xff]
    %v2946 = vld [vmem:[#allocation14 + $0x18] sm:$0xff]
    %v2947 = vld [vmem:[#allocation14 + $0x20] sm:$0xff]
    %v2948 = vld [vmem:[#allocation14 + $0x28] sm:$0xff]
    %v2949 = vld [vmem:[#allocation14 + $0x30] sm:$0xff]
    %v2950 = vld [vmem:[#allocation14 + $0x38] sm:$0xff]
    %v2951 = vld [vmem:[#allocation14 + $0x40] sm:$0xff]
    %v2952 = vld [vmem:[#allocation14 + $0x48] sm:$0xff]
    %v2953 = vld [vmem:[#allocation14 + $0x50] sm:$0xff]
    %v2954 = vld [vmem:[#allocation14 + $0x58] sm:$0xff]
    %v2955 = vld [vmem:[#allocation14 + $0x60] sm:$0xff]
    %v2956 = vld [vmem:[#allocation14 + $0x68] sm:$0xff]
    %v2957 = vld [vmem:[#allocation14 + $0x70] sm:$0xff]
    %v2958 = vld [vmem:[#allocation14 + $0x78] sm:$0xff]
    %v2959 = vld [vmem:[#allocation14 + $0x80] sm:$0xff]
    %v2960 = vld [vmem:[#allocation14 + $0x88] sm:$0xff]
    %v2961 = vld [vmem:[#allocation14 + $0x90] sm:$0xff]
    %v2962 = vld [vmem:[#allocation14 + $0x98] sm:$0xff]
    %v2963 = vld [vmem:[#allocation14 + $0xa0] sm:$0xff]
    %v2964 = vld [vmem:[#allocation14 + $0xa8] sm:$0xff]
    %v2965 = vld [vmem:[#allocation14 + $0xb0] sm:$0xff]
    %v2966 = vld [vmem:[#allocation14 + $0xb8] sm:$0xff]
    %v2967 = vld [vmem:[#allocation14 + $0xc0] sm:$0xff]
    %v2968 = vld [vmem:[#allocation14 + $0xc8] sm:$0xff]
    %v2969 = vld [vmem:[#allocation14 + $0xd0] sm:$0xff]
    %v2970 = vld [vmem:[#allocation14 + $0xd8] sm:$0xff]
    %v2971 = vld [vmem:[#allocation14 + $0xe0] sm:$0xff]
    %v2972 = vld [vmem:[#allocation14 + $0xe8] sm:$0xff]
    %v2973 = vld [vmem:[#allocation14 + $0xf0] sm:$0xff]
    %v2974 = vld [vmem:[#allocation14 + $0xf8] sm:$0xff]
    %v2975 = vld [vmem:[#allocation14 + $0x100] sm:$0xff]
    %v2976 = vld [vmem:[#allocation14 + $0x108] sm:$0xff]
    %v2977 = vld [vmem:[#allocation14 + $0x110] sm:$0xff]
    %v2978 = vld [vmem:[#allocation14 + $0x118] sm:$0xff]
    %v2979 = vld [vmem:[#allocation14 + $0x120] sm:$0xff]
    %v2980 = vld [vmem:[#allocation14 + $0x128] sm:$0xff]
    %v2981 = vld [vmem:[#allocation14 + $0x130] sm:$0xff]
    %v2982 = vld [vmem:[#allocation14 + $0x138] sm:$0xff]
    %v2983 = vld [vmem:[#allocation14 + $0x140] sm:$0xff]
    %v2984 = vld [vmem:[#allocation14 + $0x148] sm:$0xff]
    %v2985 = vld [vmem:[#allocation14 + $0x150] sm:$0xff]
    %v2986 = vld [vmem:[#allocation14 + $0x158] sm:$0xff]
    %v2987 = vld [vmem:[#allocation14 + $0x160] sm:$0xff]
    %v2988 = vld [vmem:[#allocation14 + $0x168] sm:$0xff]
    %v2989 = vld [vmem:[#allocation14 + $0x170] sm:$0xff]
    %v2990 = vld [vmem:[#allocation14 + $0x178] sm:$0xff]
    %v2991 = vld [vmem:[#allocation14 + $0x180] sm:$0xff]
    %v2992 = vld [vmem:[#allocation14 + $0x188] sm:$0xff]
    %v2993 = vld [vmem:[#allocation14 + $0x190] sm:$0xff]
    %v2994 = vld [vmem:[#allocation14 + $0x198] sm:$0xff]
    %v2995 = vld [vmem:[#allocation14 + $0x1a0] sm:$0xff]
    %v2996 = vld [vmem:[#allocation14 + $0x1a8] sm:$0xff]
    %v2997 = vld [vmem:[#allocation14 + $0x1b0] sm:$0xff]
    %v2998 = vld [vmem:[#allocation14 + $0x1b8] sm:$0xff]
    %v2999 = vld [vmem:[#allocation14 + $0x1c0] sm:$0xff]
    %v3000 = vld [vmem:[#allocation14 + $0x1c8] sm:$0xff]
    %v3001 = vld [vmem:[#allocation14 + $0x1d0] sm:$0xff]
    %v3002 = vld [vmem:[#allocation14 + $0x1d8] sm:$0xff]
    %v3003 = vld [vmem:[#allocation14 + $0x1e0] sm:$0xff]
    %v3004 = vld [vmem:[#allocation14 + $0x1e8] sm:$0xff]
    %v3005 = vld [vmem:[#allocation14 + $0x1f0] sm:$0xff]
    %v3006 = vld [vmem:[#allocation14 + $0x1f8] sm:$0xff]
    %3007 = vmatprep.subr.mxu0 %v2944
    %3008 = vmatpush1.msra.mxu0 %v2943
    %3009 = vmatprep.subr.mxu0 %v2948
    %3010 = vmatpush1.msra.mxu0 %v2947
    %3011 = vmatprep.subr.mxu0 %v2952
    %3012 = vmatpush1.msra.mxu0 %v2951
    %3013 = vmatprep.subr.mxu0 %v2956
    %3014 = vmatpush1.msra.mxu0 %v2955
    %3015 = vmatprep.subr.mxu0 %v2960
    %3016 = vmatpush1.msra.mxu0 %v2959
    %3017 = vmatprep.subr.mxu0 %v2964
    %3018 = vmatpush1.msra.mxu0 %v2963
    %3019 = vmatprep.subr.mxu0 %v2968
    %3020 = vmatpush1.msra.mxu0 %v2967
    %3021 = vmatprep.subr.mxu0 %v2972
    %3022 = vmatpush1.msra.mxu0 %v2971
    %3023 = vmatprep.subr.mxu0 %v2976
    %3024 = vmatpush1.msra.mxu0 %v2975
    %3025 = vmatprep.subr.mxu0 %v2980
    %3026 = vmatpush1.msra.mxu0 %v2979
    %3027 = vmatprep.subr.mxu0 %v2984
    %3028 = vmatpush1.msra.mxu0 %v2983
    %3029 = vmatprep.subr.mxu0 %v2988
    %3030 = vmatpush1.msra.mxu0 %v2987
    %3031 = vmatprep.subr.mxu0 %v2992
    %3032 = vmatpush1.msra.mxu0 %v2991
    %3033 = vmatprep.subr.mxu0 %v2996
    %3034 = vmatpush1.msra.mxu0 %v2995
    %3035 = vmatprep.subr.mxu0 %v3000
    %3036 = vmatpush1.msra.mxu0 %v2999
    %3037 = vmatprep.subr.mxu0 %v3004
    %3038 = vmatpush1.msra.mxu0 %v3003
    %3039 = vmatprep.subr.mxu0 0.0
    %3040 = vmatpush1.msra.mxu0 0.0
    %3041 = vmatprep.subr.mxu0 0.0
    %3042 = vmatpush1.msra.mxu0 0.0
    %3043 = vmatprep.subr.mxu0 0.0
    %3044 = vmatpush1.msra.mxu0 0.0
    %3045 = vmatprep.subr.mxu0 0.0
    %3046 = vmatpush1.msra.mxu0 0.0
    %3047 = vmatprep.subr.mxu0 0.0
    %3048 = vmatpush1.msra.mxu0 0.0
    %3049 = vmatprep.subr.mxu0 0.0
    %3050 = vmatpush1.msra.mxu0 0.0
    %3051 = vmatprep.subr.mxu0 0.0
    %3052 = vmatpush1.msra.mxu0 0.0
    %3053 = vmatprep.subr.mxu0 0.0
    %3054 = vmatpush1.msra.mxu0 0.0
    %3055 = vmatprep.subr.mxu0 0.0
    %3056 = vmatpush1.msra.mxu0 0.0
    %3057 = vmatprep.subr.mxu0 0.0
    %3058 = vmatpush1.msra.mxu0 0.0
    %3059 = vmatprep.subr.mxu0 0.0
    %3060 = vmatpush1.msra.mxu0 0.0
    %3061 = vmatprep.subr.mxu0 0.0
    %3062 = vmatpush1.msra.mxu0 0.0
    %3063 = vmatprep.subr.mxu0 0.0
    %3064 = vmatpush1.msra.mxu0 0.0
    %3065 = vmatprep.subr.mxu0 0.0
    %3066 = vmatpush1.msra.mxu0 0.0
    %3067 = vmatprep.subr.mxu0 0.0
    %3068 = vmatpush1.msra.mxu0 0.0
    %3069 = vmatprep.subr.mxu0 0.0
    %3070 = vmatpush1.msra.mxu0 0.0
    %3071 = vmatprep.mubr.f32.mxu0 0.0
    %3072 = vmatmul.mubr.f32.gmra.mrb[0].mxu0 0.0
    %v3073 = vpop.f32.mrb[0].mxu0
    %v3074 = vadd.f32 0.0, %v3073
    %v3075 = vpop.f32.mrb[0].mxu0
    %v3076 = vadd.f32 0.0, %v3075
    %3077 = vdwg.mxu0
    %3078 = vmatprep.subr.mxu0 %v2946
    %3079 = vmatpush1.msra.mxu0 %v2945
    %3080 = vmatprep.subr.mxu0 %v2950
    %3081 = vmatpush1.msra.mxu0 %v2949
    %3082 = vmatprep.subr.mxu0 %v2954
    %3083 = vmatpush1.msra.mxu0 %v2953
    %3084 = vmatprep.subr.mxu0 %v2958
    %3085 = vmatpush1.msra.mxu0 %v2957
    %3086 = vmatprep.subr.mxu0 %v2962
    %3087 = vmatpush1.msra.mxu0 %v2961
    %3088 = vmatprep.subr.mxu0 %v2966
    %3089 = vmatpush1.msra.mxu0 %v2965
    %3090 = vmatprep.subr.mxu0 %v2970
    %3091 = vmatpush1.msra.mxu0 %v2969
    %3092 = vmatprep.subr.mxu0 %v2974
    %3093 = vmatpush1.msra.mxu0 %v2973
    %3094 = vmatprep.subr.mxu0 %v2978
    %3095 = vmatpush1.msra.mxu0 %v2977
    %3096 = vmatprep.subr.mxu0 %v2982
    %3097 = vmatpush1.msra.mxu0 %v2981
    %3098 = vmatprep.subr.mxu0 %v2986
    %3099 = vmatpush1.msra.mxu0 %v2985
    %3100 = vmatprep.subr.mxu0 %v2990
    %3101 = vmatpush1.msra.mxu0 %v2989
    %3102 = vmatprep.subr.mxu0 %v2994
    %3103 = vmatpush1.msra.mxu0 %v2993
    %3104 = vmatprep.subr.mxu0 %v2998
    %3105 = vmatpush1.msra.mxu0 %v2997
    %3106 = vmatprep.subr.mxu0 %v3002
    %3107 = vmatpush1.msra.mxu0 %v3001
    %3108 = vmatprep.subr.mxu0 %v3006
    %3109 = vmatpush1.msra.mxu0 %v3005
    %3110 = vmatprep.subr.mxu0 0.0
    %3111 = vmatpush1.msra.mxu0 0.0
    %3112 = vmatprep.subr.mxu0 0.0
    %3113 = vmatpush1.msra.mxu0 0.0
    %3114 = vmatprep.subr.mxu0 0.0
    %3115 = vmatpush1.msra.mxu0 0.0
    %3116 = vmatprep.subr.mxu0 0.0
    %3117 = vmatpush1.msra.mxu0 0.0
    %3118 = vmatprep.subr.mxu0 0.0
    %3119 = vmatpush1.msra.mxu0 0.0
    %3120 = vmatprep.subr.mxu0 0.0
    %3121 = vmatpush1.msra.mxu0 0.0
    %3122 = vmatprep.subr.mxu0 0.0
    %3123 = vmatpush1.msra.mxu0 0.0
    %3124 = vmatprep.subr.mxu0 0.0
    %3125 = vmatpush1.msra.mxu0 0.0
    %3126 = vmatprep.subr.mxu0 0.0
    %3127 = vmatpush1.msra.mxu0 0.0
    %3128 = vmatprep.subr.mxu0 0.0
    %3129 = vmatpush1.msra.mxu0 0.0
    %3130 = vmatprep.subr.mxu0 0.0
    %3131 = vmatpush1.msra.mxu0 0.0
    %3132 = vmatprep.subr.mxu0 0.0
    %3133 = vmatpush1.msra.mxu0 0.0
    %3134 = vmatprep.subr.mxu0 0.0
    %3135 = vmatpush1.msra.mxu0 0.0
    %3136 = vmatprep.subr.mxu0 0.0
    %3137 = vmatpush1.msra.mxu0 0.0
    %3138 = vmatprep.subr.mxu0 0.0
    %3139 = vmatpush1.msra.mxu0 0.0
    %3140 = vmatprep.subr.mxu0 0.0
    %3141 = vmatpush1.msra.mxu0 0.0
    %3142 = vmatprep.mubr.f32.mxu0 0.0
    %3143 = vmatmul.mubr.f32.gmra.mrb[0].mxu0 0.0
    %v3144 = vpop.f32.mrb[0].mxu0
    %v3145 = vadd.f32 0.0, %v3144
    %v3146 = vpop.f32.mrb[0].mxu0
    %v3147 = vadd.f32 0.0, %v3146
    %3148 = vdwg.mxu0
    %v3149 = vadd.f32 %v2939, %v3074
    %v3150 = vadd.f32 %v2940, %v3076
    %v3151 = vadd.f32 %v2941, %v3145
    %v3152 = vadd.f32 %v2942, %v3147
    %v3153 = vxor.u32 %v3149, 2147483648
    %v3154 = vmul.f32 %v3153, 1.442695
    %v3155 = vpow.pop %v3154
    %v3156 = vadd.f32 %v3155, 1.0
    %v3157 = vrcp.pop %v3156
    %v3158 = vmul.f32 1.0, %v3157
    %v3159 = vxor.u32 %v3150, 2147483648
    %v3160 = vmul.f32 %v3159, 1.442695
    %v3161 = vpow.pop %v3160
    %v3162 = vadd.f32 %v3161, 1.0
    %v3163 = vrcp.pop %v3162
    %v3164 = vmul.f32 1.0, %v3163
    %v3165 = vtanh.pop %v3151
    %v3166 = vxor.u32 %v3152, 2147483648
    %v3167 = vmul.f32 %v3166, 1.442695
    %v3168 = vpow.pop %v3167
    %v3169 = vadd.f32 %v3168, 1.0
    %v3170 = vrcp.pop %v3169
    %v3171 = vmul.f32 1.0, %v3170
    %v3172 = vmul.f32 %v3164, 0.0
    %v3173 = vmul.f32 %v3158, %v3165
    %v3174 = vadd.f32 %v3172, %v3173
    %v3175 = vtanh.pop %v3174
    %v3176 = vmul.f32 %v3171, %v3175
    %3177 = vst [vmem:[#allocation2] sm:$0x1] %v3176
    %3178 = vst [vmem:[#allocation3 + $0x7] sm:$0x1] %v3176
    %v3179 = vld [vmem:[%s664] ss:$8 sm:$0xf]
    %v3180 = vld [vmem:[%s666] ss:$8 sm:$0xf]
    %v3182 = vlaneseq
    %v3183 = vshrl.u32 %v3182, 7
    %v3184 = vsub.s32 0, %v3183
    %v3185 = vrot.slane %v3179, %v3184
    %v3186 = vlaneseq
    %v3187 = vshrl.u32 %v3186, 7
    %v3188 = vsub.s32 1, %v3187
    %v3189 = vrot.slane %v3179, %v3188
    %v3190 = vlaneseq
    %v3191 = vshrl.u32 %v3190, 7
    %v3192 = vsub.s32 2, %v3191
    %v3193 = vrot.slane %v3179, %v3192
    %v3194 = vlaneseq
    %v3195 = vshrl.u32 %v3194, 7
    %v3196 = vsub.s32 3, %v3195
    %v3197 = vrot.slane %v3179, %v3196
    %v3203 = vlaneseq
    %v3204 = vshrl.u32 %v3203, 7
    %v3205 = vsub.s32 0, %v3204
    %v3206 = vrot.slane %v3180, %v3205
    %v3207 = vlaneseq
    %v3208 = vshrl.u32 %v3207, 7
    %v3209 = vsub.s32 1, %v3208
    %v3210 = vrot.slane %v3180, %v3209
    %v3211 = vlaneseq
    %v3212 = vshrl.u32 %v3211, 7
    %v3213 = vsub.s32 2, %v3212
    %v3214 = vrot.slane %v3180, %v3213
    %v3215 = vlaneseq
    %v3216 = vshrl.u32 %v3215, 7
    %v3217 = vsub.s32 3, %v3216
    %v3218 = vrot.slane %v3180, %v3217
    %v3223 = vsel %vm184, %v3185, %v3206
    %v3224 = vsel %vm185, %v3189, %v3210
    %v3225 = vsel %vm186, %v3193, %v3214
    %v3226 = vsel %vm187, %v3197, %v3218
    %v3227 = vld [vmem:[#allocation14] sm:$0xff]
    %v3228 = vld [vmem:[#allocation14 + $0x8] sm:$0xff]
    %v3229 = vld [vmem:[#allocation14 + $0x10] sm:$0xff]
    %v3230 = vld [vmem:[#allocation14 + $0x18] sm:$0xff]
    %v3231 = vld [vmem:[#allocation14 + $0x20] sm:$0xff]
    %v3232 = vld [vmem:[#allocation14 + $0x28] sm:$0xff]
    %v3233 = vld [vmem:[#allocation14 + $0x30] sm:$0xff]
    %v3234 = vld [vmem:[#allocation14 + $0x38] sm:$0xff]
    %v3235 = vld [vmem:[#allocation14 + $0x40] sm:$0xff]
    %v3236 = vld [vmem:[#allocation14 + $0x48] sm:$0xff]
    %v3237 = vld [vmem:[#allocation14 + $0x50] sm:$0xff]
    %v3238 = vld [vmem:[#allocation14 + $0x58] sm:$0xff]
    %v3239 = vld [vmem:[#allocation14 + $0x60] sm:$0xff]
    %v3240 = vld [vmem:[#allocation14 + $0x68] sm:$0xff]
    %v3241 = vld [vmem:[#allocation14 + $0x70] sm:$0xff]
    %v3242 = vld [vmem:[#allocation14 + $0x78] sm:$0xff]
    %v3243 = vld [vmem:[#allocation14 + $0x80] sm:$0xff]
    %v3244 = vld [vmem:[#allocation14 + $0x88] sm:$0xff]
    %v3245 = vld [vmem:[#allocation14 + $0x90] sm:$0xff]
    %v3246 = vld [vmem:[#allocation14 + $0x98] sm:$0xff]
    %v3247 = vld [vmem:[#allocation14 + $0xa0] sm:$0xff]
    %v3248 = vld [vmem:[#allocation14 + $0xa8] sm:$0xff]
    %v3249 = vld [vmem:[#allocation14 + $0xb0] sm:$0xff]
    %v3250 = vld [vmem:[#allocation14 + $0xb8] sm:$0xff]
    %v3251 = vld [vmem:[#allocation14 + $0xc0] sm:$0xff]
    %v3252 = vld [vmem:[#allocation14 + $0xc8] sm:$0xff]
    %v3253 = vld [vmem:[#allocation14 + $0xd0] sm:$0xff]
    %v3254 = vld [vmem:[#allocation14 + $0xd8] sm:$0xff]
    %v3255 = vld [vmem:[#allocation14 + $0xe0] sm:$0xff]
    %v3256 = vld [vmem:[#allocation14 + $0xe8] sm:$0xff]
    %v3257 = vld [vmem:[#allocation14 + $0xf0] sm:$0xff]
    %v3258 = vld [vmem:[#allocation14 + $0xf8] sm:$0xff]
    %v3259 = vld [vmem:[#allocation14 + $0x100] sm:$0xff]
    %v3260 = vld [vmem:[#allocation14 + $0x108] sm:$0xff]
    %v3261 = vld [vmem:[#allocation14 + $0x110] sm:$0xff]
    %v3262 = vld [vmem:[#allocation14 + $0x118] sm:$0xff]
    %v3263 = vld [vmem:[#allocation14 + $0x120] sm:$0xff]
    %v3264 = vld [vmem:[#allocation14 + $0x128] sm:$0xff]
    %v3265 = vld [vmem:[#allocation14 + $0x130] sm:$0xff]
    %v3266 = vld [vmem:[#allocation14 + $0x138] sm:$0xff]
    %v3267 = vld [vmem:[#allocation14 + $0x140] sm:$0xff]
    %v3268 = vld [vmem:[#allocation14 + $0x148] sm:$0xff]
    %v3269 = vld [vmem:[#allocation14 + $0x150] sm:$0xff]
    %v3270 = vld [vmem:[#allocation14 + $0x158] sm:$0xff]
    %v3271 = vld [vmem:[#allocation14 + $0x160] sm:$0xff]
    %v3272 = vld [vmem:[#allocation14 + $0x168] sm:$0xff]
    %v3273 = vld [vmem:[#allocation14 + $0x170] sm:$0xff]
    %v3274 = vld [vmem:[#allocation14 + $0x178] sm:$0xff]
    %v3275 = vld [vmem:[#allocation14 + $0x180] sm:$0xff]
    %v3276 = vld [vmem:[#allocation14 + $0x188] sm:$0xff]
    %v3277 = vld [vmem:[#allocation14 + $0x190] sm:$0xff]
    %v3278 = vld [vmem:[#allocation14 + $0x198] sm:$0xff]
    %v3279 = vld [vmem:[#allocation14 + $0x1a0] sm:$0xff]
    %v3280 = vld [vmem:[#allocation14 + $0x1a8] sm:$0xff]
    %v3281 = vld [vmem:[#allocation14 + $0x1b0] sm:$0xff]
    %v3282 = vld [vmem:[#allocation14 + $0x1b8] sm:$0xff]
    %v3283 = vld [vmem:[#allocation14 + $0x1c0] sm:$0xff]
    %v3284 = vld [vmem:[#allocation14 + $0x1c8] sm:$0xff]
    %v3285 = vld [vmem:[#allocation14 + $0x1d0] sm:$0xff]
    %v3286 = vld [vmem:[#allocation14 + $0x1d8] sm:$0xff]
    %v3287 = vld [vmem:[#allocation14 + $0x1e0] sm:$0xff]
    %v3288 = vld [vmem:[#allocation14 + $0x1e8] sm:$0xff]
    %v3289 = vld [vmem:[#allocation14 + $0x1f0] sm:$0xff]
    %v3290 = vld [vmem:[#allocation14 + $0x1f8] sm:$0xff]
    %3291 = vmatprep.subr.mxu0 %v3228
    %3292 = vmatpush1.msra.mxu0 %v3227
    %3293 = vmatprep.subr.mxu0 %v3232
    %3294 = vmatpush1.msra.mxu0 %v3231
    %3295 = vmatprep.subr.mxu0 %v3236
    %3296 = vmatpush1.msra.mxu0 %v3235
    %3297 = vmatprep.subr.mxu0 %v3240
    %3298 = vmatpush1.msra.mxu0 %v3239
    %3299 = vmatprep.subr.mxu0 %v3244
    %3300 = vmatpush1.msra.mxu0 %v3243
    %3301 = vmatprep.subr.mxu0 %v3248
    %3302 = vmatpush1.msra.mxu0 %v3247
    %3303 = vmatprep.subr.mxu0 %v3252
    %3304 = vmatpush1.msra.mxu0 %v3251
    %3305 = vmatprep.subr.mxu0 %v3256
    %3306 = vmatpush1.msra.mxu0 %v3255
    %3307 = vmatprep.subr.mxu0 %v3260
    %3308 = vmatpush1.msra.mxu0 %v3259
    %3309 = vmatprep.subr.mxu0 %v3264
    %3310 = vmatpush1.msra.mxu0 %v3263
    %3311 = vmatprep.subr.mxu0 %v3268
    %3312 = vmatpush1.msra.mxu0 %v3267
    %3313 = vmatprep.subr.mxu0 %v3272
    %3314 = vmatpush1.msra.mxu0 %v3271
    %3315 = vmatprep.subr.mxu0 %v3276
    %3316 = vmatpush1.msra.mxu0 %v3275
    %3317 = vmatprep.subr.mxu0 %v3280
    %3318 = vmatpush1.msra.mxu0 %v3279
    %3319 = vmatprep.subr.mxu0 %v3284
    %3320 = vmatpush1.msra.mxu0 %v3283
    %3321 = vmatprep.subr.mxu0 %v3288
    %3322 = vmatpush1.msra.mxu0 %v3287
    %3323 = vmatprep.subr.mxu0 0.0
    %3324 = vmatpush1.msra.mxu0 0.0
    %3325 = vmatprep.subr.mxu0 0.0
    %3326 = vmatpush1.msra.mxu0 0.0
    %3327 = vmatprep.subr.mxu0 0.0
    %3328 = vmatpush1.msra.mxu0 0.0
    %3329 = vmatprep.subr.mxu0 0.0
    %3330 = vmatpush1.msra.mxu0 0.0
    %3331 = vmatprep.subr.mxu0 0.0
    %3332 = vmatpush1.msra.mxu0 0.0
    %3333 = vmatprep.subr.mxu0 0.0
    %3334 = vmatpush1.msra.mxu0 0.0
    %3335 = vmatprep.subr.mxu0 0.0
    %3336 = vmatpush1.msra.mxu0 0.0
    %3337 = vmatprep.subr.mxu0 0.0
    %3338 = vmatpush1.msra.mxu0 0.0
    %3339 = vmatprep.subr.mxu0 0.0
    %3340 = vmatpush1.msra.mxu0 0.0
    %3341 = vmatprep.subr.mxu0 0.0
    %3342 = vmatpush1.msra.mxu0 0.0
    %3343 = vmatprep.subr.mxu0 0.0
    %3344 = vmatpush1.msra.mxu0 0.0
    %3345 = vmatprep.subr.mxu0 0.0
    %3346 = vmatpush1.msra.mxu0 0.0
    %3347 = vmatprep.subr.mxu0 0.0
    %3348 = vmatpush1.msra.mxu0 0.0
    %3349 = vmatprep.subr.mxu0 0.0
    %3350 = vmatpush1.msra.mxu0 0.0
    %3351 = vmatprep.subr.mxu0 0.0
    %3352 = vmatpush1.msra.mxu0 0.0
    %3353 = vmatprep.subr.mxu0 0.0
    %3354 = vmatpush1.msra.mxu0 0.0
    %3355 = vmatprep.mubr.f32.mxu0 0.0
    %3356 = vmatmul.mubr.f32.gmra.mrb[0].mxu0 %v3176
    %v3357 = vpop.f32.mrb[0].mxu0
    %v3358 = vadd.f32 0.0, %v3357
    %v3359 = vpop.f32.mrb[0].mxu0
    %v3360 = vadd.f32 0.0, %v3359
    %3361 = vdwg.mxu0
    %3362 = vmatprep.subr.mxu0 %v3230
    %3363 = vmatpush1.msra.mxu0 %v3229
    %3364 = vmatprep.subr.mxu0 %v3234
    %3365 = vmatpush1.msra.mxu0 %v3233
    %3366 = vmatprep.subr.mxu0 %v3238
    %3367 = vmatpush1.msra.mxu0 %v3237
    %3368 = vmatprep.subr.mxu0 %v3242
    %3369 = vmatpush1.msra.mxu0 %v3241
    %3370 = vmatprep.subr.mxu0 %v3246
    %3371 = vmatpush1.msra.mxu0 %v3245
    %3372 = vmatprep.subr.mxu0 %v3250
    %3373 = vmatpush1.msra.mxu0 %v3249
    %3374 = vmatprep.subr.mxu0 %v3254
    %3375 = vmatpush1.msra.mxu0 %v3253
    %3376 = vmatprep.subr.mxu0 %v3258
    %3377 = vmatpush1.msra.mxu0 %v3257
    %3378 = vmatprep.subr.mxu0 %v3262
    %3379 = vmatpush1.msra.mxu0 %v3261
    %3380 = vmatprep.subr.mxu0 %v3266
    %3381 = vmatpush1.msra.mxu0 %v3265
    %3382 = vmatprep.subr.mxu0 %v3270
    %3383 = vmatpush1.msra.mxu0 %v3269
    %3384 = vmatprep.subr.mxu0 %v3274
    %3385 = vmatpush1.msra.mxu0 %v3273
    %3386 = vmatprep.subr.mxu0 %v3278
    %3387 = vmatpush1.msra.mxu0 %v3277
    %3388 = vmatprep.subr.mxu0 %v3282
    %3389 = vmatpush1.msra.mxu0 %v3281
    %3390 = vmatprep.subr.mxu0 %v3286
    %3391 = vmatpush1.msra.mxu0 %v3285
    %3392 = vmatprep.subr.mxu0 %v3290
    %3393 = vmatpush1.msra.mxu0 %v3289
    %3394 = vmatprep.subr.mxu0 0.0
    %3395 = vmatpush1.msra.mxu0 0.0
    %3396 = vmatprep.subr.mxu0 0.0
    %3397 = vmatpush1.msra.mxu0 0.0
    %3398 = vmatprep.subr.mxu0 0.0
    %3399 = vmatpush1.msra.mxu0 0.0
    %3400 = vmatprep.subr.mxu0 0.0
    %3401 = vmatpush1.msra.mxu0 0.0
    %3402 = vmatprep.subr.mxu0 0.0
    %3403 = vmatpush1.msra.mxu0 0.0
    %3404 = vmatprep.subr.mxu0 0.0
    %3405 = vmatpush1.msra.mxu0 0.0
    %3406 = vmatprep.subr.mxu0 0.0
    %3407 = vmatpush1.msra.mxu0 0.0
    %3408 = vmatprep.subr.mxu0 0.0
    %3409 = vmatpush1.msra.mxu0 0.0
    %3410 = vmatprep.subr.mxu0 0.0
    %3411 = vmatpush1.msra.mxu0 0.0
    %3412 = vmatprep.subr.mxu0 0.0
    %3413 = vmatpush1.msra.mxu0 0.0
    %3414 = vmatprep.subr.mxu0 0.0
    %3415 = vmatpush1.msra.mxu0 0.0
    %3416 = vmatprep.subr.mxu0 0.0
    %3417 = vmatpush1.msra.mxu0 0.0
    %3418 = vmatprep.subr.mxu0 0.0
    %3419 = vmatpush1.msra.mxu0 0.0
    %3420 = vmatprep.subr.mxu0 0.0
    %3421 = vmatpush1.msra.mxu0 0.0
    %3422 = vmatprep.subr.mxu0 0.0
    %3423 = vmatpush1.msra.mxu0 0.0
    %3424 = vmatprep.subr.mxu0 0.0
    %3425 = vmatpush1.msra.mxu0 0.0
    %3426 = vmatprep.mubr.f32.mxu0 0.0
    %3427 = vmatmul.mubr.f32.gmra.mrb[0].mxu0 %v3176
    %v3428 = vpop.f32.mrb[0].mxu0
    %v3429 = vadd.f32 0.0, %v3428
    %v3430 = vpop.f32.mrb[0].mxu0
    %v3431 = vadd.f32 0.0, %v3430
    %3432 = vdwg.mxu0
    %v3433 = vadd.f32 %v3223, %v3358
    %v3434 = vadd.f32 %v3224, %v3360
    %v3435 = vadd.f32 %v3225, %v3429
    %v3436 = vadd.f32 %v3226, %v3431
    %v3437 = vxor.u32 %v3433, 2147483648
    %v3438 = vmul.f32 %v3437, 1.442695
    %v3439 = vpow.pop %v3438
    %v3440 = vadd.f32 %v3439, 1.0
    %v3441 = vrcp.pop %v3440
    %v3442 = vmul.f32 1.0, %v3441
    %v3443 = vxor.u32 %v3434, 2147483648
    %v3444 = vmul.f32 %v3443, 1.442695
    %v3445 = vpow.pop %v3444
    %v3446 = vadd.f32 %v3445, 1.0
    %v3447 = vrcp.pop %v3446
    %v3448 = vmul.f32 1.0, %v3447
    %v3449 = vtanh.pop %v3435
    %v3450 = vxor.u32 %v3436, 2147483648
    %v3451 = vmul.f32 %v3450, 1.442695
    %v3452 = vpow.pop %v3451
    %v3453 = vadd.f32 %v3452, 1.0
    %v3454 = vrcp.pop %v3453
    %v3455 = vmul.f32 1.0, %v3454
    %v3456 = vmul.f32 %v3448, %v3174
    %v3457 = vmul.f32 %v3442, %v3449
    %v3458 = vadd.f32 %v3456, %v3457
    %v3459 = vtanh.pop %v3458
    %v3460 = vmul.f32 %v3455, %v3459
    %3461 = vst [vmem:[#allocation2 + $0x1] sm:$0x1] %v3460
    %3462 = vst [vmem:[#allocation3 + $0x6] sm:$0x1] %v3460
    %v3463 = vld [vmem:[%s950] ss:$8 sm:$0xf]
    %v3464 = vld [vmem:[%s952] ss:$8 sm:$0xf]
    %v3466 = vlaneseq
    %v3467 = vshrl.u32 %v3466, 7
    %v3468 = vsub.s32 0, %v3467
    %v3469 = vrot.slane %v3463, %v3468
    %v3470 = vlaneseq
    %v3471 = vshrl.u32 %v3470, 7
    %v3472 = vsub.s32 1, %v3471
    %v3473 = vrot.slane %v3463, %v3472
    %v3474 = vlaneseq
    %v3475 = vshrl.u32 %v3474, 7
    %v3476 = vsub.s32 2, %v3475
    %v3477 = vrot.slane %v3463, %v3476
    %v3478 = vlaneseq
    %v3479 = vshrl.u32 %v3478, 7
    %v3480 = vsub.s32 3, %v3479
    %v3481 = vrot.slane %v3463, %v3480
    %v3487 = vlaneseq
    %v3488 = vshrl.u32 %v3487, 7
    %v3489 = vsub.s32 0, %v3488
    %v3490 = vrot.slane %v3464, %v3489
    %v3491 = vlaneseq
    %v3492 = vshrl.u32 %v3491, 7
    %v3493 = vsub.s32 1, %v3492
    %v3494 = vrot.slane %v3464, %v3493
    %v3495 = vlaneseq
    %v3496 = vshrl.u32 %v3495, 7
    %v3497 = vsub.s32 2, %v3496
    %v3498 = vrot.slane %v3464, %v3497
    %v3499 = vlaneseq
    %v3500 = vshrl.u32 %v3499, 7
    %v3501 = vsub.s32 3, %v3500
    %v3502 = vrot.slane %v3464, %v3501
    %v3507 = vsel %vm184, %v3469, %v3490
    %v3508 = vsel %vm185, %v3473, %v3494
    %v3509 = vsel %vm186, %v3477, %v3498
    %v3510 = vsel %vm187, %v3481, %v3502
    %v3511 = vld [vmem:[#allocation14] sm:$0xff]
    %v3512 = vld [vmem:[#allocation14 + $0x8] sm:$0xff]
    %v3513 = vld [vmem:[#allocation14 + $0x10] sm:$0xff]
    %v3514 = vld [vmem:[#allocation14 + $0x18] sm:$0xff]
    %v3515 = vld [vmem:[#allocation14 + $0x20] sm:$0xff]
    %v3516 = vld [vmem:[#allocation14 + $0x28] sm:$0xff]
    %v3517 = vld [vmem:[#allocation14 + $0x30] sm:$0xff]
    %v3518 = vld [vmem:[#allocation14 + $0x38] sm:$0xff]
    %v3519 = vld [vmem:[#allocation14 + $0x40] sm:$0xff]
    %v3520 = vld [vmem:[#allocation14 + $0x48] sm:$0xff]
    %v3521 = vld [vmem:[#allocation14 + $0x50] sm:$0xff]
    %v3522 = vld [vmem:[#allocation14 + $0x58] sm:$0xff]
    %v3523 = vld [vmem:[#allocation14 + $0x60] sm:$0xff]
    %v3524 = vld [vmem:[#allocation14 + $0x68] sm:$0xff]
    %v3525 = vld [vmem:[#allocation14 + $0x70] sm:$0xff]
    %v3526 = vld [vmem:[#allocation14 + $0x78] sm:$0xff]
    %v3527 = vld [vmem:[#allocation14 + $0x80] sm:$0xff]
    %v3528 = vld [vmem:[#allocation14 + $0x88] sm:$0xff]
    %v3529 = vld [vmem:[#allocation14 + $0x90] sm:$0xff]
    %v3530 = vld [vmem:[#allocation14 + $0x98] sm:$0xff]
    %v3531 = vld [vmem:[#allocation14 + $0xa0] sm:$0xff]
    %v3532 = vld [vmem:[#allocation14 + $0xa8] sm:$0xff]
    %v3533 = vld [vmem:[#allocation14 + $0xb0] sm:$0xff]
    %v3534 = vld [vmem:[#allocation14 + $0xb8] sm:$0xff]
    %v3535 = vld [vmem:[#allocation14 + $0xc0] sm:$0xff]
    %v3536 = vld [vmem:[#allocation14 + $0xc8] sm:$0xff]
    %v3537 = vld [vmem:[#allocation14 + $0xd0] sm:$0xff]
    %v3538 = vld [vmem:[#allocation14 + $0xd8] sm:$0xff]
    %v3539 = vld [vmem:[#allocation14 + $0xe0] sm:$0xff]
    %v3540 = vld [vmem:[#allocation14 + $0xe8] sm:$0xff]
    %v3541 = vld [vmem:[#allocation14 + $0xf0] sm:$0xff]
    %v3542 = vld [vmem:[#allocation14 + $0xf8] sm:$0xff]
    %v3543 = vld [vmem:[#allocation14 + $0x100] sm:$0xff]
    %v3544 = vld [vmem:[#allocation14 + $0x108] sm:$0xff]
    %v3545 = vld [vmem:[#allocation14 + $0x110] sm:$0xff]
    %v3546 = vld [vmem:[#allocation14 + $0x118] sm:$0xff]
    %v3547 = vld [vmem:[#allocation14 + $0x120] sm:$0xff]
    %v3548 = vld [vmem:[#allocation14 + $0x128] sm:$0xff]
    %v3549 = vld [vmem:[#allocation14 + $0x130] sm:$0xff]
    %v3550 = vld [vmem:[#allocation14 + $0x138] sm:$0xff]
    %v3551 = vld [vmem:[#allocation14 + $0x140] sm:$0xff]
    %v3552 = vld [vmem:[#allocation14 + $0x148] sm:$0xff]
    %v3553 = vld [vmem:[#allocation14 + $0x150] sm:$0xff]
    %v3554 = vld [vmem:[#allocation14 + $0x158] sm:$0xff]
    %v3555 = vld [vmem:[#allocation14 + $0x160] sm:$0xff]
    %v3556 = vld [vmem:[#allocation14 + $0x168] sm:$0xff]
    %v3557 = vld [vmem:[#allocation14 + $0x170] sm:$0xff]
    %v3558 = vld [vmem:[#allocation14 + $0x178] sm:$0xff]
    %v3559 = vld [vmem:[#allocation14 + $0x180] sm:$0xff]
    %v3560 = vld [vmem:[#allocation14 + $0x188] sm:$0xff]
    %v3561 = vld [vmem:[#allocation14 + $0x190] sm:$0xff]
    %v3562 = vld [vmem:[#allocation14 + $0x198] sm:$0xff]
    %v3563 = vld [vmem:[#allocation14 + $0x1a0] sm:$0xff]
    %v3564 = vld [vmem:[#allocation14 + $0x1a8] sm:$0xff]
    %v3565 = vld [vmem:[#allocation14 + $0x1b0] sm:$0xff]
    %v3566 = vld [vmem:[#allocation14 + $0x1b8] sm:$0xff]
    %v3567 = vld [vmem:[#allocation14 + $0x1c0] sm:$0xff]
    %v3568 = vld [vmem:[#allocation14 + $0x1c8] sm:$0xff]
    %v3569 = vld [vmem:[#allocation14 + $0x1d0] sm:$0xff]
    %v3570 = vld [vmem:[#allocation14 + $0x1d8] sm:$0xff]
    %v3571 = vld [vmem:[#allocation14 + $0x1e0] sm:$0xff]
    %v3572 = vld [vmem:[#allocation14 + $0x1e8] sm:$0xff]
    %v3573 = vld [vmem:[#allocation14 + $0x1f0] sm:$0xff]
    %v3574 = vld [vmem:[#allocation14 + $0x1f8] sm:$0xff]
    %3575 = vmatprep.subr.mxu0 %v3512
    %3576 = vmatpush1.msra.mxu0 %v3511
    %3577 = vmatprep.subr.mxu0 %v3516
    %3578 = vmatpush1.msra.mxu0 %v3515
    %3579 = vmatprep.subr.mxu0 %v3520
    %3580 = vmatpush1.msra.mxu0 %v3519
    %3581 = vmatprep.subr.mxu0 %v3524
    %3582 = vmatpush1.msra.mxu0 %v3523
    %3583 = vmatprep.subr.mxu0 %v3528
    %3584 = vmatpush1.msra.mxu0 %v3527
    %3585 = vmatprep.subr.mxu0 %v3532
    %3586 = vmatpush1.msra.mxu0 %v3531
    %3587 = vmatprep.subr.mxu0 %v3536
    %3588 = vmatpush1.msra.mxu0 %v3535
    %3589 = vmatprep.subr.mxu0 %v3540
    %3590 = vmatpush1.msra.mxu0 %v3539
    %3591 = vmatprep.subr.mxu0 %v3544
    %3592 = vmatpush1.msra.mxu0 %v3543
    %3593 = vmatprep.subr.mxu0 %v3548
    %3594 = vmatpush1.msra.mxu0 %v3547
    %3595 = vmatprep.subr.mxu0 %v3552
    %3596 = vmatpush1.msra.mxu0 %v3551
    %3597 = vmatprep.subr.mxu0 %v3556
    %3598 = vmatpush1.msra.mxu0 %v3555
    %3599 = vmatprep.subr.mxu0 %v3560
    %3600 = vmatpush1.msra.mxu0 %v3559
    %3601 = vmatprep.subr.mxu0 %v3564
    %3602 = vmatpush1.msra.mxu0 %v3563
    %3603 = vmatprep.subr.mxu0 %v3568
    %3604 = vmatpush1.msra.mxu0 %v3567
    %3605 = vmatprep.subr.mxu0 %v3572
    %3606 = vmatpush1.msra.mxu0 %v3571
    %3607 = vmatprep.subr.mxu0 0.0
    %3608 = vmatpush1.msra.mxu0 0.0
    %3609 = vmatprep.subr.mxu0 0.0
    %3610 = vmatpush1.msra.mxu0 0.0
    %3611 = vmatprep.subr.mxu0 0.0
    %3612 = vmatpush1.msra.mxu0 0.0
    %3613 = vmatprep.subr.mxu0 0.0
    %3614 = vmatpush1.msra.mxu0 0.0
    %3615 = vmatprep.subr.mxu0 0.0
    %3616 = vmatpush1.msra.mxu0 0.0
    %3617 = vmatprep.subr.mxu0 0.0
    %3618 = vmatpush1.msra.mxu0 0.0
    %3619 = vmatprep.subr.mxu0 0.0
    %3620 = vmatpush1.msra.mxu0 0.0
    %3621 = vmatprep.subr.mxu0 0.0
    %3622 = vmatpush1.msra.mxu0 0.0
    %3623 = vmatprep.subr.mxu0 0.0
    %3624 = vmatpush1.msra.mxu0 0.0
    %3625 = vmatprep.subr.mxu0 0.0
    %3626 = vmatpush1.msra.mxu0 0.0
    %3627 = vmatprep.subr.mxu0 0.0
    %3628 = vmatpush1.msra.mxu0 0.0
    %3629 = vmatprep.subr.mxu0 0.0
    %3630 = vmatpush1.msra.mxu0 0.0
    %3631 = vmatprep.subr.mxu0 0.0
    %3632 = vmatpush1.msra.mxu0 0.0
    %3633 = vmatprep.subr.mxu0 0.0
    %3634 = vmatpush1.msra.mxu0 0.0
    %3635 = vmatprep.subr.mxu0 0.0
    %3636 = vmatpush1.msra.mxu0 0.0
    %3637 = vmatprep.subr.mxu0 0.0
    %3638 = vmatpush1.msra.mxu0 0.0
    %3639 = vmatprep.mubr.f32.mxu0 0.0
    %3640 = vmatmul.mubr.f32.gmra.mrb[0].mxu0 %v3460
    %v3641 = vpop.f32.mrb[0].mxu0
    %v3642 = vadd.f32 0.0, %v3641
    %v3643 = vpop.f32.mrb[0].mxu0
    %v3644 = vadd.f32 0.0, %v3643
    %3645 = vdwg.mxu0
    %3646 = vmatprep.subr.mxu0 %v3514
    %3647 = vmatpush1.msra.mxu0 %v3513
    %3648 = vmatprep.subr.mxu0 %v3518
    %3649 = vmatpush1.msra.mxu0 %v3517
    %3650 = vmatprep.subr.mxu0 %v3522
    %3651 = vmatpush1.msra.mxu0 %v3521
    %3652 = vmatprep.subr.mxu0 %v3526
    %3653 = vmatpush1.msra.mxu0 %v3525
    %3654 = vmatprep.subr.mxu0 %v3530
    %3655 = vmatpush1.msra.mxu0 %v3529
    %3656 = vmatprep.subr.mxu0 %v3534
    %3657 = vmatpush1.msra.mxu0 %v3533
    %3658 = vmatprep.subr.mxu0 %v3538
    %3659 = vmatpush1.msra.mxu0 %v3537
    %3660 = vmatprep.subr.mxu0 %v3542
    %3661 = vmatpush1.msra.mxu0 %v3541
    %3662 = vmatprep.subr.mxu0 %v3546
    %3663 = vmatpush1.msra.mxu0 %v3545
    %3664 = vmatprep.subr.mxu0 %v3550
    %3665 = vmatpush1.msra.mxu0 %v3549
    %3666 = vmatprep.subr.mxu0 %v3554
    %3667 = vmatpush1.msra.mxu0 %v3553
    %3668 = vmatprep.subr.mxu0 %v3558
    %3669 = vmatpush1.msra.mxu0 %v3557
    %3670 = vmatprep.subr.mxu0 %v3562
    %3671 = vmatpush1.msra.mxu0 %v3561
    %3672 = vmatprep.subr.mxu0 %v3566
    %3673 = vmatpush1.msra.mxu0 %v3565
    %3674 = vmatprep.subr.mxu0 %v3570
    %3675 = vmatpush1.msra.mxu0 %v3569
    %3676 = vmatprep.subr.mxu0 %v3574
    %3677 = vmatpush1.msra.mxu0 %v3573
    %3678 = vmatprep.subr.mxu0 0.0
    %3679 = vmatpush1.msra.mxu0 0.0
    %3680 = vmatprep.subr.mxu0 0.0
    %3681 = vmatpush1.msra.mxu0 0.0
    %3682 = vmatprep.subr.mxu0 0.0
    %3683 = vmatpush1.msra.mxu0 0.0
    %3684 = vmatprep.subr.mxu0 0.0
    %3685 = vmatpush1.msra.mxu0 0.0
    %3686 = vmatprep.subr.mxu0 0.0
    %3687 = vmatpush1.msra.mxu0 0.0
    %3688 = vmatprep.subr.mxu0 0.0
    %3689 = vmatpush1.msra.mxu0 0.0
    %3690 = vmatprep.subr.mxu0 0.0
    %3691 = vmatpush1.msra.mxu0 0.0
    %3692 = vmatprep.subr.mxu0 0.0
    %3693 = vmatpush1.msra.mxu0 0.0
    %3694 = vmatprep.subr.mxu0 0.0
    %3695 = vmatpush1.msra.mxu0 0.0
    %3696 = vmatprep.subr.mxu0 0.0
    %3697 = vmatpush1.msra.mxu0 0.0
    %3698 = vmatprep.subr.mxu0 0.0
    %3699 = vmatpush1.msra.mxu0 0.0
    %3700 = vmatprep.subr.mxu0 0.0
    %3701 = vmatpush1.msra.mxu0 0.0
    %3702 = vmatprep.subr.mxu0 0.0
    %3703 = vmatpush1.msra.mxu0 0.0
    %3704 = vmatprep.subr.mxu0 0.0
    %3705 = vmatpush1.msra.mxu0 0.0
    %3706 = vmatprep.subr.mxu0 0.0
    %3707 = vmatpush1.msra.mxu0 0.0
    %3708 = vmatprep.subr.mxu0 0.0
    %3709 = vmatpush1.msra.mxu0 0.0
    %3710 = vmatprep.mubr.f32.mxu0 0.0
    %3711 = vmatmul.mubr.f32.gmra.mrb[0].mxu0 %v3460
    %v3712 = vpop.f32.mrb[0].mxu0
    %v3713 = vadd.f32 0.0, %v3712
    %v3714 = vpop.f32.mrb[0].mxu0
    %v3715 = vadd.f32 0.0, %v3714
    %3716 = vdwg.mxu0
    %v3717 = vadd.f32 %v3507, %v3642
    %v3718 = vadd.f32 %v3508, %v3644
    %v3719 = vadd.f32 %v3509, %v3713
    %v3720 = vadd.f32 %v3510, %v3715
    %v3721 = vxor.u32 %v3717, 2147483648
    %v3722 = vmul.f32 %v3721, 1.442695
    %v3723 = vpow.pop %v3722
    %v3724 = vadd.f32 %v3723, 1.0
    %v3725 = vrcp.pop %v3724
    %v3726 = vmul.f32 1.0, %v3725
    %v3727 = vxor.u32 %v3718, 2147483648
    %v3728 = vmul.f32 %v3727, 1.442695
    %v3729 = vpow.pop %v3728
    %v3730 = vadd.f32 %v3729, 1.0
    %v3731 = vrcp.pop %v3730
    %v3732 = vmul.f32 1.0, %v3731
    %v3733 = vtanh.pop %v3719
    %v3734 = vxor.u32 %v3720, 2147483648
    %v3735 = vmul.f32 %v3734, 1.442695
    %v3736 = vpow.pop %v3735
    %v3737 = vadd.f32 %v3736, 1.0
    %v3738 = vrcp.pop %v3737
    %v3739 = vmul.f32 1.0, %v3738
    %v3740 = vmul.f32 %v3732, %v3458
    %v3741 = vmul.f32 %v3726, %v3733
    %v3742 = vadd.f32 %v3740, %v3741
    %v3743 = vtanh.pop %v3742
    %v3744 = vmul.f32 %v3739, %v3743
    %3745 = vst [vmem:[#allocation2 + $0x2] sm:$0x1] %v3744
    %3746 = vst [vmem:[#allocation3 + $0x5] sm:$0x1] %v3744
    %v3747 = vld [vmem:[%s1236] ss:$8 sm:$0xf]
    %v3748 = vld [vmem:[%s1238] ss:$8 sm:$0xf]
    %v3750 = vlaneseq
    %v3751 = vshrl.u32 %v3750, 7
    %v3752 = vsub.s32 0, %v3751
    %v3753 = vrot.slane %v3747, %v3752
    %v3754 = vlaneseq
    %v3755 = vshrl.u32 %v3754, 7
    %v3756 = vsub.s32 1, %v3755
    %v3757 = vrot.slane %v3747, %v3756
    %v3758 = vlaneseq
    %v3759 = vshrl.u32 %v3758, 7
    %v3760 = vsub.s32 2, %v3759
    %v3761 = vrot.slane %v3747, %v3760
    %v3762 = vlaneseq
    %v3763 = vshrl.u32 %v3762, 7
    %v3764 = vsub.s32 3, %v3763
    %v3765 = vrot.slane %v3747, %v3764
    %v3771 = vlaneseq
    %v3772 = vshrl.u32 %v3771, 7
    %v3773 = vsub.s32 0, %v3772
    %v3774 = vrot.slane %v3748, %v3773
    %v3775 = vlaneseq
    %v3776 = vshrl.u32 %v3775, 7
    %v3777 = vsub.s32 1, %v3776
    %v3778 = vrot.slane %v3748, %v3777
    %v3779 = vlaneseq
    %v3780 = vshrl.u32 %v3779, 7
    %v3781 = vsub.s32 2, %v3780
    %v3782 = vrot.slane %v3748, %v3781
    %v3783 = vlaneseq
    %v3784 = vshrl.u32 %v3783, 7
    %v3785 = vsub.s32 3, %v3784
    %v3786 = vrot.slane %v3748, %v3785
    %v3791 = vsel %vm184, %v3753, %v3774
    %v3792 = vsel %vm185, %v3757, %v3778
    %v3793 = vsel %vm186, %v3761, %v3782
    %v3794 = vsel %vm187, %v3765, %v3786
    %v3795 = vld [vmem:[#allocation14] sm:$0xff]
    %v3796 = vld [vmem:[#allocation14 + $0x8] sm:$0xff]
    %v3797 = vld [vmem:[#allocation14 + $0x10] sm:$0xff]
    %v3798 = vld [vmem:[#allocation14 + $0x18] sm:$0xff]
    %v3799 = vld [vmem:[#allocation14 + $0x20] sm:$0xff]
    %v3800 = vld [vmem:[#allocation14 + $0x28] sm:$0xff]
    %v3801 = vld [vmem:[#allocation14 + $0x30] sm:$0xff]
    %v3802 = vld [vmem:[#allocation14 + $0x38] sm:$0xff]
    %v3803 = vld [vmem:[#allocation14 + $0x40] sm:$0xff]
    %v3804 = vld [vmem:[#allocation14 + $0x48] sm:$0xff]
    %v3805 = vld [vmem:[#allocation14 + $0x50] sm:$0xff]
    %v3806 = vld [vmem:[#allocation14 + $0x58] sm:$0xff]
    %v3807 = vld [vmem:[#allocation14 + $0x60] sm:$0xff]
    %v3808 = vld [vmem:[#allocation14 + $0x68] sm:$0xff]
    %v3809 = vld [vmem:[#allocation14 + $0x70] sm:$0xff]
    %v3810 = vld [vmem:[#allocation14 + $0x78] sm:$0xff]
    %v3811 = vld [vmem:[#allocation14 + $0x80] sm:$0xff]
    %v3812 = vld [vmem:[#allocation14 + $0x88] sm:$0xff]
    %v3813 = vld [vmem:[#allocation14 + $0x90] sm:$0xff]
    %v3814 = vld [vmem:[#allocation14 + $0x98] sm:$0xff]
    %v3815 = vld [vmem:[#allocation14 + $0xa0] sm:$0xff]
    %v3816 = vld [vmem:[#allocation14 + $0xa8] sm:$0xff]
    %v3817 = vld [vmem:[#allocation14 + $0xb0] sm:$0xff]
    %v3818 = vld [vmem:[#allocation14 + $0xb8] sm:$0xff]
    %v3819 = vld [vmem:[#allocation14 + $0xc0] sm:$0xff]
    %v3820 = vld [vmem:[#allocation14 + $0xc8] sm:$0xff]
    %v3821 = vld [vmem:[#allocation14 + $0xd0] sm:$0xff]
    %v3822 = vld [vmem:[#allocation14 + $0xd8] sm:$0xff]
    %v3823 = vld [vmem:[#allocation14 + $0xe0] sm:$0xff]
    %v3824 = vld [vmem:[#allocation14 + $0xe8] sm:$0xff]
    %v3825 = vld [vmem:[#allocation14 + $0xf0] sm:$0xff]
    %v3826 = vld [vmem:[#allocation14 + $0xf8] sm:$0xff]
    %v3827 = vld [vmem:[#allocation14 + $0x100] sm:$0xff]
    %v3828 = vld [vmem:[#allocation14 + $0x108] sm:$0xff]
    %v3829 = vld [vmem:[#allocation14 + $0x110] sm:$0xff]
    %v3830 = vld [vmem:[#allocation14 + $0x118] sm:$0xff]
    %v3831 = vld [vmem:[#allocation14 + $0x120] sm:$0xff]
    %v3832 = vld [vmem:[#allocation14 + $0x128] sm:$0xff]
    %v3833 = vld [vmem:[#allocation14 + $0x130] sm:$0xff]
    %v3834 = vld [vmem:[#allocation14 + $0x138] sm:$0xff]
    %v3835 = vld [vmem:[#allocation14 + $0x140] sm:$0xff]
    %v3836 = vld [vmem:[#allocation14 + $0x148] sm:$0xff]
    %v3837 = vld [vmem:[#allocation14 + $0x150] sm:$0xff]
    %v3838 = vld [vmem:[#allocation14 + $0x158] sm:$0xff]
    %v3839 = vld [vmem:[#allocation14 + $0x160] sm:$0xff]
    %v3840 = vld [vmem:[#allocation14 + $0x168] sm:$0xff]
    %v3841 = vld [vmem:[#allocation14 + $0x170] sm:$0xff]
    %v3842 = vld [vmem:[#allocation14 + $0x178] sm:$0xff]
    %v3843 = vld [vmem:[#allocation14 + $0x180] sm:$0xff]
    %v3844 = vld [vmem:[#allocation14 + $0x188] sm:$0xff]
    %v3845 = vld [vmem:[#allocation14 + $0x190] sm:$0xff]
    %v3846 = vld [vmem:[#allocation14 + $0x198] sm:$0xff]
    %v3847 = vld [vmem:[#allocation14 + $0x1a0] sm:$0xff]
    %v3848 = vld [vmem:[#allocation14 + $0x1a8] sm:$0xff]
    %v3849 = vld [vmem:[#allocation14 + $0x1b0] sm:$0xff]
    %v3850 = vld [vmem:[#allocation14 + $0x1b8] sm:$0xff]
    %v3851 = vld [vmem:[#allocation14 + $0x1c0] sm:$0xff]
    %v3852 = vld [vmem:[#allocation14 + $0x1c8] sm:$0xff]
    %v3853 = vld [vmem:[#allocation14 + $0x1d0] sm:$0xff]
    %v3854 = vld [vmem:[#allocation14 + $0x1d8] sm:$0xff]
    %v3855 = vld [vmem:[#allocation14 + $0x1e0] sm:$0xff]
    %v3856 = vld [vmem:[#allocation14 + $0x1e8] sm:$0xff]
    %v3857 = vld [vmem:[#allocation14 + $0x1f0] sm:$0xff]
    %v3858 = vld [vmem:[#allocation14 + $0x1f8] sm:$0xff]
    %3859 = vmatprep.subr.mxu0 %v3796
    %3860 = vmatpush1.msra.mxu0 %v3795
    %3861 = vmatprep.subr.mxu0 %v3800
    %3862 = vmatpush1.msra.mxu0 %v3799
    %3863 = vmatprep.subr.mxu0 %v3804
    %3864 = vmatpush1.msra.mxu0 %v3803
    %3865 = vmatprep.subr.mxu0 %v3808
    %3866 = vmatpush1.msra.mxu0 %v3807
    %3867 = vmatprep.subr.mxu0 %v3812
    %3868 = vmatpush1.msra.mxu0 %v3811
    %3869 = vmatprep.subr.mxu0 %v3816
    %3870 = vmatpush1.msra.mxu0 %v3815
    %3871 = vmatprep.subr.mxu0 %v3820
    %3872 = vmatpush1.msra.mxu0 %v3819
    %3873 = vmatprep.subr.mxu0 %v3824
    %3874 = vmatpush1.msra.mxu0 %v3823
    %3875 = vmatprep.subr.mxu0 %v3828
    %3876 = vmatpush1.msra.mxu0 %v3827
    %3877 = vmatprep.subr.mxu0 %v3832
    %3878 = vmatpush1.msra.mxu0 %v3831
    %3879 = vmatprep.subr.mxu0 %v3836
    %3880 = vmatpush1.msra.mxu0 %v3835
    %3881 = vmatprep.subr.mxu0 %v3840
    %3882 = vmatpush1.msra.mxu0 %v3839
    %3883 = vmatprep.subr.mxu0 %v3844
    %3884 = vmatpush1.msra.mxu0 %v3843
    %3885 = vmatprep.subr.mxu0 %v3848
    %3886 = vmatpush1.msra.mxu0 %v3847
    %3887 = vmatprep.subr.mxu0 %v3852
    %3888 = vmatpush1.msra.mxu0 %v3851
    %3889 = vmatprep.subr.mxu0 %v3856
    %3890 = vmatpush1.msra.mxu0 %v3855
    %3891 = vmatprep.subr.mxu0 0.0
    %3892 = vmatpush1.msra.mxu0 0.0
    %3893 = vmatprep.subr.mxu0 0.0
    %3894 = vmatpush1.msra.mxu0 0.0
    %3895 = vmatprep.subr.mxu0 0.0
    %3896 = vmatpush1.msra.mxu0 0.0
    %3897 = vmatprep.subr.mxu0 0.0
    %3898 = vmatpush1.msra.mxu0 0.0
    %3899 = vmatprep.subr.mxu0 0.0
    %3900 = vmatpush1.msra.mxu0 0.0
    %3901 = vmatprep.subr.mxu0 0.0
    %3902 = vmatpush1.msra.mxu0 0.0
    %3903 = vmatprep.subr.mxu0 0.0
    %3904 = vmatpush1.msra.mxu0 0.0
    %3905 = vmatprep.subr.mxu0 0.0
    %3906 = vmatpush1.msra.mxu0 0.0
    %3907 = vmatprep.subr.mxu0 0.0
    %3908 = vmatpush1.msra.mxu0 0.0
    %3909 = vmatprep.subr.mxu0 0.0
    %3910 = vmatpush1.msra.mxu0 0.0
    %3911 = vmatprep.subr.mxu0 0.0
    %3912 = vmatpush1.msra.mxu0 0.0
    %3913 = vmatprep.subr.mxu0 0.0
    %3914 = vmatpush1.msra.mxu0 0.0
    %3915 = vmatprep.subr.mxu0 0.0
    %3916 = vmatpush1.msra.mxu0 0.0
    %3917 = vmatprep.subr.mxu0 0.0
    %3918 = vmatpush1.msra.mxu0 0.0
    %3919 = vmatprep.subr.mxu0 0.0
    %3920 = vmatpush1.msra.mxu0 0.0
    %3921 = vmatprep.subr.mxu0 0.0
    %3922 = vmatpush1.msra.mxu0 0.0
    %3923 = vmatprep.mubr.f32.mxu0 0.0
    %3924 = vmatmul.mubr.f32.gmra.mrb[0].mxu0 %v3744
    %v3925 = vpop.f32.mrb[0].mxu0
    %v3926 = vadd.f32 0.0, %v3925
    %v3927 = vpop.f32.mrb[0].mxu0
    %v3928 = vadd.f32 0.0, %v3927
    %3929 = vdwg.mxu0
    %3930 = vmatprep.subr.mxu0 %v3798
    %3931 = vmatpush1.msra.mxu0 %v3797
    %3932 = vmatprep.subr.mxu0 %v3802
    %3933 = vmatpush1.msra.mxu0 %v3801
    %3934 = vmatprep.subr.mxu0 %v3806
    %3935 = vmatpush1.msra.mxu0 %v3805
    %3936 = vmatprep.subr.mxu0 %v3810
    %3937 = vmatpush1.msra.mxu0 %v3809
    %3938 = vmatprep.subr.mxu0 %v3814
    %3939 = vmatpush1.msra.mxu0 %v3813
    %3940 = vmatprep.subr.mxu0 %v3818
    %3941 = vmatpush1.msra.mxu0 %v3817
    %3942 = vmatprep.subr.mxu0 %v3822
    %3943 = vmatpush1.msra.mxu0 %v3821
    %3944 = vmatprep.subr.mxu0 %v3826
    %3945 = vmatpush1.msra.mxu0 %v3825
    %3946 = vmatprep.subr.mxu0 %v3830
    %3947 = vmatpush1.msra.mxu0 %v3829
    %3948 = vmatprep.subr.mxu0 %v3834
    %3949 = vmatpush1.msra.mxu0 %v3833
    %3950 = vmatprep.subr.mxu0 %v3838
    %3951 = vmatpush1.msra.mxu0 %v3837
    %3952 = vmatprep.subr.mxu0 %v3842
    %3953 = vmatpush1.msra.mxu0 %v3841
    %3954 = vmatprep.subr.mxu0 %v3846
    %3955 = vmatpush1.msra.mxu0 %v3845
    %3956 = vmatprep.subr.mxu0 %v3850
    %3957 = vmatpush1.msra.mxu0 %v3849
    %3958 = vmatprep.subr.mxu0 %v3854
    %3959 = vmatpush1.msra.mxu0 %v3853
    %3960 = vmatprep.subr.mxu0 %v3858
    %3961 = vmatpush1.msra.mxu0 %v3857
    %3962 = vmatprep.subr.mxu0 0.0
    %3963 = vmatpush1.msra.mxu0 0.0
    %3964 = vmatprep.subr.mxu0 0.0
    %3965 = vmatpush1.msra.mxu0 0.0
    %3966 = vmatprep.subr.mxu0 0.0
    %3967 = vmatpush1.msra.mxu0 0.0
    %3968 = vmatprep.subr.mxu0 0.0
    %3969 = vmatpush1.msra.mxu0 0.0
    %3970 = vmatprep.subr.mxu0 0.0
    %3971 = vmatpush1.msra.mxu0 0.0
    %3972 = vmatprep.subr.mxu0 0.0
    %3973 = vmatpush1.msra.mxu0 0.0
    %3974 = vmatprep.subr.mxu0 0.0
    %3975 = vmatpush1.msra.mxu0 0.0
    %3976 = vmatprep.subr.mxu0 0.0
    %3977 = vmatpush1.msra.mxu0 0.0
    %3978 = vmatprep.subr.mxu0 0.0
    %3979 = vmatpush1.msra.mxu0 0.0
    %3980 = vmatprep.subr.mxu0 0.0
    %3981 = vmatpush1.msra.mxu0 0.0
    %3982 = vmatprep.subr.mxu0 0.0
    %3983 = vmatpush1.msra.mxu0 0.0
    %3984 = vmatprep.subr.mxu0 0.0
    %3985 = vmatpush1.msra.mxu0 0.0
    %3986 = vmatprep.subr.mxu0 0.0
    %3987 = vmatpush1.msra.mxu0 0.0
    %3988 = vmatprep.subr.mxu0 0.0
    %3989 = vmatpush1.msra.mxu0 0.0
    %3990 = vmatprep.subr.mxu0 0.0
    %3991 = vmatpush1.msra.mxu0 0.0
    %3992 = vmatprep.subr.mxu0 0.0
    %3993 = vmatpush1.msra.mxu0 0.0
    %3994 = vmatprep.mubr.f32.mxu0 0.0
    %3995 = vmatmul.mubr.f32.gmra.mrb[0].mxu0 %v3744
    %v3996 = vpop.f32.mrb[0].mxu0
    %v3997 = vadd.f32 0.0, %v3996
    %v3998 = vpop.f32.mrb[0].mxu0
    %v3999 = vadd.f32 0.0, %v3998
    %4000 = vdwg.mxu0
    %v4001 = vadd.f32 %v3791, %v3926
    %v4002 = vadd.f32 %v3792, %v3928
    %v4003 = vadd.f32 %v3793, %v3997
    %v4004 = vadd.f32 %v3794, %v3999
    %v4005 = vxor.u32 %v4001, 2147483648
    %v4006 = vmul.f32 %v4005, 1.442695
    %v4007 = vpow.pop %v4006
    %v4008 = vadd.f32 %v4007, 1.0
    %v4009 = vrcp.pop %v4008
    %v4010 = vmul.f32 1.0, %v4009
    %v4011 = vxor.u32 %v4002, 2147483648
    %v4012 = vmul.f32 %v4011, 1.442695
    %v4013 = vpow.pop %v4012
    %v4014 = vadd.f32 %v4013, 1.0
    %v4015 = vrcp.pop %v4014
    %v4016 = vmul.f32 1.0, %v4015
    %v4017 = vtanh.pop %v4003
    %v4018 = vxor.u32 %v4004, 2147483648
    %v4019 = vmul.f32 %v4018, 1.442695
    %v4020 = vpow.pop %v4019
    %v4021 = vadd.f32 %v4020, 1.0
    %v4022 = vrcp.pop %v4021
    %v4023 = vmul.f32 1.0, %v4022
    %v4024 = vmul.f32 %v4016, %v3742
    %v4025 = vmul.f32 %v4010, %v4017
    %v4026 = vadd.f32 %v4024, %v4025
    %v4027 = vtanh.pop %v4026
    %v4028 = vmul.f32 %v4023, %v4027
    %4029 = vst [vmem:[#allocation2 + $0x3] sm:$0x1] %v4028
    %4030 = vst [vmem:[#allocation3 + $0x4] sm:$0x1] %v4028
    %v4031 = vld [vmem:[%s1238] ss:$8 sm:$0xf]
    %v4032 = vld [vmem:[%s1236] ss:$8 sm:$0xf]
    %v4034 = vlaneseq
    %v4035 = vshrl.u32 %v4034, 7
    %v4036 = vsub.s32 0, %v4035
    %v4037 = vrot.slane %v4031, %v4036
    %v4038 = vlaneseq
    %v4039 = vshrl.u32 %v4038, 7
    %v4040 = vsub.s32 1, %v4039
    %v4041 = vrot.slane %v4031, %v4040
    %v4042 = vlaneseq
    %v4043 = vshrl.u32 %v4042, 7
    %v4044 = vsub.s32 2, %v4043
    %v4045 = vrot.slane %v4031, %v4044
    %v4046 = vlaneseq
    %v4047 = vshrl.u32 %v4046, 7
    %v4048 = vsub.s32 3, %v4047
    %v4049 = vrot.slane %v4031, %v4048
    %v4055 = vlaneseq
    %v4056 = vshrl.u32 %v4055, 7
    %v4057 = vsub.s32 0, %v4056
    %v4058 = vrot.slane %v4032, %v4057
    %v4059 = vlaneseq
    %v4060 = vshrl.u32 %v4059, 7
    %v4061 = vsub.s32 1, %v4060
    %v4062 = vrot.slane %v4032, %v4061
    %v4063 = vlaneseq
    %v4064 = vshrl.u32 %v4063, 7
    %v4065 = vsub.s32 2, %v4064
    %v4066 = vrot.slane %v4032, %v4065
    %v4067 = vlaneseq
    %v4068 = vshrl.u32 %v4067, 7
    %v4069 = vsub.s32 3, %v4068
    %v4070 = vrot.slane %v4032, %v4069
    %v4075 = vsel %vm184, %v4037, %v4058
    %v4076 = vsel %vm185, %v4041, %v4062
    %v4077 = vsel %vm186, %v4045, %v4066
    %v4078 = vsel %vm187, %v4049, %v4070
    %v4079 = vld [vmem:[#allocation14] sm:$0xff]
    %v4080 = vld [vmem:[#allocation14 + $0x8] sm:$0xff]
    %v4081 = vld [vmem:[#allocation14 + $0x10] sm:$0xff]
    %v4082 = vld [vmem:[#allocation14 + $0x18] sm:$0xff]
    %v4083 = vld [vmem:[#allocation14 + $0x20] sm:$0xff]
    %v4084 = vld [vmem:[#allocation14 + $0x28] sm:$0xff]
    %v4085 = vld [vmem:[#allocation14 + $0x30] sm:$0xff]
    %v4086 = vld [vmem:[#allocation14 + $0x38] sm:$0xff]
    %v4087 = vld [vmem:[#allocation14 + $0x40] sm:$0xff]
    %v4088 = vld [vmem:[#allocation14 + $0x48] sm:$0xff]
    %v4089 = vld [vmem:[#allocation14 + $0x50] sm:$0xff]
    %v4090 = vld [vmem:[#allocation14 + $0x58] sm:$0xff]
    %v4091 = vld [vmem:[#allocation14 + $0x60] sm:$0xff]
    %v4092 = vld [vmem:[#allocation14 + $0x68] sm:$0xff]
    %v4093 = vld [vmem:[#allocation14 + $0x70] sm:$0xff]
    %v4094 = vld [vmem:[#allocation14 + $0x78] sm:$0xff]
    %v4095 = vld [vmem:[#allocation14 + $0x80] sm:$0xff]
    %v4096 = vld [vmem:[#allocation14 + $0x88] sm:$0xff]
    %v4097 = vld [vmem:[#allocation14 + $0x90] sm:$0xff]
    %v4098 = vld [vmem:[#allocation14 + $0x98] sm:$0xff]
    %v4099 = vld [vmem:[#allocation14 + $0xa0] sm:$0xff]
    %v4100 = vld [vmem:[#allocation14 + $0xa8] sm:$0xff]
    %v4101 = vld [vmem:[#allocation14 + $0xb0] sm:$0xff]
    %v4102 = vld [vmem:[#allocation14 + $0xb8] sm:$0xff]
    %v4103 = vld [vmem:[#allocation14 + $0xc0] sm:$0xff]
    %v4104 = vld [vmem:[#allocation14 + $0xc8] sm:$0xff]
    %v4105 = vld [vmem:[#allocation14 + $0xd0] sm:$0xff]
    %v4106 = vld [vmem:[#allocation14 + $0xd8] sm:$0xff]
    %v4107 = vld [vmem:[#allocation14 + $0xe0] sm:$0xff]
    %v4108 = vld [vmem:[#allocation14 + $0xe8] sm:$0xff]
    %v4109 = vld [vmem:[#allocation14 + $0xf0] sm:$0xff]
    %v4110 = vld [vmem:[#allocation14 + $0xf8] sm:$0xff]
    %v4111 = vld [vmem:[#allocation14 + $0x100] sm:$0xff]
    %v4112 = vld [vmem:[#allocation14 + $0x108] sm:$0xff]
    %v4113 = vld [vmem:[#allocation14 + $0x110] sm:$0xff]
    %v4114 = vld [vmem:[#allocation14 + $0x118] sm:$0xff]
    %v4115 = vld [vmem:[#allocation14 + $0x120] sm:$0xff]
    %v4116 = vld [vmem:[#allocation14 + $0x128] sm:$0xff]
    %v4117 = vld [vmem:[#allocation14 + $0x130] sm:$0xff]
    %v4118 = vld [vmem:[#allocation14 + $0x138] sm:$0xff]
    %v4119 = vld [vmem:[#allocation14 + $0x140] sm:$0xff]
    %v4120 = vld [vmem:[#allocation14 + $0x148] sm:$0xff]
    %v4121 = vld [vmem:[#allocation14 + $0x150] sm:$0xff]
    %v4122 = vld [vmem:[#allocation14 + $0x158] sm:$0xff]
    %v4123 = vld [vmem:[#allocation14 + $0x160] sm:$0xff]
    %v4124 = vld [vmem:[#allocation14 + $0x168] sm:$0xff]
    %v4125 = vld [vmem:[#allocation14 + $0x170] sm:$0xff]
    %v4126 = vld [vmem:[#allocation14 + $0x178] sm:$0xff]
    %v4127 = vld [vmem:[#allocation14 + $0x180] sm:$0xff]
    %v4128 = vld [vmem:[#allocation14 + $0x188] sm:$0xff]
    %v4129 = vld [vmem:[#allocation14 + $0x190] sm:$0xff]
    %v4130 = vld [vmem:[#allocation14 + $0x198] sm:$0xff]
    %v4131 = vld [vmem:[#allocation14 + $0x1a0] sm:$0xff]
    %v4132 = vld [vmem:[#allocation14 + $0x1a8] sm:$0xff]
    %v4133 = vld [vmem:[#allocation14 + $0x1b0] sm:$0xff]
    %v4134 = vld [vmem:[#allocation14 + $0x1b8] sm:$0xff]
    %v4135 = vld [vmem:[#allocation14 + $0x1c0] sm:$0xff]
    %v4136 = vld [vmem:[#allocation14 + $0x1c8] sm:$0xff]
    %v4137 = vld [vmem:[#allocation14 + $0x1d0] sm:$0xff]
    %v4138 = vld [vmem:[#allocation14 + $0x1d8] sm:$0xff]
    %v4139 = vld [vmem:[#allocation14 + $0x1e0] sm:$0xff]
    %v4140 = vld [vmem:[#allocation14 + $0x1e8] sm:$0xff]
    %v4141 = vld [vmem:[#allocation14 + $0x1f0] sm:$0xff]
    %v4142 = vld [vmem:[#allocation14 + $0x1f8] sm:$0xff]
    %4143 = vmatprep.subr.mxu0 %v4080
    %4144 = vmatpush1.msra.mxu0 %v4079
    %4145 = vmatprep.subr.mxu0 %v4084
    %4146 = vmatpush1.msra.mxu0 %v4083
    %4147 = vmatprep.subr.mxu0 %v4088
    %4148 = vmatpush1.msra.mxu0 %v4087
    %4149 = vmatprep.subr.mxu0 %v4092
    %4150 = vmatpush1.msra.mxu0 %v4091
    %4151 = vmatprep.subr.mxu0 %v4096
    %4152 = vmatpush1.msra.mxu0 %v4095
    %4153 = vmatprep.subr.mxu0 %v4100
    %4154 = vmatpush1.msra.mxu0 %v4099
    %4155 = vmatprep.subr.mxu0 %v4104
    %4156 = vmatpush1.msra.mxu0 %v4103
    %4157 = vmatprep.subr.mxu0 %v4108
    %4158 = vmatpush1.msra.mxu0 %v4107
    %4159 = vmatprep.subr.mxu0 %v4112
    %4160 = vmatpush1.msra.mxu0 %v4111
    %4161 = vmatprep.subr.mxu0 %v4116
    %4162 = vmatpush1.msra.mxu0 %v4115
    %4163 = vmatprep.subr.mxu0 %v4120
    %4164 = vmatpush1.msra.mxu0 %v4119
    %4165 = vmatprep.subr.mxu0 %v4124
    %4166 = vmatpush1.msra.mxu0 %v4123
    %4167 = vmatprep.subr.mxu0 %v4128
    %4168 = vmatpush1.msra.mxu0 %v4127
    %4169 = vmatprep.subr.mxu0 %v4132
    %4170 = vmatpush1.msra.mxu0 %v4131
    %4171 = vmatprep.subr.mxu0 %v4136
    %4172 = vmatpush1.msra.mxu0 %v4135
    %4173 = vmatprep.subr.mxu0 %v4140
    %4174 = vmatpush1.msra.mxu0 %v4139
    %4175 = vmatprep.subr.mxu0 0.0
    %4176 = vmatpush1.msra.mxu0 0.0
    %4177 = vmatprep.subr.mxu0 0.0
    %4178 = vmatpush1.msra.mxu0 0.0
    %4179 = vmatprep.subr.mxu0 0.0
    %4180 = vmatpush1.msra.mxu0 0.0
    %4181 = vmatprep.subr.mxu0 0.0
    %4182 = vmatpush1.msra.mxu0 0.0
    %4183 = vmatprep.subr.mxu0 0.0
    %4184 = vmatpush1.msra.mxu0 0.0
    %4185 = vmatprep.subr.mxu0 0.0
    %4186 = vmatpush1.msra.mxu0 0.0
    %4187 = vmatprep.subr.mxu0 0.0
    %4188 = vmatpush1.msra.mxu0 0.0
    %4189 = vmatprep.subr.mxu0 0.0
    %4190 = vmatpush1.msra.mxu0 0.0
    %4191 = vmatprep.subr.mxu0 0.0
    %4192 = vmatpush1.msra.mxu0 0.0
    %4193 = vmatprep.subr.mxu0 0.0
    %4194 = vmatpush1.msra.mxu0 0.0
    %4195 = vmatprep.subr.mxu0 0.0
    %4196 = vmatpush1.msra.mxu0 0.0
    %4197 = vmatprep.subr.mxu0 0.0
    %4198 = vmatpush1.msra.mxu0 0.0
    %4199 = vmatprep.subr.mxu0 0.0
    %4200 = vmatpush1.msra.mxu0 0.0
    %4201 = vmatprep.subr.mxu0 0.0
    %4202 = vmatpush1.msra.mxu0 0.0
    %4203 = vmatprep.subr.mxu0 0.0
    %4204 = vmatpush1.msra.mxu0 0.0
    %4205 = vmatprep.subr.mxu0 0.0
    %4206 = vmatpush1.msra.mxu0 0.0
    %4207 = vmatprep.mubr.f32.mxu0 0.0
    %4208 = vmatmul.mubr.f32.gmra.mrb[0].mxu0 %v4028
    %v4209 = vpop.f32.mrb[0].mxu0
    %v4210 = vadd.f32 0.0, %v4209
    %v4211 = vpop.f32.mrb[0].mxu0
    %v4212 = vadd.f32 0.0, %v4211
    %4213 = vdwg.mxu0
    %4214 = vmatprep.subr.mxu0 %v4082
    %4215 = vmatpush1.msra.mxu0 %v4081
    %4216 = vmatprep.subr.mxu0 %v4086
    %4217 = vmatpush1.msra.mxu0 %v4085
    %4218 = vmatprep.subr.mxu0 %v4090
    %4219 = vmatpush1.msra.mxu0 %v4089
    %4220 = vmatprep.subr.mxu0 %v4094
    %4221 = vmatpush1.msra.mxu0 %v4093
    %4222 = vmatprep.subr.mxu0 %v4098
    %4223 = vmatpush1.msra.mxu0 %v4097
    %4224 = vmatprep.subr.mxu0 %v4102
    %4225 = vmatpush1.msra.mxu0 %v4101
    %4226 = vmatprep.subr.mxu0 %v4106
    %4227 = vmatpush1.msra.mxu0 %v4105
    %4228 = vmatprep.subr.mxu0 %v4110
    %4229 = vmatpush1.msra.mxu0 %v4109
    %4230 = vmatprep.subr.mxu0 %v4114
    %4231 = vmatpush1.msra.mxu0 %v4113
    %4232 = vmatprep.subr.mxu0 %v4118
    %4233 = vmatpush1.msra.mxu0 %v4117
    %4234 = vmatprep.subr.mxu0 %v4122
    %4235 = vmatpush1.msra.mxu0 %v4121
    %4236 = vmatprep.subr.mxu0 %v4126
    %4237 = vmatpush1.msra.mxu0 %v4125
    %4238 = vmatprep.subr.mxu0 %v4130
    %4239 = vmatpush1.msra.mxu0 %v4129
    %4240 = vmatprep.subr.mxu0 %v4134
    %4241 = vmatpush1.msra.mxu0 %v4133
    %4242 = vmatprep.subr.mxu0 %v4138
    %4243 = vmatpush1.msra.mxu0 %v4137
    %4244 = vmatprep.subr.mxu0 %v4142
    %4245 = vmatpush1.msra.mxu0 %v4141
    %4246 = vmatprep.subr.mxu0 0.0
    %4247 = vmatpush1.msra.mxu0 0.0
    %4248 = vmatprep.subr.mxu0 0.0
    %4249 = vmatpush1.msra.mxu0 0.0
    %4250 = vmatprep.subr.mxu0 0.0
    %4251 = vmatpush1.msra.mxu0 0.0
    %4252 = vmatprep.subr.mxu0 0.0
    %4253 = vmatpush1.msra.mxu0 0.0
    %4254 = vmatprep.subr.mxu0 0.0
    %4255 = vmatpush1.msra.mxu0 0.0
    %4256 = vmatprep.subr.mxu0 0.0
    %4257 = vmatpush1.msra.mxu0 0.0
    %4258 = vmatprep.subr.mxu0 0.0
    %4259 = vmatpush1.msra.mxu0 0.0
    %4260 = vmatprep.subr.mxu0 0.0
    %4261 = vmatpush1.msra.mxu0 0.0
    %4262 = vmatprep.subr.mxu0 0.0
    %4263 = vmatpush1.msra.mxu0 0.0
    %4264 = vmatprep.subr.mxu0 0.0
    %4265 = vmatpush1.msra.mxu0 0.0
    %4266 = vmatprep.subr.mxu0 0.0
    %4267 = vmatpush1.msra.mxu0 0.0
    %4268 = vmatprep.subr.mxu0 0.0
    %4269 = vmatpush1.msra.mxu0 0.0
    %4270 = vmatprep.subr.mxu0 0.0
    %4271 = vmatpush1.msra.mxu0 0.0
    %4272 = vmatprep.subr.mxu0 0.0
    %4273 = vmatpush1.msra.mxu0 0.0
    %4274 = vmatprep.subr.mxu0 0.0
    %4275 = vmatpush1.msra.mxu0 0.0
    %4276 = vmatprep.subr.mxu0 0.0
    %4277 = vmatpush1.msra.mxu0 0.0
    %4278 = vmatprep.mubr.f32.mxu0 0.0
    %4279 = vmatmul.mubr.f32.gmra.mrb[0].mxu0 %v4028
    %v4280 = vpop.f32.mrb[0].mxu0
    %v4281 = vadd.f32 0.0, %v4280
    %v4282 = vpop.f32.mrb[0].mxu0
    %v4283 = vadd.f32 0.0, %v4282
    %4284 = vdwg.mxu0
    %v4285 = vadd.f32 %v4075, %v4210
    %v4286 = vadd.f32 %v4076, %v4212
    %v4287 = vadd.f32 %v4077, %v4281
    %v4288 = vadd.f32 %v4078, %v4283
    %v4289 = vxor.u32 %v4285, 2147483648
    %v4290 = vmul.f32 %v4289, 1.442695
    %v4291 = vpow.pop %v4290
    %v4292 = vadd.f32 %v4291, 1.0
    %v4293 = vrcp.pop %v4292
    %v4294 = vmul.f32 1.0, %v4293
    %v4295 = vxor.u32 %v4286, 2147483648
    %v4296 = vmul.f32 %v4295, 1.442695
    %v4297 = vpow.pop %v4296
    %v4298 = vadd.f32 %v4297, 1.0
    %v4299 = vrcp.pop %v4298
    %v4300 = vmul.f32 1.0, %v4299
    %v4301 = vtanh.pop %v4287
    %v4302 = vxor.u32 %v4288, 2147483648
    %v4303 = vmul.f32 %v4302, 1.442695
    %v4304 = vpow.pop %v4303
    %v4305 = vadd.f32 %v4304, 1.0
    %v4306 = vrcp.pop %v4305
    %v4307 = vmul.f32 1.0, %v4306
    %v4308 = vmul.f32 %v4300, %v4026
    %v4309 = vmul.f32 %v4294, %v4301
    %v4310 = vadd.f32 %v4308, %v4309
    %v4311 = vtanh.pop %v4310
    %v4312 = vmul.f32 %v4307, %v4311
    %4313 = vst [vmem:[#allocation2 + $0x4] sm:$0x1] %v4312
    %4314 = vst [vmem:[#allocation3 + $0x3] sm:$0x1] %v4312
    %v4315 = vld [vmem:[%s952] ss:$8 sm:$0xf]
    %v4316 = vld [vmem:[%s950] ss:$8 sm:$0xf]
    %v4318 = vlaneseq
    %v4319 = vshrl.u32 %v4318, 7
    %v4320 = vsub.s32 0, %v4319
    %v4321 = vrot.slane %v4315, %v4320
    %v4322 = vlaneseq
    %v4323 = vshrl.u32 %v4322, 7
    %v4324 = vsub.s32 1, %v4323
    %v4325 = vrot.slane %v4315, %v4324
    %v4326 = vlaneseq
    %v4327 = vshrl.u32 %v4326, 7
    %v4328 = vsub.s32 2, %v4327
    %v4329 = vrot.slane %v4315, %v4328
    %v4330 = vlaneseq
    %v4331 = vshrl.u32 %v4330, 7
    %v4332 = vsub.s32 3, %v4331
    %v4333 = vrot.slane %v4315, %v4332
    %v4339 = vlaneseq
    %v4340 = vshrl.u32 %v4339, 7
    %v4341 = vsub.s32 0, %v4340
    %v4342 = vrot.slane %v4316, %v4341
    %v4343 = vlaneseq
    %v4344 = vshrl.u32 %v4343, 7
    %v4345 = vsub.s32 1, %v4344
    %v4346 = vrot.slane %v4316, %v4345
    %v4347 = vlaneseq
    %v4348 = vshrl.u32 %v4347, 7
    %v4349 = vsub.s32 2, %v4348
    %v4350 = vrot.slane %v4316, %v4349
    %v4351 = vlaneseq
    %v4352 = vshrl.u32 %v4351, 7
    %v4353 = vsub.s32 3, %v4352
    %v4354 = vrot.slane %v4316, %v4353
    %v4359 = vsel %vm184, %v4321, %v4342
    %v4360 = vsel %vm185, %v4325, %v4346
    %v4361 = vsel %vm186, %v4329, %v4350
    %v4362 = vsel %vm187, %v4333, %v4354
    %v4363 = vld [vmem:[#allocation14] sm:$0xff]
    %v4364 = vld [vmem:[#allocation14 + $0x8] sm:$0xff]
    %v4365 = vld [vmem:[#allocation14 + $0x10] sm:$0xff]
    %v4366 = vld [vmem:[#allocation14 + $0x18] sm:$0xff]
    %v4367 = vld [vmem:[#allocation14 + $0x20] sm:$0xff]
    %v4368 = vld [vmem:[#allocation14 + $0x28] sm:$0xff]
    %v4369 = vld [vmem:[#allocation14 + $0x30] sm:$0xff]
    %v4370 = vld [vmem:[#allocation14 + $0x38] sm:$0xff]
    %v4371 = vld [vmem:[#allocation14 + $0x40] sm:$0xff]
    %v4372 = vld [vmem:[#allocation14 + $0x48] sm:$0xff]
    %v4373 = vld [vmem:[#allocation14 + $0x50] sm:$0xff]
    %v4374 = vld [vmem:[#allocation14 + $0x58] sm:$0xff]
    %v4375 = vld [vmem:[#allocation14 + $0x60] sm:$0xff]
    %v4376 = vld [vmem:[#allocation14 + $0x68] sm:$0xff]
    %v4377 = vld [vmem:[#allocation14 + $0x70] sm:$0xff]
    %v4378 = vld [vmem:[#allocation14 + $0x78] sm:$0xff]
    %v4379 = vld [vmem:[#allocation14 + $0x80] sm:$0xff]
    %v4380 = vld [vmem:[#allocation14 + $0x88] sm:$0xff]
    %v4381 = vld [vmem:[#allocation14 + $0x90] sm:$0xff]
    %v4382 = vld [vmem:[#allocation14 + $0x98] sm:$0xff]
    %v4383 = vld [vmem:[#allocation14 + $0xa0] sm:$0xff]
    %v4384 = vld [vmem:[#allocation14 + $0xa8] sm:$0xff]
    %v4385 = vld [vmem:[#allocation14 + $0xb0] sm:$0xff]
    %v4386 = vld [vmem:[#allocation14 + $0xb8] sm:$0xff]
    %v4387 = vld [vmem:[#allocation14 + $0xc0] sm:$0xff]
    %v4388 = vld [vmem:[#allocation14 + $0xc8] sm:$0xff]
    %v4389 = vld [vmem:[#allocation14 + $0xd0] sm:$0xff]
    %v4390 = vld [vmem:[#allocation14 + $0xd8] sm:$0xff]
    %v4391 = vld [vmem:[#allocation14 + $0xe0] sm:$0xff]
    %v4392 = vld [vmem:[#allocation14 + $0xe8] sm:$0xff]
    %v4393 = vld [vmem:[#allocation14 + $0xf0] sm:$0xff]
    %v4394 = vld [vmem:[#allocation14 + $0xf8] sm:$0xff]
    %v4395 = vld [vmem:[#allocation14 + $0x100] sm:$0xff]
    %v4396 = vld [vmem:[#allocation14 + $0x108] sm:$0xff]
    %v4397 = vld [vmem:[#allocation14 + $0x110] sm:$0xff]
    %v4398 = vld [vmem:[#allocation14 + $0x118] sm:$0xff]
    %v4399 = vld [vmem:[#allocation14 + $0x120] sm:$0xff]
    %v4400 = vld [vmem:[#allocation14 + $0x128] sm:$0xff]
    %v4401 = vld [vmem:[#allocation14 + $0x130] sm:$0xff]
    %v4402 = vld [vmem:[#allocation14 + $0x138] sm:$0xff]
    %v4403 = vld [vmem:[#allocation14 + $0x140] sm:$0xff]
    %v4404 = vld [vmem:[#allocation14 + $0x148] sm:$0xff]
    %v4405 = vld [vmem:[#allocation14 + $0x150] sm:$0xff]
    %v4406 = vld [vmem:[#allocation14 + $0x158] sm:$0xff]
    %v4407 = vld [vmem:[#allocation14 + $0x160] sm:$0xff]
    %v4408 = vld [vmem:[#allocation14 + $0x168] sm:$0xff]
    %v4409 = vld [vmem:[#allocation14 + $0x170] sm:$0xff]
    %v4410 = vld [vmem:[#allocation14 + $0x178] sm:$0xff]
    %v4411 = vld [vmem:[#allocation14 + $0x180] sm:$0xff]
    %v4412 = vld [vmem:[#allocation14 + $0x188] sm:$0xff]
    %v4413 = vld [vmem:[#allocation14 + $0x190] sm:$0xff]
    %v4414 = vld [vmem:[#allocation14 + $0x198] sm:$0xff]
    %v4415 = vld [vmem:[#allocation14 + $0x1a0] sm:$0xff]
    %v4416 = vld [vmem:[#allocation14 + $0x1a8] sm:$0xff]
    %v4417 = vld [vmem:[#allocation14 + $0x1b0] sm:$0xff]
    %v4418 = vld [vmem:[#allocation14 + $0x1b8] sm:$0xff]
    %v4419 = vld [vmem:[#allocation14 + $0x1c0] sm:$0xff]
    %v4420 = vld [vmem:[#allocation14 + $0x1c8] sm:$0xff]
    %v4421 = vld [vmem:[#allocation14 + $0x1d0] sm:$0xff]
    %v4422 = vld [vmem:[#allocation14 + $0x1d8] sm:$0xff]
    %v4423 = vld [vmem:[#allocation14 + $0x1e0] sm:$0xff]
    %v4424 = vld [vmem:[#allocation14 + $0x1e8] sm:$0xff]
    %v4425 = vld [vmem:[#allocation14 + $0x1f0] sm:$0xff]
    %v4426 = vld [vmem:[#allocation14 + $0x1f8] sm:$0xff]
    %4427 = vmatprep.subr.mxu0 %v4364
    %4428 = vmatpush1.msra.mxu0 %v4363
    %4429 = vmatprep.subr.mxu0 %v4368
    %4430 = vmatpush1.msra.mxu0 %v4367
    %4431 = vmatprep.subr.mxu0 %v4372
    %4432 = vmatpush1.msra.mxu0 %v4371
    %4433 = vmatprep.subr.mxu0 %v4376
    %4434 = vmatpush1.msra.mxu0 %v4375
    %4435 = vmatprep.subr.mxu0 %v4380
    %4436 = vmatpush1.msra.mxu0 %v4379
    %4437 = vmatprep.subr.mxu0 %v4384
    %4438 = vmatpush1.msra.mxu0 %v4383
    %4439 = vmatprep.subr.mxu0 %v4388
    %4440 = vmatpush1.msra.mxu0 %v4387
    %4441 = vmatprep.subr.mxu0 %v4392
    %4442 = vmatpush1.msra.mxu0 %v4391
    %4443 = vmatprep.subr.mxu0 %v4396
    %4444 = vmatpush1.msra.mxu0 %v4395
    %4445 = vmatprep.subr.mxu0 %v4400
    %4446 = vmatpush1.msra.mxu0 %v4399
    %4447 = vmatprep.subr.mxu0 %v4404
    %4448 = vmatpush1.msra.mxu0 %v4403
    %4449 = vmatprep.subr.mxu0 %v4408
    %4450 = vmatpush1.msra.mxu0 %v4407
    %4451 = vmatprep.subr.mxu0 %v4412
    %4452 = vmatpush1.msra.mxu0 %v4411
    %4453 = vmatprep.subr.mxu0 %v4416
    %4454 = vmatpush1.msra.mxu0 %v4415
    %4455 = vmatprep.subr.mxu0 %v4420
    %4456 = vmatpush1.msra.mxu0 %v4419
    %4457 = vmatprep.subr.mxu0 %v4424
    %4458 = vmatpush1.msra.mxu0 %v4423
    %4459 = vmatprep.subr.mxu0 0.0
    %4460 = vmatpush1.msra.mxu0 0.0
    %4461 = vmatprep.subr.mxu0 0.0
    %4462 = vmatpush1.msra.mxu0 0.0
    %4463 = vmatprep.subr.mxu0 0.0
    %4464 = vmatpush1.msra.mxu0 0.0
    %4465 = vmatprep.subr.mxu0 0.0
    %4466 = vmatpush1.msra.mxu0 0.0
    %4467 = vmatprep.subr.mxu0 0.0
    %4468 = vmatpush1.msra.mxu0 0.0
    %4469 = vmatprep.subr.mxu0 0.0
    %4470 = vmatpush1.msra.mxu0 0.0
    %4471 = vmatprep.subr.mxu0 0.0
    %4472 = vmatpush1.msra.mxu0 0.0
    %4473 = vmatprep.subr.mxu0 0.0
    %4474 = vmatpush1.msra.mxu0 0.0
    %4475 = vmatprep.subr.mxu0 0.0
    %4476 = vmatpush1.msra.mxu0 0.0
    %4477 = vmatprep.subr.mxu0 0.0
    %4478 = vmatpush1.msra.mxu0 0.0
    %4479 = vmatprep.subr.mxu0 0.0
    %4480 = vmatpush1.msra.mxu0 0.0
    %4481 = vmatprep.subr.mxu0 0.0
    %4482 = vmatpush1.msra.mxu0 0.0
    %4483 = vmatprep.subr.mxu0 0.0
    %4484 = vmatpush1.msra.mxu0 0.0
    %4485 = vmatprep.subr.mxu0 0.0
    %4486 = vmatpush1.msra.mxu0 0.0
    %4487 = vmatprep.subr.mxu0 0.0
    %4488 = vmatpush1.msra.mxu0 0.0
    %4489 = vmatprep.subr.mxu0 0.0
    %4490 = vmatpush1.msra.mxu0 0.0
    %4491 = vmatprep.mubr.f32.mxu0 0.0
    %4492 = vmatmul.mubr.f32.gmra.mrb[0].mxu0 %v4312
    %v4493 = vpop.f32.mrb[0].mxu0
    %v4494 = vadd.f32 0.0, %v4493
    %v4495 = vpop.f32.mrb[0].mxu0
    %v4496 = vadd.f32 0.0, %v4495
    %4497 = vdwg.mxu0
    %4498 = vmatprep.subr.mxu0 %v4366
    %4499 = vmatpush1.msra.mxu0 %v4365
    %4500 = vmatprep.subr.mxu0 %v4370
    %4501 = vmatpush1.msra.mxu0 %v4369
    %4502 = vmatprep.subr.mxu0 %v4374
    %4503 = vmatpush1.msra.mxu0 %v4373
    %4504 = vmatprep.subr.mxu0 %v4378
    %4505 = vmatpush1.msra.mxu0 %v4377
    %4506 = vmatprep.subr.mxu0 %v4382
    %4507 = vmatpush1.msra.mxu0 %v4381
    %4508 = vmatprep.subr.mxu0 %v4386
    %4509 = vmatpush1.msra.mxu0 %v4385
    %4510 = vmatprep.subr.mxu0 %v4390
    %4511 = vmatpush1.msra.mxu0 %v4389
    %4512 = vmatprep.subr.mxu0 %v4394
    %4513 = vmatpush1.msra.mxu0 %v4393
    %4514 = vmatprep.subr.mxu0 %v4398
    %4515 = vmatpush1.msra.mxu0 %v4397
    %4516 = vmatprep.subr.mxu0 %v4402
    %4517 = vmatpush1.msra.mxu0 %v4401
    %4518 = vmatprep.subr.mxu0 %v4406
    %4519 = vmatpush1.msra.mxu0 %v4405
    %4520 = vmatprep.subr.mxu0 %v4410
    %4521 = vmatpush1.msra.mxu0 %v4409
    %4522 = vmatprep.subr.mxu0 %v4414
    %4523 = vmatpush1.msra.mxu0 %v4413
    %4524 = vmatprep.subr.mxu0 %v4418
    %4525 = vmatpush1.msra.mxu0 %v4417
    %4526 = vmatprep.subr.mxu0 %v4422
    %4527 = vmatpush1.msra.mxu0 %v4421
    %4528 = vmatprep.subr.mxu0 %v4426
    %4529 = vmatpush1.msra.mxu0 %v4425
    %4530 = vmatprep.subr.mxu0 0.0
    %4531 = vmatpush1.msra.mxu0 0.0
    %4532 = vmatprep.subr.mxu0 0.0
    %4533 = vmatpush1.msra.mxu0 0.0
    %4534 = vmatprep.subr.mxu0 0.0
    %4535 = vmatpush1.msra.mxu0 0.0
    %4536 = vmatprep.subr.mxu0 0.0
    %4537 = vmatpush1.msra.mxu0 0.0
    %4538 = vmatprep.subr.mxu0 0.0
    %4539 = vmatpush1.msra.mxu0 0.0
    %4540 = vmatprep.subr.mxu0 0.0
    %4541 = vmatpush1.msra.mxu0 0.0
    %4542 = vmatprep.subr.mxu0 0.0
    %4543 = vmatpush1.msra.mxu0 0.0
    %4544 = vmatprep.subr.mxu0 0.0
    %4545 = vmatpush1.msra.mxu0 0.0
    %4546 = vmatprep.subr.mxu0 0.0
    %4547 = vmatpush1.msra.mxu0 0.0
    %4548 = vmatprep.subr.mxu0 0.0
    %4549 = vmatpush1.msra.mxu0 0.0
    %4550 = vmatprep.subr.mxu0 0.0
    %4551 = vmatpush1.msra.mxu0 0.0
    %4552 = vmatprep.subr.mxu0 0.0
    %4553 = vmatpush1.msra.mxu0 0.0
    %4554 = vmatprep.subr.mxu0 0.0
    %4555 = vmatpush1.msra.mxu0 0.0
    %4556 = vmatprep.subr.mxu0 0.0
    %4557 = vmatpush1.msra.mxu0 0.0
    %4558 = vmatprep.subr.mxu0 0.0
    %4559 = vmatpush1.msra.mxu0 0.0
    %4560 = vmatprep.subr.mxu0 0.0
    %4561 = vmatpush1.msra.mxu0 0.0
    %4562 = vmatprep.mubr.f32.mxu0 0.0
    %4563 = vmatmul.mubr.f32.gmra.mrb[0].mxu0 %v4312
    %v4564 = vpop.f32.mrb[0].mxu0
    %v4565 = vadd.f32 0.0, %v4564
    %v4566 = vpop.f32.mrb[0].mxu0
    %v4567 = vadd.f32 0.0, %v4566
    %4568 = vdwg.mxu0
    %v4569 = vadd.f32 %v4359, %v4494
    %v4570 = vadd.f32 %v4360, %v4496
    %v4571 = vadd.f32 %v4361, %v4565
    %v4572 = vadd.f32 %v4362, %v4567
    %v4573 = vxor.u32 %v4569, 2147483648
    %v4574 = vmul.f32 %v4573, 1.442695
    %v4575 = vpow.pop %v4574
    %v4576 = vadd.f32 %v4575, 1.0
    %v4577 = vrcp.pop %v4576
    %v4578 = vmul.f32 1.0, %v4577
    %v4579 = vxor.u32 %v4570, 2147483648
    %v4580 = vmul.f32 %v4579, 1.442695
    %v4581 = vpow.pop %v4580
    %v4582 = vadd.f32 %v4581, 1.0
    %v4583 = vrcp.pop %v4582
    %v4584 = vmul.f32 1.0, %v4583
    %v4585 = vtanh.pop %v4571
    %v4586 = vxor.u32 %v4572, 2147483648
    %v4587 = vmul.f32 %v4586, 1.442695
    %v4588 = vpow.pop %v4587
    %v4589 = vadd.f32 %v4588, 1.0
    %v4590 = vrcp.pop %v4589
    %v4591 = vmul.f32 1.0, %v4590
    %v4592 = vmul.f32 %v4584, %v4310
    %v4593 = vmul.f32 %v4578, %v4585
    %v4594 = vadd.f32 %v4592, %v4593
    %v4595 = vtanh.pop %v4594
    %v4596 = vmul.f32 %v4591, %v4595
    %4597 = vst [vmem:[#allocation2 + $0x5] sm:$0x1] %v4596
    %4598 = vst [vmem:[#allocation3 + $0x2] sm:$0x1] %v4596
    %v4599 = vld [vmem:[%s666] ss:$8 sm:$0xf]
    %v4600 = vld [vmem:[%s664] ss:$8 sm:$0xf]
    %v4602 = vlaneseq
    %v4603 = vshrl.u32 %v4602, 7
    %v4604 = vsub.s32 0, %v4603
    %v4605 = vrot.slane %v4599, %v4604
    %v4606 = vlaneseq
    %v4607 = vshrl.u32 %v4606, 7
    %v4608 = vsub.s32 1, %v4607
    %v4609 = vrot.slane %v4599, %v4608
    %v4610 = vlaneseq
    %v4611 = vshrl.u32 %v4610, 7
    %v4612 = vsub.s32 2, %v4611
    %v4613 = vrot.slane %v4599, %v4612
    %v4614 = vlaneseq
    %v4615 = vshrl.u32 %v4614, 7
    %v4616 = vsub.s32 3, %v4615
    %v4617 = vrot.slane %v4599, %v4616
    %v4623 = vlaneseq
    %v4624 = vshrl.u32 %v4623, 7
    %v4625 = vsub.s32 0, %v4624
    %v4626 = vrot.slane %v4600, %v4625
    %v4627 = vlaneseq
    %v4628 = vshrl.u32 %v4627, 7
    %v4629 = vsub.s32 1, %v4628
    %v4630 = vrot.slane %v4600, %v4629
    %v4631 = vlaneseq
    %v4632 = vshrl.u32 %v4631, 7
    %v4633 = vsub.s32 2, %v4632
    %v4634 = vrot.slane %v4600, %v4633
    %v4635 = vlaneseq
    %v4636 = vshrl.u32 %v4635, 7
    %v4637 = vsub.s32 3, %v4636
    %v4638 = vrot.slane %v4600, %v4637
    %v4643 = vsel %vm184, %v4605, %v4626
    %v4644 = vsel %vm185, %v4609, %v4630
    %v4645 = vsel %vm186, %v4613, %v4634
    %v4646 = vsel %vm187, %v4617, %v4638
    %v4647 = vld [vmem:[#allocation14] sm:$0xff]
    %v4648 = vld [vmem:[#allocation14 + $0x8] sm:$0xff]
    %v4649 = vld [vmem:[#allocation14 + $0x10] sm:$0xff]
    %v4650 = vld [vmem:[#allocation14 + $0x18] sm:$0xff]
    %v4651 = vld [vmem:[#allocation14 + $0x20] sm:$0xff]
    %v4652 = vld [vmem:[#allocation14 + $0x28] sm:$0xff]
    %v4653 = vld [vmem:[#allocation14 + $0x30] sm:$0xff]
    %v4654 = vld [vmem:[#allocation14 + $0x38] sm:$0xff]
    %v4655 = vld [vmem:[#allocation14 + $0x40] sm:$0xff]
    %v4656 = vld [vmem:[#allocation14 + $0x48] sm:$0xff]
    %v4657 = vld [vmem:[#allocation14 + $0x50] sm:$0xff]
    %v4658 = vld [vmem:[#allocation14 + $0x58] sm:$0xff]
    %v4659 = vld [vmem:[#allocation14 + $0x60] sm:$0xff]
    %v4660 = vld [vmem:[#allocation14 + $0x68] sm:$0xff]
    %v4661 = vld [vmem:[#allocation14 + $0x70] sm:$0xff]
    %v4662 = vld [vmem:[#allocation14 + $0x78] sm:$0xff]
    %v4663 = vld [vmem:[#allocation14 + $0x80] sm:$0xff]
    %v4664 = vld [vmem:[#allocation14 + $0x88] sm:$0xff]
    %v4665 = vld [vmem:[#allocation14 + $0x90] sm:$0xff]
    %v4666 = vld [vmem:[#allocation14 + $0x98] sm:$0xff]
    %v4667 = vld [vmem:[#allocation14 + $0xa0] sm:$0xff]
    %v4668 = vld [vmem:[#allocation14 + $0xa8] sm:$0xff]
    %v4669 = vld [vmem:[#allocation14 + $0xb0] sm:$0xff]
    %v4670 = vld [vmem:[#allocation14 + $0xb8] sm:$0xff]
    %v4671 = vld [vmem:[#allocation14 + $0xc0] sm:$0xff]
    %v4672 = vld [vmem:[#allocation14 + $0xc8] sm:$0xff]
    %v4673 = vld [vmem:[#allocation14 + $0xd0] sm:$0xff]
    %v4674 = vld [vmem:[#allocation14 + $0xd8] sm:$0xff]
    %v4675 = vld [vmem:[#allocation14 + $0xe0] sm:$0xff]
    %v4676 = vld [vmem:[#allocation14 + $0xe8] sm:$0xff]
    %v4677 = vld [vmem:[#allocation14 + $0xf0] sm:$0xff]
    %v4678 = vld [vmem:[#allocation14 + $0xf8] sm:$0xff]
    %v4679 = vld [vmem:[#allocation14 + $0x100] sm:$0xff]
    %v4680 = vld [vmem:[#allocation14 + $0x108] sm:$0xff]
    %v4681 = vld [vmem:[#allocation14 + $0x110] sm:$0xff]
    %v4682 = vld [vmem:[#allocation14 + $0x118] sm:$0xff]
    %v4683 = vld [vmem:[#allocation14 + $0x120] sm:$0xff]
    %v4684 = vld [vmem:[#allocation14 + $0x128] sm:$0xff]
    %v4685 = vld [vmem:[#allocation14 + $0x130] sm:$0xff]
    %v4686 = vld [vmem:[#allocation14 + $0x138] sm:$0xff]
    %v4687 = vld [vmem:[#allocation14 + $0x140] sm:$0xff]
    %v4688 = vld [vmem:[#allocation14 + $0x148] sm:$0xff]
    %v4689 = vld [vmem:[#allocation14 + $0x150] sm:$0xff]
    %v4690 = vld [vmem:[#allocation14 + $0x158] sm:$0xff]
    %v4691 = vld [vmem:[#allocation14 + $0x160] sm:$0xff]
    %v4692 = vld [vmem:[#allocation14 + $0x168] sm:$0xff]
    %v4693 = vld [vmem:[#allocation14 + $0x170] sm:$0xff]
    %v4694 = vld [vmem:[#allocation14 + $0x178] sm:$0xff]
    %v4695 = vld [vmem:[#allocation14 + $0x180] sm:$0xff]
    %v4696 = vld [vmem:[#allocation14 + $0x188] sm:$0xff]
    %v4697 = vld [vmem:[#allocation14 + $0x190] sm:$0xff]
    %v4698 = vld [vmem:[#allocation14 + $0x198] sm:$0xff]
    %v4699 = vld [vmem:[#allocation14 + $0x1a0] sm:$0xff]
    %v4700 = vld [vmem:[#allocation14 + $0x1a8] sm:$0xff]
    %v4701 = vld [vmem:[#allocation14 + $0x1b0] sm:$0xff]
    %v4702 = vld [vmem:[#allocation14 + $0x1b8] sm:$0xff]
    %v4703 = vld [vmem:[#allocation14 + $0x1c0] sm:$0xff]
    %v4704 = vld [vmem:[#allocation14 + $0x1c8] sm:$0xff]
    %v4705 = vld [vmem:[#allocation14 + $0x1d0] sm:$0xff]
    %v4706 = vld [vmem:[#allocation14 + $0x1d8] sm:$0xff]
    %v4707 = vld [vmem:[#allocation14 + $0x1e0] sm:$0xff]
    %v4708 = vld [vmem:[#allocation14 + $0x1e8] sm:$0xff]
    %v4709 = vld [vmem:[#allocation14 + $0x1f0] sm:$0xff]
    %v4710 = vld [vmem:[#allocation14 + $0x1f8] sm:$0xff]
    %4711 = vmatprep.subr.mxu0 %v4648
    %4712 = vmatpush1.msra.mxu0 %v4647
    %4713 = vmatprep.subr.mxu0 %v4652
    %4714 = vmatpush1.msra.mxu0 %v4651
    %4715 = vmatprep.subr.mxu0 %v4656
    %4716 = vmatpush1.msra.mxu0 %v4655
    %4717 = vmatprep.subr.mxu0 %v4660
    %4718 = vmatpush1.msra.mxu0 %v4659
    %4719 = vmatprep.subr.mxu0 %v4664
    %4720 = vmatpush1.msra.mxu0 %v4663
    %4721 = vmatprep.subr.mxu0 %v4668
    %4722 = vmatpush1.msra.mxu0 %v4667
    %4723 = vmatprep.subr.mxu0 %v4672
    %4724 = vmatpush1.msra.mxu0 %v4671
    %4725 = vmatprep.subr.mxu0 %v4676
    %4726 = vmatpush1.msra.mxu0 %v4675
    %4727 = vmatprep.subr.mxu0 %v4680
    %4728 = vmatpush1.msra.mxu0 %v4679
    %4729 = vmatprep.subr.mxu0 %v4684
    %4730 = vmatpush1.msra.mxu0 %v4683
    %4731 = vmatprep.subr.mxu0 %v4688
    %4732 = vmatpush1.msra.mxu0 %v4687
    %4733 = vmatprep.subr.mxu0 %v4692
    %4734 = vmatpush1.msra.mxu0 %v4691
    %4735 = vmatprep.subr.mxu0 %v4696
    %4736 = vmatpush1.msra.mxu0 %v4695
    %4737 = vmatprep.subr.mxu0 %v4700
    %4738 = vmatpush1.msra.mxu0 %v4699
    %4739 = vmatprep.subr.mxu0 %v4704
    %4740 = vmatpush1.msra.mxu0 %v4703
    %4741 = vmatprep.subr.mxu0 %v4708
    %4742 = vmatpush1.msra.mxu0 %v4707
    %4743 = vmatprep.subr.mxu0 0.0
    %4744 = vmatpush1.msra.mxu0 0.0
    %4745 = vmatprep.subr.mxu0 0.0
    %4746 = vmatpush1.msra.mxu0 0.0
    %4747 = vmatprep.subr.mxu0 0.0
    %4748 = vmatpush1.msra.mxu0 0.0
    %4749 = vmatprep.subr.mxu0 0.0
    %4750 = vmatpush1.msra.mxu0 0.0
    %4751 = vmatprep.subr.mxu0 0.0
    %4752 = vmatpush1.msra.mxu0 0.0
    %4753 = vmatprep.subr.mxu0 0.0
    %4754 = vmatpush1.msra.mxu0 0.0
    %4755 = vmatprep.subr.mxu0 0.0
    %4756 = vmatpush1.msra.mxu0 0.0
    %4757 = vmatprep.subr.mxu0 0.0
    %4758 = vmatpush1.msra.mxu0 0.0
    %4759 = vmatprep.subr.mxu0 0.0
    %4760 = vmatpush1.msra.mxu0 0.0
    %4761 = vmatprep.subr.mxu0 0.0
    %4762 = vmatpush1.msra.mxu0 0.0
    %4763 = vmatprep.subr.mxu0 0.0
    %4764 = vmatpush1.msra.mxu0 0.0
    %4765 = vmatprep.subr.mxu0 0.0
    %4766 = vmatpush1.msra.mxu0 0.0
    %4767 = vmatprep.subr.mxu0 0.0
    %4768 = vmatpush1.msra.mxu0 0.0
    %4769 = vmatprep.subr.mxu0 0.0
    %4770 = vmatpush1.msra.mxu0 0.0
    %4771 = vmatprep.subr.mxu0 0.0
    %4772 = vmatpush1.msra.mxu0 0.0
    %4773 = vmatprep.subr.mxu0 0.0
    %4774 = vmatpush1.msra.mxu0 0.0
    %4775 = vmatprep.mubr.f32.mxu0 0.0
    %4776 = vmatmul.mubr.f32.gmra.mrb[0].mxu0 %v4596
    %v4777 = vpop.f32.mrb[0].mxu0
    %v4778 = vadd.f32 0.0, %v4777
    %v4779 = vpop.f32.mrb[0].mxu0
    %v4780 = vadd.f32 0.0, %v4779
    %4781 = vdwg.mxu0
    %4782 = vmatprep.subr.mxu0 %v4650
    %4783 = vmatpush1.msra.mxu0 %v4649
    %4784 = vmatprep.subr.mxu0 %v4654
    %4785 = vmatpush1.msra.mxu0 %v4653
    %4786 = vmatprep.subr.mxu0 %v4658
    %4787 = vmatpush1.msra.mxu0 %v4657
    %4788 = vmatprep.subr.mxu0 %v4662
    %4789 = vmatpush1.msra.mxu0 %v4661
    %4790 = vmatprep.subr.mxu0 %v4666
    %4791 = vmatpush1.msra.mxu0 %v4665
    %4792 = vmatprep.subr.mxu0 %v4670
    %4793 = vmatpush1.msra.mxu0 %v4669
    %4794 = vmatprep.subr.mxu0 %v4674
    %4795 = vmatpush1.msra.mxu0 %v4673
    %4796 = vmatprep.subr.mxu0 %v4678
    %4797 = vmatpush1.msra.mxu0 %v4677
    %4798 = vmatprep.subr.mxu0 %v4682
    %4799 = vmatpush1.msra.mxu0 %v4681
    %4800 = vmatprep.subr.mxu0 %v4686
    %4801 = vmatpush1.msra.mxu0 %v4685
    %4802 = vmatprep.subr.mxu0 %v4690
    %4803 = vmatpush1.msra.mxu0 %v4689
    %4804 = vmatprep.subr.mxu0 %v4694
    %4805 = vmatpush1.msra.mxu0 %v4693
    %4806 = vmatprep.subr.mxu0 %v4698
    %4807 = vmatpush1.msra.mxu0 %v4697
    %4808 = vmatprep.subr.mxu0 %v4702
    %4809 = vmatpush1.msra.mxu0 %v4701
    %4810 = vmatprep.subr.mxu0 %v4706
    %4811 = vmatpush1.msra.mxu0 %v4705
    %4812 = vmatprep.subr.mxu0 %v4710
    %4813 = vmatpush1.msra.mxu0 %v4709
    %4814 = vmatprep.subr.mxu0 0.0
    %4815 = vmatpush1.msra.mxu0 0.0
    %4816 = vmatprep.subr.mxu0 0.0
    %4817 = vmatpush1.msra.mxu0 0.0
    %4818 = vmatprep.subr.mxu0 0.0
    %4819 = vmatpush1.msra.mxu0 0.0
    %4820 = vmatprep.subr.mxu0 0.0
    %4821 = vmatpush1.msra.mxu0 0.0
    %4822 = vmatprep.subr.mxu0 0.0
    %4823 = vmatpush1.msra.mxu0 0.0
    %4824 = vmatprep.subr.mxu0 0.0
    %4825 = vmatpush1.msra.mxu0 0.0
    %4826 = vmatprep.subr.mxu0 0.0
    %4827 = vmatpush1.msra.mxu0 0.0
    %4828 = vmatprep.subr.mxu0 0.0
    %4829 = vmatpush1.msra.mxu0 0.0
    %4830 = vmatprep.subr.mxu0 0.0
    %4831 = vmatpush1.msra.mxu0 0.0
    %4832 = vmatprep.subr.mxu0 0.0
    %4833 = vmatpush1.msra.mxu0 0.0
    %4834 = vmatprep.subr.mxu0 0.0
    %4835 = vmatpush1.msra.mxu0 0.0
    %4836 = vmatprep.subr.mxu0 0.0
    %4837 = vmatpush1.msra.mxu0 0.0
    %4838 = vmatprep.subr.mxu0 0.0
    %4839 = vmatpush1.msra.mxu0 0.0
    %4840 = vmatprep.subr.mxu0 0.0
    %4841 = vmatpush1.msra.mxu0 0.0
    %4842 = vmatprep.subr.mxu0 0.0
    %4843 = vmatpush1.msra.mxu0 0.0
    %4844 = vmatprep.subr.mxu0 0.0
    %4845 = vmatpush1.msra.mxu0 0.0
    %4846 = vmatprep.mubr.f32.mxu0 0.0
    %4847 = vmatmul.mubr.f32.gmra.mrb[0].mxu0 %v4596
    %v4848 = vpop.f32.mrb[0].mxu0
    %v4849 = vadd.f32 0.0, %v4848
    %v4850 = vpop.f32.mrb[0].mxu0
    %v4851 = vadd.f32 0.0, %v4850
    %4852 = vdwg.mxu0
    %v4853 = vadd.f32 %v4643, %v4778
    %v4854 = vadd.f32 %v4644, %v4780
    %v4855 = vadd.f32 %v4645, %v4849
    %v4856 = vadd.f32 %v4646, %v4851
    %v4857 = vxor.u32 %v4853, 2147483648
    %v4858 = vmul.f32 %v4857, 1.442695
    %v4859 = vpow.pop %v4858
    %v4860 = vadd.f32 %v4859, 1.0
    %v4861 = vrcp.pop %v4860
    %v4862 = vmul.f32 1.0, %v4861
    %v4863 = vxor.u32 %v4854, 2147483648
    %v4864 = vmul.f32 %v4863, 1.442695
    %v4865 = vpow.pop %v4864
    %v4866 = vadd.f32 %v4865, 1.0
    %v4867 = vrcp.pop %v4866
    %v4868 = vmul.f32 1.0, %v4867
    %v4869 = vtanh.pop %v4855
    %v4870 = vxor.u32 %v4856, 2147483648
    %v4871 = vmul.f32 %v4870, 1.442695
    %v4872 = vpow.pop %v4871
    %v4873 = vadd.f32 %v4872, 1.0
    %v4874 = vrcp.pop %v4873
    %v4875 = vmul.f32 1.0, %v4874
    %v4876 = vmul.f32 %v4868, %v4594
    %v4877 = vmul.f32 %v4862, %v4869
    %v4878 = vadd.f32 %v4876, %v4877
    %v4879 = vtanh.pop %v4878
    %v4880 = vmul.f32 %v4875, %v4879
    %4881 = vst [vmem:[#allocation2 + $0x6] sm:$0x1] %v4880
    %4882 = vst [vmem:[#allocation3 + $0x1] sm:$0x1] %v4880
    %v4883 = vld [vmem:[%s380] ss:$8 sm:$0xf]
    %v4884 = vld [vmem:[#allocation4] ss:$8 sm:$0xf]
    %v4886 = vlaneseq
    %v4887 = vshrl.u32 %v4886, 7
    %v4888 = vsub.s32 0, %v4887
    %v4889 = vrot.slane %v4883, %v4888
    %v4890 = vlaneseq
    %v4891 = vshrl.u32 %v4890, 7
    %v4892 = vsub.s32 1, %v4891
    %v4893 = vrot.slane %v4883, %v4892
    %v4894 = vlaneseq
    %v4895 = vshrl.u32 %v4894, 7
    %v4896 = vsub.s32 2, %v4895
    %v4897 = vrot.slane %v4883, %v4896
    %v4898 = vlaneseq
    %v4899 = vshrl.u32 %v4898, 7
    %v4900 = vsub.s32 3, %v4899
    %v4901 = vrot.slane %v4883, %v4900
    %v4907 = vlaneseq
    %v4908 = vshrl.u32 %v4907, 7
    %v4909 = vsub.s32 0, %v4908
    %v4910 = vrot.slane %v4884, %v4909
    %v4911 = vlaneseq
    %v4912 = vshrl.u32 %v4911, 7
    %v4913 = vsub.s32 1, %v4912
    %v4914 = vrot.slane %v4884, %v4913
    %v4915 = vlaneseq
    %v4916 = vshrl.u32 %v4915, 7
    %v4917 = vsub.s32 2, %v4916
    %v4918 = vrot.slane %v4884, %v4917
    %v4919 = vlaneseq
    %v4920 = vshrl.u32 %v4919, 7
    %v4921 = vsub.s32 3, %v4920
    %v4922 = vrot.slane %v4884, %v4921
    %v4927 = vsel %vm184, %v4889, %v4910
    %v4928 = vsel %vm185, %v4893, %v4914
    %v4929 = vsel %vm186, %v4897, %v4918
    %v4930 = vsel %vm187, %v4901, %v4922
    %v4931 = vld [vmem:[#allocation14] sm:$0xff]
    %v4932 = vld [vmem:[#allocation14 + $0x8] sm:$0xff]
    %v4933 = vld [vmem:[#allocation14 + $0x10] sm:$0xff]
    %v4934 = vld [vmem:[#allocation14 + $0x18] sm:$0xff]
    %v4935 = vld [vmem:[#allocation14 + $0x20] sm:$0xff]
    %v4936 = vld [vmem:[#allocation14 + $0x28] sm:$0xff]
    %v4937 = vld [vmem:[#allocation14 + $0x30] sm:$0xff]
    %v4938 = vld [vmem:[#allocation14 + $0x38] sm:$0xff]
    %v4939 = vld [vmem:[#allocation14 + $0x40] sm:$0xff]
    %v4940 = vld [vmem:[#allocation14 + $0x48] sm:$0xff]
    %v4941 = vld [vmem:[#allocation14 + $0x50] sm:$0xff]
    %v4942 = vld [vmem:[#allocation14 + $0x58] sm:$0xff]
    %v4943 = vld [vmem:[#allocation14 + $0x60] sm:$0xff]
    %v4944 = vld [vmem:[#allocation14 + $0x68] sm:$0xff]
    %v4945 = vld [vmem:[#allocation14 + $0x70] sm:$0xff]
    %v4946 = vld [vmem:[#allocation14 + $0x78] sm:$0xff]
    %v4947 = vld [vmem:[#allocation14 + $0x80] sm:$0xff]
    %v4948 = vld [vmem:[#allocation14 + $0x88] sm:$0xff]
    %v4949 = vld [vmem:[#allocation14 + $0x90] sm:$0xff]
    %v4950 = vld [vmem:[#allocation14 + $0x98] sm:$0xff]
    %v4951 = vld [vmem:[#allocation14 + $0xa0] sm:$0xff]
    %v4952 = vld [vmem:[#allocation14 + $0xa8] sm:$0xff]
    %v4953 = vld [vmem:[#allocation14 + $0xb0] sm:$0xff]
    %v4954 = vld [vmem:[#allocation14 + $0xb8] sm:$0xff]
    %v4955 = vld [vmem:[#allocation14 + $0xc0] sm:$0xff]
    %v4956 = vld [vmem:[#allocation14 + $0xc8] sm:$0xff]
    %v4957 = vld [vmem:[#allocation14 + $0xd0] sm:$0xff]
    %v4958 = vld [vmem:[#allocation14 + $0xd8] sm:$0xff]
    %v4959 = vld [vmem:[#allocation14 + $0xe0] sm:$0xff]
    %v4960 = vld [vmem:[#allocation14 + $0xe8] sm:$0xff]
    %v4961 = vld [vmem:[#allocation14 + $0xf0] sm:$0xff]
    %v4962 = vld [vmem:[#allocation14 + $0xf8] sm:$0xff]
    %v4963 = vld [vmem:[#allocation14 + $0x100] sm:$0xff]
    %v4964 = vld [vmem:[#allocation14 + $0x108] sm:$0xff]
    %v4965 = vld [vmem:[#allocation14 + $0x110] sm:$0xff]
    %v4966 = vld [vmem:[#allocation14 + $0x118] sm:$0xff]
    %v4967 = vld [vmem:[#allocation14 + $0x120] sm:$0xff]
    %v4968 = vld [vmem:[#allocation14 + $0x128] sm:$0xff]
    %v4969 = vld [vmem:[#allocation14 + $0x130] sm:$0xff]
    %v4970 = vld [vmem:[#allocation14 + $0x138] sm:$0xff]
    %v4971 = vld [vmem:[#allocation14 + $0x140] sm:$0xff]
    %v4972 = vld [vmem:[#allocation14 + $0x148] sm:$0xff]
    %v4973 = vld [vmem:[#allocation14 + $0x150] sm:$0xff]
    %v4974 = vld [vmem:[#allocation14 + $0x158] sm:$0xff]
    %v4975 = vld [vmem:[#allocation14 + $0x160] sm:$0xff]
    %v4976 = vld [vmem:[#allocation14 + $0x168] sm:$0xff]
    %v4977 = vld [vmem:[#allocation14 + $0x170] sm:$0xff]
    %v4978 = vld [vmem:[#allocation14 + $0x178] sm:$0xff]
    %v4979 = vld [vmem:[#allocation14 + $0x180] sm:$0xff]
    %v4980 = vld [vmem:[#allocation14 + $0x188] sm:$0xff]
    %v4981 = vld [vmem:[#allocation14 + $0x190] sm:$0xff]
    %v4982 = vld [vmem:[#allocation14 + $0x198] sm:$0xff]
    %v4983 = vld [vmem:[#allocation14 + $0x1a0] sm:$0xff]
    %v4984 = vld [vmem:[#allocation14 + $0x1a8] sm:$0xff]
    %v4985 = vld [vmem:[#allocation14 + $0x1b0] sm:$0xff]
    %v4986 = vld [vmem:[#allocation14 + $0x1b8] sm:$0xff]
    %v4987 = vld [vmem:[#allocation14 + $0x1c0] sm:$0xff]
    %v4988 = vld [vmem:[#allocation14 + $0x1c8] sm:$0xff]
    %v4989 = vld [vmem:[#allocation14 + $0x1d0] sm:$0xff]
    %v4990 = vld [vmem:[#allocation14 + $0x1d8] sm:$0xff]
    %v4991 = vld [vmem:[#allocation14 + $0x1e0] sm:$0xff]
    %v4992 = vld [vmem:[#allocation14 + $0x1e8] sm:$0xff]
    %v4993 = vld [vmem:[#allocation14 + $0x1f0] sm:$0xff]
    %v4994 = vld [vmem:[#allocation14 + $0x1f8] sm:$0xff]
    %4995 = vmatprep.subr.mxu0 %v4932
    %4996 = vmatpush1.msra.mxu0 %v4931
    %4997 = vmatprep.subr.mxu0 %v4936
    %4998 = vmatpush1.msra.mxu0 %v4935
    %4999 = vmatprep.subr.mxu0 %v4940
    %5000 = vmatpush1.msra.mxu0 %v4939
    %5001 = vmatprep.subr.mxu0 %v4944
    %5002 = vmatpush1.msra.mxu0 %v4943
    %5003 = vmatprep.subr.mxu0 %v4948
    %5004 = vmatpush1.msra.mxu0 %v4947
    %5005 = vmatprep.subr.mxu0 %v4952
    %5006 = vmatpush1.msra.mxu0 %v4951
    %5007 = vmatprep.subr.mxu0 %v4956
    %5008 = vmatpush1.msra.mxu0 %v4955
    %5009 = vmatprep.subr.mxu0 %v4960
    %5010 = vmatpush1.msra.mxu0 %v4959
    %5011 = vmatprep.subr.mxu0 %v4964
    %5012 = vmatpush1.msra.mxu0 %v4963
    %5013 = vmatprep.subr.mxu0 %v4968
    %5014 = vmatpush1.msra.mxu0 %v4967
    %5015 = vmatprep.subr.mxu0 %v4972
    %5016 = vmatpush1.msra.mxu0 %v4971
    %5017 = vmatprep.subr.mxu0 %v4976
    %5018 = vmatpush1.msra.mxu0 %v4975
    %5019 = vmatprep.subr.mxu0 %v4980
    %5020 = vmatpush1.msra.mxu0 %v4979
    %5021 = vmatprep.subr.mxu0 %v4984
    %5022 = vmatpush1.msra.mxu0 %v4983
    %5023 = vmatprep.subr.mxu0 %v4988
    %5024 = vmatpush1.msra.mxu0 %v4987
    %5025 = vmatprep.subr.mxu0 %v4992
    %5026 = vmatpush1.msra.mxu0 %v4991
    %5027 = vmatprep.subr.mxu0 0.0
    %5028 = vmatpush1.msra.mxu0 0.0
    %5029 = vmatprep.subr.mxu0 0.0
    %5030 = vmatpush1.msra.mxu0 0.0
    %5031 = vmatprep.subr.mxu0 0.0
    %5032 = vmatpush1.msra.mxu0 0.0
    %5033 = vmatprep.subr.mxu0 0.0
    %5034 = vmatpush1.msra.mxu0 0.0
    %5035 = vmatprep.subr.mxu0 0.0
    %5036 = vmatpush1.msra.mxu0 0.0
    %5037 = vmatprep.subr.mxu0 0.0
    %5038 = vmatpush1.msra.mxu0 0.0
    %5039 = vmatprep.subr.mxu0 0.0
    %5040 = vmatpush1.msra.mxu0 0.0
    %5041 = vmatprep.subr.mxu0 0.0
    %5042 = vmatpush1.msra.mxu0 0.0
    %5043 = vmatprep.subr.mxu0 0.0
    %5044 = vmatpush1.msra.mxu0 0.0
    %5045 = vmatprep.subr.mxu0 0.0
    %5046 = vmatpush1.msra.mxu0 0.0
    %5047 = vmatprep.subr.mxu0 0.0
    %5048 = vmatpush1.msra.mxu0 0.0
    %5049 = vmatprep.subr.mxu0 0.0
    %5050 = vmatpush1.msra.mxu0 0.0
    %5051 = vmatprep.subr.mxu0 0.0
    %5052 = vmatpush1.msra.mxu0 0.0
    %5053 = vmatprep.subr.mxu0 0.0
    %5054 = vmatpush1.msra.mxu0 0.0
    %5055 = vmatprep.subr.mxu0 0.0
    %5056 = vmatpush1.msra.mxu0 0.0
    %5057 = vmatprep.subr.mxu0 0.0
    %5058 = vmatpush1.msra.mxu0 0.0
    %5059 = vmatprep.mubr.f32.mxu0 0.0
    %5060 = vmatmul.mubr.f32.gmra.mrb[0].mxu0 %v4880
    %v5061 = vpop.f32.mrb[0].mxu0
    %v5062 = vadd.f32 0.0, %v5061
    %v5063 = vpop.f32.mrb[0].mxu0
    %v5064 = vadd.f32 0.0, %v5063
    %5065 = vdwg.mxu0
    %5066 = vmatprep.subr.mxu0 %v4934
    %5067 = vmatpush1.msra.mxu0 %v4933
    %5068 = vmatprep.subr.mxu0 %v4938
    %5069 = vmatpush1.msra.mxu0 %v4937
    %5070 = vmatprep.subr.mxu0 %v4942
    %5071 = vmatpush1.msra.mxu0 %v4941
    %5072 = vmatprep.subr.mxu0 %v4946
    %5073 = vmatpush1.msra.mxu0 %v4945
    %5074 = vmatprep.subr.mxu0 %v4950
    %5075 = vmatpush1.msra.mxu0 %v4949
    %5076 = vmatprep.subr.mxu0 %v4954
    %5077 = vmatpush1.msra.mxu0 %v4953
    %5078 = vmatprep.subr.mxu0 %v4958
    %5079 = vmatpush1.msra.mxu0 %v4957
    %5080 = vmatprep.subr.mxu0 %v4962
    %5081 = vmatpush1.msra.mxu0 %v4961
    %5082 = vmatprep.subr.mxu0 %v4966
    %5083 = vmatpush1.msra.mxu0 %v4965
    %5084 = vmatprep.subr.mxu0 %v4970
    %5085 = vmatpush1.msra.mxu0 %v4969
    %5086 = vmatprep.subr.mxu0 %v4974
    %5087 = vmatpush1.msra.mxu0 %v4973
    %5088 = vmatprep.subr.mxu0 %v4978
    %5089 = vmatpush1.msra.mxu0 %v4977
    %5090 = vmatprep.subr.mxu0 %v4982
    %5091 = vmatpush1.msra.mxu0 %v4981
    %5092 = vmatprep.subr.mxu0 %v4986
    %5093 = vmatpush1.msra.mxu0 %v4985
    %5094 = vmatprep.subr.mxu0 %v4990
    %5095 = vmatpush1.msra.mxu0 %v4989
    %5096 = vmatprep.subr.mxu0 %v4994
    %5097 = vmatpush1.msra.mxu0 %v4993
    %5098 = vmatprep.subr.mxu0 0.0
    %5099 = vmatpush1.msra.mxu0 0.0
    %5100 = vmatprep.subr.mxu0 0.0
    %5101 = vmatpush1.msra.mxu0 0.0
    %5102 = vmatprep.subr.mxu0 0.0
    %5103 = vmatpush1.msra.mxu0 0.0
    %5104 = vmatprep.subr.mxu0 0.0
    %5105 = vmatpush1.msra.mxu0 0.0
    %5106 = vmatprep.subr.mxu0 0.0
    %5107 = vmatpush1.msra.mxu0 0.0
    %5108 = vmatprep.subr.mxu0 0.0
    %5109 = vmatpush1.msra.mxu0 0.0
    %5110 = vmatprep.subr.mxu0 0.0
    %5111 = vmatpush1.msra.mxu0 0.0
    %5112 = vmatprep.subr.mxu0 0.0
    %5113 = vmatpush1.msra.mxu0 0.0
    %5114 = vmatprep.subr.mxu0 0.0
    %5115 = vmatpush1.msra.mxu0 0.0
    %5116 = vmatprep.subr.mxu0 0.0
    %5117 = vmatpush1.msra.mxu0 0.0
    %5118 = vmatprep.subr.mxu0 0.0
    %5119 = vmatpush1.msra.mxu0 0.0
    %5120 = vmatprep.subr.mxu0 0.0
    %5121 = vmatpush1.msra.mxu0 0.0
    %5122 = vmatprep.subr.mxu0 0.0
    %5123 = vmatpush1.msra.mxu0 0.0
    %5124 = vmatprep.subr.mxu0 0.0
    %5125 = vmatpush1.msra.mxu0 0.0
    %5126 = vmatprep.subr.mxu0 0.0
    %5127 = vmatpush1.msra.mxu0 0.0
    %5128 = vmatprep.subr.mxu0 0.0
    %5129 = vmatpush1.msra.mxu0 0.0
    %5130 = vmatprep.mubr.f32.mxu0 0.0
    %5131 = vmatmul.mubr.f32.gmra.mrb[0].mxu0 %v4880
    %v5132 = vpop.f32.mrb[0].mxu0
    %v5133 = vadd.f32 0.0, %v5132
    %v5134 = vpop.f32.mrb[0].mxu0
    %v5135 = vadd.f32 0.0, %v5134
    %5136 = vdwg.mxu0
    %v5137 = vadd.f32 %v4927, %v5062
    %v5138 = vadd.f32 %v4928, %v5064
    %v5139 = vadd.f32 %v4929, %v5133
    %v5140 = vadd.f32 %v4930, %v5135
    %v5141 = vxor.u32 %v5137, 2147483648
    %v5142 = vmul.f32 %v5141, 1.442695
    %v5143 = vpow.pop %v5142
    %v5144 = vadd.f32 %v5143, 1.0
    %v5145 = vrcp.pop %v5144
    %v5146 = vmul.f32 1.0, %v5145
    %v5147 = vxor.u32 %v5138, 2147483648
    %v5148 = vmul.f32 %v5147, 1.442695
    %v5149 = vpow.pop %v5148
    %v5150 = vadd.f32 %v5149, 1.0
    %v5151 = vrcp.pop %v5150
    %v5152 = vmul.f32 1.0, %v5151
    %v5153 = vtanh.pop %v5139
    %v5154 = vxor.u32 %v5140, 2147483648
    %v5155 = vmul.f32 %v5154, 1.442695
    %v5156 = vpow.pop %v5155
    %v5157 = vadd.f32 %v5156, 1.0
    %v5158 = vrcp.pop %v5157
    %v5159 = vmul.f32 1.0, %v5158
    %v5160 = vmul.f32 %v5152, %v4878
    %v5161 = vmul.f32 %v5146, %v5153
    %v5162 = vadd.f32 %v5160, %v5161
    %v5163 = vtanh.pop %v5162
    %v5164 = vmul.f32 %v5159, %v5163
    %5165 = vst [vmem:[#allocation2 + $0x7] sm:$0x1] %v5164
    %5166 = vst [vmem:[#allocation3] sm:$0x1] %v5164
    %v5167 = vld [vmem:[#allocation2] sm:$0xff]
    %v5168 = vld [vmem:[#allocation3] sm:$0xff]
    %v5169 = vsel %vm188, %v5167, %v5168
    %5170 = vst [vmem:[#allocation2] sm:$0xff] %v5169
    %v5171 = vld [vmem:[#allocation2] sm:$0xff]
    %v5172 = vld [vmem:[#allocation15] sm:$0xff]
    %v5173 = vld [vmem:[#allocation15 + $0x8] sm:$0xff]
    %v5174 = vld [vmem:[#allocation15 + $0x10] sm:$0xff]
    %v5175 = vld [vmem:[#allocation15 + $0x18] sm:$0xff]
    %v5176 = vld [vmem:[#allocation15 + $0x20] sm:$0xff]
    %v5177 = vld [vmem:[#allocation15 + $0x28] sm:$0xff]
    %v5178 = vld [vmem:[#allocation15 + $0x30] sm:$0xff]
    %v5179 = vld [vmem:[#allocation15 + $0x38] sm:$0xff]
    %v5180 = vld [vmem:[#allocation15 + $0x40] sm:$0xff]
    %v5181 = vld [vmem:[#allocation15 + $0x48] sm:$0xff]
    %v5182 = vld [vmem:[#allocation15 + $0x50] sm:$0xff]
    %v5183 = vld [vmem:[#allocation15 + $0x58] sm:$0xff]
    %v5184 = vld [vmem:[#allocation15 + $0x60] sm:$0xff]
    %v5185 = vld [vmem:[#allocation15 + $0x68] sm:$0xff]
    %v5186 = vld [vmem:[#allocation15 + $0x70] sm:$0xff]
    %v5187 = vld [vmem:[#allocation15 + $0x78] sm:$0xff]
    %v5188 = vld [vmem:[%s8] sm:$0x1]
    %v5190 = vlaneseq
    %v5191 = vshrl.u32 %v5190, 7
    %v5192 = vsub.s32 0, %v5191
    %v5193 = vrot.slane %v5188, %v5192
    %5195 = vmatprep.subr.mxu0 0.0
    %5196 = vmatpush1.msra.mxu0 %v5172
    %5197 = vmatprep.subr.mxu0 0.0
    %5198 = vmatpush1.msra.mxu0 %v5173
    %5199 = vmatprep.subr.mxu0 0.0
    %5200 = vmatpush1.msra.mxu0 %v5174
    %5201 = vmatprep.subr.mxu0 0.0
    %5202 = vmatpush1.msra.mxu0 %v5175
    %5203 = vmatprep.subr.mxu0 0.0
    %5204 = vmatpush1.msra.mxu0 %v5176
    %5205 = vmatprep.subr.mxu0 0.0
    %5206 = vmatpush1.msra.mxu0 %v5177
    %5207 = vmatprep.subr.mxu0 0.0
    %5208 = vmatpush1.msra.mxu0 %v5178
    %5209 = vmatprep.subr.mxu0 0.0
    %5210 = vmatpush1.msra.mxu0 %v5179
    %5211 = vmatprep.subr.mxu0 0.0
    %5212 = vmatpush1.msra.mxu0 %v5180
    %5213 = vmatprep.subr.mxu0 0.0
    %5214 = vmatpush1.msra.mxu0 %v5181
    %5215 = vmatprep.subr.mxu0 0.0
    %5216 = vmatpush1.msra.mxu0 %v5182
    %5217 = vmatprep.subr.mxu0 0.0
    %5218 = vmatpush1.msra.mxu0 %v5183
    %5219 = vmatprep.subr.mxu0 0.0
    %5220 = vmatpush1.msra.mxu0 %v5184
    %5221 = vmatprep.subr.mxu0 0.0
    %5222 = vmatpush1.msra.mxu0 %v5185
    %5223 = vmatprep.subr.mxu0 0.0
    %5224 = vmatpush1.msra.mxu0 %v5186
    %5225 = vmatprep.subr.mxu0 0.0
    %5226 = vmatpush1.msra.mxu0 %v5187
    %5227 = vmatprep.subr.mxu0 0.0
    %5228 = vmatpush1.msra.mxu0 0.0
    %5229 = vmatprep.subr.mxu0 0.0
    %5230 = vmatpush1.msra.mxu0 0.0
    %5231 = vmatprep.subr.mxu0 0.0
    %5232 = vmatpush1.msra.mxu0 0.0
    %5233 = vmatprep.subr.mxu0 0.0
    %5234 = vmatpush1.msra.mxu0 0.0
    %5235 = vmatprep.subr.mxu0 0.0
    %5236 = vmatpush1.msra.mxu0 0.0
    %5237 = vmatprep.subr.mxu0 0.0
    %5238 = vmatpush1.msra.mxu0 0.0
    %5239 = vmatprep.subr.mxu0 0.0
    %5240 = vmatpush1.msra.mxu0 0.0
    %5241 = vmatprep.subr.mxu0 0.0
    %5242 = vmatpush1.msra.mxu0 0.0
    %5243 = vmatprep.subr.mxu0 0.0
    %5244 = vmatpush1.msra.mxu0 0.0
    %5245 = vmatprep.subr.mxu0 0.0
    %5246 = vmatpush1.msra.mxu0 0.0
    %5247 = vmatprep.subr.mxu0 0.0
    %5248 = vmatpush1.msra.mxu0 0.0
    %5249 = vmatprep.subr.mxu0 0.0
    %5250 = vmatpush1.msra.mxu0 0.0
    %5251 = vmatprep.subr.mxu0 0.0
    %5252 = vmatpush1.msra.mxu0 0.0
    %5253 = vmatprep.subr.mxu0 0.0
    %5254 = vmatpush1.msra.mxu0 0.0
    %5255 = vmatprep.subr.mxu0 0.0
    %5256 = vmatpush1.msra.mxu0 0.0
    %5257 = vmatprep.subr.mxu0 0.0
    %5258 = vmatpush1.msra.mxu0 0.0
    %5259 = vmatprep.mubr.f32.mxu0 0.0
    %5260 = vmatmul.mubr.f32.gmra.mrb[0].mxu0 %v5171
    %v5261 = vpop.f32.mrb[0].mxu0
    %v5262 = vadd.f32 %v5193, %v5261
    %v5263 = vpop.f32.mrb[0].mxu0
    %5264 = vdwg.mxu0
    %5265 = vst [vmem:[#allocation5] sm:$0xff] %v5262
    %v5266 = vlaneseq
    %v5267 = vshrl.u32 %v5266, 7
    %v5268 = vadd.s32 %v5267, 8
    %v5269 = vadd.s32 %v5267, 16
    %v5270 = vadd.s32 %v5267, 24
    %v5271 = vadd.s32 %v5267, 32
    %v5272 = vadd.s32 %v5267, 40
    %v5273 = vadd.s32 %v5267, 48
    %v5274 = vadd.s32 %v5267, 56
    %v5275 = vadd.s32 %v5267, 64
    %v5276 = vadd.s32 %v5267, 72
    %v5277 = vadd.s32 %v5267, 80
    %v5278 = vadd.s32 %v5267, 88
    %v5279 = vadd.s32 %v5267, 96
    %v5280 = vadd.s32 %v5267, 104
    %v5281 = vadd.s32 %v5267, 112
    %v5282 = vadd.s32 %v5267, 120
    %vm5283 = vcmp.eq.s32.totalorder %v5267, 3
    %vm5284 = vcmp.eq.s32.totalorder %v5268, 3
    %vm5285 = vcmp.eq.s32.totalorder %v5269, 3
    %vm5286 = vcmp.eq.s32.totalorder %v5270, 3
    %vm5287 = vcmp.eq.s32.totalorder %v5271, 3
    %vm5288 = vcmp.eq.s32.totalorder %v5272, 3
    %vm5289 = vcmp.eq.s32.totalorder %v5273, 3
    %vm5290 = vcmp.eq.s32.totalorder %v5274, 3
    %vm5291 = vcmp.eq.s32.totalorder %v5275, 3
    %vm5292 = vcmp.eq.s32.totalorder %v5276, 3
    %vm5293 = vcmp.eq.s32.totalorder %v5277, 3
    %vm5294 = vcmp.eq.s32.totalorder %v5278, 3
    %vm5295 = vcmp.eq.s32.totalorder %v5279, 3
    %vm5296 = vcmp.eq.s32.totalorder %v5280, 3
    %vm5297 = vcmp.eq.s32.totalorder %v5281, 3
    %vm5298 = vcmp.eq.s32.totalorder %v5282, 3
    %v5299 = vsel %vm5283, 0.0, -10000.0
    %v5300 = vsel %vm5284, 0.0, -10000.0
    %v5301 = vsel %vm5285, 0.0, -10000.0
    %v5302 = vsel %vm5286, 0.0, -10000.0
    %v5303 = vsel %vm5287, 0.0, -10000.0
    %v5304 = vsel %vm5288, 0.0, -10000.0
    %v5305 = vsel %vm5289, 0.0, -10000.0
    %v5306 = vsel %vm5290, 0.0, -10000.0
    %v5307 = vsel %vm5291, 0.0, -10000.0
    %v5308 = vsel %vm5292, 0.0, -10000.0
    %v5309 = vsel %vm5293, 0.0, -10000.0
    %v5310 = vsel %vm5294, 0.0, -10000.0
    %v5311 = vsel %vm5295, 0.0, -10000.0
    %v5312 = vsel %vm5296, 0.0, -10000.0
    %v5313 = vsel %vm5297, 0.0, -10000.0
    %v5314 = vsel %vm5298, 0.0, -10000.0
    %v5315 = vld [vmem:[#allocation17] sm:$0xff]
    %v5316 = vld [vmem:[#allocation17 + $0x8] sm:$0xff]
    %v5317 = vld [vmem:[#allocation17 + $0x10] sm:$0xff]
    %v5318 = vld [vmem:[#allocation17 + $0x18] sm:$0xff]
    %v5319 = vld [vmem:[#allocation17 + $0x20] sm:$0xff]
    %v5320 = vld [vmem:[#allocation17 + $0x28] sm:$0xff]
    %v5321 = vld [vmem:[#allocation17 + $0x30] sm:$0xff]
    %v5322 = vld [vmem:[#allocation17 + $0x38] sm:$0xff]
    %v5323 = vld [vmem:[#allocation17 + $0x40] sm:$0xff]
    %v5324 = vld [vmem:[#allocation17 + $0x48] sm:$0xff]
    %v5325 = vld [vmem:[#allocation17 + $0x50] sm:$0xff]
    %v5326 = vld [vmem:[#allocation17 + $0x58] sm:$0xff]
    %v5327 = vld [vmem:[#allocation17 + $0x60] sm:$0xff]
    %v5328 = vld [vmem:[#allocation17 + $0x68] sm:$0xff]
    %v5329 = vld [vmem:[#allocation17 + $0x70] sm:$0xff]
    %v5330 = vld [vmem:[#allocation17 + $0x78] sm:$0xff]
    %v5331 = vcvt.s32.f32 %v5267
    %v5332 = vcvt.s32.f32 %v5268
    %v5333 = vcvt.s32.f32 %v5269
    %v5334 = vcvt.s32.f32 %v5270
    %v5335 = vcvt.s32.f32 %v5271
    %v5336 = vcvt.s32.f32 %v5272
    %v5337 = vcvt.s32.f32 %v5273
    %v5338 = vcvt.s32.f32 %v5274
    %v5339 = vcvt.s32.f32 %v5275
    %v5340 = vcvt.s32.f32 %v5276
    %v5341 = vcvt.s32.f32 %v5277
    %v5342 = vcvt.s32.f32 %v5278
    %v5343 = vcvt.s32.f32 %v5279
    %v5344 = vcvt.s32.f32 %v5280
    %v5345 = vcvt.s32.f32 %v5281
    %v5346 = vcvt.s32.f32 %v5282
    %v5347 = vadd.f32 %v5315, %v5299
    %v5348 = vadd.f32 %v5316, %v5300
    %v5349 = vadd.f32 %v5317, %v5301
    %v5350 = vadd.f32 %v5318, %v5302
    %v5351 = vadd.f32 %v5319, %v5303
    %v5352 = vadd.f32 %v5320, %v5304
    %v5353 = vadd.f32 %v5321, %v5305
    %v5354 = vadd.f32 %v5322, %v5306
    %v5355 = vadd.f32 %v5323, %v5307
    %v5356 = vadd.f32 %v5324, %v5308
    %v5357 = vadd.f32 %v5325, %v5309
    %v5358 = vadd.f32 %v5326, %v5310
    %v5359 = vadd.f32 %v5327, %v5311
    %v5360 = vadd.f32 %v5328, %v5312
    %v5361 = vadd.f32 %v5329, %v5313
    %v5362 = vadd.f32 %v5330, %v5314
    %v5363 = vmax.f32 %v5347, %v5351
    %v5364 = vmax.f32 %v5348, %v5352
    %v5365 = vmax.f32 %v5349, %v5353
    %v5366 = vmax.f32 %v5350, %v5354
    %v5367 = vmax.f32 %v5363, %v5355
    %v5368 = vmax.f32 %v5364, %v5356
    %v5369 = vmax.f32 %v5365, %v5357
    %v5370 = vmax.f32 %v5366, %v5358
    %v5371 = vmax.f32 %v5367, %v5359
    %v5372 = vmax.f32 %v5368, %v5360
    %v5373 = vmax.f32 %v5369, %v5361
    %v5374 = vmax.f32 %v5370, %v5362
    %v5375 = vmax.f32 %v5371, %v5372
    %v5376 = vmax.f32 %v5373, %v5374
    %v5377 = vmax.f32 %v5375, %v5376
    %v5378 = vrot.slane %v5377, 4
    %v5379 = vmax.f32 %v5377, %v5378
    %v5380 = vrot.slane %v5379, 2
    %v5381 = vmax.f32 %v5379, %v5380
    %v5382 = vrot.slane %v5381, 1
    %v5383 = vmax.f32 %v5381, %v5382
    %vm5384 = vcmp.eq.f32.partialorder %v5347, %v5383
    %vm5385 = vcmp.eq.f32.partialorder %v5348, %v5383
    %vm5386 = vcmp.eq.f32.partialorder %v5349, %v5383
    %vm5387 = vcmp.eq.f32.partialorder %v5350, %v5383
    %vm5388 = vcmp.eq.f32.partialorder %v5351, %v5383
    %vm5389 = vcmp.eq.f32.partialorder %v5352, %v5383
    %vm5390 = vcmp.eq.f32.partialorder %v5353, %v5383
    %vm5391 = vcmp.eq.f32.partialorder %v5354, %v5383
    %vm5392 = vcmp.eq.f32.partialorder %v5355, %v5383
    %vm5393 = vcmp.eq.f32.partialorder %v5356, %v5383
    %vm5394 = vcmp.eq.f32.partialorder %v5357, %v5383
    %vm5395 = vcmp.eq.f32.partialorder %v5358, %v5383
    %vm5396 = vcmp.eq.f32.partialorder %v5359, %v5383
    %vm5397 = vcmp.eq.f32.partialorder %v5360, %v5383
    %vm5398 = vcmp.eq.f32.partialorder %v5361, %v5383
    %vm5399 = vcmp.eq.f32.partialorder %v5362, %v5383
    %v5400 = vsel %vm5384, %v5331, 128.0
    %v5401 = vsel %vm5385, %v5332, 128.0
    %v5402 = vsel %vm5386, %v5333, 128.0
    %v5403 = vsel %vm5387, %v5334, 128.0
    %v5404 = vsel %vm5388, %v5335, 128.0
    %v5405 = vsel %vm5389, %v5336, 128.0
    %v5406 = vsel %vm5390, %v5337, 128.0
    %v5407 = vsel %vm5391, %v5338, 128.0
    %v5408 = vsel %vm5392, %v5339, 128.0
    %v5409 = vsel %vm5393, %v5340, 128.0
    %v5410 = vsel %vm5394, %v5341, 128.0
    %v5411 = vsel %vm5395, %v5342, 128.0
    %v5412 = vsel %vm5396, %v5343, 128.0
    %v5413 = vsel %vm5397, %v5344, 128.0
    %v5414 = vsel %vm5398, %v5345, 128.0
    %v5415 = vsel %vm5399, %v5346, 128.0
    %v5416 = vmin.f32 %v5400, %v5404
    %v5417 = vmin.f32 %v5401, %v5405
    %v5418 = vmin.f32 %v5402, %v5406
    %v5419 = vmin.f32 %v5403, %v5407
    %v5420 = vmin.f32 %v5416, %v5408
    %v5421 = vmin.f32 %v5417, %v5409
    %v5422 = vmin.f32 %v5418, %v5410
    %v5423 = vmin.f32 %v5419, %v5411
    %v5424 = vmin.f32 %v5420, %v5412
    %v5425 = vmin.f32 %v5421, %v5413
    %v5426 = vmin.f32 %v5422, %v5414
    %v5427 = vmin.f32 %v5423, %v5415
    %v5428 = vmin.f32 %v5424, %v5425
    %v5429 = vmin.f32 %v5426, %v5427
    %v5430 = vmin.f32 %v5428, %v5429
    %v5431 = vrot.slane %v5430, 4
    %v5432 = vmin.f32 %v5430, %v5431
    %v5433 = vrot.slane %v5432, 2
    %v5434 = vmin.f32 %v5432, %v5433
    %v5435 = vrot.slane %v5434, 1
    %v5436 = vmin.f32 %v5434, %v5435
    %5437 = vst [vmem:[#allocation6] sm:$0x1] %v5436
    %v5438 = vld [vmem:[#allocation5] sm:$0x1]
    %v5439 = vadd.f32 %v5383, %v5438
    %5440 = vxpose.xlu0.b32.start [1/16] %v5439, 128
    %5441 = vxpose.xlu0.b32.cont [2/16] 0.0, 128
    %5442 = vxpose.xlu0.b32.cont [3/16] 0.0, 128
    %5443 = vxpose.xlu0.b32.cont [4/16] 0.0, 128
    %5444 = vxpose.xlu0.b32.cont [5/16] 0.0, 128
    %5445 = vxpose.xlu0.b32.cont [6/16] 0.0, 128
    %5446 = vxpose.xlu0.b32.cont [7/16] 0.0, 128
    %5447 = vxpose.xlu0.b32.cont [8/16] 0.0, 128
    %5448 = vxpose.xlu0.b32.cont [9/16] 0.0, 128
    %5449 = vxpose.xlu0.b32.cont [10/16] 0.0, 128
    %5450 = vxpose.xlu0.b32.cont [11/16] 0.0, 128
    %5451 = vxpose.xlu0.b32.cont [12/16] 0.0, 128
    %5452 = vxpose.xlu0.b32.cont [13/16] 0.0, 128
    %5453 = vxpose.xlu0.b32.cont [14/16] 0.0, 128
    %5454 = vxpose.xlu0.b32.cont [15/16] 0.0, 128
    %5455 = vxpose.xlu0.b32.end [16/16] 0.0, 128
    %v5456 = vpop.trf.xlu0
    %v5457 = vpop.trf.xlu0
    %v5458 = vpop.trf.xlu0
    %v5459 = vpop.trf.xlu0
    %v5460 = vpop.trf.xlu0
    %v5461 = vpop.trf.xlu0
    %v5462 = vpop.trf.xlu0
    %v5463 = vpop.trf.xlu0
    %v5464 = vpop.trf.xlu0
    %v5465 = vpop.trf.xlu0
    %v5466 = vpop.trf.xlu0
    %v5467 = vpop.trf.xlu0
    %v5468 = vpop.trf.xlu0
    %v5469 = vpop.trf.xlu0
    %v5470 = vpop.trf.xlu0
    %v5471 = vpop.trf.xlu0
    %v5472 = vld [vmem:[#allocation17] sm:$0xff]
    %v5473 = vld [vmem:[#allocation17 + $0x8] sm:$0xff]
    %v5474 = vld [vmem:[#allocation17 + $0x10] sm:$0xff]
    %v5475 = vld [vmem:[#allocation17 + $0x18] sm:$0xff]
    %v5476 = vld [vmem:[#allocation17 + $0x20] sm:$0xff]
    %v5477 = vld [vmem:[#allocation17 + $0x28] sm:$0xff]
    %v5478 = vld [vmem:[#allocation17 + $0x30] sm:$0xff]
    %v5479 = vld [vmem:[#allocation17 + $0x38] sm:$0xff]
    %v5480 = vld [vmem:[#allocation17 + $0x40] sm:$0xff]
    %v5481 = vld [vmem:[#allocation17 + $0x48] sm:$0xff]
    %v5482 = vld [vmem:[#allocation17 + $0x50] sm:$0xff]
    %v5483 = vld [vmem:[#allocation17 + $0x58] sm:$0xff]
    %v5484 = vld [vmem:[#allocation17 + $0x60] sm:$0xff]
    %v5485 = vld [vmem:[#allocation17 + $0x68] sm:$0xff]
    %v5486 = vld [vmem:[#allocation17 + $0x70] sm:$0xff]
    %v5487 = vld [vmem:[#allocation17 + $0x78] sm:$0xff]
    %5489 = vset.pattern.permute.xlu0 0
    %5490 = vperm.xlu0 %5489, %v5456
    %v5491 = vpop.permute.xlu0 %5490
    %5494 = vset.pattern.permute.xlu0 0
    %5495 = vperm.xlu0 %5494, %v5457
    %v5496 = vpop.permute.xlu0 %5495
    %5499 = vset.pattern.permute.xlu0 0
    %5500 = vperm.xlu0 %5499, %v5458
    %v5501 = vpop.permute.xlu0 %5500
    %5504 = vset.pattern.permute.xlu0 0
    %5505 = vperm.xlu0 %5504, %v5459
    %v5506 = vpop.permute.xlu0 %5505
    %5509 = vset.pattern.permute.xlu0 0
    %5510 = vperm.xlu0 %5509, %v5460
    %v5511 = vpop.permute.xlu0 %5510
    %5514 = vset.pattern.permute.xlu0 0
    %5515 = vperm.xlu0 %5514, %v5461
    %v5516 = vpop.permute.xlu0 %5515
    %5519 = vset.pattern.permute.xlu0 0
    %5520 = vperm.xlu0 %5519, %v5462
    %v5521 = vpop.permute.xlu0 %5520
    %5524 = vset.pattern.permute.xlu0 0
    %5525 = vperm.xlu0 %5524, %v5463
    %v5526 = vpop.permute.xlu0 %5525
    %5529 = vset.pattern.permute.xlu0 0
    %5530 = vperm.xlu0 %5529, %v5464
    %v5531 = vpop.permute.xlu0 %5530
    %5534 = vset.pattern.permute.xlu0 0
    %5535 = vperm.xlu0 %5534, %v5465
    %v5536 = vpop.permute.xlu0 %5535
    %5539 = vset.pattern.permute.xlu0 0
    %5540 = vperm.xlu0 %5539, %v5466
    %v5541 = vpop.permute.xlu0 %5540
    %5544 = vset.pattern.permute.xlu0 0
    %5545 = vperm.xlu0 %5544, %v5467
    %v5546 = vpop.permute.xlu0 %5545
    %5549 = vset.pattern.permute.xlu0 0
    %5550 = vperm.xlu0 %5549, %v5468
    %v5551 = vpop.permute.xlu0 %5550
    %5554 = vset.pattern.permute.xlu0 0
    %5555 = vperm.xlu0 %5554, %v5469
    %v5556 = vpop.permute.xlu0 %5555
    %5559 = vset.pattern.permute.xlu0 0
    %5560 = vperm.xlu0 %5559, %v5470
    %v5561 = vpop.permute.xlu0 %5560
    %5564 = vset.pattern.permute.xlu0 0
    %5565 = vperm.xlu0 %5564, %v5471
    %v5566 = vpop.permute.xlu0 %5565
    %v5568 = vadd.f32 %v5472, %v5491
    %v5569 = vadd.f32 %v5473, %v5496
    %v5570 = vadd.f32 %v5474, %v5501
    %v5571 = vadd.f32 %v5475, %v5506
    %v5572 = vadd.f32 %v5476, %v5511
    %v5573 = vadd.f32 %v5477, %v5516
    %v5574 = vadd.f32 %v5478, %v5521
    %v5575 = vadd.f32 %v5479, %v5526
    %v5576 = vadd.f32 %v5480, %v5531
    %v5577 = vadd.f32 %v5481, %v5536
    %v5578 = vadd.f32 %v5482, %v5541
    %v5579 = vadd.f32 %v5483, %v5546
    %v5580 = vadd.f32 %v5484, %v5551
    %v5581 = vadd.f32 %v5485, %v5556
    %v5582 = vadd.f32 %v5486, %v5561
    %v5583 = vadd.f32 %v5487, %v5566
    %v5584 = vmax.f32 %v5568, %v5572
    %v5585 = vmax.f32 %v5569, %v5573
    %v5586 = vmax.f32 %v5570, %v5574
    %v5587 = vmax.f32 %v5571, %v5575
    %v5588 = vmax.f32 %v5584, %v5576
    %v5589 = vmax.f32 %v5585, %v5577
    %v5590 = vmax.f32 %v5586, %v5578
    %v5591 = vmax.f32 %v5587, %v5579
    %v5592 = vmax.f32 %v5588, %v5580
    %v5593 = vmax.f32 %v5589, %v5581
    %v5594 = vmax.f32 %v5590, %v5582
    %v5595 = vmax.f32 %v5591, %v5583
    %v5596 = vmax.f32 %v5592, %v5593
    %v5597 = vmax.f32 %v5594, %v5595
    %v5598 = vmax.f32 %v5596, %v5597
    %v5599 = vrot.slane %v5598, 4
    %v5600 = vmax.f32 %v5598, %v5599
    %v5601 = vrot.slane %v5600, 2
    %v5602 = vmax.f32 %v5600, %v5601
    %v5603 = vrot.slane %v5602, 1
    %v5604 = vmax.f32 %v5602, %v5603
    %vm5605 = vcmp.eq.f32.partialorder %v5568, %v5604
    %vm5606 = vcmp.eq.f32.partialorder %v5569, %v5604
    %vm5607 = vcmp.eq.f32.partialorder %v5570, %v5604
    %vm5608 = vcmp.eq.f32.partialorder %v5571, %v5604
    %vm5609 = vcmp.eq.f32.partialorder %v5572, %v5604
    %vm5610 = vcmp.eq.f32.partialorder %v5573, %v5604
    %vm5611 = vcmp.eq.f32.partialorder %v5574, %v5604
    %vm5612 = vcmp.eq.f32.partialorder %v5575, %v5604
    %vm5613 = vcmp.eq.f32.partialorder %v5576, %v5604
    %vm5614 = vcmp.eq.f32.partialorder %v5577, %v5604
    %vm5615 = vcmp.eq.f32.partialorder %v5578, %v5604
    %vm5616 = vcmp.eq.f32.partialorder %v5579, %v5604
    %vm5617 = vcmp.eq.f32.partialorder %v5580, %v5604
    %vm5618 = vcmp.eq.f32.partialorder %v5581, %v5604
    %vm5619 = vcmp.eq.f32.partialorder %v5582, %v5604
    %vm5620 = vcmp.eq.f32.partialorder %v5583, %v5604
    %v5621 = vsel %vm5605, %v5331, 128.0
    %v5622 = vsel %vm5606, %v5332, 128.0
    %v5623 = vsel %vm5607, %v5333, 128.0
    %v5624 = vsel %vm5608, %v5334, 128.0
    %v5625 = vsel %vm5609, %v5335, 128.0
    %v5626 = vsel %vm5610, %v5336, 128.0
    %v5627 = vsel %vm5611, %v5337, 128.0
    %v5628 = vsel %vm5612, %v5338, 128.0
    %v5629 = vsel %vm5613, %v5339, 128.0
    %v5630 = vsel %vm5614, %v5340, 128.0
    %v5631 = vsel %vm5615, %v5341, 128.0
    %v5632 = vsel %vm5616, %v5342, 128.0
    %v5633 = vsel %vm5617, %v5343, 128.0
    %v5634 = vsel %vm5618, %v5344, 128.0
    %v5635 = vsel %vm5619, %v5345, 128.0
    %v5636 = vsel %vm5620, %v5346, 128.0
    %v5637 = vmin.f32 %v5621, %v5625
    %v5638 = vmin.f32 %v5622, %v5626
    %v5639 = vmin.f32 %v5623, %v5627
    %v5640 = vmin.f32 %v5624, %v5628
    %v5641 = vmin.f32 %v5637, %v5629
    %v5642 = vmin.f32 %v5638, %v5630
    %v5643 = vmin.f32 %v5639, %v5631
    %v5644 = vmin.f32 %v5640, %v5632
    %v5645 = vmin.f32 %v5641, %v5633
    %v5646 = vmin.f32 %v5642, %v5634
    %v5647 = vmin.f32 %v5643, %v5635
    %v5648 = vmin.f32 %v5644, %v5636
    %v5649 = vmin.f32 %v5645, %v5646
    %v5650 = vmin.f32 %v5647, %v5648
    %v5651 = vmin.f32 %v5649, %v5650
    %v5652 = vrot.slane %v5651, 4
    %v5653 = vmin.f32 %v5651, %v5652
    %v5654 = vrot.slane %v5653, 2
    %v5655 = vmin.f32 %v5653, %v5654
    %v5656 = vrot.slane %v5655, 1
    %v5657 = vmin.f32 %v5655, %v5656
    %5658 = vst [vmem:[#allocation6 + $0x1] sm:$0x1] %v5657
    %v5659 = vld [vmem:[#allocation5 + $0x1] sm:$0x1]
    %v5660 = vadd.f32 %v5604, %v5659
    %5661 = vxpose.xlu0.b32.start [1/16] %v5660, 128
    %5662 = vxpose.xlu0.b32.cont [2/16] 0.0, 128
    %5663 = vxpose.xlu0.b32.cont [3/16] 0.0, 128
    %5664 = vxpose.xlu0.b32.cont [4/16] 0.0, 128
    %5665 = vxpose.xlu0.b32.cont [5/16] 0.0, 128
    %5666 = vxpose.xlu0.b32.cont [6/16] 0.0, 128
    %5667 = vxpose.xlu0.b32.cont [7/16] 0.0, 128
    %5668 = vxpose.xlu0.b32.cont [8/16] 0.0, 128
    %5669 = vxpose.xlu0.b32.cont [9/16] 0.0, 128
    %5670 = vxpose.xlu0.b32.cont [10/16] 0.0, 128
    %5671 = vxpose.xlu0.b32.cont [11/16] 0.0, 128
    %5672 = vxpose.xlu0.b32.cont [12/16] 0.0, 128
    %5673 = vxpose.xlu0.b32.cont [13/16] 0.0, 128
    %5674 = vxpose.xlu0.b32.cont [14/16] 0.0, 128
    %5675 = vxpose.xlu0.b32.cont [15/16] 0.0, 128
    %5676 = vxpose.xlu0.b32.end [16/16] 0.0, 128
    %v5677 = vpop.trf.xlu0
    %v5678 = vpop.trf.xlu0
    %v5679 = vpop.trf.xlu0
    %v5680 = vpop.trf.xlu0
    %v5681 = vpop.trf.xlu0
    %v5682 = vpop.trf.xlu0
    %v5683 = vpop.trf.xlu0
    %v5684 = vpop.trf.xlu0
    %v5685 = vpop.trf.xlu0
    %v5686 = vpop.trf.xlu0
    %v5687 = vpop.trf.xlu0
    %v5688 = vpop.trf.xlu0
    %v5689 = vpop.trf.xlu0
    %v5690 = vpop.trf.xlu0
    %v5691 = vpop.trf.xlu0
    %v5692 = vpop.trf.xlu0
    %v5693 = vld [vmem:[#allocation17] sm:$0xff]
    %v5694 = vld [vmem:[#allocation17 + $0x8] sm:$0xff]
    %v5695 = vld [vmem:[#allocation17 + $0x10] sm:$0xff]
    %v5696 = vld [vmem:[#allocation17 + $0x18] sm:$0xff]
    %v5697 = vld [vmem:[#allocation17 + $0x20] sm:$0xff]
    %v5698 = vld [vmem:[#allocation17 + $0x28] sm:$0xff]
    %v5699 = vld [vmem:[#allocation17 + $0x30] sm:$0xff]
    %v5700 = vld [vmem:[#allocation17 + $0x38] sm:$0xff]
    %v5701 = vld [vmem:[#allocation17 + $0x40] sm:$0xff]
    %v5702 = vld [vmem:[#allocation17 + $0x48] sm:$0xff]
    %v5703 = vld [vmem:[#allocation17 + $0x50] sm:$0xff]
    %v5704 = vld [vmem:[#allocation17 + $0x58] sm:$0xff]
    %v5705 = vld [vmem:[#allocation17 + $0x60] sm:$0xff]
    %v5706 = vld [vmem:[#allocation17 + $0x68] sm:$0xff]
    %v5707 = vld [vmem:[#allocation17 + $0x70] sm:$0xff]
    %v5708 = vld [vmem:[#allocation17 + $0x78] sm:$0xff]
    %5710 = vset.pattern.permute.xlu0 0
    %5711 = vperm.xlu0 %5710, %v5677
    %v5712 = vpop.permute.xlu0 %5711
    %5715 = vset.pattern.permute.xlu0 0
    %5716 = vperm.xlu0 %5715, %v5678
    %v5717 = vpop.permute.xlu0 %5716
    %5720 = vset.pattern.permute.xlu0 0
    %5721 = vperm.xlu0 %5720, %v5679
    %v5722 = vpop.permute.xlu0 %5721
    %5725 = vset.pattern.permute.xlu0 0
    %5726 = vperm.xlu0 %5725, %v5680
    %v5727 = vpop.permute.xlu0 %5726
    %5730 = vset.pattern.permute.xlu0 0
    %5731 = vperm.xlu0 %5730, %v5681
    %v5732 = vpop.permute.xlu0 %5731
    %5735 = vset.pattern.permute.xlu0 0
    %5736 = vperm.xlu0 %5735, %v5682
    %v5737 = vpop.permute.xlu0 %5736
    %5740 = vset.pattern.permute.xlu0 0
    %5741 = vperm.xlu0 %5740, %v5683
    %v5742 = vpop.permute.xlu0 %5741
    %5745 = vset.pattern.permute.xlu0 0
    %5746 = vperm.xlu0 %5745, %v5684
    %v5747 = vpop.permute.xlu0 %5746
    %5750 = vset.pattern.permute.xlu0 0
    %5751 = vperm.xlu0 %5750, %v5685
    %v5752 = vpop.permute.xlu0 %5751
    %5755 = vset.pattern.permute.xlu0 0
    %5756 = vperm.xlu0 %5755, %v5686
    %v5757 = vpop.permute.xlu0 %5756
    %5760 = vset.pattern.permute.xlu0 0
    %5761 = vperm.xlu0 %5760, %v5687
    %v5762 = vpop.permute.xlu0 %5761
    %5765 = vset.pattern.permute.xlu0 0
    %5766 = vperm.xlu0 %5765, %v5688
    %v5767 = vpop.permute.xlu0 %5766
    %5770 = vset.pattern.permute.xlu0 0
    %5771 = vperm.xlu0 %5770, %v5689
    %v5772 = vpop.permute.xlu0 %5771
    %5775 = vset.pattern.permute.xlu0 0
    %5776 = vperm.xlu0 %5775, %v5690
    %v5777 = vpop.permute.xlu0 %5776
    %5780 = vset.pattern.permute.xlu0 0
    %5781 = vperm.xlu0 %5780, %v5691
    %v5782 = vpop.permute.xlu0 %5781
    %5785 = vset.pattern.permute.xlu0 0
    %5786 = vperm.xlu0 %5785, %v5692
    %v5787 = vpop.permute.xlu0 %5786
    %v5789 = vadd.f32 %v5693, %v5712
    %v5790 = vadd.f32 %v5694, %v5717
    %v5791 = vadd.f32 %v5695, %v5722
    %v5792 = vadd.f32 %v5696, %v5727
    %v5793 = vadd.f32 %v5697, %v5732
    %v5794 = vadd.f32 %v5698, %v5737
    %v5795 = vadd.f32 %v5699, %v5742
    %v5796 = vadd.f32 %v5700, %v5747
    %v5797 = vadd.f32 %v5701, %v5752
    %v5798 = vadd.f32 %v5702, %v5757
    %v5799 = vadd.f32 %v5703, %v5762
    %v5800 = vadd.f32 %v5704, %v5767
    %v5801 = vadd.f32 %v5705, %v5772
    %v5802 = vadd.f32 %v5706, %v5777
    %v5803 = vadd.f32 %v5707, %v5782
    %v5804 = vadd.f32 %v5708, %v5787
    %v5805 = vmax.f32 %v5789, %v5793
    %v5806 = vmax.f32 %v5790, %v5794
    %v5807 = vmax.f32 %v5791, %v5795
    %v5808 = vmax.f32 %v5792, %v5796
    %v5809 = vmax.f32 %v5805, %v5797
    %v5810 = vmax.f32 %v5806, %v5798
    %v5811 = vmax.f32 %v5807, %v5799
    %v5812 = vmax.f32 %v5808, %v5800
    %v5813 = vmax.f32 %v5809, %v5801
    %v5814 = vmax.f32 %v5810, %v5802
    %v5815 = vmax.f32 %v5811, %v5803
    %v5816 = vmax.f32 %v5812, %v5804
    %v5817 = vmax.f32 %v5813, %v5814
    %v5818 = vmax.f32 %v5815, %v5816
    %v5819 = vmax.f32 %v5817, %v5818
    %v5820 = vrot.slane %v5819, 4
    %v5821 = vmax.f32 %v5819, %v5820
    %v5822 = vrot.slane %v5821, 2
    %v5823 = vmax.f32 %v5821, %v5822
    %v5824 = vrot.slane %v5823, 1
    %v5825 = vmax.f32 %v5823, %v5824
    %vm5826 = vcmp.eq.f32.partialorder %v5789, %v5825
    %vm5827 = vcmp.eq.f32.partialorder %v5790, %v5825
    %vm5828 = vcmp.eq.f32.partialorder %v5791, %v5825
    %vm5829 = vcmp.eq.f32.partialorder %v5792, %v5825
    %vm5830 = vcmp.eq.f32.partialorder %v5793, %v5825
    %vm5831 = vcmp.eq.f32.partialorder %v5794, %v5825
    %vm5832 = vcmp.eq.f32.partialorder %v5795, %v5825
    %vm5833 = vcmp.eq.f32.partialorder %v5796, %v5825
    %vm5834 = vcmp.eq.f32.partialorder %v5797, %v5825
    %vm5835 = vcmp.eq.f32.partialorder %v5798, %v5825
    %vm5836 = vcmp.eq.f32.partialorder %v5799, %v5825
    %vm5837 = vcmp.eq.f32.partialorder %v5800, %v5825
    %vm5838 = vcmp.eq.f32.partialorder %v5801, %v5825
    %vm5839 = vcmp.eq.f32.partialorder %v5802, %v5825
    %vm5840 = vcmp.eq.f32.partialorder %v5803, %v5825
    %vm5841 = vcmp.eq.f32.partialorder %v5804, %v5825
    %v5842 = vsel %vm5826, %v5331, 128.0
    %v5843 = vsel %vm5827, %v5332, 128.0
    %v5844 = vsel %vm5828, %v5333, 128.0
    %v5845 = vsel %vm5829, %v5334, 128.0
    %v5846 = vsel %vm5830, %v5335, 128.0
    %v5847 = vsel %vm5831, %v5336, 128.0
    %v5848 = vsel %vm5832, %v5337, 128.0
    %v5849 = vsel %vm5833, %v5338, 128.0
    %v5850 = vsel %vm5834, %v5339, 128.0
    %v5851 = vsel %vm5835, %v5340, 128.0
    %v5852 = vsel %vm5836, %v5341, 128.0
    %v5853 = vsel %vm5837, %v5342, 128.0
    %v5854 = vsel %vm5838, %v5343, 128.0
    %v5855 = vsel %vm5839, %v5344, 128.0
    %v5856 = vsel %vm5840, %v5345, 128.0
    %v5857 = vsel %vm5841, %v5346, 128.0
    %v5858 = vmin.f32 %v5842, %v5846
    %v5859 = vmin.f32 %v5843, %v5847
    %v5860 = vmin.f32 %v5844, %v5848
    %v5861 = vmin.f32 %v5845, %v5849
    %v5862 = vmin.f32 %v5858, %v5850
    %v5863 = vmin.f32 %v5859, %v5851
    %v5864 = vmin.f32 %v5860, %v5852
    %v5865 = vmin.f32 %v5861, %v5853
    %v5866 = vmin.f32 %v5862, %v5854
    %v5867 = vmin.f32 %v5863, %v5855
    %v5868 = vmin.f32 %v5864, %v5856
    %v5869 = vmin.f32 %v5865, %v5857
    %v5870 = vmin.f32 %v5866, %v5867
    %v5871 = vmin.f32 %v5868, %v5869
    %v5872 = vmin.f32 %v5870, %v5871
    %v5873 = vrot.slane %v5872, 4
    %v5874 = vmin.f32 %v5872, %v5873
    %v5875 = vrot.slane %v5874, 2
    %v5876 = vmin.f32 %v5874, %v5875
    %v5877 = vrot.slane %v5876, 1
    %v5878 = vmin.f32 %v5876, %v5877
    %5879 = vst [vmem:[#allocation6 + $0x2] sm:$0x1] %v5878
    %v5880 = vld [vmem:[#allocation5 + $0x2] sm:$0x1]
    %v5881 = vadd.f32 %v5825, %v5880
    %5882 = vxpose.xlu0.b32.start [1/16] %v5881, 128
    %5883 = vxpose.xlu0.b32.cont [2/16] 0.0, 128
    %5884 = vxpose.xlu0.b32.cont [3/16] 0.0, 128
    %5885 = vxpose.xlu0.b32.cont [4/16] 0.0, 128
    %5886 = vxpose.xlu0.b32.cont [5/16] 0.0, 128
    %5887 = vxpose.xlu0.b32.cont [6/16] 0.0, 128
    %5888 = vxpose.xlu0.b32.cont [7/16] 0.0, 128
    %5889 = vxpose.xlu0.b32.cont [8/16] 0.0, 128
    %5890 = vxpose.xlu0.b32.cont [9/16] 0.0, 128
    %5891 = vxpose.xlu0.b32.cont [10/16] 0.0, 128
    %5892 = vxpose.xlu0.b32.cont [11/16] 0.0, 128
    %5893 = vxpose.xlu0.b32.cont [12/16] 0.0, 128
    %5894 = vxpose.xlu0.b32.cont [13/16] 0.0, 128
    %5895 = vxpose.xlu0.b32.cont [14/16] 0.0, 128
    %5896 = vxpose.xlu0.b32.cont [15/16] 0.0, 128
    %5897 = vxpose.xlu0.b32.end [16/16] 0.0, 128
    %v5898 = vpop.trf.xlu0
    %v5899 = vpop.trf.xlu0
    %v5900 = vpop.trf.xlu0
    %v5901 = vpop.trf.xlu0
    %v5902 = vpop.trf.xlu0
    %v5903 = vpop.trf.xlu0
    %v5904 = vpop.trf.xlu0
    %v5905 = vpop.trf.xlu0
    %v5906 = vpop.trf.xlu0
    %v5907 = vpop.trf.xlu0
    %v5908 = vpop.trf.xlu0
    %v5909 = vpop.trf.xlu0
    %v5910 = vpop.trf.xlu0
    %v5911 = vpop.trf.xlu0
    %v5912 = vpop.trf.xlu0
    %v5913 = vpop.trf.xlu0
    %v5914 = vld [vmem:[#allocation17] sm:$0xff]
    %v5915 = vld [vmem:[#allocation17 + $0x8] sm:$0xff]
    %v5916 = vld [vmem:[#allocation17 + $0x10] sm:$0xff]
    %v5917 = vld [vmem:[#allocation17 + $0x18] sm:$0xff]
    %v5918 = vld [vmem:[#allocation17 + $0x20] sm:$0xff]
    %v5919 = vld [vmem:[#allocation17 + $0x28] sm:$0xff]
    %v5920 = vld [vmem:[#allocation17 + $0x30] sm:$0xff]
    %v5921 = vld [vmem:[#allocation17 + $0x38] sm:$0xff]
    %v5922 = vld [vmem:[#allocation17 + $0x40] sm:$0xff]
    %v5923 = vld [vmem:[#allocation17 + $0x48] sm:$0xff]
    %v5924 = vld [vmem:[#allocation17 + $0x50] sm:$0xff]
    %v5925 = vld [vmem:[#allocation17 + $0x58] sm:$0xff]
    %v5926 = vld [vmem:[#allocation17 + $0x60] sm:$0xff]
    %v5927 = vld [vmem:[#allocation17 + $0x68] sm:$0xff]
    %v5928 = vld [vmem:[#allocation17 + $0x70] sm:$0xff]
    %v5929 = vld [vmem:[#allocation17 + $0x78] sm:$0xff]
    %5931 = vset.pattern.permute.xlu0 0
    %5932 = vperm.xlu0 %5931, %v5898
    %v5933 = vpop.permute.xlu0 %5932
    %5936 = vset.pattern.permute.xlu0 0
    %5937 = vperm.xlu0 %5936, %v5899
    %v5938 = vpop.permute.xlu0 %5937
    %5941 = vset.pattern.permute.xlu0 0
    %5942 = vperm.xlu0 %5941, %v5900
    %v5943 = vpop.permute.xlu0 %5942
    %5946 = vset.pattern.permute.xlu0 0
    %5947 = vperm.xlu0 %5946, %v5901
    %v5948 = vpop.permute.xlu0 %5947
    %5951 = vset.pattern.permute.xlu0 0
    %5952 = vperm.xlu0 %5951, %v5902
    %v5953 = vpop.permute.xlu0 %5952
    %5956 = vset.pattern.permute.xlu0 0
    %5957 = vperm.xlu0 %5956, %v5903
    %v5958 = vpop.permute.xlu0 %5957
    %5961 = vset.pattern.permute.xlu0 0
    %5962 = vperm.xlu0 %5961, %v5904
    %v5963 = vpop.permute.xlu0 %5962
    %5966 = vset.pattern.permute.xlu0 0
    %5967 = vperm.xlu0 %5966, %v5905
    %v5968 = vpop.permute.xlu0 %5967
    %5971 = vset.pattern.permute.xlu0 0
    %5972 = vperm.xlu0 %5971, %v5906
    %v5973 = vpop.permute.xlu0 %5972
    %5976 = vset.pattern.permute.xlu0 0
    %5977 = vperm.xlu0 %5976, %v5907
    %v5978 = vpop.permute.xlu0 %5977
    %5981 = vset.pattern.permute.xlu0 0
    %5982 = vperm.xlu0 %5981, %v5908
    %v5983 = vpop.permute.xlu0 %5982
    %5986 = vset.pattern.permute.xlu0 0
    %5987 = vperm.xlu0 %5986, %v5909
    %v5988 = vpop.permute.xlu0 %5987
    %5991 = vset.pattern.permute.xlu0 0
    %5992 = vperm.xlu0 %5991, %v5910
    %v5993 = vpop.permute.xlu0 %5992
    %5996 = vset.pattern.permute.xlu0 0
    %5997 = vperm.xlu0 %5996, %v5911
    %v5998 = vpop.permute.xlu0 %5997
    %6001 = vset.pattern.permute.xlu0 0
    %6002 = vperm.xlu0 %6001, %v5912
    %v6003 = vpop.permute.xlu0 %6002
    %6006 = vset.pattern.permute.xlu0 0
    %6007 = vperm.xlu0 %6006, %v5913
    %v6008 = vpop.permute.xlu0 %6007
    %v6010 = vadd.f32 %v5914, %v5933
    %v6011 = vadd.f32 %v5915, %v5938
    %v6012 = vadd.f32 %v5916, %v5943
    %v6013 = vadd.f32 %v5917, %v5948
    %v6014 = vadd.f32 %v5918, %v5953
    %v6015 = vadd.f32 %v5919, %v5958
    %v6016 = vadd.f32 %v5920, %v5963
    %v6017 = vadd.f32 %v5921, %v5968
    %v6018 = vadd.f32 %v5922, %v5973
    %v6019 = vadd.f32 %v5923, %v5978
    %v6020 = vadd.f32 %v5924, %v5983
    %v6021 = vadd.f32 %v5925, %v5988
    %v6022 = vadd.f32 %v5926, %v5993
    %v6023 = vadd.f32 %v5927, %v5998
    %v6024 = vadd.f32 %v5928, %v6003
    %v6025 = vadd.f32 %v5929, %v6008
    %v6026 = vmax.f32 %v6010, %v6014
    %v6027 = vmax.f32 %v6011, %v6015
    %v6028 = vmax.f32 %v6012, %v6016
    %v6029 = vmax.f32 %v6013, %v6017
    %v6030 = vmax.f32 %v6026, %v6018
    %v6031 = vmax.f32 %v6027, %v6019
    %v6032 = vmax.f32 %v6028, %v6020
    %v6033 = vmax.f32 %v6029, %v6021
    %v6034 = vmax.f32 %v6030, %v6022
    %v6035 = vmax.f32 %v6031, %v6023
    %v6036 = vmax.f32 %v6032, %v6024
    %v6037 = vmax.f32 %v6033, %v6025
    %v6038 = vmax.f32 %v6034, %v6035
    %v6039 = vmax.f32 %v6036, %v6037
    %v6040 = vmax.f32 %v6038, %v6039
    %v6041 = vrot.slane %v6040, 4
    %v6042 = vmax.f32 %v6040, %v6041
    %v6043 = vrot.slane %v6042, 2
    %v6044 = vmax.f32 %v6042, %v6043
    %v6045 = vrot.slane %v6044, 1
    %v6046 = vmax.f32 %v6044, %v6045
    %vm6047 = vcmp.eq.f32.partialorder %v6010, %v6046
    %vm6048 = vcmp.eq.f32.partialorder %v6011, %v6046
    %vm6049 = vcmp.eq.f32.partialorder %v6012, %v6046
    %vm6050 = vcmp.eq.f32.partialorder %v6013, %v6046
    %vm6051 = vcmp.eq.f32.partialorder %v6014, %v6046
    %vm6052 = vcmp.eq.f32.partialorder %v6015, %v6046
    %vm6053 = vcmp.eq.f32.partialorder %v6016, %v6046
    %vm6054 = vcmp.eq.f32.partialorder %v6017, %v6046
    %vm6055 = vcmp.eq.f32.partialorder %v6018, %v6046
    %vm6056 = vcmp.eq.f32.partialorder %v6019, %v6046
    %vm6057 = vcmp.eq.f32.partialorder %v6020, %v6046
    %vm6058 = vcmp.eq.f32.partialorder %v6021, %v6046
    %vm6059 = vcmp.eq.f32.partialorder %v6022, %v6046
    %vm6060 = vcmp.eq.f32.partialorder %v6023, %v6046
    %vm6061 = vcmp.eq.f32.partialorder %v6024, %v6046
    %vm6062 = vcmp.eq.f32.partialorder %v6025, %v6046
    %v6063 = vsel %vm6047, %v5331, 128.0
    %v6064 = vsel %vm6048, %v5332, 128.0
    %v6065 = vsel %vm6049, %v5333, 128.0
    %v6066 = vsel %vm6050, %v5334, 128.0
    %v6067 = vsel %vm6051, %v5335, 128.0
    %v6068 = vsel %vm6052, %v5336, 128.0
    %v6069 = vsel %vm6053, %v5337, 128.0
    %v6070 = vsel %vm6054, %v5338, 128.0
    %v6071 = vsel %vm6055, %v5339, 128.0
    %v6072 = vsel %vm6056, %v5340, 128.0
    %v6073 = vsel %vm6057, %v5341, 128.0
    %v6074 = vsel %vm6058, %v5342, 128.0
    %v6075 = vsel %vm6059, %v5343, 128.0
    %v6076 = vsel %vm6060, %v5344, 128.0
    %v6077 = vsel %vm6061, %v5345, 128.0
    %v6078 = vsel %vm6062, %v5346, 128.0
    %v6079 = vmin.f32 %v6063, %v6067
    %v6080 = vmin.f32 %v6064, %v6068
    %v6081 = vmin.f32 %v6065, %v6069
    %v6082 = vmin.f32 %v6066, %v6070
    %v6083 = vmin.f32 %v6079, %v6071
    %v6084 = vmin.f32 %v6080, %v6072
    %v6085 = vmin.f32 %v6081, %v6073
    %v6086 = vmin.f32 %v6082, %v6074
    %v6087 = vmin.f32 %v6083, %v6075
    %v6088 = vmin.f32 %v6084, %v6076
    %v6089 = vmin.f32 %v6085, %v6077
    %v6090 = vmin.f32 %v6086, %v6078
    %v6091 = vmin.f32 %v6087, %v6088
    %v6092 = vmin.f32 %v6089, %v6090
    %v6093 = vmin.f32 %v6091, %v6092
    %v6094 = vrot.slane %v6093, 4
    %v6095 = vmin.f32 %v6093, %v6094
    %v6096 = vrot.slane %v6095, 2
    %v6097 = vmin.f32 %v6095, %v6096
    %v6098 = vrot.slane %v6097, 1
    %v6099 = vmin.f32 %v6097, %v6098
    %6100 = vst [vmem:[#allocation6 + $0x3] sm:$0x1] %v6099
    %v6101 = vld [vmem:[#allocation5 + $0x3] sm:$0x1]
    %v6102 = vadd.f32 %v6046, %v6101
    %6103 = vxpose.xlu0.b32.start [1/16] %v6102, 128
    %6104 = vxpose.xlu0.b32.cont [2/16] 0.0, 128
    %6105 = vxpose.xlu0.b32.cont [3/16] 0.0, 128
    %6106 = vxpose.xlu0.b32.cont [4/16] 0.0, 128
    %6107 = vxpose.xlu0.b32.cont [5/16] 0.0, 128
    %6108 = vxpose.xlu0.b32.cont [6/16] 0.0, 128
    %6109 = vxpose.xlu0.b32.cont [7/16] 0.0, 128
    %6110 = vxpose.xlu0.b32.cont [8/16] 0.0, 128
    %6111 = vxpose.xlu0.b32.cont [9/16] 0.0, 128
    %6112 = vxpose.xlu0.b32.cont [10/16] 0.0, 128
    %6113 = vxpose.xlu0.b32.cont [11/16] 0.0, 128
    %6114 = vxpose.xlu0.b32.cont [12/16] 0.0, 128
    %6115 = vxpose.xlu0.b32.cont [13/16] 0.0, 128
    %6116 = vxpose.xlu0.b32.cont [14/16] 0.0, 128
    %6117 = vxpose.xlu0.b32.cont [15/16] 0.0, 128
    %6118 = vxpose.xlu0.b32.end [16/16] 0.0, 128
    %v6119 = vpop.trf.xlu0
    %v6120 = vpop.trf.xlu0
    %v6121 = vpop.trf.xlu0
    %v6122 = vpop.trf.xlu0
    %v6123 = vpop.trf.xlu0
    %v6124 = vpop.trf.xlu0
    %v6125 = vpop.trf.xlu0
    %v6126 = vpop.trf.xlu0
    %v6127 = vpop.trf.xlu0
    %v6128 = vpop.trf.xlu0
    %v6129 = vpop.trf.xlu0
    %v6130 = vpop.trf.xlu0
    %v6131 = vpop.trf.xlu0
    %v6132 = vpop.trf.xlu0
    %v6133 = vpop.trf.xlu0
    %v6134 = vpop.trf.xlu0
    %v6135 = vld [vmem:[#allocation17] sm:$0xff]
    %v6136 = vld [vmem:[#allocation17 + $0x8] sm:$0xff]
    %v6137 = vld [vmem:[#allocation17 + $0x10] sm:$0xff]
    %v6138 = vld [vmem:[#allocation17 + $0x18] sm:$0xff]
    %v6139 = vld [vmem:[#allocation17 + $0x20] sm:$0xff]
    %v6140 = vld [vmem:[#allocation17 + $0x28] sm:$0xff]
    %v6141 = vld [vmem:[#allocation17 + $0x30] sm:$0xff]
    %v6142 = vld [vmem:[#allocation17 + $0x38] sm:$0xff]
    %v6143 = vld [vmem:[#allocation17 + $0x40] sm:$0xff]
    %v6144 = vld [vmem:[#allocation17 + $0x48] sm:$0xff]
    %v6145 = vld [vmem:[#allocation17 + $0x50] sm:$0xff]
    %v6146 = vld [vmem:[#allocation17 + $0x58] sm:$0xff]
    %v6147 = vld [vmem:[#allocation17 + $0x60] sm:$0xff]
    %v6148 = vld [vmem:[#allocation17 + $0x68] sm:$0xff]
    %v6149 = vld [vmem:[#allocation17 + $0x70] sm:$0xff]
    %v6150 = vld [vmem:[#allocation17 + $0x78] sm:$0xff]
    %6152 = vset.pattern.permute.xlu0 0
    %6153 = vperm.xlu0 %6152, %v6119
    %v6154 = vpop.permute.xlu0 %6153
    %6157 = vset.pattern.permute.xlu0 0
    %6158 = vperm.xlu0 %6157, %v6120
    %v6159 = vpop.permute.xlu0 %6158
    %6162 = vset.pattern.permute.xlu0 0
    %6163 = vperm.xlu0 %6162, %v6121
    %v6164 = vpop.permute.xlu0 %6163
    %6167 = vset.pattern.permute.xlu0 0
    %6168 = vperm.xlu0 %6167, %v6122
    %v6169 = vpop.permute.xlu0 %6168
    %6172 = vset.pattern.permute.xlu0 0
    %6173 = vperm.xlu0 %6172, %v6123
    %v6174 = vpop.permute.xlu0 %6173
    %6177 = vset.pattern.permute.xlu0 0
    %6178 = vperm.xlu0 %6177, %v6124
    %v6179 = vpop.permute.xlu0 %6178
    %6182 = vset.pattern.permute.xlu0 0
    %6183 = vperm.xlu0 %6182, %v6125
    %v6184 = vpop.permute.xlu0 %6183
    %6187 = vset.pattern.permute.xlu0 0
    %6188 = vperm.xlu0 %6187, %v6126
    %v6189 = vpop.permute.xlu0 %6188
    %6192 = vset.pattern.permute.xlu0 0
    %6193 = vperm.xlu0 %6192, %v6127
    %v6194 = vpop.permute.xlu0 %6193
    %6197 = vset.pattern.permute.xlu0 0
    %6198 = vperm.xlu0 %6197, %v6128
    %v6199 = vpop.permute.xlu0 %6198
    %6202 = vset.pattern.permute.xlu0 0
    %6203 = vperm.xlu0 %6202, %v6129
    %v6204 = vpop.permute.xlu0 %6203
    %6207 = vset.pattern.permute.xlu0 0
    %6208 = vperm.xlu0 %6207, %v6130
    %v6209 = vpop.permute.xlu0 %6208
    %6212 = vset.pattern.permute.xlu0 0
    %6213 = vperm.xlu0 %6212, %v6131
    %v6214 = vpop.permute.xlu0 %6213
    %6217 = vset.pattern.permute.xlu0 0
    %6218 = vperm.xlu0 %6217, %v6132
    %v6219 = vpop.permute.xlu0 %6218
    %6222 = vset.pattern.permute.xlu0 0
    %6223 = vperm.xlu0 %6222, %v6133
    %v6224 = vpop.permute.xlu0 %6223
    %6227 = vset.pattern.permute.xlu0 0
    %6228 = vperm.xlu0 %6227, %v6134
    %v6229 = vpop.permute.xlu0 %6228
    %v6231 = vadd.f32 %v6135, %v6154
    %v6232 = vadd.f32 %v6136, %v6159
    %v6233 = vadd.f32 %v6137, %v6164
    %v6234 = vadd.f32 %v6138, %v6169
    %v6235 = vadd.f32 %v6139, %v6174
    %v6236 = vadd.f32 %v6140, %v6179
    %v6237 = vadd.f32 %v6141, %v6184
    %v6238 = vadd.f32 %v6142, %v6189
    %v6239 = vadd.f32 %v6143, %v6194
    %v6240 = vadd.f32 %v6144, %v6199
    %v6241 = vadd.f32 %v6145, %v6204
    %v6242 = vadd.f32 %v6146, %v6209
    %v6243 = vadd.f32 %v6147, %v6214
    %v6244 = vadd.f32 %v6148, %v6219
    %v6245 = vadd.f32 %v6149, %v6224
    %v6246 = vadd.f32 %v6150, %v6229
    %v6247 = vmax.f32 %v6231, %v6235
    %v6248 = vmax.f32 %v6232, %v6236
    %v6249 = vmax.f32 %v6233, %v6237
    %v6250 = vmax.f32 %v6234, %v6238
    %v6251 = vmax.f32 %v6247, %v6239
    %v6252 = vmax.f32 %v6248, %v6240
    %v6253 = vmax.f32 %v6249, %v6241
    %v6254 = vmax.f32 %v6250, %v6242
    %v6255 = vmax.f32 %v6251, %v6243
    %v6256 = vmax.f32 %v6252, %v6244
    %v6257 = vmax.f32 %v6253, %v6245
    %v6258 = vmax.f32 %v6254, %v6246
    %v6259 = vmax.f32 %v6255, %v6256
    %v6260 = vmax.f32 %v6257, %v6258
    %v6261 = vmax.f32 %v6259, %v6260
    %v6262 = vrot.slane %v6261, 4
    %v6263 = vmax.f32 %v6261, %v6262
    %v6264 = vrot.slane %v6263, 2
    %v6265 = vmax.f32 %v6263, %v6264
    %v6266 = vrot.slane %v6265, 1
    %v6267 = vmax.f32 %v6265, %v6266
    %vm6268 = vcmp.eq.f32.partialorder %v6231, %v6267
    %vm6269 = vcmp.eq.f32.partialorder %v6232, %v6267
    %vm6270 = vcmp.eq.f32.partialorder %v6233, %v6267
    %vm6271 = vcmp.eq.f32.partialorder %v6234, %v6267
    %vm6272 = vcmp.eq.f32.partialorder %v6235, %v6267
    %vm6273 = vcmp.eq.f32.partialorder %v6236, %v6267
    %vm6274 = vcmp.eq.f32.partialorder %v6237, %v6267
    %vm6275 = vcmp.eq.f32.partialorder %v6238, %v6267
    %vm6276 = vcmp.eq.f32.partialorder %v6239, %v6267
    %vm6277 = vcmp.eq.f32.partialorder %v6240, %v6267
    %vm6278 = vcmp.eq.f32.partialorder %v6241, %v6267
    %vm6279 = vcmp.eq.f32.partialorder %v6242, %v6267
    %vm6280 = vcmp.eq.f32.partialorder %v6243, %v6267
    %vm6281 = vcmp.eq.f32.partialorder %v6244, %v6267
    %vm6282 = vcmp.eq.f32.partialorder %v6245, %v6267
    %vm6283 = vcmp.eq.f32.partialorder %v6246, %v6267
    %v6284 = vsel %vm6268, %v5331, 128.0
    %v6285 = vsel %vm6269, %v5332, 128.0
    %v6286 = vsel %vm6270, %v5333, 128.0
    %v6287 = vsel %vm6271, %v5334, 128.0
    %v6288 = vsel %vm6272, %v5335, 128.0
    %v6289 = vsel %vm6273, %v5336, 128.0
    %v6290 = vsel %vm6274, %v5337, 128.0
    %v6291 = vsel %vm6275, %v5338, 128.0
    %v6292 = vsel %vm6276, %v5339, 128.0
    %v6293 = vsel %vm6277, %v5340, 128.0
    %v6294 = vsel %vm6278, %v5341, 128.0
    %v6295 = vsel %vm6279, %v5342, 128.0
    %v6296 = vsel %vm6280, %v5343, 128.0
    %v6297 = vsel %vm6281, %v5344, 128.0
    %v6298 = vsel %vm6282, %v5345, 128.0
    %v6299 = vsel %vm6283, %v5346, 128.0
    %v6300 = vmin.f32 %v6284, %v6288
    %v6301 = vmin.f32 %v6285, %v6289
    %v6302 = vmin.f32 %v6286, %v6290
    %v6303 = vmin.f32 %v6287, %v6291
    %v6304 = vmin.f32 %v6300, %v6292
    %v6305 = vmin.f32 %v6301, %v6293
    %v6306 = vmin.f32 %v6302, %v6294
    %v6307 = vmin.f32 %v6303, %v6295
    %v6308 = vmin.f32 %v6304, %v6296
    %v6309 = vmin.f32 %v6305, %v6297
    %v6310 = vmin.f32 %v6306, %v6298
    %v6311 = vmin.f32 %v6307, %v6299
    %v6312 = vmin.f32 %v6308, %v6309
    %v6313 = vmin.f32 %v6310, %v6311
    %v6314 = vmin.f32 %v6312, %v6313
    %v6315 = vrot.slane %v6314, 4
    %v6316 = vmin.f32 %v6314, %v6315
    %v6317 = vrot.slane %v6316, 2
    %v6318 = vmin.f32 %v6316, %v6317
    %v6319 = vrot.slane %v6318, 1
    %v6320 = vmin.f32 %v6318, %v6319
    %6321 = vst [vmem:[#allocation6 + $0x4] sm:$0x1] %v6320
    %v6322 = vld [vmem:[#allocation5 + $0x4] sm:$0x1]
    %v6323 = vadd.f32 %v6267, %v6322
    %6324 = vxpose.xlu0.b32.start [1/16] %v6323, 128
    %6325 = vxpose.xlu0.b32.cont [2/16] 0.0, 128
    %6326 = vxpose.xlu0.b32.cont [3/16] 0.0, 128
    %6327 = vxpose.xlu0.b32.cont [4/16] 0.0, 128
    %6328 = vxpose.xlu0.b32.cont [5/16] 0.0, 128
    %6329 = vxpose.xlu0.b32.cont [6/16] 0.0, 128
    %6330 = vxpose.xlu0.b32.cont [7/16] 0.0, 128
    %6331 = vxpose.xlu0.b32.cont [8/16] 0.0, 128
    %6332 = vxpose.xlu0.b32.cont [9/16] 0.0, 128
    %6333 = vxpose.xlu0.b32.cont [10/16] 0.0, 128
    %6334 = vxpose.xlu0.b32.cont [11/16] 0.0, 128
    %6335 = vxpose.xlu0.b32.cont [12/16] 0.0, 128
    %6336 = vxpose.xlu0.b32.cont [13/16] 0.0, 128
    %6337 = vxpose.xlu0.b32.cont [14/16] 0.0, 128
    %6338 = vxpose.xlu0.b32.cont [15/16] 0.0, 128
    %6339 = vxpose.xlu0.b32.end [16/16] 0.0, 128
    %v6340 = vpop.trf.xlu0
    %v6341 = vpop.trf.xlu0
    %v6342 = vpop.trf.xlu0
    %v6343 = vpop.trf.xlu0
    %v6344 = vpop.trf.xlu0
    %v6345 = vpop.trf.xlu0
    %v6346 = vpop.trf.xlu0
    %v6347 = vpop.trf.xlu0
    %v6348 = vpop.trf.xlu0
    %v6349 = vpop.trf.xlu0
    %v6350 = vpop.trf.xlu0
    %v6351 = vpop.trf.xlu0
    %v6352 = vpop.trf.xlu0
    %v6353 = vpop.trf.xlu0
    %v6354 = vpop.trf.xlu0
    %v6355 = vpop.trf.xlu0
    %v6356 = vld [vmem:[#allocation17] sm:$0xff]
    %v6357 = vld [vmem:[#allocation17 + $0x8] sm:$0xff]
    %v6358 = vld [vmem:[#allocation17 + $0x10] sm:$0xff]
    %v6359 = vld [vmem:[#allocation17 + $0x18] sm:$0xff]
    %v6360 = vld [vmem:[#allocation17 + $0x20] sm:$0xff]
    %v6361 = vld [vmem:[#allocation17 + $0x28] sm:$0xff]
    %v6362 = vld [vmem:[#allocation17 + $0x30] sm:$0xff]
    %v6363 = vld [vmem:[#allocation17 + $0x38] sm:$0xff]
    %v6364 = vld [vmem:[#allocation17 + $0x40] sm:$0xff]
    %v6365 = vld [vmem:[#allocation17 + $0x48] sm:$0xff]
    %v6366 = vld [vmem:[#allocation17 + $0x50] sm:$0xff]
    %v6367 = vld [vmem:[#allocation17 + $0x58] sm:$0xff]
    %v6368 = vld [vmem:[#allocation17 + $0x60] sm:$0xff]
    %v6369 = vld [vmem:[#allocation17 + $0x68] sm:$0xff]
    %v6370 = vld [vmem:[#allocation17 + $0x70] sm:$0xff]
    %v6371 = vld [vmem:[#allocation17 + $0x78] sm:$0xff]
    %6373 = vset.pattern.permute.xlu0 0
    %6374 = vperm.xlu0 %6373, %v6340
    %v6375 = vpop.permute.xlu0 %6374
    %6378 = vset.pattern.permute.xlu0 0
    %6379 = vperm.xlu0 %6378, %v6341
    %v6380 = vpop.permute.xlu0 %6379
    %6383 = vset.pattern.permute.xlu0 0
    %6384 = vperm.xlu0 %6383, %v6342
    %v6385 = vpop.permute.xlu0 %6384
    %6388 = vset.pattern.permute.xlu0 0
    %6389 = vperm.xlu0 %6388, %v6343
    %v6390 = vpop.permute.xlu0 %6389
    %6393 = vset.pattern.permute.xlu0 0
    %6394 = vperm.xlu0 %6393, %v6344
    %v6395 = vpop.permute.xlu0 %6394
    %6398 = vset.pattern.permute.xlu0 0
    %6399 = vperm.xlu0 %6398, %v6345
    %v6400 = vpop.permute.xlu0 %6399
    %6403 = vset.pattern.permute.xlu0 0
    %6404 = vperm.xlu0 %6403, %v6346
    %v6405 = vpop.permute.xlu0 %6404
    %6408 = vset.pattern.permute.xlu0 0
    %6409 = vperm.xlu0 %6408, %v6347
    %v6410 = vpop.permute.xlu0 %6409
    %6413 = vset.pattern.permute.xlu0 0
    %6414 = vperm.xlu0 %6413, %v6348
    %v6415 = vpop.permute.xlu0 %6414
    %6418 = vset.pattern.permute.xlu0 0
    %6419 = vperm.xlu0 %6418, %v6349
    %v6420 = vpop.permute.xlu0 %6419
    %6423 = vset.pattern.permute.xlu0 0
    %6424 = vperm.xlu0 %6423, %v6350
    %v6425 = vpop.permute.xlu0 %6424
    %6428 = vset.pattern.permute.xlu0 0
    %6429 = vperm.xlu0 %6428, %v6351
    %v6430 = vpop.permute.xlu0 %6429
    %6433 = vset.pattern.permute.xlu0 0
    %6434 = vperm.xlu0 %6433, %v6352
    %v6435 = vpop.permute.xlu0 %6434
    %6438 = vset.pattern.permute.xlu0 0
    %6439 = vperm.xlu0 %6438, %v6353
    %v6440 = vpop.permute.xlu0 %6439
    %6443 = vset.pattern.permute.xlu0 0
    %6444 = vperm.xlu0 %6443, %v6354
    %v6445 = vpop.permute.xlu0 %6444
    %6448 = vset.pattern.permute.xlu0 0
    %6449 = vperm.xlu0 %6448, %v6355
    %v6450 = vpop.permute.xlu0 %6449
    %v6452 = vadd.f32 %v6356, %v6375
    %v6453 = vadd.f32 %v6357, %v6380
    %v6454 = vadd.f32 %v6358, %v6385
    %v6455 = vadd.f32 %v6359, %v6390
    %v6456 = vadd.f32 %v6360, %v6395
    %v6457 = vadd.f32 %v6361, %v6400
    %v6458 = vadd.f32 %v6362, %v6405
    %v6459 = vadd.f32 %v6363, %v6410
    %v6460 = vadd.f32 %v6364, %v6415
    %v6461 = vadd.f32 %v6365, %v6420
    %v6462 = vadd.f32 %v6366, %v6425
    %v6463 = vadd.f32 %v6367, %v6430
    %v6464 = vadd.f32 %v6368, %v6435
    %v6465 = vadd.f32 %v6369, %v6440
    %v6466 = vadd.f32 %v6370, %v6445
    %v6467 = vadd.f32 %v6371, %v6450
    %v6468 = vmax.f32 %v6452, %v6456
    %v6469 = vmax.f32 %v6453, %v6457
    %v6470 = vmax.f32 %v6454, %v6458
    %v6471 = vmax.f32 %v6455, %v6459
    %v6472 = vmax.f32 %v6468, %v6460
    %v6473 = vmax.f32 %v6469, %v6461
    %v6474 = vmax.f32 %v6470, %v6462
    %v6475 = vmax.f32 %v6471, %v6463
    %v6476 = vmax.f32 %v6472, %v6464
    %v6477 = vmax.f32 %v6473, %v6465
    %v6478 = vmax.f32 %v6474, %v6466
    %v6479 = vmax.f32 %v6475, %v6467
    %v6480 = vmax.f32 %v6476, %v6477
    %v6481 = vmax.f32 %v6478, %v6479
    %v6482 = vmax.f32 %v6480, %v6481
    %v6483 = vrot.slane %v6482, 4
    %v6484 = vmax.f32 %v6482, %v6483
    %v6485 = vrot.slane %v6484, 2
    %v6486 = vmax.f32 %v6484, %v6485
    %v6487 = vrot.slane %v6486, 1
    %v6488 = vmax.f32 %v6486, %v6487
    %vm6489 = vcmp.eq.f32.partialorder %v6452, %v6488
    %vm6490 = vcmp.eq.f32.partialorder %v6453, %v6488
    %vm6491 = vcmp.eq.f32.partialorder %v6454, %v6488
    %vm6492 = vcmp.eq.f32.partialorder %v6455, %v6488
    %vm6493 = vcmp.eq.f32.partialorder %v6456, %v6488
    %vm6494 = vcmp.eq.f32.partialorder %v6457, %v6488
    %vm6495 = vcmp.eq.f32.partialorder %v6458, %v6488
    %vm6496 = vcmp.eq.f32.partialorder %v6459, %v6488
    %vm6497 = vcmp.eq.f32.partialorder %v6460, %v6488
    %vm6498 = vcmp.eq.f32.partialorder %v6461, %v6488
    %vm6499 = vcmp.eq.f32.partialorder %v6462, %v6488
    %vm6500 = vcmp.eq.f32.partialorder %v6463, %v6488
    %vm6501 = vcmp.eq.f32.partialorder %v6464, %v6488
    %vm6502 = vcmp.eq.f32.partialorder %v6465, %v6488
    %vm6503 = vcmp.eq.f32.partialorder %v6466, %v6488
    %vm6504 = vcmp.eq.f32.partialorder %v6467, %v6488
    %v6505 = vsel %vm6489, %v5331, 128.0
    %v6506 = vsel %vm6490, %v5332, 128.0
    %v6507 = vsel %vm6491, %v5333, 128.0
    %v6508 = vsel %vm6492, %v5334, 128.0
    %v6509 = vsel %vm6493, %v5335, 128.0
    %v6510 = vsel %vm6494, %v5336, 128.0
    %v6511 = vsel %vm6495, %v5337, 128.0
    %v6512 = vsel %vm6496, %v5338, 128.0
    %v6513 = vsel %vm6497, %v5339, 128.0
    %v6514 = vsel %vm6498, %v5340, 128.0
    %v6515 = vsel %vm6499, %v5341, 128.0
    %v6516 = vsel %vm6500, %v5342, 128.0
    %v6517 = vsel %vm6501, %v5343, 128.0
    %v6518 = vsel %vm6502, %v5344, 128.0
    %v6519 = vsel %vm6503, %v5345, 128.0
    %v6520 = vsel %vm6504, %v5346, 128.0
    %v6521 = vmin.f32 %v6505, %v6509
    %v6522 = vmin.f32 %v6506, %v6510
    %v6523 = vmin.f32 %v6507, %v6511
    %v6524 = vmin.f32 %v6508, %v6512
    %v6525 = vmin.f32 %v6521, %v6513
    %v6526 = vmin.f32 %v6522, %v6514
    %v6527 = vmin.f32 %v6523, %v6515
    %v6528 = vmin.f32 %v6524, %v6516
    %v6529 = vmin.f32 %v6525, %v6517
    %v6530 = vmin.f32 %v6526, %v6518
    %v6531 = vmin.f32 %v6527, %v6519
    %v6532 = vmin.f32 %v6528, %v6520
    %v6533 = vmin.f32 %v6529, %v6530
    %v6534 = vmin.f32 %v6531, %v6532
    %v6535 = vmin.f32 %v6533, %v6534
    %v6536 = vrot.slane %v6535, 4
    %v6537 = vmin.f32 %v6535, %v6536
    %v6538 = vrot.slane %v6537, 2
    %v6539 = vmin.f32 %v6537, %v6538
    %v6540 = vrot.slane %v6539, 1
    %v6541 = vmin.f32 %v6539, %v6540
    %6542 = vst [vmem:[#allocation6 + $0x5] sm:$0x1] %v6541
    %v6543 = vld [vmem:[#allocation5 + $0x5] sm:$0x1]
    %v6544 = vadd.f32 %v6488, %v6543
    %6545 = vxpose.xlu0.b32.start [1/16] %v6544, 128
    %6546 = vxpose.xlu0.b32.cont [2/16] 0.0, 128
    %6547 = vxpose.xlu0.b32.cont [3/16] 0.0, 128
    %6548 = vxpose.xlu0.b32.cont [4/16] 0.0, 128
    %6549 = vxpose.xlu0.b32.cont [5/16] 0.0, 128
    %6550 = vxpose.xlu0.b32.cont [6/16] 0.0, 128
    %6551 = vxpose.xlu0.b32.cont [7/16] 0.0, 128
    %6552 = vxpose.xlu0.b32.cont [8/16] 0.0, 128
    %6553 = vxpose.xlu0.b32.cont [9/16] 0.0, 128
    %6554 = vxpose.xlu0.b32.cont [10/16] 0.0, 128
    %6555 = vxpose.xlu0.b32.cont [11/16] 0.0, 128
    %6556 = vxpose.xlu0.b32.cont [12/16] 0.0, 128
    %6557 = vxpose.xlu0.b32.cont [13/16] 0.0, 128
    %6558 = vxpose.xlu0.b32.cont [14/16] 0.0, 128
    %6559 = vxpose.xlu0.b32.cont [15/16] 0.0, 128
    %6560 = vxpose.xlu0.b32.end [16/16] 0.0, 128
    %v6561 = vpop.trf.xlu0
    %v6562 = vpop.trf.xlu0
    %v6563 = vpop.trf.xlu0
    %v6564 = vpop.trf.xlu0
    %v6565 = vpop.trf.xlu0
    %v6566 = vpop.trf.xlu0
    %v6567 = vpop.trf.xlu0
    %v6568 = vpop.trf.xlu0
    %v6569 = vpop.trf.xlu0
    %v6570 = vpop.trf.xlu0
    %v6571 = vpop.trf.xlu0
    %v6572 = vpop.trf.xlu0
    %v6573 = vpop.trf.xlu0
    %v6574 = vpop.trf.xlu0
    %v6575 = vpop.trf.xlu0
    %v6576 = vpop.trf.xlu0
    %v6577 = vld [vmem:[#allocation17] sm:$0xff]
    %v6578 = vld [vmem:[#allocation17 + $0x8] sm:$0xff]
    %v6579 = vld [vmem:[#allocation17 + $0x10] sm:$0xff]
    %v6580 = vld [vmem:[#allocation17 + $0x18] sm:$0xff]
    %v6581 = vld [vmem:[#allocation17 + $0x20] sm:$0xff]
    %v6582 = vld [vmem:[#allocation17 + $0x28] sm:$0xff]
    %v6583 = vld [vmem:[#allocation17 + $0x30] sm:$0xff]
    %v6584 = vld [vmem:[#allocation17 + $0x38] sm:$0xff]
    %v6585 = vld [vmem:[#allocation17 + $0x40] sm:$0xff]
    %v6586 = vld [vmem:[#allocation17 + $0x48] sm:$0xff]
    %v6587 = vld [vmem:[#allocation17 + $0x50] sm:$0xff]
    %v6588 = vld [vmem:[#allocation17 + $0x58] sm:$0xff]
    %v6589 = vld [vmem:[#allocation17 + $0x60] sm:$0xff]
    %v6590 = vld [vmem:[#allocation17 + $0x68] sm:$0xff]
    %v6591 = vld [vmem:[#allocation17 + $0x70] sm:$0xff]
    %v6592 = vld [vmem:[#allocation17 + $0x78] sm:$0xff]
    %6594 = vset.pattern.permute.xlu0 0
    %6595 = vperm.xlu0 %6594, %v6561
    %v6596 = vpop.permute.xlu0 %6595
    %6599 = vset.pattern.permute.xlu0 0
    %6600 = vperm.xlu0 %6599, %v6562
    %v6601 = vpop.permute.xlu0 %6600
    %6604 = vset.pattern.permute.xlu0 0
    %6605 = vperm.xlu0 %6604, %v6563
    %v6606 = vpop.permute.xlu0 %6605
    %6609 = vset.pattern.permute.xlu0 0
    %6610 = vperm.xlu0 %6609, %v6564
    %v6611 = vpop.permute.xlu0 %6610
    %6614 = vset.pattern.permute.xlu0 0
    %6615 = vperm.xlu0 %6614, %v6565
    %v6616 = vpop.permute.xlu0 %6615
    %6619 = vset.pattern.permute.xlu0 0
    %6620 = vperm.xlu0 %6619, %v6566
    %v6621 = vpop.permute.xlu0 %6620
    %6624 = vset.pattern.permute.xlu0 0
    %6625 = vperm.xlu0 %6624, %v6567
    %v6626 = vpop.permute.xlu0 %6625
    %6629 = vset.pattern.permute.xlu0 0
    %6630 = vperm.xlu0 %6629, %v6568
    %v6631 = vpop.permute.xlu0 %6630
    %6634 = vset.pattern.permute.xlu0 0
    %6635 = vperm.xlu0 %6634, %v6569
    %v6636 = vpop.permute.xlu0 %6635
    %6639 = vset.pattern.permute.xlu0 0
    %6640 = vperm.xlu0 %6639, %v6570
    %v6641 = vpop.permute.xlu0 %6640
    %6644 = vset.pattern.permute.xlu0 0
    %6645 = vperm.xlu0 %6644, %v6571
    %v6646 = vpop.permute.xlu0 %6645
    %6649 = vset.pattern.permute.xlu0 0
    %6650 = vperm.xlu0 %6649, %v6572
    %v6651 = vpop.permute.xlu0 %6650
    %6654 = vset.pattern.permute.xlu0 0
    %6655 = vperm.xlu0 %6654, %v6573
    %v6656 = vpop.permute.xlu0 %6655
    %6659 = vset.pattern.permute.xlu0 0
    %6660 = vperm.xlu0 %6659, %v6574
    %v6661 = vpop.permute.xlu0 %6660
    %6664 = vset.pattern.permute.xlu0 0
    %6665 = vperm.xlu0 %6664, %v6575
    %v6666 = vpop.permute.xlu0 %6665
    %6669 = vset.pattern.permute.xlu0 0
    %6670 = vperm.xlu0 %6669, %v6576
    %v6671 = vpop.permute.xlu0 %6670
    %v6673 = vadd.f32 %v6577, %v6596
    %v6674 = vadd.f32 %v6578, %v6601
    %v6675 = vadd.f32 %v6579, %v6606
    %v6676 = vadd.f32 %v6580, %v6611
    %v6677 = vadd.f32 %v6581, %v6616
    %v6678 = vadd.f32 %v6582, %v6621
    %v6679 = vadd.f32 %v6583, %v6626
    %v6680 = vadd.f32 %v6584, %v6631
    %v6681 = vadd.f32 %v6585, %v6636
    %v6682 = vadd.f32 %v6586, %v6641
    %v6683 = vadd.f32 %v6587, %v6646
    %v6684 = vadd.f32 %v6588, %v6651
    %v6685 = vadd.f32 %v6589, %v6656
    %v6686 = vadd.f32 %v6590, %v6661
    %v6687 = vadd.f32 %v6591, %v6666
    %v6688 = vadd.f32 %v6592, %v6671
    %v6689 = vmax.f32 %v6673, %v6677
    %v6690 = vmax.f32 %v6674, %v6678
    %v6691 = vmax.f32 %v6675, %v6679
    %v6692 = vmax.f32 %v6676, %v6680
    %v6693 = vmax.f32 %v6689, %v6681
    %v6694 = vmax.f32 %v6690, %v6682
    %v6695 = vmax.f32 %v6691, %v6683
    %v6696 = vmax.f32 %v6692, %v6684
    %v6697 = vmax.f32 %v6693, %v6685
    %v6698 = vmax.f32 %v6694, %v6686
    %v6699 = vmax.f32 %v6695, %v6687
    %v6700 = vmax.f32 %v6696, %v6688
    %v6701 = vmax.f32 %v6697, %v6698
    %v6702 = vmax.f32 %v6699, %v6700
    %v6703 = vmax.f32 %v6701, %v6702
    %v6704 = vrot.slane %v6703, 4
    %v6705 = vmax.f32 %v6703, %v6704
    %v6706 = vrot.slane %v6705, 2
    %v6707 = vmax.f32 %v6705, %v6706
    %v6708 = vrot.slane %v6707, 1
    %v6709 = vmax.f32 %v6707, %v6708
    %vm6710 = vcmp.eq.f32.partialorder %v6673, %v6709
    %vm6711 = vcmp.eq.f32.partialorder %v6674, %v6709
    %vm6712 = vcmp.eq.f32.partialorder %v6675, %v6709
    %vm6713 = vcmp.eq.f32.partialorder %v6676, %v6709
    %vm6714 = vcmp.eq.f32.partialorder %v6677, %v6709
    %vm6715 = vcmp.eq.f32.partialorder %v6678, %v6709
    %vm6716 = vcmp.eq.f32.partialorder %v6679, %v6709
    %vm6717 = vcmp.eq.f32.partialorder %v6680, %v6709
    %vm6718 = vcmp.eq.f32.partialorder %v6681, %v6709
    %vm6719 = vcmp.eq.f32.partialorder %v6682, %v6709
    %vm6720 = vcmp.eq.f32.partialorder %v6683, %v6709
    %vm6721 = vcmp.eq.f32.partialorder %v6684, %v6709
    %vm6722 = vcmp.eq.f32.partialorder %v6685, %v6709
    %vm6723 = vcmp.eq.f32.partialorder %v6686, %v6709
    %vm6724 = vcmp.eq.f32.partialorder %v6687, %v6709
    %vm6725 = vcmp.eq.f32.partialorder %v6688, %v6709
    %v6726 = vsel %vm6710, %v5331, 128.0
    %v6727 = vsel %vm6711, %v5332, 128.0
    %v6728 = vsel %vm6712, %v5333, 128.0
    %v6729 = vsel %vm6713, %v5334, 128.0
    %v6730 = vsel %vm6714, %v5335, 128.0
    %v6731 = vsel %vm6715, %v5336, 128.0
    %v6732 = vsel %vm6716, %v5337, 128.0
    %v6733 = vsel %vm6717, %v5338, 128.0
    %v6734 = vsel %vm6718, %v5339, 128.0
    %v6735 = vsel %vm6719, %v5340, 128.0
    %v6736 = vsel %vm6720, %v5341, 128.0
    %v6737 = vsel %vm6721, %v5342, 128.0
    %v6738 = vsel %vm6722, %v5343, 128.0
    %v6739 = vsel %vm6723, %v5344, 128.0
    %v6740 = vsel %vm6724, %v5345, 128.0
    %v6741 = vsel %vm6725, %v5346, 128.0
    %v6742 = vmin.f32 %v6726, %v6730
    %v6743 = vmin.f32 %v6727, %v6731
    %v6744 = vmin.f32 %v6728, %v6732
    %v6745 = vmin.f32 %v6729, %v6733
    %v6746 = vmin.f32 %v6742, %v6734
    %v6747 = vmin.f32 %v6743, %v6735
    %v6748 = vmin.f32 %v6744, %v6736
    %v6749 = vmin.f32 %v6745, %v6737
    %v6750 = vmin.f32 %v6746, %v6738
    %v6751 = vmin.f32 %v6747, %v6739
    %v6752 = vmin.f32 %v6748, %v6740
    %v6753 = vmin.f32 %v6749, %v6741
    %v6754 = vmin.f32 %v6750, %v6751
    %v6755 = vmin.f32 %v6752, %v6753
    %v6756 = vmin.f32 %v6754, %v6755
    %v6757 = vrot.slane %v6756, 4
    %v6758 = vmin.f32 %v6756, %v6757
    %v6759 = vrot.slane %v6758, 2
    %v6760 = vmin.f32 %v6758, %v6759
    %v6761 = vrot.slane %v6760, 1
    %v6762 = vmin.f32 %v6760, %v6761
    %6763 = vst [vmem:[#allocation6 + $0x6] sm:$0x1] %v6762
    %v6764 = vld [vmem:[#allocation5 + $0x6] sm:$0x1]
    %v6765 = vadd.f32 %v6709, %v6764
    %6766 = vxpose.xlu0.b32.start [1/16] %v6765, 128
    %6767 = vxpose.xlu0.b32.cont [2/16] 0.0, 128
    %6768 = vxpose.xlu0.b32.cont [3/16] 0.0, 128
    %6769 = vxpose.xlu0.b32.cont [4/16] 0.0, 128
    %6770 = vxpose.xlu0.b32.cont [5/16] 0.0, 128
    %6771 = vxpose.xlu0.b32.cont [6/16] 0.0, 128
    %6772 = vxpose.xlu0.b32.cont [7/16] 0.0, 128
    %6773 = vxpose.xlu0.b32.cont [8/16] 0.0, 128
    %6774 = vxpose.xlu0.b32.cont [9/16] 0.0, 128
    %6775 = vxpose.xlu0.b32.cont [10/16] 0.0, 128
    %6776 = vxpose.xlu0.b32.cont [11/16] 0.0, 128
    %6777 = vxpose.xlu0.b32.cont [12/16] 0.0, 128
    %6778 = vxpose.xlu0.b32.cont [13/16] 0.0, 128
    %6779 = vxpose.xlu0.b32.cont [14/16] 0.0, 128
    %6780 = vxpose.xlu0.b32.cont [15/16] 0.0, 128
    %6781 = vxpose.xlu0.b32.end [16/16] 0.0, 128
    %v6782 = vpop.trf.xlu0
    %v6783 = vpop.trf.xlu0
    %v6784 = vpop.trf.xlu0
    %v6785 = vpop.trf.xlu0
    %v6786 = vpop.trf.xlu0
    %v6787 = vpop.trf.xlu0
    %v6788 = vpop.trf.xlu0
    %v6789 = vpop.trf.xlu0
    %v6790 = vpop.trf.xlu0
    %v6791 = vpop.trf.xlu0
    %v6792 = vpop.trf.xlu0
    %v6793 = vpop.trf.xlu0
    %v6794 = vpop.trf.xlu0
    %v6795 = vpop.trf.xlu0
    %v6796 = vpop.trf.xlu0
    %v6797 = vpop.trf.xlu0
    %v6798 = vld [vmem:[#allocation17] sm:$0xff]
    %v6799 = vld [vmem:[#allocation17 + $0x8] sm:$0xff]
    %v6800 = vld [vmem:[#allocation17 + $0x10] sm:$0xff]
    %v6801 = vld [vmem:[#allocation17 + $0x18] sm:$0xff]
    %v6802 = vld [vmem:[#allocation17 + $0x20] sm:$0xff]
    %v6803 = vld [vmem:[#allocation17 + $0x28] sm:$0xff]
    %v6804 = vld [vmem:[#allocation17 + $0x30] sm:$0xff]
    %v6805 = vld [vmem:[#allocation17 + $0x38] sm:$0xff]
    %v6806 = vld [vmem:[#allocation17 + $0x40] sm:$0xff]
    %v6807 = vld [vmem:[#allocation17 + $0x48] sm:$0xff]
    %v6808 = vld [vmem:[#allocation17 + $0x50] sm:$0xff]
    %v6809 = vld [vmem:[#allocation17 + $0x58] sm:$0xff]
    %v6810 = vld [vmem:[#allocation17 + $0x60] sm:$0xff]
    %v6811 = vld [vmem:[#allocation17 + $0x68] sm:$0xff]
    %v6812 = vld [vmem:[#allocation17 + $0x70] sm:$0xff]
    %v6813 = vld [vmem:[#allocation17 + $0x78] sm:$0xff]
    %6815 = vset.pattern.permute.xlu0 0
    %6816 = vperm.xlu0 %6815, %v6782
    %v6817 = vpop.permute.xlu0 %6816
    %6820 = vset.pattern.permute.xlu0 0
    %6821 = vperm.xlu0 %6820, %v6783
    %v6822 = vpop.permute.xlu0 %6821
    %6825 = vset.pattern.permute.xlu0 0
    %6826 = vperm.xlu0 %6825, %v6784
    %v6827 = vpop.permute.xlu0 %6826
    %6830 = vset.pattern.permute.xlu0 0
    %6831 = vperm.xlu0 %6830, %v6785
    %v6832 = vpop.permute.xlu0 %6831
    %6835 = vset.pattern.permute.xlu0 0
    %6836 = vperm.xlu0 %6835, %v6786
    %v6837 = vpop.permute.xlu0 %6836
    %6840 = vset.pattern.permute.xlu0 0
    %6841 = vperm.xlu0 %6840, %v6787
    %v6842 = vpop.permute.xlu0 %6841
    %6845 = vset.pattern.permute.xlu0 0
    %6846 = vperm.xlu0 %6845, %v6788
    %v6847 = vpop.permute.xlu0 %6846
    %6850 = vset.pattern.permute.xlu0 0
    %6851 = vperm.xlu0 %6850, %v6789
    %v6852 = vpop.permute.xlu0 %6851
    %6855 = vset.pattern.permute.xlu0 0
    %6856 = vperm.xlu0 %6855, %v6790
    %v6857 = vpop.permute.xlu0 %6856
    %6860 = vset.pattern.permute.xlu0 0
    %6861 = vperm.xlu0 %6860, %v6791
    %v6862 = vpop.permute.xlu0 %6861
    %6865 = vset.pattern.permute.xlu0 0
    %6866 = vperm.xlu0 %6865, %v6792
    %v6867 = vpop.permute.xlu0 %6866
    %6870 = vset.pattern.permute.xlu0 0
    %6871 = vperm.xlu0 %6870, %v6793
    %v6872 = vpop.permute.xlu0 %6871
    %6875 = vset.pattern.permute.xlu0 0
    %6876 = vperm.xlu0 %6875, %v6794
    %v6877 = vpop.permute.xlu0 %6876
    %6880 = vset.pattern.permute.xlu0 0
    %6881 = vperm.xlu0 %6880, %v6795
    %v6882 = vpop.permute.xlu0 %6881
    %6885 = vset.pattern.permute.xlu0 0
    %6886 = vperm.xlu0 %6885, %v6796
    %v6887 = vpop.permute.xlu0 %6886
    %6890 = vset.pattern.permute.xlu0 0
    %6891 = vperm.xlu0 %6890, %v6797
    %v6892 = vpop.permute.xlu0 %6891
    %v6894 = vadd.f32 %v6798, %v6817
    %v6895 = vadd.f32 %v6799, %v6822
    %v6896 = vadd.f32 %v6800, %v6827
    %v6897 = vadd.f32 %v6801, %v6832
    %v6898 = vadd.f32 %v6802, %v6837
    %v6899 = vadd.f32 %v6803, %v6842
    %v6900 = vadd.f32 %v6804, %v6847
    %v6901 = vadd.f32 %v6805, %v6852
    %v6902 = vadd.f32 %v6806, %v6857
    %v6903 = vadd.f32 %v6807, %v6862
    %v6904 = vadd.f32 %v6808, %v6867
    %v6905 = vadd.f32 %v6809, %v6872
    %v6906 = vadd.f32 %v6810, %v6877
    %v6907 = vadd.f32 %v6811, %v6882
    %v6908 = vadd.f32 %v6812, %v6887
    %v6909 = vadd.f32 %v6813, %v6892
    %v6910 = vmax.f32 %v6894, %v6898
    %v6911 = vmax.f32 %v6895, %v6899
    %v6912 = vmax.f32 %v6896, %v6900
    %v6913 = vmax.f32 %v6897, %v6901
    %v6914 = vmax.f32 %v6910, %v6902
    %v6915 = vmax.f32 %v6911, %v6903
    %v6916 = vmax.f32 %v6912, %v6904
    %v6917 = vmax.f32 %v6913, %v6905
    %v6918 = vmax.f32 %v6914, %v6906
    %v6919 = vmax.f32 %v6915, %v6907
    %v6920 = vmax.f32 %v6916, %v6908
    %v6921 = vmax.f32 %v6917, %v6909
    %v6922 = vmax.f32 %v6918, %v6919
    %v6923 = vmax.f32 %v6920, %v6921
    %v6924 = vmax.f32 %v6922, %v6923
    %v6925 = vrot.slane %v6924, 4
    %v6926 = vmax.f32 %v6924, %v6925
    %v6927 = vrot.slane %v6926, 2
    %v6928 = vmax.f32 %v6926, %v6927
    %v6929 = vrot.slane %v6928, 1
    %v6930 = vmax.f32 %v6928, %v6929
    %vm6931 = vcmp.eq.f32.partialorder %v6894, %v6930
    %vm6932 = vcmp.eq.f32.partialorder %v6895, %v6930
    %vm6933 = vcmp.eq.f32.partialorder %v6896, %v6930
    %vm6934 = vcmp.eq.f32.partialorder %v6897, %v6930
    %vm6935 = vcmp.eq.f32.partialorder %v6898, %v6930
    %vm6936 = vcmp.eq.f32.partialorder %v6899, %v6930
    %vm6937 = vcmp.eq.f32.partialorder %v6900, %v6930
    %vm6938 = vcmp.eq.f32.partialorder %v6901, %v6930
    %vm6939 = vcmp.eq.f32.partialorder %v6902, %v6930
    %vm6940 = vcmp.eq.f32.partialorder %v6903, %v6930
    %vm6941 = vcmp.eq.f32.partialorder %v6904, %v6930
    %vm6942 = vcmp.eq.f32.partialorder %v6905, %v6930
    %vm6943 = vcmp.eq.f32.partialorder %v6906, %v6930
    %vm6944 = vcmp.eq.f32.partialorder %v6907, %v6930
    %vm6945 = vcmp.eq.f32.partialorder %v6908, %v6930
    %vm6946 = vcmp.eq.f32.partialorder %v6909, %v6930
    %v6947 = vsel %vm6931, %v5331, 128.0
    %v6948 = vsel %vm6932, %v5332, 128.0
    %v6949 = vsel %vm6933, %v5333, 128.0
    %v6950 = vsel %vm6934, %v5334, 128.0
    %v6951 = vsel %vm6935, %v5335, 128.0
    %v6952 = vsel %vm6936, %v5336, 128.0
    %v6953 = vsel %vm6937, %v5337, 128.0
    %v6954 = vsel %vm6938, %v5338, 128.0
    %v6955 = vsel %vm6939, %v5339, 128.0
    %v6956 = vsel %vm6940, %v5340, 128.0
    %v6957 = vsel %vm6941, %v5341, 128.0
    %v6958 = vsel %vm6942, %v5342, 128.0
    %v6959 = vsel %vm6943, %v5343, 128.0
    %v6960 = vsel %vm6944, %v5344, 128.0
    %v6961 = vsel %vm6945, %v5345, 128.0
    %v6962 = vsel %vm6946, %v5346, 128.0
    %v6963 = vmin.f32 %v6947, %v6951
    %v6964 = vmin.f32 %v6948, %v6952
    %v6965 = vmin.f32 %v6949, %v6953
    %v6966 = vmin.f32 %v6950, %v6954
    %v6967 = vmin.f32 %v6963, %v6955
    %v6968 = vmin.f32 %v6964, %v6956
    %v6969 = vmin.f32 %v6965, %v6957
    %v6970 = vmin.f32 %v6966, %v6958
    %v6971 = vmin.f32 %v6967, %v6959
    %v6972 = vmin.f32 %v6968, %v6960
    %v6973 = vmin.f32 %v6969, %v6961
    %v6974 = vmin.f32 %v6970, %v6962
    %v6975 = vmin.f32 %v6971, %v6972
    %v6976 = vmin.f32 %v6973, %v6974
    %v6977 = vmin.f32 %v6975, %v6976
    %v6978 = vrot.slane %v6977, 4
    %v6979 = vmin.f32 %v6977, %v6978
    %v6980 = vrot.slane %v6979, 2
    %v6981 = vmin.f32 %v6979, %v6980
    %v6982 = vrot.slane %v6981, 1
    %v6983 = vmin.f32 %v6981, %v6982
    %6984 = vst [vmem:[#allocation6 + $0x7] sm:$0x1] %v6983
    %v6985 = vld [vmem:[#allocation5 + $0x7] sm:$0x1]
    %v6986 = vadd.f32 %v6930, %v6985
    %6987 = vxpose.xlu0.b32.start [1/16] %v6986, 128
    %6988 = vxpose.xlu0.b32.cont [2/16] 0.0, 128
    %6989 = vxpose.xlu0.b32.cont [3/16] 0.0, 128
    %6990 = vxpose.xlu0.b32.cont [4/16] 0.0, 128
    %6991 = vxpose.xlu0.b32.cont [5/16] 0.0, 128
    %6992 = vxpose.xlu0.b32.cont [6/16] 0.0, 128
    %6993 = vxpose.xlu0.b32.cont [7/16] 0.0, 128
    %6994 = vxpose.xlu0.b32.cont [8/16] 0.0, 128
    %6995 = vxpose.xlu0.b32.cont [9/16] 0.0, 128
    %6996 = vxpose.xlu0.b32.cont [10/16] 0.0, 128
    %6997 = vxpose.xlu0.b32.cont [11/16] 0.0, 128
    %6998 = vxpose.xlu0.b32.cont [12/16] 0.0, 128
    %6999 = vxpose.xlu0.b32.cont [13/16] 0.0, 128
    %7000 = vxpose.xlu0.b32.cont [14/16] 0.0, 128
    %7001 = vxpose.xlu0.b32.cont [15/16] 0.0, 128
    %7002 = vxpose.xlu0.b32.end [16/16] 0.0, 128
    %v7003 = vpop.trf.xlu0
    %v7004 = vpop.trf.xlu0
    %v7005 = vpop.trf.xlu0
    %v7006 = vpop.trf.xlu0
    %v7007 = vpop.trf.xlu0
    %v7008 = vpop.trf.xlu0
    %v7009 = vpop.trf.xlu0
    %v7010 = vpop.trf.xlu0
    %v7011 = vpop.trf.xlu0
    %v7012 = vpop.trf.xlu0
    %v7013 = vpop.trf.xlu0
    %v7014 = vpop.trf.xlu0
    %v7015 = vpop.trf.xlu0
    %v7016 = vpop.trf.xlu0
    %v7017 = vpop.trf.xlu0
    %v7018 = vpop.trf.xlu0
    %v7019 = vld [vmem:[#allocation17] sm:$0xff]
    %v7020 = vld [vmem:[#allocation17 + $0x8] sm:$0xff]
    %v7021 = vld [vmem:[#allocation17 + $0x10] sm:$0xff]
    %v7022 = vld [vmem:[#allocation17 + $0x18] sm:$0xff]
    %v7023 = vld [vmem:[#allocation17 + $0x20] sm:$0xff]
    %v7024 = vld [vmem:[#allocation17 + $0x28] sm:$0xff]
    %v7025 = vld [vmem:[#allocation17 + $0x30] sm:$0xff]
    %v7026 = vld [vmem:[#allocation17 + $0x38] sm:$0xff]
    %v7027 = vld [vmem:[#allocation17 + $0x40] sm:$0xff]
    %v7028 = vld [vmem:[#allocation17 + $0x48] sm:$0xff]
    %v7029 = vld [vmem:[#allocation17 + $0x50] sm:$0xff]
    %v7030 = vld [vmem:[#allocation17 + $0x58] sm:$0xff]
    %v7031 = vld [vmem:[#allocation17 + $0x60] sm:$0xff]
    %v7032 = vld [vmem:[#allocation17 + $0x68] sm:$0xff]
    %v7033 = vld [vmem:[#allocation17 + $0x70] sm:$0xff]
    %v7034 = vld [vmem:[#allocation17 + $0x78] sm:$0xff]
    %7051 = vrot.lane.b32.xlu0 %v7019, 124
    %v7052 = vpop.permute.xlu0 %7051
    %7053 = vrot.lane.b32.xlu0 %v7020, 124
    %v7054 = vpop.permute.xlu0 %7053
    %7055 = vrot.lane.b32.xlu0 %v7021, 124
    %v7056 = vpop.permute.xlu0 %7055
    %7057 = vrot.lane.b32.xlu0 %v7022, 124
    %v7058 = vpop.permute.xlu0 %7057
    %7059 = vrot.lane.b32.xlu0 %v7023, 124
    %v7060 = vpop.permute.xlu0 %7059
    %7061 = vrot.lane.b32.xlu0 %v7024, 124
    %v7062 = vpop.permute.xlu0 %7061
    %7063 = vrot.lane.b32.xlu0 %v7025, 124
    %v7064 = vpop.permute.xlu0 %7063
    %7065 = vrot.lane.b32.xlu0 %v7026, 124
    %v7066 = vpop.permute.xlu0 %7065
    %7067 = vrot.lane.b32.xlu0 %v7027, 124
    %v7068 = vpop.permute.xlu0 %7067
    %7069 = vrot.lane.b32.xlu0 %v7028, 124
    %v7070 = vpop.permute.xlu0 %7069
    %7071 = vrot.lane.b32.xlu0 %v7029, 124
    %v7072 = vpop.permute.xlu0 %7071
    %7073 = vrot.lane.b32.xlu0 %v7030, 124
    %v7074 = vpop.permute.xlu0 %7073
    %7075 = vrot.lane.b32.xlu0 %v7031, 124
    %v7076 = vpop.permute.xlu0 %7075
    %7077 = vrot.lane.b32.xlu0 %v7032, 124
    %v7078 = vpop.permute.xlu0 %7077
    %7079 = vrot.lane.b32.xlu0 %v7033, 124
    %v7080 = vpop.permute.xlu0 %7079
    %7081 = vrot.lane.b32.xlu0 %v7034, 124
    %v7082 = vpop.permute.xlu0 %7081
    %v7099 = vadd.f32 %v7003, %v7052
    %v7100 = vadd.f32 %v7004, %v7054
    %v7101 = vadd.f32 %v7005, %v7056
    %v7102 = vadd.f32 %v7006, %v7058
    %v7103 = vadd.f32 %v7007, %v7060
    %v7104 = vadd.f32 %v7008, %v7062
    %v7105 = vadd.f32 %v7009, %v7064
    %v7106 = vadd.f32 %v7010, %v7066
    %v7107 = vadd.f32 %v7011, %v7068
    %v7108 = vadd.f32 %v7012, %v7070
    %v7109 = vadd.f32 %v7013, %v7072
    %v7110 = vadd.f32 %v7014, %v7074
    %v7111 = vadd.f32 %v7015, %v7076
    %v7112 = vadd.f32 %v7016, %v7078
    %v7113 = vadd.f32 %v7017, %v7080
    %v7114 = vadd.f32 %v7018, %v7082
    %7115 = vxpose.xlu0.b32.start [1/16] %v7099, 128
    %7116 = vxpose.xlu0.b32.cont [2/16] %v7100, 128
    %7117 = vxpose.xlu0.b32.cont [3/16] %v7101, 128
    %7118 = vxpose.xlu0.b32.cont [4/16] %v7102, 128
    %7119 = vxpose.xlu0.b32.cont [5/16] %v7103, 128
    %7120 = vxpose.xlu0.b32.cont [6/16] %v7104, 128
    %7121 = vxpose.xlu0.b32.cont [7/16] %v7105, 128
    %7122 = vxpose.xlu0.b32.cont [8/16] %v7106, 128
    %7123 = vxpose.xlu0.b32.cont [9/16] %v7107, 128
    %7124 = vxpose.xlu0.b32.cont [10/16] %v7108, 128
    %7125 = vxpose.xlu0.b32.cont [11/16] %v7109, 128
    %7126 = vxpose.xlu0.b32.cont [12/16] %v7110, 128
    %7127 = vxpose.xlu0.b32.cont [13/16] %v7111, 128
    %7128 = vxpose.xlu0.b32.cont [14/16] %v7112, 128
    %7129 = vxpose.xlu0.b32.cont [15/16] %v7113, 128
    %7130 = vxpose.xlu0.b32.end [16/16] %v7114, 128
    %v7131 = vpop.trf.xlu0
    %v7132 = vpop.trf.xlu0
    %v7133 = vpop.trf.xlu0
    %v7134 = vpop.trf.xlu0
    %v7135 = vpop.trf.xlu0
    %v7136 = vpop.trf.xlu0
    %v7137 = vpop.trf.xlu0
    %v7138 = vpop.trf.xlu0
    %v7139 = vpop.trf.xlu0
    %v7140 = vpop.trf.xlu0
    %v7141 = vpop.trf.xlu0
    %v7142 = vpop.trf.xlu0
    %v7143 = vpop.trf.xlu0
    %v7144 = vpop.trf.xlu0
    %v7145 = vpop.trf.xlu0
    %v7146 = vpop.trf.xlu0
    %7147 = vst [vmem:[%s11] sm:$0x1] %v7131
    %vm7148 = vcmask 1040384
    %v7149 = vsel %vm7148, %v7131, -inf
    %7150 = vmax.xlane.f32.xlu0 %v7149
    %v7151 = vpop.xlane.xlu0 %7150
    %vm7152 = vcmp.eq.f32.partialorder %v7131, %v7151
    %v7153 = vsel %vm7152, %v189, 128.0
    %v7154 = vsel %vm7148, %v7153, inf
    %7155 = vmin.xlane.f32.xlu0 %v7154
    %v7156 = vpop.xlane.xlu0 %7155
    %vm7157 = vcmp.eq.f32.partialorder %v189, %v7156
    %v7158 = vsel %vm7157, 1, 0
    %v7159 = vcvt.s32.f32 %v7158
    %7160 = vst [vmem:[%s10 + $0x7] sm:$0x1] %v7159
    %v7161 = vld [vmem:[#allocation6 + $0x7] sm:$0x1]
    %v7162 = vmul.f32 %v7161, %v7159
    %v7163 = vsel %vm7148, %v7162, 0.0
    %7164 = vadd.xlane.f32.xlu0 %v7163
    %v7165 = vpop.xlane.xlu0 %7164
    %vm7166 = vcmp.eq.f32.partialorder %v189, %v7165
    %v7167 = vsel %vm7166, 1, 0
    %v7168 = vcvt.s32.f32 %v7167
    %7169 = vst [vmem:[%s10 + $0x6] sm:$0x1] %v7168
    %v7170 = vld [vmem:[#allocation6 + $0x6] sm:$0x1]
    %v7171 = vmul.f32 %v7170, %v7168
    %v7172 = vsel %vm7148, %v7171, 0.0
    %7173 = vadd.xlane.f32.xlu0 %v7172
    %v7174 = vpop.xlane.xlu0 %7173
    %vm7175 = vcmp.eq.f32.partialorder %v189, %v7174
    %v7176 = vsel %vm7175, 1, 0
    %v7177 = vcvt.s32.f32 %v7176
    %7178 = vst [vmem:[%s10 + $0x5] sm:$0x1] %v7177
    %v7179 = vld [vmem:[#allocation6 + $0x5] sm:$0x1]
    %v7180 = vmul.f32 %v7179, %v7177
    %v7181 = vsel %vm7148, %v7180, 0.0
    %7182 = vadd.xlane.f32.xlu0 %v7181
    %v7183 = vpop.xlane.xlu0 %7182
    %vm7184 = vcmp.eq.f32.partialorder %v189, %v7183
    %v7185 = vsel %vm7184, 1, 0
    %v7186 = vcvt.s32.f32 %v7185
    %7187 = vst [vmem:[%s10 + $0x4] sm:$0x1] %v7186
    %v7188 = vld [vmem:[#allocation6 + $0x4] sm:$0x1]
    %v7189 = vmul.f32 %v7188, %v7186
    %v7190 = vsel %vm7148, %v7189, 0.0
    %7191 = vadd.xlane.f32.xlu0 %v7190
    %v7192 = vpop.xlane.xlu0 %7191
    %vm7193 = vcmp.eq.f32.partialorder %v189, %v7192
    %v7194 = vsel %vm7193, 1, 0
    %v7195 = vcvt.s32.f32 %v7194
    %7196 = vst [vmem:[%s10 + $0x3] sm:$0x1] %v7195
    %v7197 = vld [vmem:[#allocation6 + $0x3] sm:$0x1]
    %v7198 = vmul.f32 %v7197, %v7195
    %v7199 = vsel %vm7148, %v7198, 0.0
    %7200 = vadd.xlane.f32.xlu0 %v7199
    %v7201 = vpop.xlane.xlu0 %7200
    %vm7202 = vcmp.eq.f32.partialorder %v189, %v7201
    %v7203 = vsel %vm7202, 1, 0
    %v7204 = vcvt.s32.f32 %v7203
    %7205 = vst [vmem:[%s10 + $0x2] sm:$0x1] %v7204
    %v7206 = vld [vmem:[#allocation6 + $0x2] sm:$0x1]
    %v7207 = vmul.f32 %v7206, %v7204
    %v7208 = vsel %vm7148, %v7207, 0.0
    %7209 = vadd.xlane.f32.xlu0 %v7208
    %v7210 = vpop.xlane.xlu0 %7209
    %vm7211 = vcmp.eq.f32.partialorder %v189, %v7210
    %v7212 = vsel %vm7211, 1, 0
    %v7213 = vcvt.s32.f32 %v7212
    %7214 = vst [vmem:[%s10 + $0x1] sm:$0x1] %v7213
    %v7215 = vld [vmem:[#allocation6 + $0x1] sm:$0x1]
    %v7216 = vmul.f32 %v7215, %v7213
    %v7217 = vsel %vm7148, %v7216, 0.0
    %7218 = vadd.xlane.f32.xlu0 %v7217
    %v7219 = vpop.xlane.xlu0 %7218
    %vm7220 = vcmp.eq.f32.partialorder %v189, %v7219
    %v7221 = vsel %vm7220, 1, 0
    %v7222 = vcvt.s32.f32 %v7221
    %7223 = vst [vmem:[%s10] sm:$0x1] %v7222
    %v7224 = vld [vmem:[#allocation6] sm:$0x1]
    %v7225 = vmul.f32 %v7224, %v7222
    %v7226 = vsel %vm7148, %v7225, 0.0
    %7227 = vadd.xlane.f32.xlu0 %v7226
    %v7228 = vpop.xlane.xlu0 %7227
    %vm7229 = vcmp.eq.f32.partialorder %v189, %v7228
    %v7230 = vsel %vm7229, 1, 0
    %v7231 = vcvt.s32.f32 %v7230
    %7232 = vst [vmem:[%s12] sm:$0x1] %v7231
    // Predicated region
    $region70: #{_bilstm_crf_device.1} parent=1 // pred_check
      _
    $region71: #{_bilstm_crf_device.1} parent=1 // pred_check_branch
      %7234 = sbr.rel (0) target = $region73
    $region72: #{_bilstm_crf_device.1} parent=1 // pred_region
      _
    $region73: #{_bilstm_crf_device.1} parent=1 // pred_fallthru
      _
    // Predicated region
    $region74: #{_bilstm_crf_device.1} parent=1 // pred_check
      _
    $region75: #{_bilstm_crf_device.1} parent=1 // pred_check_branch
      %7236 = sbr.rel (0) target = $region77
    $region76: #{_bilstm_crf_device.1} parent=1 // pred_region
      _
    $region77: #{_bilstm_crf_device.1} parent=1 // pred_fallthru
      _
    // Predicated region
    $region78: #{_bilstm_crf_device.1} parent=1 // pred_check
      _
    $region79: #{_bilstm_crf_device.1} parent=1 // pred_check_branch
      %7238 = sbr.rel (0) target = $region81
    $region80: #{_bilstm_crf_device.1} parent=1 // pred_region
      _
    $region81: #{_bilstm_crf_device.1} parent=1 // pred_fallthru
      _
    // Predicated region
    $region82: #{_bilstm_crf_device.1} parent=1 // pred_check
      _
    $region83: #{_bilstm_crf_device.1} parent=1 // pred_check_branch
      %7240 = sbr.rel (0) target = $region85
    $region84: #{_bilstm_crf_device.1} parent=1 // pred_region
      _
    $region85: #{_bilstm_crf_device.1} parent=1 // pred_fallthru
      _
    // Predicated region
    $region86: #{_bilstm_crf_device.1} parent=1 // pred_check
      _
    $region87: #{_bilstm_crf_device.1} parent=1 // pred_check_branch
      %7242 = sbr.rel (0) target = $region89
    $region88: #{_bilstm_crf_device.1} parent=1 // pred_region
      _
    $region89: #{_bilstm_crf_device.1} parent=1 // pred_fallthru
      _
    // Predicated region
    $region90: #{_bilstm_crf_device.1} parent=1 // pred_check
      _
    $region91: #{_bilstm_crf_device.1} parent=1 // pred_check_branch
      %7244 = sbr.rel (0) target = $region93
    $region92: #{_bilstm_crf_device.1} parent=1 // pred_region
      _
    $region93: #{_bilstm_crf_device.1} parent=1 // pred_fallthru
      _
    %7245 = vsyncpa [#allocation8], 1
    %7246 = vsyncpa [#allocation10], 1
    %7247 = vsyncpa [#allocation13], 1
    %7248 = vsyncpa [#allocation16], 1

</llo_original>
